<compile_context>
chip_gen: v7x
topology: tpu7x:2x2x1
jax: 0.10.0
libtpu: 0.0.40
codegen_flags: <defaults>
</compile_context>

<pallas_src>
import functools
import math

import jax
import jax.numpy as jnp
from jax import lax
from jax.experimental import pallas as pl
from jax.experimental.pallas import tpu as pltpu

EPS = 1e-5        # nn.LayerNorm default eps
NEG_BIG = -1e30   # finite "minus infinity"; fully-masked rows give a uniform (not NaN) distribution


# --------------------------------------------------------------------------
# small helpers (host side)
# --------------------------------------------------------------------------

def _pick_bt(B, max_rows=8):
    """Largest divisor of B that is <= max_rows (batch rows processed per grid step)."""
    bt = 1
    for c in range(1, min(B, max_rows) + 1):
        if B % c == 0:
            bt = c
    return bt


def _pick_vocab_tile(V):
    """Lane-dense vocab tile: largest divisor of V that is a multiple of 128 (<=2048)."""
    for t in (2048, 1024, 512, 256, 128):
        if V % t == 0:
            return t
    return V


def _vmem_limit_bytes():
    """Explicit scoped-VMEM limit, sized per chip generation (cap ~100 MiB on 128 MiB parts,
    ~0.8 * capacity on 64 MiB parts such as v7x)."""
    cap = 128 * 1024 * 1024
    try:
        cap = int(pltpu.get_tpu_info().vmem_capacity_bytes)
    except Exception:
        pass
    return int(min(cap * 0.8, 100 * 1024 * 1024))


# --------------------------------------------------------------------------
# in-kernel helpers (traced inside the Pallas kernels)
# --------------------------------------------------------------------------

def _mm(x, w_ref, b=None, *, relu=False, out_dtype=jnp.float32):
    """x:(M,K) -> (M,N).  bf16 MXU operands, f32 accumulation, optional bias / ReLU."""
    y = jnp.dot(x.astype(jnp.bfloat16), w_ref[...].astype(jnp.bfloat16),
                preferred_element_type=jnp.float32)
    if b is not None:
        y = y + b
    if relu:
        y = jnp.maximum(y, 0.0)
    return y.astype(out_dtype)


def _ln(x, g, b):
    """Post-LN over the last dim, f32.  g/b are (H,) vectors."""
    mean = jnp.mean(x, axis=-1, keepdims=True)
    var = jnp.mean(jnp.square(x - mean), axis=-1, keepdims=True)
    return (x - mean) * lax.rsqrt(var + EPS) * g + b


def _attention(q, k, v, wo, num_heads, bias=None):
    """q:(Lq,H), k/v:(Lk,H) bf16 (q already carries the 1/sqrt(Dh) scale).
    Returns (Lq,H) f32 = concat_heads(softmax(q k^T + bias) v) @ Wo,
    with the concat folded away by accumulating each head through Wo[h*Dh:(h+1)*Dh, :]."""
    Lq, H = q.shape
    Dh = H // num_heads
    out = None
    for h in range(num_heads):
        sl = slice(h * Dh, (h + 1) * Dh)
        s = lax.dot_general(q[:, sl], k[:, sl], (((1,), (1,)), ((), ())),
                            preferred_element_type=jnp.float32)           # (Lq, Lk)
        if bias is not None:
            s = s + bias
        s = s - jnp.max(s, axis=-1, keepdims=True)
        p = jnp.exp(s)
        p = (p * pl.reciprocal(jnp.sum(p, axis=-1, keepdims=True), approx=True)
             ).astype(jnp.bfloat16)                                        # bf16 probs
        ctx = jnp.dot(p, v[:, sl], preferred_element_type=jnp.float32)     # (Lq, Dh)
        c = jnp.dot(ctx.astype(jnp.bfloat16), wo[sl, :],
                    preferred_element_type=jnp.float32)                    # (Lq, H)
        out = c if out is None else out + c
    return out


# --------------------------------------------------------------------------
# kernel 0: patch fc_in projection + positional add (prologue)
# --------------------------------------------------------------------------

def _fc_in_kernel(patch_ref, w_ref, posb_ref, out_ref, *, bt):
    w = w_ref[...].astype(jnp.bfloat16)
    posb = posb_ref[...]                                    # (S, H) = pos + fc_in bias
    for b in range(bt):
        x = patch_ref[b].astype(jnp.bfloat16)               # (S, P)
        y = jnp.dot(x, w, preferred_element_type=jnp.float32) + posb
        out_ref[b] = y.astype(out_ref.dtype)


def _fc_in_forward(params, patch_seq, bt, vmem):
    B, S, P = patch_seq.shape
    H = params["fc_in_w"].shape[1]
    posb = params["pos_embedding"].reshape(S, H) + params["fc_in_b"].reshape(1, H)
    return pl.pallas_call(
        functools.partial(_fc_in_kernel, bt=bt),
        out_shape=jax.ShapeDtypeStruct((B, S, H), jnp.float32),
        grid=(B // bt,),
        in_specs=[
            pl.BlockSpec((bt, S, P), lambda b: (b, 0, 0)),
            pl.BlockSpec((P, H), lambda b: (0, 0)),
            pl.BlockSpec((S, H), lambda b: (0, 0)),
        ],
        out_specs=pl.BlockSpec((bt, S, H), lambda b: (b, 0, 0)),
        compiler_params=pltpu.CompilerParams(
            dimension_semantics=("parallel",), vmem_limit_bytes=vmem),
    )(patch_seq, params["fc_in_w"], posb)


# --------------------------------------------------------------------------
# kernel 1: fused encoder stack
#   packed per-layer vector rows (width 4H):
#     row 0: ff1_b | row 1: [bq|bk|bv|bo] | row 2: [ln1_g|ln1_b|ln2_g|ln2_b] | row 3: [ff2_b|0|0|0]
# --------------------------------------------------------------------------

def _encoder_kernel(x0_ref, wqkv_ref, wo_ref, ff1w_ref, ff2w_ref, vec_ref,
                    out_ref, act_ref, *, num_heads, bt):
    l = pl.program_id(1)
    _, S, H = act_ref.shape
    scale = 1.0 / math.sqrt(H // num_heads)

    @pl.when(l == 0)
    def _():
        act_ref[...] = x0_ref[...]

    vec = vec_ref[...]                                       # (4, 4H) f32
    ff1b = vec[0, :]
    bq, bk, bv, bo = vec[1, 0:H], vec[1, H:2 * H], vec[1, 2 * H:3 * H], vec[1, 3 * H:4 * H]
    ln1g, ln1b = vec[2, 0:H], vec[2, H:2 * H]
    ln2g, ln2b = vec[2, 2 * H:3 * H], vec[2, 3 * H:4 * H]
    ff2b = vec[3, 0:H]
    wo = wo_ref[...].astype(jnp.bfloat16)

    for b in range(bt):                                      # static batch-row loop
        x = act_ref[b]                                       # (S, H) f32

        # --- self-attention (fused QKV, bf16 intermediate, scale folded into q) ---
        qkv = _mm(x, wqkv_ref, out_dtype=jnp.bfloat16)       # (S, 3H)
        q = ((qkv[:, 0:H] + bq) * scale).astype(jnp.bfloat16)
        k = (qkv[:, H:2 * H] + bk).astype(jnp.bfloat16)
        v = (qkv[:, 2 * H:3 * H] + bv).astype(jnp.bfloat16)
        sa = _attention(q, k, v, wo, num_heads)
        x = _ln(x + sa + bo, ln1g, ln1b)

        # --- feed-forward ---
        h1 = _mm(x, ff1w_ref, ff1b, relu=True, out_dtype=jnp.bfloat16)   # (S, 4H) bf16
        x = _ln(x + _mm(h1, ff2w_ref, ff2b), ln2g, ln2b)

        act_ref[b] = x

        @pl.when(l == pl.num_programs(1) - 1)
        def _():
            out_ref[b] = x.astype(out_ref.dtype)


def _encoder_forward(params, x0, num_heads, bt, vmem):
    B, S, H = x0.shape
    enc = params["enc"]
    n_layers = enc["wqkv"].shape[0]

    def wspec(shape):
        return pl.BlockSpec(shape, lambda b, l: (l, 0, 0))

    return pl.pallas_call(
        functools.partial(_encoder_kernel, num_heads=num_heads, bt=bt),
        out_shape=jax.ShapeDtypeStruct((B, S, H), jnp.float32),
        grid=(B // bt, n_layers),
        in_specs=[
            pl.BlockSpec((bt, S, H), lambda b, l: (b, 0, 0)),   # x0 (layer-0 input)
            wspec((None, H, 3 * H)),                            # fused qkv weight
            wspec((None, H, H)),                                # attn out-proj weight
            wspec((None, H, 4 * H)),                            # ff1 weight
            wspec((None, 4 * H, H)),                            # ff2 weight
            wspec((None, 4, 4 * H)),                            # packed bias/LN vectors
        ],
        out_specs=pl.BlockSpec((bt, S, H), lambda b, l: (b, 0, 0)),
        scratch_shapes=[pltpu.VMEM((bt, S, H), jnp.float32)],
        compiler_params=pltpu.CompilerParams(
            dimension_semantics=("parallel", "arbitrary"), vmem_limit_bytes=vmem),
    )(x0, enc["wqkv"], enc["wo"], enc["ff1_w"], enc["ff2_w"], enc["vec"])


# --------------------------------------------------------------------------
# kernel 2: fused decoder stack (outputs final hidden state; no vocab proj here)
#   packed per-layer vector rows (width 4H):
#     row 0: ff1_b | row 1: [bq|bk|bv|bo] | row 2: [cbq|cbk|cbv|cbo]
#     row 3: [ln1_g|ln1_b|ln2_g|ln2_b]    | row 4: [ln3_g|ln3_b|ff2_b|0]
# --------------------------------------------------------------------------

def _decoder_kernel(y0_ref, mem_ref, pad_ref,
                    wqkv_ref, wo_ref, cwq_ref, cwkv_ref, cwo_ref,
                    ff1w_ref, ff2w_ref, vec_ref,
                    out_ref, act_ref, bias_ref, *, num_heads, bt):
    l = pl.program_id(1)
    _, L, H = act_ref.shape
    scale = 1.0 / math.sqrt(H // num_heads)

    @pl.when(l == 0)
    def _():
        act_ref[...] = y0_ref[...]
        # causal + key-padding additive bias, built ONCE per batch tile and reused by all layers
        row = lax.broadcasted_iota(jnp.int32, (L, L), 0)
        col = lax.broadcasted_iota(jnp.int32, (L, L), 1)
        causal = jnp.where(col > row, NEG_BIG, 0.0).astype(jnp.float32)     # (L, L)
        pad = pad_ref[...]                                                   # (bt, 1, L) 1 = valid
        bias_ref[...] = causal[None, :, :] + (pad - 1.0) * (-NEG_BIG)

    vec = vec_ref[...]                                       # (5, 4H) f32
    ff1b = vec[0, :]
    bq, bk, bv, bo = vec[1, 0:H], vec[1, H:2 * H], vec[1, 2 * H:3 * H], vec[1, 3 * H:4 * H]
    cbq, cbk, cbv, cbo = vec[2, 0:H], vec[2, H:2 * H], vec[2, 2 * H:3 * H], vec[2, 3 * H:4 * H]
    ln1g, ln1b = vec[3, 0:H], vec[3, H:2 * H]
    ln2g, ln2b = vec[3, 2 * H:3 * H], vec[3, 3 * H:4 * H]
    ln3g, ln3b, ff2b = vec[4, 0:H], vec[4, H:2 * H], vec[4, 2 * H:3 * H]
    wo = wo_ref[...].astype(jnp.bfloat16)
    cwo = cwo_ref[...].astype(jnp.bfloat16)

    for b in range(bt):                                      # static batch-row loop
        y = act_ref[b]                                       # (L, H) f32
        mem = mem_ref[b]                                     # (S, H) f32
        bias = bias_ref[b]                                   # (L, L) f32

        # --- masked self-attention (fused QKV) ---
        qkv = _mm(y, wqkv_ref, out_dtype=jnp.bfloat16)       # (L, 3H)
        q = ((qkv[:, 0:H] + bq) * scale).astype(jnp.bfloat16)
        k = (qkv[:, H:2 * H] + bk).astype(jnp.bfloat16)
        v = (qkv[:, 2 * H:3 * H] + bv).astype(jnp.bfloat16)
        sa = _attention(q, k, v, wo, num_heads, bias=bias)
        y = _ln(y + sa + bo, ln1g, ln1b)

        # --- cross-attention over encoder memory (memory padding mask is None) ---
        qc = ((_mm(y, cwq_ref, out_dtype=jnp.bfloat16) + cbq) * scale).astype(jnp.bfloat16)
        kvc = _mm(mem, cwkv_ref, out_dtype=jnp.bfloat16)     # (S, 2H)
        kc = (kvc[:, 0:H] + cbk).astype(jnp.bfloat16)
        vc = (kvc[:, H:2 * H] + cbv).astype(jnp.bfloat16)
        ca = _attention(qc, kc, vc, cwo, num_heads)
        y = _ln(y + ca + cbo, ln2g, ln2b)

        # --- feed-forward ---
        h1 = _mm(y, ff1w_ref, ff1b, relu=True, out_dtype=jnp.bfloat16)   # (L, 4H)
        y = _ln(y + _mm(h1, ff2w_ref, ff2b), ln3g, ln3b)

        act_ref[b] = y

        @pl.when(l == pl.num_programs(1) - 1)
        def _():
            out_ref[b] = y.astype(out_ref.dtype)


def _decoder_forward(params, y0, memory, pad_f, num_heads, bt, vmem):
    B, L, H = y0.shape
    S = memory.shape[1]
    dec = params["dec"]
    n_layers = dec["wqkv"].shape[0]

    def wspec(shape):
        return pl.BlockSpec(shape, lambda b, l: (l, 0, 0))

    def bspec(shape):
        return pl.BlockSpec(shape, lambda b, l: (b, 0, 0))

    return pl.pallas_call(
        functools.partial(_decoder_kernel, num_heads=num_heads, bt=bt),
        out_shape=jax.ShapeDtypeStruct((B, L, H), jnp.float32),
        grid=(B // bt, n_layers),
        in_specs=[
            bspec((bt, L, H)),                 # y0 (token emb + pos)
            bspec((bt, S, H)),                 # encoder memory
            bspec((bt, 1, L)),                 # key padding (1 = valid)
            wspec((None, H, 3 * H)),           # self-attn fused qkv
            wspec((None, H, H)),               # self-attn out-proj
            wspec((None, H, H)),               # cross-attn q
            wspec((None, H, 2 * H)),           # cross-attn fused kv
            wspec((None, H, H)),               # cross-attn out-proj
            wspec((None, H, 4 * H)),           # ff1
            wspec((None, 4 * H, H)),           # ff2
            wspec((None, 5, 4 * H)),           # packed bias/LN vectors
        ],
        out_specs=bspec((bt, L, H)),
        scratch_shapes=[pltpu.VMEM((bt, L, H), jnp.float32),
                        pltpu.VMEM((bt, L, L), jnp.float32)],
        compiler_params=pltpu.CompilerParams(
            dimension_semantics=("parallel", "arbitrary"), vmem_limit_bytes=vmem),
    )(y0, memory, pad_f,
      dec["wqkv"], dec["wo"], dec["cwq"], dec["cwkv"], dec["cwo"],
      dec["ff1_w"], dec["ff2_w"], dec["vec"])


# --------------------------------------------------------------------------
# kernel 3: vocabulary projection (fc_out), tiled over lane-dense V blocks
# --------------------------------------------------------------------------

def _fc_out_kernel(y_ref, w_ref, b_ref, out_ref, *, bt):
    w = w_ref[...].astype(jnp.bfloat16)                      # (H, Tv)
    bias = b_ref[...]                                        # (1, Tv)
    for b in range(bt):
        y = y_ref[b].astype(jnp.bfloat16)                    # (L, H)
        out_ref[b] = (jnp.dot(y, w, preferred_element_type=jnp.float32) + bias
                      ).astype(out_ref.dtype)


def _fc_out_forward(params, yf, bt, vmem):
    B, L, H = yf.shape
    V = params["fc_out_w"].shape[1]
    tv = _pick_vocab_tile(V)
    return pl.pallas_call(
        functools.partial(_fc_out_kernel, bt=bt),
        out_shape=jax.ShapeDtypeStruct((B, L, V), jnp.float32),
        grid=(B // bt, V // tv),
        in_specs=[
            pl.BlockSpec((bt, L, H), lambda b, j: (b, 0, 0)),
            pl.BlockSpec((H, tv), lambda b, j: (0, j)),
            pl.BlockSpec((1, tv), lambda b, j: (0, j)),
        ],
        out_specs=pl.BlockSpec((bt, L, tv), lambda b, j: (b, 0, j)),
        compiler_params=pltpu.CompilerParams(
            dimension_semantics=("parallel", "parallel"), vmem_limit_bytes=vmem),
    )(yf, params["fc_out_w"], params["fc_out_b"])


# --------------------------------------------------------------------------
# model glue (patch extraction, embedding gather, sinusoidal table) — XLA, not Pallas
# --------------------------------------------------------------------------

def extract_patches(image, patch_size):
    # Matches torch.nn.Unfold(kernel_size=p, stride=p) + transpose + reshape.
    bs, c, h, w = image.shape
    gh, gw = h // patch_size, w // patch_size
    x = image.reshape(bs, c, gh, patch_size, gw, patch_size)
    x = x.transpose(0, 2, 4, 1, 3, 5)                        # (bs, gh, gw, c, p, p)
    return x.reshape(bs, gh * gw, c * patch_size * patch_size)


def sinusoidal_pos_emb(positions, dim):
    half = dim // 2
    emb = math.log(10000.0) / (half - 1)
    freqs = jnp.exp(jnp.arange(half, dtype=jnp.float32) * -emb)
    args = positions[:, None].astype(jnp.float32) * freqs[None, :]
    return jnp.concatenate([jnp.sin(args), jnp.cos(args)], axis=-1)


def vision_encoder_decoder(params, image, target_seq, padding_mask, *,
                           patch_size, num_heads):
    bt = _pick_bt(image.shape[0])
    vmem = _vmem_limit_bytes()

    # ---------------- VisionEncoder ----------------
    patch_seq = extract_patches(image, patch_size)                      # (B, S, C*p*p)
    x0 = _fc_in_forward(params, patch_seq, bt, vmem)                    # (B, S, H)
    memory = _encoder_forward(params, x0, num_heads, bt, vmem)          # (B, S, H)

    # ---------------- Decoder ----------------
    B, L = target_seq.shape
    H = params["pos_embedding"].shape[-1]
    # TODO(synk): token-embedding gather stays in XLA (data-dependent gather).
    tok = jnp.take(params["embedding"], target_seq, axis=0)             # (B, L, H)
    pos = sinusoidal_pos_emb(jnp.arange(L), H)[None]                    # (1, L, H)
    y0 = (tok + pos).astype(jnp.float32)
    pad_f = (padding_mask != 0).astype(jnp.float32).reshape(B, 1, L)    # 1 = valid key
    yf = _decoder_forward(params, y0, memory, pad_f, num_heads, bt, vmem)   # (B, L, H)
    return _fc_out_forward(params, yf, bt, vmem)                        # (B, L, V) logits


# --------------------------------------------------------------------------
# Deterministic parameter construction (synthetic; matches module shapes).
# Matmul weights are bf16 (MXU-native, halves weight DMA); biases / LN / embeddings f32.
# Per-layer bias & LayerNorm vectors are pre-packed into one (n_layers, rows, 4H) tensor.
# --------------------------------------------------------------------------

def init_params(key, *, image_size, channels_in, num_emb, patch_size,
                hidden_size, num_layers, num_heads):
    del num_heads
    H = hidden_size
    n_enc, n_dec = num_layers
    keys = iter(jax.random.split(key, 64))

    def nrm(shape, std=0.02, dtype=jnp.bfloat16):
        return (std * jax.random.normal(next(keys), shape, jnp.float32)).astype(dtype)

    zeros_h = jnp.zeros((H,), jnp.float32)
    ones_h = jnp.ones((H,), jnp.float32)
    zero_row = jnp.zeros((4 * H,), jnp.float32)
    ln_row = jnp.concatenate([ones_h, zeros_h, ones_h, zeros_h])           # [g|b|g|b]
    ln3_row = jnp.concatenate([ones_h, zeros_h, zeros_h, zeros_h])         # [ln3_g|ln3_b|ff2_b|0]

    def enc_stack(n):
        # vec rows: [ff1_b], [bq|bk|bv|bo], [ln1_g|ln1_b|ln2_g|ln2_b], [ff2_b|0|0|0]
        vec = jnp.tile(jnp.stack([zero_row, zero_row, ln_row, zero_row])[None], (n, 1, 1))
        return dict(
            wqkv=nrm((n, H, 3 * H)), wo=nrm((n, H, H)),
            ff1_w=nrm((n, H, 4 * H)), ff2_w=nrm((n, 4 * H, H)),
            vec=vec,
        )

    def dec_stack(n):
        # vec rows: [ff1_b], [bq|bk|bv|bo], [cbq|cbk|cbv|cbo],
        #           [ln1_g|ln1_b|ln2_g|ln2_b], [ln3_g|ln3_b|ff2_b|0]
        vec = jnp.tile(jnp.stack([zero_row, zero_row, zero_row, ln_row, ln3_row])[None],
                       (n, 1, 1))
        return dict(
            wqkv=nrm((n, H, 3 * H)), wo=nrm((n, H, H)),
            cwq=nrm((n, H, H)), cwkv=nrm((n, H, 2 * H)), cwo=nrm((n, H, H)),
            ff1_w=nrm((n, H, 4 * H)), ff2_w=nrm((n, 4 * H, H)),
            vec=vec,
        )

    P = channels_in * patch_size * patch_size
    S = (image_size // patch_size) ** 2
    return dict(
        fc_in_w=nrm((P, H)), fc_in_b=jnp.zeros((1, H), jnp.float32),
        pos_embedding=nrm((1, S, H), dtype=jnp.float32),                  # normal_(std=0.02)
        enc=enc_stack(n_enc),
        embedding=(0.001 * jax.random.normal(next(keys), (num_emb, H))).astype(jnp.float32),
        dec=dec_stack(n_dec),
        fc_out_w=nrm((H, num_emb)), fc_out_b=jnp.zeros((1, num_emb), jnp.float32),
    )


# --------------------------------------------------------------------------

if __name__ == "__main__":
    image_size, channels_in, patch_size = 16, 4, 8
    hidden_size, num_heads = 32, 4
    num_layers = (2, 2)
    num_emb = 64
    B, L = 2, 8

    key = jax.random.PRNGKey(0)
    k_params, k_img, k_seq = jax.random.split(key, 3)

    params = init_params(k_params, image_size=image_size, channels_in=channels_in,
                         num_emb=num_emb, patch_size=patch_size,
                         hidden_size=hidden_size, num_layers=num_layers,
                         num_heads=num_heads)

    image = jax.random.normal(k_img, (B, channels_in, image_size, image_size), jnp.float32)
    target_seq = jax.random.randint(k_seq, (B, L), 0, num_emb)
    padding_mask = jnp.ones((B, L), jnp.int32).at[:, L - 2:].set(0)   # last 2 tokens padded

    fwd = jax.jit(functools.partial(vision_encoder_decoder,
                                    patch_size=patch_size, num_heads=num_heads))
    out = fwd(params, image, target_seq, padding_mask)
    jax.block_until_ready(out)
    assert out.shape == (B, L, num_emb) and out.dtype == jnp.float32
    print("KERNEL_OK")
</pallas_src>

<mosaic_0001>
module attributes {stable_mosaic.version = 11 : i64} {
  func.func @_fc_in_kernel(%arg0: i32, %arg1: memref<2x4x256xf32, #tpu.memory_space<vmem>>, %arg2: memref<256x32xbf16, #tpu.memory_space<vmem>>, %arg3: memref<4x32xf32, #tpu.memory_space<vmem>>, %arg4: memref<2x4x32xf32, #tpu.memory_space<vmem>>) attributes {dimension_semantics = [#tpu.dimension_semantics<parallel>], iteration_bounds = array<i64: 1>, scalar_prefetch = 0 : i64, scratch_operands = 0 : i64, tpu.core_type = #tpu.core_type<tc>, window_params = [{transform_indices = @transform_0, window_bounds = array<i64: 2, 4, 256>}, {pipeline_mode = #tpu.pipeline_mode<synchronous>, transform_indices = @transform_1, window_bounds = array<i64: 256, 32>}, {pipeline_mode = #tpu.pipeline_mode<synchronous>, transform_indices = @transform_2, window_bounds = array<i64: 4, 32>}, {transform_indices = @transform_3, window_bounds = array<i64: 2, 4, 32>}]} {
    %c0 = arith.constant 0 : index
    %c0_0 = arith.constant 0 : index
    %0 = vector.load %arg2[%c0, %c0_0] : memref<256x32xbf16, #tpu.memory_space<vmem>>, vector<256x32xbf16>
    %c0_1 = arith.constant 0 : index
    %c0_2 = arith.constant 0 : index
    %1 = vector.load %arg3[%c0_1, %c0_2] : memref<4x32xf32, #tpu.memory_space<vmem>>, vector<4x32xf32>
    %c0_3 = arith.constant 0 : index
    %c0_4 = arith.constant 0 : index
    %c0_5 = arith.constant 0 : index
    %2 = vector.load %arg1[%c0_3, %c0_4, %c0_5] : memref<2x4x256xf32, #tpu.memory_space<vmem>>, vector<1x4x256xf32>
    %3 = vector.shape_cast %2 : vector<1x4x256xf32> to vector<4x256xf32>
    %4 = arith.truncf %3 : vector<4x256xf32> to vector<4x256xbf16>
    %cst = arith.constant dense<0.000000e+00> : vector<4x32xf32>
    %5 = tpu.matmul %4, %0, %cst {dimension_numbers = #tpu.dot_dimension_numbers<[1], [0], [0], [1], [0, 0, 1, 1], [], []>} : vector<4x256xbf16>, vector<256x32xbf16>, vector<4x32xf32> -> vector<4x32xf32>
    %6 = arith.addf %5, %1 : vector<4x32xf32>
    %c0_6 = arith.constant 0 : index
    %c0_7 = arith.constant 0 : index
    %c0_8 = arith.constant 0 : index
    %7 = vector.load %arg4[%c0_6, %c0_7, %c0_8] : memref<2x4x32xf32, #tpu.memory_space<vmem>>, vector<1x4x32xf32>
    %8 = vector.shape_cast %7 : vector<1x4x32xf32> to vector<4x32xf32>
    %9 = vector.shape_cast %6 : vector<4x32xf32> to vector<1x4x32xf32>
    tpu.vector_store %arg4[%c0_6, %c0_7, %c0_8], %9 {strides = array<i32>} : memref<2x4x32xf32, #tpu.memory_space<vmem>>, vector<1x4x32xf32>,
    %c1 = arith.constant 1 : index
    %c0_9 = arith.constant 0 : index
    %c0_10 = arith.constant 0 : index
    %10 = vector.load %arg1[%c1, %c0_9, %c0_10] : memref<2x4x256xf32, #tpu.memory_space<vmem>>, vector<1x4x256xf32>
    %11 = vector.shape_cast %10 : vector<1x4x256xf32> to vector<4x256xf32>
    %12 = arith.truncf %11 : vector<4x256xf32> to vector<4x256xbf16>
    %cst_11 = arith.constant dense<0.000000e+00> : vector<4x32xf32>
    %13 = tpu.matmul %12, %0, %cst_11 {dimension_numbers = #tpu.dot_dimension_numbers<[1], [0], [0], [1], [0, 0, 1, 1], [], []>} : vector<4x256xbf16>, vector<256x32xbf16>, vector<4x32xf32> -> vector<4x32xf32>
    %14 = arith.addf %13, %1 : vector<4x32xf32>
    %c1_12 = arith.constant 1 : index
    %c0_13 = arith.constant 0 : index
    %c0_14 = arith.constant 0 : index
    %15 = vector.load %arg4[%c1_12, %c0_13, %c0_14] : memref<2x4x32xf32, #tpu.memory_space<vmem>>, vector<1x4x32xf32>
    %16 = vector.shape_cast %15 : vector<1x4x32xf32> to vector<4x32xf32>
    %17 = vector.shape_cast %14 : vector<4x32xf32> to vector<1x4x32xf32>
    tpu.vector_store %arg4[%c1_12, %c0_13, %c0_14], %17 {strides = array<i32>} : memref<2x4x32xf32, #tpu.memory_space<vmem>>, vector<1x4x32xf32>,
    return
  }
  func.func @transform_0(%arg0: i32) -> (i32, i32, i32) {
    %c0_i32 = arith.constant 0 : i32
    %c0_i32_0 = arith.constant 0 : i32
    %c0_i32_1 = arith.constant 0 : i32
    return %arg0, %c0_i32, %c0_i32_0 : i32, i32, i32
  }
  func.func @transform_1(%arg0: i32) -> (i32, i32) {
    %c0_i32 = arith.constant 0 : i32
    %c0_i32_0 = arith.constant 0 : i32
    %c0_i32_1 = arith.constant 0 : i32
    return %c0_i32, %c0_i32_0 : i32, i32
  }
  func.func @transform_2(%arg0: i32) -> (i32, i32) {
    %c0_i32 = arith.constant 0 : i32
    %c0_i32_0 = arith.constant 0 : i32
    %c0_i32_1 = arith.constant 0 : i32
    return %c0_i32, %c0_i32_0 : i32, i32
  }
  func.func @transform_3(%arg0: i32) -> (i32, i32, i32) {
    %c0_i32 = arith.constant 0 : i32
    %c0_i32_0 = arith.constant 0 : i32
    %c0_i32_1 = arith.constant 0 : i32
    return %arg0, %c0_i32, %c0_i32_0 : i32, i32, i32
  }
}

module attributes {stable_mosaic.version = 11 : i64} {
  func.func @_fc_out_kernel(%arg0: i32, %arg1: i32, %arg2: memref<2x8x32xf32, #tpu.memory_space<vmem>>, %arg3: memref<32x64xbf16, #tpu.memory_space<vmem>>, %arg4: memref<1x64xf32, #tpu.memory_space<vmem>>, %arg5: memref<2x8x64xf32, #tpu.memory_space<vmem>>) attributes {dimension_semantics = [#tpu.dimension_semantics<parallel>, #tpu.dimension_semantics<parallel>], iteration_bounds = array<i64: 1, 1>, scalar_prefetch = 0 : i64, scratch_operands = 0 : i64, tpu.core_type = #tpu.core_type<tc>, window_params = [{transform_indices = @transform_0, window_bounds = array<i64: 2, 8, 32>}, {transform_indices = @transform_1, window_bounds = array<i64: 32, 64>}, {transform_indices = @transform_2, window_bounds = array<i64: 1, 64>}, {transform_indices = @transform_3, window_bounds = array<i64: 2, 8, 64>}]} {
    %c0 = arith.constant 0 : index
    %c0_0 = arith.constant 0 : index
    %0 = vector.load %arg3[%c0, %c0_0] : memref<32x64xbf16, #tpu.memory_space<vmem>>, vector<32x64xbf16>
    %c0_1 = arith.constant 0 : index
    %c0_2 = arith.constant 0 : index
    %1 = vector.load %arg4[%c0_1, %c0_2] : memref<1x64xf32, #tpu.memory_space<vmem>>, vector<1x64xf32>
    %c0_3 = arith.constant 0 : index
    %c0_4 = arith.constant 0 : index
    %c0_5 = arith.constant 0 : index
    %2 = vector.load %arg2[%c0_3, %c0_4, %c0_5] : memref<2x8x32xf32, #tpu.memory_space<vmem>>, vector<1x8x32xf32>
    %3 = vector.shape_cast %2 : vector<1x8x32xf32> to vector<8x32xf32>
    %4 = arith.truncf %3 : vector<8x32xf32> to vector<8x32xbf16>
    %cst = arith.constant dense<0.000000e+00> : vector<8x64xf32>
    %5 = tpu.matmul %4, %0, %cst {dimension_numbers = #tpu.dot_dimension_numbers<[1], [0], [0], [1], [0, 0, 1, 1], [], []>} : vector<8x32xbf16>, vector<32x64xbf16>, vector<8x64xf32> -> vector<8x64xf32>
    %6 = vector.broadcast %1 : vector<1x64xf32> to vector<8x64xf32>
    %7 = arith.addf %5, %6 : vector<8x64xf32>
    %c0_6 = arith.constant 0 : index
    %c0_7 = arith.constant 0 : index
    %c0_8 = arith.constant 0 : index
    %8 = vector.load %arg5[%c0_6, %c0_7, %c0_8] : memref<2x8x64xf32, #tpu.memory_space<vmem>>, vector<1x8x64xf32>
    %9 = vector.shape_cast %8 : vector<1x8x64xf32> to vector<8x64xf32>
    %10 = vector.shape_cast %7 : vector<8x64xf32> to vector<1x8x64xf32>
    tpu.vector_store %arg5[%c0_6, %c0_7, %c0_8], %10 {strides = array<i32>} : memref<2x8x64xf32, #tpu.memory_space<vmem>>, vector<1x8x64xf32>,
    %c1 = arith.constant 1 : index
    %c0_9 = arith.constant 0 : index
    %c0_10 = arith.constant 0 : index
    %11 = vector.load %arg2[%c1, %c0_9, %c0_10] : memref<2x8x32xf32, #tpu.memory_space<vmem>>, vector<1x8x32xf32>
    %12 = vector.shape_cast %11 : vector<1x8x32xf32> to vector<8x32xf32>
    %13 = arith.truncf %12 : vector<8x32xf32> to vector<8x32xbf16>
    %cst_11 = arith.constant dense<0.000000e+00> : vector<8x64xf32>
    %14 = tpu.matmul %13, %0, %cst_11 {dimension_numbers = #tpu.dot_dimension_numbers<[1], [0], [0], [1], [0, 0, 1, 1], [], []>} : vector<8x32xbf16>, vector<32x64xbf16>, vector<8x64xf32> -> vector<8x64xf32>
    %15 = vector.broadcast %1 : vector<1x64xf32> to vector<8x64xf32>
    %16 = arith.addf %14, %15 : vector<8x64xf32>
    %c1_12 = arith.constant 1 : index
    %c0_13 = arith.constant 0 : index
    %c0_14 = arith.constant 0 : index
    %17 = vector.load %arg5[%c1_12, %c0_13, %c0_14] : memref<2x8x64xf32, #tpu.memory_space<vmem>>, vector<1x8x64xf32>
    %18 = vector.shape_cast %17 : vector<1x8x64xf32> to vector<8x64xf32>
    %19 = vector.shape_cast %16 : vector<8x64xf32> to vector<1x8x64xf32>
    tpu.vector_store %arg5[%c1_12, %c0_13, %c0_14], %19 {strides = array<i32>} : memref<2x8x64xf32, #tpu.memory_space<vmem>>, vector<1x8x64xf32>,
    return
  }
  func.func @transform_0(%arg0: i32, %arg1: i32) -> (i32, i32, i32) {
    %c0_i32 = arith.constant 0 : i32
    %c0_i32_0 = arith.constant 0 : i32
    %c0_i32_1 = arith.constant 0 : i32
    return %arg0, %c0_i32, %c0_i32_0 : i32, i32, i32
  }
  func.func @transform_1(%arg0: i32, %arg1: i32) -> (i32, i32) {
    %c0_i32 = arith.constant 0 : i32
    %c0_i32_0 = arith.constant 0 : i32
    return %c0_i32, %arg1 : i32, i32
  }
  func.func @transform_2(%arg0: i32, %arg1: i32) -> (i32, i32) {
    %c0_i32 = arith.constant 0 : i32
    %c0_i32_0 = arith.constant 0 : i32
    return %c0_i32, %arg1 : i32, i32
  }
  func.func @transform_3(%arg0: i32, %arg1: i32) -> (i32, i32, i32) {
    %c0_i32 = arith.constant 0 : i32
    %c0_i32_0 = arith.constant 0 : i32
    return %arg0, %c0_i32, %arg1 : i32, i32, i32
  }
}

module attributes {stable_mosaic.version = 11 : i64} {
  func.func @_encoder_kernel(%arg0: i32, %arg1: i32, %arg2: memref<2x4x32xf32, #tpu.memory_space<vmem>>, %arg3: memref<1x32x96xbf16, #tpu.memory_space<vmem>>, %arg4: memref<1x32x32xbf16, #tpu.memory_space<vmem>>, %arg5: memref<1x32x128xbf16, #tpu.memory_space<vmem>>, %arg6: memref<1x128x32xbf16, #tpu.memory_space<vmem>>, %arg7: memref<1x4x128xf32, #tpu.memory_space<vmem>>, %arg8: memref<2x4x32xf32, #tpu.memory_space<vmem>>, %arg9: memref<2x4x32xf32, #tpu.memory_space<vmem>>) attributes {dimension_semantics = [#tpu.dimension_semantics<parallel>, #tpu.dimension_semantics<arbitrary>], iteration_bounds = array<i64: 1, 2>, scalar_prefetch = 0 : i64, scratch_operands = 1 : i64, tpu.core_type = #tpu.core_type<tc>, window_params = [{transform_indices = @transform_0, window_bounds = array<i64: 2, 4, 32>}, {transform_indices = @transform_1, window_bounds = array<i64: 1, 32, 96>}, {transform_indices = @transform_2, window_bounds = array<i64: 1, 32, 32>}, {transform_indices = @transform_3, window_bounds = array<i64: 1, 32, 128>}, {transform_indices = @transform_4, window_bounds = array<i64: 1, 128, 32>}, {transform_indices = @transform_5, window_bounds = array<i64: 1, 4, 128>}, {transform_indices = @transform_6, window_bounds = array<i64: 2, 4, 32>}]} {
    %c0_i32 = arith.constant 0 : i32
    %0 = arith.cmpi eq, %arg1, %c0_i32 : i32
    %1 = arith.extui %0 : i1 to i32
    %c0_i32_0 = arith.constant 0 : i32
    %2 = arith.cmpi ne, %1, %c0_i32_0 : i32
    scf.if %2 {
      %c0_107 = arith.constant 0 : index
      %c0_108 = arith.constant 0 : index
      %c0_109 = arith.constant 0 : index
      %389 = vector.load %arg2[%c0_107, %c0_108, %c0_109] : memref<2x4x32xf32, #tpu.memory_space<vmem>>, vector<2x4x32xf32>
      %c0_110 = arith.constant 0 : index
      %c0_111 = arith.constant 0 : index
      %c0_112 = arith.constant 0 : index
      %390 = vector.load %arg9[%c0_110, %c0_111, %c0_112] : memref<2x4x32xf32, #tpu.memory_space<vmem>>, vector<2x4x32xf32>
      tpu.vector_store %arg9[%c0_110, %c0_111, %c0_112], %389 {strides = array<i32>} : memref<2x4x32xf32, #tpu.memory_space<vmem>>, vector<2x4x32xf32>,
    } else {
    }
    %c0 = arith.constant 0 : index
    %c0_1 = arith.constant 0 : index
    %c0_2 = arith.constant 0 : index
    %3 = vector.load %arg7[%c0, %c0_1, %c0_2] : memref<1x4x128xf32, #tpu.memory_space<vmem>>, vector<1x4x128xf32>
    %4 = vector.shape_cast %3 : vector<1x4x128xf32> to vector<4x128xf32>
    %5 = vector.extract_strided_slice %4 {offsets = [0, 0], sizes = [1, 128], strides = [1, 1]} : vector<4x128xf32> to vector<1x128xf32>
    %6 = vector.shape_cast %5 : vector<1x128xf32> to vector<128xf32>
    %7 = vector.extract_strided_slice %4 {offsets = [1, 0], sizes = [1, 32], strides = [1, 1]} : vector<4x128xf32> to vector<1x32xf32>
    %8 = vector.shape_cast %7 : vector<1x32xf32> to vector<32xf32>
    %9 = vector.extract_strided_slice %4 {offsets = [1, 32], sizes = [1, 32], strides = [1, 1]} : vector<4x128xf32> to vector<1x32xf32>
    %10 = vector.shape_cast %9 : vector<1x32xf32> to vector<32xf32>
    %11 = vector.extract_strided_slice %4 {offsets = [1, 64], sizes = [1, 32], strides = [1, 1]} : vector<4x128xf32> to vector<1x32xf32>
    %12 = vector.shape_cast %11 : vector<1x32xf32> to vector<32xf32>
    %13 = vector.extract_strided_slice %4 {offsets = [1, 96], sizes = [1, 32], strides = [1, 1]} : vector<4x128xf32> to vector<1x32xf32>
    %14 = vector.shape_cast %13 : vector<1x32xf32> to vector<32xf32>
    %15 = vector.extract_strided_slice %4 {offsets = [2, 0], sizes = [1, 32], strides = [1, 1]} : vector<4x128xf32> to vector<1x32xf32>
    %16 = vector.shape_cast %15 : vector<1x32xf32> to vector<32xf32>
    %17 = vector.extract_strided_slice %4 {offsets = [2, 32], sizes = [1, 32], strides = [1, 1]} : vector<4x128xf32> to vector<1x32xf32>
    %18 = vector.shape_cast %17 : vector<1x32xf32> to vector<32xf32>
    %19 = vector.extract_strided_slice %4 {offsets = [2, 64], sizes = [1, 32], strides = [1, 1]} : vector<4x128xf32> to vector<1x32xf32>
    %20 = vector.shape_cast %19 : vector<1x32xf32> to vector<32xf32>
    %21 = vector.extract_strided_slice %4 {offsets = [2, 96], sizes = [1, 32], strides = [1, 1]} : vector<4x128xf32> to vector<1x32xf32>
    %22 = vector.shape_cast %21 : vector<1x32xf32> to vector<32xf32>
    %23 = vector.extract_strided_slice %4 {offsets = [3, 0], sizes = [1, 32], strides = [1, 1]} : vector<4x128xf32> to vector<1x32xf32>
    %24 = vector.shape_cast %23 : vector<1x32xf32> to vector<32xf32>
    %c0_3 = arith.constant 0 : index
    %c0_4 = arith.constant 0 : index
    %c0_5 = arith.constant 0 : index
    %25 = vector.load %arg4[%c0_3, %c0_4, %c0_5] : memref<1x32x32xbf16, #tpu.memory_space<vmem>>, vector<1x32x32xbf16>
    %26 = vector.shape_cast %25 : vector<1x32x32xbf16> to vector<32x32xbf16>
    %c0_6 = arith.constant 0 : index
    %c0_7 = arith.constant 0 : index
    %c0_8 = arith.constant 0 : index
    %27 = vector.load %arg9[%c0_6, %c0_7, %c0_8] : memref<2x4x32xf32, #tpu.memory_space<vmem>>, vector<1x4x32xf32>
    %28 = vector.shape_cast %27 : vector<1x4x32xf32> to vector<4x32xf32>
    %29 = arith.truncf %28 : vector<4x32xf32> to vector<4x32xbf16>
    %c0_9 = arith.constant 0 : index
    %c0_10 = arith.constant 0 : index
    %c0_11 = arith.constant 0 : index
    %30 = vector.load %arg3[%c0_9, %c0_10, %c0_11] : memref<1x32x96xbf16, #tpu.memory_space<vmem>>, vector<1x32x96xbf16>
    %31 = vector.shape_cast %30 : vector<1x32x96xbf16> to vector<32x96xbf16>
    %cst = arith.constant dense<0.000000e+00> : vector<4x96xf32>
    %32 = tpu.matmul %29, %31, %cst {dimension_numbers = #tpu.dot_dimension_numbers<[1], [0], [0], [1], [0, 0, 1, 1], [], []>} : vector<4x32xbf16>, vector<32x96xbf16>, vector<4x96xf32> -> vector<4x96xf32>
    %33 = arith.truncf %32 : vector<4x96xf32> to vector<4x96xbf16>
    %34 = vector.extract_strided_slice %33 {offsets = [0, 0], sizes = [4, 32], strides = [1, 1]} : vector<4x96xbf16> to vector<4x32xbf16>
    %35 = arith.extf %34 : vector<4x32xbf16> to vector<4x32xf32>
    %36 = vector.shape_cast %8 : vector<32xf32> to vector<1x32xf32>
    %37 = vector.broadcast %36 : vector<1x32xf32> to vector<4x32xf32>
    %38 = arith.addf %35, %37 : vector<4x32xf32>
    %cst_12 = arith.constant 0.353553385 : f32
    %39 = vector.broadcast %cst_12 : f32 to vector<4x32xf32>
    %40 = arith.mulf %38, %39 : vector<4x32xf32>
    %41 = arith.truncf %40 : vector<4x32xf32> to vector<4x32xbf16>
    %42 = vector.extract_strided_slice %33 {offsets = [0, 32], sizes = [4, 32], strides = [1, 1]} : vector<4x96xbf16> to vector<4x32xbf16>
    %43 = arith.extf %42 : vector<4x32xbf16> to vector<4x32xf32>
    %44 = vector.shape_cast %10 : vector<32xf32> to vector<1x32xf32>
    %45 = vector.broadcast %44 : vector<1x32xf32> to vector<4x32xf32>
    %46 = arith.addf %43, %45 : vector<4x32xf32>
    %47 = arith.truncf %46 : vector<4x32xf32> to vector<4x32xbf16>
    %48 = vector.extract_strided_slice %33 {offsets = [0, 64], sizes = [4, 32], strides = [1, 1]} : vector<4x96xbf16> to vector<4x32xbf16>
    %49 = arith.extf %48 : vector<4x32xbf16> to vector<4x32xf32>
    %50 = vector.shape_cast %12 : vector<32xf32> to vector<1x32xf32>
    %51 = vector.broadcast %50 : vector<1x32xf32> to vector<4x32xf32>
    %52 = arith.addf %49, %51 : vector<4x32xf32>
    %53 = arith.truncf %52 : vector<4x32xf32> to vector<4x32xbf16>
    %54 = vector.extract_strided_slice %41 {offsets = [0, 0], sizes = [4, 8], strides = [1, 1]} : vector<4x32xbf16> to vector<4x8xbf16>
    %55 = vector.extract_strided_slice %47 {offsets = [0, 0], sizes = [4, 8], strides = [1, 1]} : vector<4x32xbf16> to vector<4x8xbf16>
    %cst_13 = arith.constant dense<0.000000e+00> : vector<4x4xf32>
    %56 = tpu.matmul %54, %55, %cst_13 {dimension_numbers = #tpu.dot_dimension_numbers<[1], [1], [0], [0], [0, 0, 1, 0], [], []>} : vector<4x8xbf16>, vector<4x8xbf16>, vector<4x4xf32> -> vector<4x4xf32>
    %cst_14 = arith.constant dense<0xFF800000> : vector<4xf32>
    %57 = vector.multi_reduction <maximumf>, %56, %cst_14 [1] : vector<4x4xf32> to vector<4xf32>
    %58 = vector.shape_cast %57 : vector<4xf32> to vector<4x1xf32>
    %59 = vector.broadcast %58 : vector<4x1xf32> to vector<4x4xf32>
    %60 = arith.subf %56, %59 : vector<4x4xf32>
    %61 = math.exp %60 : vector<4x4xf32>
    %cst_15 = arith.constant dense<0.000000e+00> : vector<4xf32>
    %62 = vector.multi_reduction <add>, %61, %cst_15 [1] : vector<4x4xf32> to vector<4xf32>
    %63 = vector.shape_cast %62 : vector<4xf32> to vector<4x1xf32>
    %64 = tpu.reciprocal %63 {approx = true} : vector<4x1xf32> -> vector<4x1xf32>
    %65 = vector.broadcast %64 : vector<4x1xf32> to vector<4x4xf32>
    %66 = arith.mulf %61, %65 : vector<4x4xf32>
    %67 = arith.truncf %66 : vector<4x4xf32> to vector<4x4xbf16>
    %68 = vector.extract_strided_slice %53 {offsets = [0, 0], sizes = [4, 8], strides = [1, 1]} : vector<4x32xbf16> to vector<4x8xbf16>
    %cst_16 = arith.constant dense<0.000000e+00> : vector<4x8xf32>
    %69 = tpu.matmul %67, %68, %cst_16 {dimension_numbers = #tpu.dot_dimension_numbers<[1], [0], [0], [1], [0, 0, 1, 1], [], []>} : vector<4x4xbf16>, vector<4x8xbf16>, vector<4x8xf32> -> vector<4x8xf32>
    %70 = arith.truncf %69 : vector<4x8xf32> to vector<4x8xbf16>
    %71 = vector.extract_strided_slice %26 {offsets = [0, 0], sizes = [8, 32], strides = [1, 1]} : vector<32x32xbf16> to vector<8x32xbf16>
    %cst_17 = arith.constant dense<0.000000e+00> : vector<4x32xf32>
    %72 = tpu.matmul %70, %71, %cst_17 {dimension_numbers = #tpu.dot_dimension_numbers<[1], [0], [0], [1], [0, 0, 1, 1], [], []>} : vector<4x8xbf16>, vector<8x32xbf16>, vector<4x32xf32> -> vector<4x32xf32>
    %73 = vector.extract_strided_slice %41 {offsets = [0, 8], sizes = [4, 8], strides = [1, 1]} : vector<4x32xbf16> to vector<4x8xbf16>
    %74 = vector.extract_strided_slice %47 {offsets = [0, 8], sizes = [4, 8], strides = [1, 1]} : vector<4x32xbf16> to vector<4x8xbf16>
    %cst_18 = arith.constant dense<0.000000e+00> : vector<4x4xf32>
    %75 = tpu.matmul %73, %74, %cst_18 {dimension_numbers = #tpu.dot_dimension_numbers<[1], [1], [0], [0], [0, 0, 1, 0], [], []>} : vector<4x8xbf16>, vector<4x8xbf16>, vector<4x4xf32> -> vector<4x4xf32>
    %cst_19 = arith.constant dense<0xFF800000> : vector<4xf32>
    %76 = vector.multi_reduction <maximumf>, %75, %cst_19 [1] : vector<4x4xf32> to vector<4xf32>
    %77 = vector.shape_cast %76 : vector<4xf32> to vector<4x1xf32>
    %78 = vector.broadcast %77 : vector<4x1xf32> to vector<4x4xf32>
    %79 = arith.subf %75, %78 : vector<4x4xf32>
    %80 = math.exp %79 : vector<4x4xf32>
    %cst_20 = arith.constant dense<0.000000e+00> : vector<4xf32>
    %81 = vector.multi_reduction <add>, %80, %cst_20 [1] : vector<4x4xf32> to vector<4xf32>
    %82 = vector.shape_cast %81 : vector<4xf32> to vector<4x1xf32>
    %83 = tpu.reciprocal %82 {approx = true} : vector<4x1xf32> -> vector<4x1xf32>
    %84 = vector.broadcast %83 : vector<4x1xf32> to vector<4x4xf32>
    %85 = arith.mulf %80, %84 : vector<4x4xf32>
    %86 = arith.truncf %85 : vector<4x4xf32> to vector<4x4xbf16>
    %87 = vector.extract_strided_slice %53 {offsets = [0, 8], sizes = [4, 8], strides = [1, 1]} : vector<4x32xbf16> to vector<4x8xbf16>
    %cst_21 = arith.constant dense<0.000000e+00> : vector<4x8xf32>
    %88 = tpu.matmul %86, %87, %cst_21 {dimension_numbers = #tpu.dot_dimension_numbers<[1], [0], [0], [1], [0, 0, 1, 1], [], []>} : vector<4x4xbf16>, vector<4x8xbf16>, vector<4x8xf32> -> vector<4x8xf32>
    %89 = arith.truncf %88 : vector<4x8xf32> to vector<4x8xbf16>
    %90 = vector.extract_strided_slice %26 {offsets = [8, 0], sizes = [8, 32], strides = [1, 1]} : vector<32x32xbf16> to vector<8x32xbf16>
    %cst_22 = arith.constant dense<0.000000e+00> : vector<4x32xf32>
    %91 = tpu.matmul %89, %90, %cst_22 {dimension_numbers = #tpu.dot_dimension_numbers<[1], [0], [0], [1], [0, 0, 1, 1], [], []>} : vector<4x8xbf16>, vector<8x32xbf16>, vector<4x32xf32> -> vector<4x32xf32>
    %92 = arith.addf %72, %91 : vector<4x32xf32>
    %93 = vector.extract_strided_slice %41 {offsets = [0, 16], sizes = [4, 8], strides = [1, 1]} : vector<4x32xbf16> to vector<4x8xbf16>
    %94 = vector.extract_strided_slice %47 {offsets = [0, 16], sizes = [4, 8], strides = [1, 1]} : vector<4x32xbf16> to vector<4x8xbf16>
    %cst_23 = arith.constant dense<0.000000e+00> : vector<4x4xf32>
    %95 = tpu.matmul %93, %94, %cst_23 {dimension_numbers = #tpu.dot_dimension_numbers<[1], [1], [0], [0], [0, 0, 1, 0], [], []>} : vector<4x8xbf16>, vector<4x8xbf16>, vector<4x4xf32> -> vector<4x4xf32>
    %cst_24 = arith.constant dense<0xFF800000> : vector<4xf32>
    %96 = vector.multi_reduction <maximumf>, %95, %cst_24 [1] : vector<4x4xf32> to vector<4xf32>
    %97 = vector.shape_cast %96 : vector<4xf32> to vector<4x1xf32>
    %98 = vector.broadcast %97 : vector<4x1xf32> to vector<4x4xf32>
    %99 = arith.subf %95, %98 : vector<4x4xf32>
    %100 = math.exp %99 : vector<4x4xf32>
    %cst_25 = arith.constant dense<0.000000e+00> : vector<4xf32>
    %101 = vector.multi_reduction <add>, %100, %cst_25 [1] : vector<4x4xf32> to vector<4xf32>
    %102 = vector.shape_cast %101 : vector<4xf32> to vector<4x1xf32>
    %103 = tpu.reciprocal %102 {approx = true} : vector<4x1xf32> -> vector<4x1xf32>
    %104 = vector.broadcast %103 : vector<4x1xf32> to vector<4x4xf32>
    %105 = arith.mulf %100, %104 : vector<4x4xf32>
    %106 = arith.truncf %105 : vector<4x4xf32> to vector<4x4xbf16>
    %107 = vector.extract_strided_slice %53 {offsets = [0, 16], sizes = [4, 8], strides = [1, 1]} : vector<4x32xbf16> to vector<4x8xbf16>
    %cst_26 = arith.constant dense<0.000000e+00> : vector<4x8xf32>
    %108 = tpu.matmul %106, %107, %cst_26 {dimension_numbers = #tpu.dot_dimension_numbers<[1], [0], [0], [1], [0, 0, 1, 1], [], []>} : vector<4x4xbf16>, vector<4x8xbf16>, vector<4x8xf32> -> vector<4x8xf32>
    %109 = arith.truncf %108 : vector<4x8xf32> to vector<4x8xbf16>
    %110 = vector.extract_strided_slice %26 {offsets = [16, 0], sizes = [8, 32], strides = [1, 1]} : vector<32x32xbf16> to vector<8x32xbf16>
    %cst_27 = arith.constant dense<0.000000e+00> : vector<4x32xf32>
    %111 = tpu.matmul %109, %110, %cst_27 {dimension_numbers = #tpu.dot_dimension_numbers<[1], [0], [0], [1], [0, 0, 1, 1], [], []>} : vector<4x8xbf16>, vector<8x32xbf16>, vector<4x32xf32> -> vector<4x32xf32>
    %112 = arith.addf %92, %111 : vector<4x32xf32>
    %113 = vector.extract_strided_slice %41 {offsets = [0, 24], sizes = [4, 8], strides = [1, 1]} : vector<4x32xbf16> to vector<4x8xbf16>
    %114 = vector.extract_strided_slice %47 {offsets = [0, 24], sizes = [4, 8], strides = [1, 1]} : vector<4x32xbf16> to vector<4x8xbf16>
    %cst_28 = arith.constant dense<0.000000e+00> : vector<4x4xf32>
    %115 = tpu.matmul %113, %114, %cst_28 {dimension_numbers = #tpu.dot_dimension_numbers<[1], [1], [0], [0], [0, 0, 1, 0], [], []>} : vector<4x8xbf16>, vector<4x8xbf16>, vector<4x4xf32> -> vector<4x4xf32>
    %cst_29 = arith.constant dense<0xFF800000> : vector<4xf32>
    %116 = vector.multi_reduction <maximumf>, %115, %cst_29 [1] : vector<4x4xf32> to vector<4xf32>
    %117 = vector.shape_cast %116 : vector<4xf32> to vector<4x1xf32>
    %118 = vector.broadcast %117 : vector<4x1xf32> to vector<4x4xf32>
    %119 = arith.subf %115, %118 : vector<4x4xf32>
    %120 = math.exp %119 : vector<4x4xf32>
    %cst_30 = arith.constant dense<0.000000e+00> : vector<4xf32>
    %121 = vector.multi_reduction <add>, %120, %cst_30 [1] : vector<4x4xf32> to vector<4xf32>
    %122 = vector.shape_cast %121 : vector<4xf32> to vector<4x1xf32>
    %123 = tpu.reciprocal %122 {approx = true} : vector<4x1xf32> -> vector<4x1xf32>
    %124 = vector.broadcast %123 : vector<4x1xf32> to vector<4x4xf32>
    %125 = arith.mulf %120, %124 : vector<4x4xf32>
    %126 = arith.truncf %125 : vector<4x4xf32> to vector<4x4xbf16>
    %127 = vector.extract_strided_slice %53 {offsets = [0, 24], sizes = [4, 8], strides = [1, 1]} : vector<4x32xbf16> to vector<4x8xbf16>
    %cst_31 = arith.constant dense<0.000000e+00> : vector<4x8xf32>
    %128 = tpu.matmul %126, %127, %cst_31 {dimension_numbers = #tpu.dot_dimension_numbers<[1], [0], [0], [1], [0, 0, 1, 1], [], []>} : vector<4x4xbf16>, vector<4x8xbf16>, vector<4x8xf32> -> vector<4x8xf32>
    %129 = arith.truncf %128 : vector<4x8xf32> to vector<4x8xbf16>
    %130 = vector.extract_strided_slice %26 {offsets = [24, 0], sizes = [8, 32], strides = [1, 1]} : vector<32x32xbf16> to vector<8x32xbf16>
    %cst_32 = arith.constant dense<0.000000e+00> : vector<4x32xf32>
    %131 = tpu.matmul %129, %130, %cst_32 {dimension_numbers = #tpu.dot_dimension_numbers<[1], [0], [0], [1], [0, 0, 1, 1], [], []>} : vector<4x8xbf16>, vector<8x32xbf16>, vector<4x32xf32> -> vector<4x32xf32>
    %132 = arith.addf %112, %131 : vector<4x32xf32>
    %133 = arith.addf %28, %132 : vector<4x32xf32>
    %134 = vector.shape_cast %14 : vector<32xf32> to vector<1x32xf32>
    %135 = vector.broadcast %134 : vector<1x32xf32> to vector<4x32xf32>
    %136 = arith.addf %133, %135 : vector<4x32xf32>
    %cst_33 = arith.constant dense<0.000000e+00> : vector<4xf32>
    %137 = vector.multi_reduction <add>, %136, %cst_33 [1] : vector<4x32xf32> to vector<4xf32>
    %138 = vector.shape_cast %137 : vector<4xf32> to vector<4x1xf32>
    %cst_34 = arith.constant 3.200000e+01 : f32
    %139 = vector.broadcast %cst_34 : f32 to vector<4x1xf32>
    %140 = arith.divf %138, %139 : vector<4x1xf32>
    %141 = vector.broadcast %140 : vector<4x1xf32> to vector<4x32xf32>
    %142 = arith.subf %136, %141 : vector<4x32xf32>
    %143 = arith.mulf %142, %142 : vector<4x32xf32>
    %cst_35 = arith.constant dense<0.000000e+00> : vector<4xf32>
    %144 = vector.multi_reduction <add>, %143, %cst_35 [1] : vector<4x32xf32> to vector<4xf32>
    %145 = vector.shape_cast %144 : vector<4xf32> to vector<4x1xf32>
    %cst_36 = arith.constant 3.200000e+01 : f32
    %146 = vector.broadcast %cst_36 : f32 to vector<4x1xf32>
    %147 = arith.divf %145, %146 : vector<4x1xf32>
    %148 = vector.broadcast %140 : vector<4x1xf32> to vector<4x32xf32>
    %149 = arith.subf %136, %148 : vector<4x32xf32>
    %cst_37 = arith.constant 9.99999974E-6 : f32
    %150 = vector.broadcast %cst_37 : f32 to vector<4x1xf32>
    %151 = arith.addf %147, %150 : vector<4x1xf32>
    %152 = math.rsqrt %151 : vector<4x1xf32>
    %153 = vector.broadcast %152 : vector<4x1xf32> to vector<4x32xf32>
    %154 = arith.mulf %149, %153 : vector<4x32xf32>
    %155 = vector.shape_cast %16 : vector<32xf32> to vector<1x32xf32>
    %156 = vector.broadcast %155 : vector<1x32xf32> to vector<4x32xf32>
    %157 = arith.mulf %154, %156 : vector<4x32xf32>
    %158 = vector.shape_cast %18 : vector<32xf32> to vector<1x32xf32>
    %159 = vector.broadcast %158 : vector<1x32xf32> to vector<4x32xf32>
    %160 = arith.addf %157, %159 : vector<4x32xf32>
    %161 = arith.truncf %160 : vector<4x32xf32> to vector<4x32xbf16>
    %c0_38 = arith.constant 0 : index
    %c0_39 = arith.constant 0 : index
    %c0_40 = arith.constant 0 : index
    %162 = vector.load %arg5[%c0_38, %c0_39, %c0_40] : memref<1x32x128xbf16, #tpu.memory_space<vmem>>, vector<1x32x128xbf16>
    %163 = vector.shape_cast %162 : vector<1x32x128xbf16> to vector<32x128xbf16>
    %cst_41 = arith.constant dense<0.000000e+00> : vector<4x128xf32>
    %164 = tpu.matmul %161, %163, %cst_41 {dimension_numbers = #tpu.dot_dimension_numbers<[1], [0], [0], [1], [0, 0, 1, 1], [], []>} : vector<4x32xbf16>, vector<32x128xbf16>, vector<4x128xf32> -> vector<4x128xf32>
    %165 = vector.shape_cast %6 : vector<128xf32> to vector<1x128xf32>
    %166 = vector.broadcast %165 : vector<1x128xf32> to vector<4x128xf32>
    %167 = arith.addf %164, %166 : vector<4x128xf32>
    %cst_42 = arith.constant 0.000000e+00 : f32
    %168 = vector.broadcast %cst_42 : f32 to vector<4x128xf32>
    %169 = arith.maximumf %167, %168 : vector<4x128xf32>
    %170 = arith.truncf %169 : vector<4x128xf32> to vector<4x128xbf16>
    %c0_43 = arith.constant 0 : index
    %c0_44 = arith.constant 0 : index
    %c0_45 = arith.constant 0 : index
    %171 = vector.load %arg6[%c0_43, %c0_44, %c0_45] : memref<1x128x32xbf16, #tpu.memory_space<vmem>>, vector<1x128x32xbf16>
    %172 = vector.shape_cast %171 : vector<1x128x32xbf16> to vector<128x32xbf16>
    %cst_46 = arith.constant dense<0.000000e+00> : vector<4x32xf32>
    %173 = tpu.matmul %170, %172, %cst_46 {dimension_numbers = #tpu.dot_dimension_numbers<[1], [0], [0], [1], [0, 0, 1, 1], [], []>} : vector<4x128xbf16>, vector<128x32xbf16>, vector<4x32xf32> -> vector<4x32xf32>
    %174 = vector.shape_cast %24 : vector<32xf32> to vector<1x32xf32>
    %175 = vector.broadcast %174 : vector<1x32xf32> to vector<4x32xf32>
    %176 = arith.addf %173, %175 : vector<4x32xf32>
    %177 = arith.addf %160, %176 : vector<4x32xf32>
    %cst_47 = arith.constant dense<0.000000e+00> : vector<4xf32>
    %178 = vector.multi_reduction <add>, %177, %cst_47 [1] : vector<4x32xf32> to vector<4xf32>
    %179 = vector.shape_cast %178 : vector<4xf32> to vector<4x1xf32>
    %cst_48 = arith.constant 3.200000e+01 : f32
    %180 = vector.broadcast %cst_48 : f32 to vector<4x1xf32>
    %181 = arith.divf %179, %180 : vector<4x1xf32>
    %182 = vector.broadcast %181 : vector<4x1xf32> to vector<4x32xf32>
    %183 = arith.subf %177, %182 : vector<4x32xf32>
    %184 = arith.mulf %183, %183 : vector<4x32xf32>
    %cst_49 = arith.constant dense<0.000000e+00> : vector<4xf32>
    %185 = vector.multi_reduction <add>, %184, %cst_49 [1] : vector<4x32xf32> to vector<4xf32>
    %186 = vector.shape_cast %185 : vector<4xf32> to vector<4x1xf32>
    %cst_50 = arith.constant 3.200000e+01 : f32
    %187 = vector.broadcast %cst_50 : f32 to vector<4x1xf32>
    %188 = arith.divf %186, %187 : vector<4x1xf32>
    %189 = vector.broadcast %181 : vector<4x1xf32> to vector<4x32xf32>
    %190 = arith.subf %177, %189 : vector<4x32xf32>
    %cst_51 = arith.constant 9.99999974E-6 : f32
    %191 = vector.broadcast %cst_51 : f32 to vector<4x1xf32>
    %192 = arith.addf %188, %191 : vector<4x1xf32>
    %193 = math.rsqrt %192 : vector<4x1xf32>
    %194 = vector.broadcast %193 : vector<4x1xf32> to vector<4x32xf32>
    %195 = arith.mulf %190, %194 : vector<4x32xf32>
    %196 = vector.shape_cast %20 : vector<32xf32> to vector<1x32xf32>
    %197 = vector.broadcast %196 : vector<1x32xf32> to vector<4x32xf32>
    %198 = arith.mulf %195, %197 : vector<4x32xf32>
    %199 = vector.shape_cast %22 : vector<32xf32> to vector<1x32xf32>
    %200 = vector.broadcast %199 : vector<1x32xf32> to vector<4x32xf32>
    %201 = arith.addf %198, %200 : vector<4x32xf32>
    %c0_52 = arith.constant 0 : index
    %c0_53 = arith.constant 0 : index
    %c0_54 = arith.constant 0 : index
    %202 = vector.load %arg9[%c0_52, %c0_53, %c0_54] : memref<2x4x32xf32, #tpu.memory_space<vmem>>, vector<1x4x32xf32>
    %203 = vector.shape_cast %202 : vector<1x4x32xf32> to vector<4x32xf32>
    %204 = vector.shape_cast %201 : vector<4x32xf32> to vector<1x4x32xf32>
    tpu.vector_store %arg9[%c0_52, %c0_53, %c0_54], %204 {strides = array<i32>} : memref<2x4x32xf32, #tpu.memory_space<vmem>>, vector<1x4x32xf32>,
    %c1_i32 = arith.constant 1 : i32
    %205 = arith.cmpi eq, %arg1, %c1_i32 : i32
    %206 = arith.extui %205 : i1 to i32
    %c0_i32_55 = arith.constant 0 : i32
    %207 = arith.cmpi ne, %206, %c0_i32_55 : i32
    scf.if %207 {
      %c0_107 = arith.constant 0 : index
      %c0_108 = arith.constant 0 : index
      %c0_109 = arith.constant 0 : index
      %389 = vector.load %arg8[%c0_107, %c0_108, %c0_109] : memref<2x4x32xf32, #tpu.memory_space<vmem>>, vector<1x4x32xf32>
      %390 = vector.shape_cast %389 : vector<1x4x32xf32> to vector<4x32xf32>
      %391 = vector.shape_cast %201 : vector<4x32xf32> to vector<1x4x32xf32>
      tpu.vector_store %arg8[%c0_107, %c0_108, %c0_109], %391 {strides = array<i32>} : memref<2x4x32xf32, #tpu.memory_space<vmem>>, vector<1x4x32xf32>,
    } else {
    }
    %c1 = arith.constant 1 : index
    %c0_56 = arith.constant 0 : index
    %c0_57 = arith.constant 0 : index
    %208 = vector.load %arg9[%c1, %c0_56, %c0_57] : memref<2x4x32xf32, #tpu.memory_space<vmem>>, vector<1x4x32xf32>
    %209 = vector.shape_cast %208 : vector<1x4x32xf32> to vector<4x32xf32>
    %210 = arith.truncf %209 : vector<4x32xf32> to vector<4x32xbf16>
    %c0_58 = arith.constant 0 : index
    %c0_59 = arith.constant 0 : index
    %c0_60 = arith.constant 0 : index
    %211 = vector.load %arg3[%c0_58, %c0_59, %c0_60] : memref<1x32x96xbf16, #tpu.memory_space<vmem>>, vector<1x32x96xbf16>
    %212 = vector.shape_cast %211 : vector<1x32x96xbf16> to vector<32x96xbf16>
    %cst_61 = arith.constant dense<0.000000e+00> : vector<4x96xf32>
    %213 = tpu.matmul %210, %212, %cst_61 {dimension_numbers = #tpu.dot_dimension_numbers<[1], [0], [0], [1], [0, 0, 1, 1], [], []>} : vector<4x32xbf16>, vector<32x96xbf16>, vector<4x96xf32> -> vector<4x96xf32>
    %214 = arith.truncf %213 : vector<4x96xf32> to vector<4x96xbf16>
    %215 = vector.extract_strided_slice %214 {offsets = [0, 0], sizes = [4, 32], strides = [1, 1]} : vector<4x96xbf16> to vector<4x32xbf16>
    %216 = arith.extf %215 : vector<4x32xbf16> to vector<4x32xf32>
    %217 = vector.shape_cast %8 : vector<32xf32> to vector<1x32xf32>
    %218 = vector.broadcast %217 : vector<1x32xf32> to vector<4x32xf32>
    %219 = arith.addf %216, %218 : vector<4x32xf32>
    %cst_62 = arith.constant 0.353553385 : f32
    %220 = vector.broadcast %cst_62 : f32 to vector<4x32xf32>
    %221 = arith.mulf %219, %220 : vector<4x32xf32>
    %222 = arith.truncf %221 : vector<4x32xf32> to vector<4x32xbf16>
    %223 = vector.extract_strided_slice %214 {offsets = [0, 32], sizes = [4, 32], strides = [1, 1]} : vector<4x96xbf16> to vector<4x32xbf16>
    %224 = arith.extf %223 : vector<4x32xbf16> to vector<4x32xf32>
    %225 = vector.shape_cast %10 : vector<32xf32> to vector<1x32xf32>
    %226 = vector.broadcast %225 : vector<1x32xf32> to vector<4x32xf32>
    %227 = arith.addf %224, %226 : vector<4x32xf32>
    %228 = arith.truncf %227 : vector<4x32xf32> to vector<4x32xbf16>
    %229 = vector.extract_strided_slice %214 {offsets = [0, 64], sizes = [4, 32], strides = [1, 1]} : vector<4x96xbf16> to vector<4x32xbf16>
    %230 = arith.extf %229 : vector<4x32xbf16> to vector<4x32xf32>
    %231 = vector.shape_cast %12 : vector<32xf32> to vector<1x32xf32>
    %232 = vector.broadcast %231 : vector<1x32xf32> to vector<4x32xf32>
    %233 = arith.addf %230, %232 : vector<4x32xf32>
    %234 = arith.truncf %233 : vector<4x32xf32> to vector<4x32xbf16>
    %235 = vector.extract_strided_slice %222 {offsets = [0, 0], sizes = [4, 8], strides = [1, 1]} : vector<4x32xbf16> to vector<4x8xbf16>
    %236 = vector.extract_strided_slice %228 {offsets = [0, 0], sizes = [4, 8], strides = [1, 1]} : vector<4x32xbf16> to vector<4x8xbf16>
    %cst_63 = arith.constant dense<0.000000e+00> : vector<4x4xf32>
    %237 = tpu.matmul %235, %236, %cst_63 {dimension_numbers = #tpu.dot_dimension_numbers<[1], [1], [0], [0], [0, 0, 1, 0], [], []>} : vector<4x8xbf16>, vector<4x8xbf16>, vector<4x4xf32> -> vector<4x4xf32>
    %cst_64 = arith.constant dense<0xFF800000> : vector<4xf32>
    %238 = vector.multi_reduction <maximumf>, %237, %cst_64 [1] : vector<4x4xf32> to vector<4xf32>
    %239 = vector.shape_cast %238 : vector<4xf32> to vector<4x1xf32>
    %240 = vector.broadcast %239 : vector<4x1xf32> to vector<4x4xf32>
    %241 = arith.subf %237, %240 : vector<4x4xf32>
    %242 = math.exp %241 : vector<4x4xf32>
    %cst_65 = arith.constant dense<0.000000e+00> : vector<4xf32>
    %243 = vector.multi_reduction <add>, %242, %cst_65 [1] : vector<4x4xf32> to vector<4xf32>
    %244 = vector.shape_cast %243 : vector<4xf32> to vector<4x1xf32>
    %245 = tpu.reciprocal %244 {approx = true} : vector<4x1xf32> -> vector<4x1xf32>
    %246 = vector.broadcast %245 : vector<4x1xf32> to vector<4x4xf32>
    %247 = arith.mulf %242, %246 : vector<4x4xf32>
    %248 = arith.truncf %247 : vector<4x4xf32> to vector<4x4xbf16>
    %249 = vector.extract_strided_slice %234 {offsets = [0, 0], sizes = [4, 8], strides = [1, 1]} : vector<4x32xbf16> to vector<4x8xbf16>
    %cst_66 = arith.constant dense<0.000000e+00> : vector<4x8xf32>
    %250 = tpu.matmul %248, %249, %cst_66 {dimension_numbers = #tpu.dot_dimension_numbers<[1], [0], [0], [1], [0, 0, 1, 1], [], []>} : vector<4x4xbf16>, vector<4x8xbf16>, vector<4x8xf32> -> vector<4x8xf32>
    %251 = arith.truncf %250 : vector<4x8xf32> to vector<4x8xbf16>
    %252 = vector.extract_strided_slice %26 {offsets = [0, 0], sizes = [8, 32], strides = [1, 1]} : vector<32x32xbf16> to vector<8x32xbf16>
    %cst_67 = arith.constant dense<0.000000e+00> : vector<4x32xf32>
    %253 = tpu.matmul %251, %252, %cst_67 {dimension_numbers = #tpu.dot_dimension_numbers<[1], [0], [0], [1], [0, 0, 1, 1], [], []>} : vector<4x8xbf16>, vector<8x32xbf16>, vector<4x32xf32> -> vector<4x32xf32>
    %254 = vector.extract_strided_slice %222 {offsets = [0, 8], sizes = [4, 8], strides = [1, 1]} : vector<4x32xbf16> to vector<4x8xbf16>
    %255 = vector.extract_strided_slice %228 {offsets = [0, 8], sizes = [4, 8], strides = [1, 1]} : vector<4x32xbf16> to vector<4x8xbf16>
    %cst_68 = arith.constant dense<0.000000e+00> : vector<4x4xf32>
    %256 = tpu.matmul %254, %255, %cst_68 {dimension_numbers = #tpu.dot_dimension_numbers<[1], [1], [0], [0], [0, 0, 1, 0], [], []>} : vector<4x8xbf16>, vector<4x8xbf16>, vector<4x4xf32> -> vector<4x4xf32>
    %cst_69 = arith.constant dense<0xFF800000> : vector<4xf32>
    %257 = vector.multi_reduction <maximumf>, %256, %cst_69 [1] : vector<4x4xf32> to vector<4xf32>
    %258 = vector.shape_cast %257 : vector<4xf32> to vector<4x1xf32>
    %259 = vector.broadcast %258 : vector<4x1xf32> to vector<4x4xf32>
    %260 = arith.subf %256, %259 : vector<4x4xf32>
    %261 = math.exp %260 : vector<4x4xf32>
    %cst_70 = arith.constant dense<0.000000e+00> : vector<4xf32>
    %262 = vector.multi_reduction <add>, %261, %cst_70 [1] : vector<4x4xf32> to vector<4xf32>
    %263 = vector.shape_cast %262 : vector<4xf32> to vector<4x1xf32>
    %264 = tpu.reciprocal %263 {approx = true} : vector<4x1xf32> -> vector<4x1xf32>
    %265 = vector.broadcast %264 : vector<4x1xf32> to vector<4x4xf32>
    %266 = arith.mulf %261, %265 : vector<4x4xf32>
    %267 = arith.truncf %266 : vector<4x4xf32> to vector<4x4xbf16>
    %268 = vector.extract_strided_slice %234 {offsets = [0, 8], sizes = [4, 8], strides = [1, 1]} : vector<4x32xbf16> to vector<4x8xbf16>
    %cst_71 = arith.constant dense<0.000000e+00> : vector<4x8xf32>
    %269 = tpu.matmul %267, %268, %cst_71 {dimension_numbers = #tpu.dot_dimension_numbers<[1], [0], [0], [1], [0, 0, 1, 1], [], []>} : vector<4x4xbf16>, vector<4x8xbf16>, vector<4x8xf32> -> vector<4x8xf32>
    %270 = arith.truncf %269 : vector<4x8xf32> to vector<4x8xbf16>
    %271 = vector.extract_strided_slice %26 {offsets = [8, 0], sizes = [8, 32], strides = [1, 1]} : vector<32x32xbf16> to vector<8x32xbf16>
    %cst_72 = arith.constant dense<0.000000e+00> : vector<4x32xf32>
    %272 = tpu.matmul %270, %271, %cst_72 {dimension_numbers = #tpu.dot_dimension_numbers<[1], [0], [0], [1], [0, 0, 1, 1], [], []>} : vector<4x8xbf16>, vector<8x32xbf16>, vector<4x32xf32> -> vector<4x32xf32>
    %273 = arith.addf %253, %272 : vector<4x32xf32>
    %274 = vector.extract_strided_slice %222 {offsets = [0, 16], sizes = [4, 8], strides = [1, 1]} : vector<4x32xbf16> to vector<4x8xbf16>
    %275 = vector.extract_strided_slice %228 {offsets = [0, 16], sizes = [4, 8], strides = [1, 1]} : vector<4x32xbf16> to vector<4x8xbf16>
    %cst_73 = arith.constant dense<0.000000e+00> : vector<4x4xf32>
    %276 = tpu.matmul %274, %275, %cst_73 {dimension_numbers = #tpu.dot_dimension_numbers<[1], [1], [0], [0], [0, 0, 1, 0], [], []>} : vector<4x8xbf16>, vector<4x8xbf16>, vector<4x4xf32> -> vector<4x4xf32>
    %cst_74 = arith.constant dense<0xFF800000> : vector<4xf32>
    %277 = vector.multi_reduction <maximumf>, %276, %cst_74 [1] : vector<4x4xf32> to vector<4xf32>
    %278 = vector.shape_cast %277 : vector<4xf32> to vector<4x1xf32>
    %279 = vector.broadcast %278 : vector<4x1xf32> to vector<4x4xf32>
    %280 = arith.subf %276, %279 : vector<4x4xf32>
    %281 = math.exp %280 : vector<4x4xf32>
    %cst_75 = arith.constant dense<0.000000e+00> : vector<4xf32>
    %282 = vector.multi_reduction <add>, %281, %cst_75 [1] : vector<4x4xf32> to vector<4xf32>
    %283 = vector.shape_cast %282 : vector<4xf32> to vector<4x1xf32>
    %284 = tpu.reciprocal %283 {approx = true} : vector<4x1xf32> -> vector<4x1xf32>
    %285 = vector.broadcast %284 : vector<4x1xf32> to vector<4x4xf32>
    %286 = arith.mulf %281, %285 : vector<4x4xf32>
    %287 = arith.truncf %286 : vector<4x4xf32> to vector<4x4xbf16>
    %288 = vector.extract_strided_slice %234 {offsets = [0, 16], sizes = [4, 8], strides = [1, 1]} : vector<4x32xbf16> to vector<4x8xbf16>
    %cst_76 = arith.constant dense<0.000000e+00> : vector<4x8xf32>
    %289 = tpu.matmul %287, %288, %cst_76 {dimension_numbers = #tpu.dot_dimension_numbers<[1], [0], [0], [1], [0, 0, 1, 1], [], []>} : vector<4x4xbf16>, vector<4x8xbf16>, vector<4x8xf32> -> vector<4x8xf32>
    %290 = arith.truncf %289 : vector<4x8xf32> to vector<4x8xbf16>
    %291 = vector.extract_strided_slice %26 {offsets = [16, 0], sizes = [8, 32], strides = [1, 1]} : vector<32x32xbf16> to vector<8x32xbf16>
    %cst_77 = arith.constant dense<0.000000e+00> : vector<4x32xf32>
    %292 = tpu.matmul %290, %291, %cst_77 {dimension_numbers = #tpu.dot_dimension_numbers<[1], [0], [0], [1], [0, 0, 1, 1], [], []>} : vector<4x8xbf16>, vector<8x32xbf16>, vector<4x32xf32> -> vector<4x32xf32>
    %293 = arith.addf %273, %292 : vector<4x32xf32>
    %294 = vector.extract_strided_slice %222 {offsets = [0, 24], sizes = [4, 8], strides = [1, 1]} : vector<4x32xbf16> to vector<4x8xbf16>
    %295 = vector.extract_strided_slice %228 {offsets = [0, 24], sizes = [4, 8], strides = [1, 1]} : vector<4x32xbf16> to vector<4x8xbf16>
    %cst_78 = arith.constant dense<0.000000e+00> : vector<4x4xf32>
    %296 = tpu.matmul %294, %295, %cst_78 {dimension_numbers = #tpu.dot_dimension_numbers<[1], [1], [0], [0], [0, 0, 1, 0], [], []>} : vector<4x8xbf16>, vector<4x8xbf16>, vector<4x4xf32> -> vector<4x4xf32>
    %cst_79 = arith.constant dense<0xFF800000> : vector<4xf32>
    %297 = vector.multi_reduction <maximumf>, %296, %cst_79 [1] : vector<4x4xf32> to vector<4xf32>
    %298 = vector.shape_cast %297 : vector<4xf32> to vector<4x1xf32>
    %299 = vector.broadcast %298 : vector<4x1xf32> to vector<4x4xf32>
    %300 = arith.subf %296, %299 : vector<4x4xf32>
    %301 = math.exp %300 : vector<4x4xf32>
    %cst_80 = arith.constant dense<0.000000e+00> : vector<4xf32>
    %302 = vector.multi_reduction <add>, %301, %cst_80 [1] : vector<4x4xf32> to vector<4xf32>
    %303 = vector.shape_cast %302 : vector<4xf32> to vector<4x1xf32>
    %304 = tpu.reciprocal %303 {approx = true} : vector<4x1xf32> -> vector<4x1xf32>
    %305 = vector.broadcast %304 : vector<4x1xf32> to vector<4x4xf32>
    %306 = arith.mulf %301, %305 : vector<4x4xf32>
    %307 = arith.truncf %306 : vector<4x4xf32> to vector<4x4xbf16>
    %308 = vector.extract_strided_slice %234 {offsets = [0, 24], sizes = [4, 8], strides = [1, 1]} : vector<4x32xbf16> to vector<4x8xbf16>
    %cst_81 = arith.constant dense<0.000000e+00> : vector<4x8xf32>
    %309 = tpu.matmul %307, %308, %cst_81 {dimension_numbers = #tpu.dot_dimension_numbers<[1], [0], [0], [1], [0, 0, 1, 1], [], []>} : vector<4x4xbf16>, vector<4x8xbf16>, vector<4x8xf32> -> vector<4x8xf32>
    %310 = arith.truncf %309 : vector<4x8xf32> to vector<4x8xbf16>
    %311 = vector.extract_strided_slice %26 {offsets = [24, 0], sizes = [8, 32], strides = [1, 1]} : vector<32x32xbf16> to vector<8x32xbf16>
    %cst_82 = arith.constant dense<0.000000e+00> : vector<4x32xf32>
    %312 = tpu.matmul %310, %311, %cst_82 {dimension_numbers = #tpu.dot_dimension_numbers<[1], [0], [0], [1], [0, 0, 1, 1], [], []>} : vector<4x8xbf16>, vector<8x32xbf16>, vector<4x32xf32> -> vector<4x32xf32>
    %313 = arith.addf %293, %312 : vector<4x32xf32>
    %314 = arith.addf %209, %313 : vector<4x32xf32>
    %315 = vector.shape_cast %14 : vector<32xf32> to vector<1x32xf32>
    %316 = vector.broadcast %315 : vector<1x32xf32> to vector<4x32xf32>
    %317 = arith.addf %314, %316 : vector<4x32xf32>
    %cst_83 = arith.constant dense<0.000000e+00> : vector<4xf32>
    %318 = vector.multi_reduction <add>, %317, %cst_83 [1] : vector<4x32xf32> to vector<4xf32>
    %319 = vector.shape_cast %318 : vector<4xf32> to vector<4x1xf32>
    %cst_84 = arith.constant 3.200000e+01 : f32
    %320 = vector.broadcast %cst_84 : f32 to vector<4x1xf32>
    %321 = arith.divf %319, %320 : vector<4x1xf32>
    %322 = vector.broadcast %321 : vector<4x1xf32> to vector<4x32xf32>
    %323 = arith.subf %317, %322 : vector<4x32xf32>
    %324 = arith.mulf %323, %323 : vector<4x32xf32>
    %cst_85 = arith.constant dense<0.000000e+00> : vector<4xf32>
    %325 = vector.multi_reduction <add>, %324, %cst_85 [1] : vector<4x32xf32> to vector<4xf32>
    %326 = vector.shape_cast %325 : vector<4xf32> to vector<4x1xf32>
    %cst_86 = arith.constant 3.200000e+01 : f32
    %327 = vector.broadcast %cst_86 : f32 to vector<4x1xf32>
    %328 = arith.divf %326, %327 : vector<4x1xf32>
    %329 = vector.broadcast %321 : vector<4x1xf32> to vector<4x32xf32>
    %330 = arith.subf %317, %329 : vector<4x32xf32>
    %cst_87 = arith.constant 9.99999974E-6 : f32
    %331 = vector.broadcast %cst_87 : f32 to vector<4x1xf32>
    %332 = arith.addf %328, %331 : vector<4x1xf32>
    %333 = math.rsqrt %332 : vector<4x1xf32>
    %334 = vector.broadcast %333 : vector<4x1xf32> to vector<4x32xf32>
    %335 = arith.mulf %330, %334 : vector<4x32xf32>
    %336 = vector.shape_cast %16 : vector<32xf32> to vector<1x32xf32>
    %337 = vector.broadcast %336 : vector<1x32xf32> to vector<4x32xf32>
    %338 = arith.mulf %335, %337 : vector<4x32xf32>
    %339 = vector.shape_cast %18 : vector<32xf32> to vector<1x32xf32>
    %340 = vector.broadcast %339 : vector<1x32xf32> to vector<4x32xf32>
    %341 = arith.addf %338, %340 : vector<4x32xf32>
    %342 = arith.truncf %341 : vector<4x32xf32> to vector<4x32xbf16>
    %c0_88 = arith.constant 0 : index
    %c0_89 = arith.constant 0 : index
    %c0_90 = arith.constant 0 : index
    %343 = vector.load %arg5[%c0_88, %c0_89, %c0_90] : memref<1x32x128xbf16, #tpu.memory_space<vmem>>, vector<1x32x128xbf16>
    %344 = vector.shape_cast %343 : vector<1x32x128xbf16> to vector<32x128xbf16>
    %cst_91 = arith.constant dense<0.000000e+00> : vector<4x128xf32>
    %345 = tpu.matmul %342, %344, %cst_91 {dimension_numbers = #tpu.dot_dimension_numbers<[1], [0], [0], [1], [0, 0, 1, 1], [], []>} : vector<4x32xbf16>, vector<32x128xbf16>, vector<4x128xf32> -> vector<4x128xf32>
    %346 = vector.shape_cast %6 : vector<128xf32> to vector<1x128xf32>
    %347 = vector.broadcast %346 : vector<1x128xf32> to vector<4x128xf32>
    %348 = arith.addf %345, %347 : vector<4x128xf32>
    %cst_92 = arith.constant 0.000000e+00 : f32
    %349 = vector.broadcast %cst_92 : f32 to vector<4x128xf32>
    %350 = arith.maximumf %348, %349 : vector<4x128xf32>
    %351 = arith.truncf %350 : vector<4x128xf32> to vector<4x128xbf16>
    %c0_93 = arith.constant 0 : index
    %c0_94 = arith.constant 0 : index
    %c0_95 = arith.constant 0 : index
    %352 = vector.load %arg6[%c0_93, %c0_94, %c0_95] : memref<1x128x32xbf16, #tpu.memory_space<vmem>>, vector<1x128x32xbf16>
    %353 = vector.shape_cast %352 : vector<1x128x32xbf16> to vector<128x32xbf16>
    %cst_96 = arith.constant dense<0.000000e+00> : vector<4x32xf32>
    %354 = tpu.matmul %351, %353, %cst_96 {dimension_numbers = #tpu.dot_dimension_numbers<[1], [0], [0], [1], [0, 0, 1, 1], [], []>} : vector<4x128xbf16>, vector<128x32xbf16>, vector<4x32xf32> -> vector<4x32xf32>
    %355 = vector.shape_cast %24 : vector<32xf32> to vector<1x32xf32>
    %356 = vector.broadcast %355 : vector<1x32xf32> to vector<4x32xf32>
    %357 = arith.addf %354, %356 : vector<4x32xf32>
    %358 = arith.addf %341, %357 : vector<4x32xf32>
    %cst_97 = arith.constant dense<0.000000e+00> : vector<4xf32>
    %359 = vector.multi_reduction <add>, %358, %cst_97 [1] : vector<4x32xf32> to vector<4xf32>
    %360 = vector.shape_cast %359 : vector<4xf32> to vector<4x1xf32>
    %cst_98 = arith.constant 3.200000e+01 : f32
    %361 = vector.broadcast %cst_98 : f32 to vector<4x1xf32>
    %362 = arith.divf %360, %361 : vector<4x1xf32>
    %363 = vector.broadcast %362 : vector<4x1xf32> to vector<4x32xf32>
    %364 = arith.subf %358, %363 : vector<4x32xf32>
    %365 = arith.mulf %364, %364 : vector<4x32xf32>
    %cst_99 = arith.constant dense<0.000000e+00> : vector<4xf32>
    %366 = vector.multi_reduction <add>, %365, %cst_99 [1] : vector<4x32xf32> to vector<4xf32>
    %367 = vector.shape_cast %366 : vector<4xf32> to vector<4x1xf32>
    %cst_100 = arith.constant 3.200000e+01 : f32
    %368 = vector.broadcast %cst_100 : f32 to vector<4x1xf32>
    %369 = arith.divf %367, %368 : vector<4x1xf32>
    %370 = vector.broadcast %362 : vector<4x1xf32> to vector<4x32xf32>
    %371 = arith.subf %358, %370 : vector<4x32xf32>
    %cst_101 = arith.constant 9.99999974E-6 : f32
    %372 = vector.broadcast %cst_101 : f32 to vector<4x1xf32>
    %373 = arith.addf %369, %372 : vector<4x1xf32>
    %374 = math.rsqrt %373 : vector<4x1xf32>
    %375 = vector.broadcast %374 : vector<4x1xf32> to vector<4x32xf32>
    %376 = arith.mulf %371, %375 : vector<4x32xf32>
    %377 = vector.shape_cast %20 : vector<32xf32> to vector<1x32xf32>
    %378 = vector.broadcast %377 : vector<1x32xf32> to vector<4x32xf32>
    %379 = arith.mulf %376, %378 : vector<4x32xf32>
    %380 = vector.shape_cast %22 : vector<32xf32> to vector<1x32xf32>
    %381 = vector.broadcast %380 : vector<1x32xf32> to vector<4x32xf32>
    %382 = arith.addf %379, %381 : vector<4x32xf32>
    %c1_102 = arith.constant 1 : index
    %c0_103 = arith.constant 0 : index
    %c0_104 = arith.constant 0 : index
    %383 = vector.load %arg9[%c1_102, %c0_103, %c0_104] : memref<2x4x32xf32, #tpu.memory_space<vmem>>, vector<1x4x32xf32>
    %384 = vector.shape_cast %383 : vector<1x4x32xf32> to vector<4x32xf32>
    %385 = vector.shape_cast %382 : vector<4x32xf32> to vector<1x4x32xf32>
    tpu.vector_store %arg9[%c1_102, %c0_103, %c0_104], %385 {strides = array<i32>} : memref<2x4x32xf32, #tpu.memory_space<vmem>>, vector<1x4x32xf32>,
    %c1_i32_105 = arith.constant 1 : i32
    %386 = arith.cmpi eq, %arg1, %c1_i32_105 : i32
    %387 = arith.extui %386 : i1 to i32
    %c0_i32_106 = arith.constant 0 : i32
    %388 = arith.cmpi ne, %387, %c0_i32_106 : i32
    scf.if %388 {
      %c1_107 = arith.constant 1 : index
      %c0_108 = arith.constant 0 : index
      %c0_109 = arith.constant 0 : index
      %389 = vector.load %arg8[%c1_107, %c0_108, %c0_109] : memref<2x4x32xf32, #tpu.memory_space<vmem>>, vector<1x4x32xf32>
      %390 = vector.shape_cast %389 : vector<1x4x32xf32> to vector<4x32xf32>
      %391 = vector.shape_cast %382 : vector<4x32xf32> to vector<1x4x32xf32>
      tpu.vector_store %arg8[%c1_107, %c0_108, %c0_109], %391 {strides = array<i32>} : memref<2x4x32xf32, #tpu.memory_space<vmem>>, vector<1x4x32xf32>,
    } else {
    }
    return
  }
  func.func @transform_0(%arg0: i32, %arg1: i32) -> (i32, i32, i32) {
    %c0_i32 = arith.constant 0 : i32
    %c0_i32_0 = arith.constant 0 : i32
    %c0_i32_1 = arith.constant 0 : i32
    return %arg0, %c0_i32, %c0_i32_0 : i32, i32, i32
  }
  func.func @transform_1(%arg0: i32, %arg1: i32) -> (i32, i32, i32) {
    %c0_i32 = arith.constant 0 : i32
    %c0_i32_0 = arith.constant 0 : i32
    %c0_i32_1 = arith.constant 0 : i32
    return %arg1, %c0_i32, %c0_i32_0 : i32, i32, i32
  }
  func.func @transform_2(%arg0: i32, %arg1: i32) -> (i32, i32, i32) {
    %c0_i32 = arith.constant 0 : i32
    %c0_i32_0 = arith.constant 0 : i32
    %c0_i32_1 = arith.constant 0 : i32
    return %arg1, %c0_i32, %c0_i32_0 : i32, i32, i32
  }
  func.func @transform_3(%arg0: i32, %arg1: i32) -> (i32, i32, i32) {
    %c0_i32 = arith.constant 0 : i32
    %c0_i32_0 = arith.constant 0 : i32
    %c0_i32_1 = arith.constant 0 : i32
    return %arg1, %c0_i32, %c0_i32_0 : i32, i32, i32
  }
  func.func @transform_4(%arg0: i32, %arg1: i32) -> (i32, i32, i32) {
    %c0_i32 = arith.constant 0 : i32
    %c0_i32_0 = arith.constant 0 : i32
    %c0_i32_1 = arith.constant 0 : i32
    return %arg1, %c0_i32, %c0_i32_0 : i32, i32, i32
  }
  func.func @transform_5(%arg0: i32, %arg1: i32) -> (i32, i32, i32) {
    %c0_i32 = arith.constant 0 : i32
    %c0_i32_0 = arith.constant 0 : i32
    %c0_i32_1 = arith.constant 0 : i32
    return %arg1, %c0_i32, %c0_i32_0 : i32, i32, i32
  }
  func.func @transform_6(%arg0: i32, %arg1: i32) -> (i32, i32, i32) {
    %c0_i32 = arith.constant 0 : i32
    %c0_i32_0 = arith.constant 0 : i32
    %c0_i32_1 = arith.constant 0 : i32
    return %arg0, %c0_i32, %c0_i32_0 : i32, i32, i32
  }
}

module attributes {stable_mosaic.version = 11 : i64} {
  func.func @_decoder_kernel(%arg0: i32, %arg1: i32, %arg2: memref<2x8x32xf32, #tpu.memory_space<vmem>>, %arg3: memref<2x4x32xf32, #tpu.memory_space<vmem>>, %arg4: memref<2x1x8xf32, #tpu.memory_space<vmem>>, %arg5: memref<1x32x96xbf16, #tpu.memory_space<vmem>>, %arg6: memref<1x32x32xbf16, #tpu.memory_space<vmem>>, %arg7: memref<1x32x32xbf16, #tpu.memory_space<vmem>>, %arg8: memref<1x32x64xbf16, #tpu.memory_space<vmem>>, %arg9: memref<1x32x32xbf16, #tpu.memory_space<vmem>>, %arg10: memref<1x32x128xbf16, #tpu.memory_space<vmem>>, %arg11: memref<1x128x32xbf16, #tpu.memory_space<vmem>>, %arg12: memref<1x5x128xf32, #tpu.memory_space<vmem>>, %arg13: memref<2x8x32xf32, #tpu.memory_space<vmem>>, %arg14: memref<2x8x32xf32, #tpu.memory_space<vmem>>, %arg15: memref<2x8x8xf32, #tpu.memory_space<vmem>>) attributes {dimension_semantics = [#tpu.dimension_semantics<parallel>, #tpu.dimension_semantics<arbitrary>], iteration_bounds = array<i64: 1, 2>, scalar_prefetch = 0 : i64, scratch_operands = 2 : i64, tpu.core_type = #tpu.core_type<tc>, window_params = [{transform_indices = @transform_0, window_bounds = array<i64: 2, 8, 32>}, {transform_indices = @transform_1, window_bounds = array<i64: 2, 4, 32>}, {transform_indices = @transform_2, window_bounds = array<i64: 2, 1, 8>}, {transform_indices = @transform_3, window_bounds = array<i64: 1, 32, 96>}, {transform_indices = @transform_4, window_bounds = array<i64: 1, 32, 32>}, {transform_indices = @transform_5, window_bounds = array<i64: 1, 32, 32>}, {transform_indices = @transform_6, window_bounds = array<i64: 1, 32, 64>}, {transform_indices = @transform_7, window_bounds = array<i64: 1, 32, 32>}, {transform_indices = @transform_8, window_bounds = array<i64: 1, 32, 128>}, {transform_indices = @transform_9, window_bounds = array<i64: 1, 128, 32>}, {transform_indices = @transform_10, window_bounds = array<i64: 1, 5, 128>}, {transform_indices = @transform_11, window_bounds = array<i64: 2, 8, 32>}]} {
    %c0_i32 = arith.constant 0 : i32
    %0 = arith.cmpi eq, %arg1, %c0_i32 : i32
    %1 = arith.extui %0 : i1 to i32
    %c0_i32_0 = arith.constant 0 : i32
    %2 = arith.cmpi ne, %1, %c0_i32_0 : i32
    scf.if %2 {
      %c0_190 = arith.constant 0 : index
      %c0_191 = arith.constant 0 : index
      %c0_192 = arith.constant 0 : index
      %691 = vector.load %arg2[%c0_190, %c0_191, %c0_192] : memref<2x8x32xf32, #tpu.memory_space<vmem>>, vector<2x8x32xf32>
      %c0_193 = arith.constant 0 : index
      %c0_194 = arith.constant 0 : index
      %c0_195 = arith.constant 0 : index
      %692 = vector.load %arg14[%c0_193, %c0_194, %c0_195] : memref<2x8x32xf32, #tpu.memory_space<vmem>>, vector<2x8x32xf32>
      tpu.vector_store %arg14[%c0_193, %c0_194, %c0_195], %691 {strides = array<i32>} : memref<2x8x32xf32, #tpu.memory_space<vmem>>, vector<2x8x32xf32>,
      %693 = tpu.iota {dimensions = array<i32: 0>} : vector<8x8xi32>
      %694 = tpu.iota {dimensions = array<i32: 1>} : vector<8x8xi32>
      %695 = arith.cmpi sgt, %694, %693 : vector<8x8xi32>
      %cst_196 = arith.constant -1.000000e+30 : f32
      %cst_197 = arith.constant 0.000000e+00 : f32
      %696 = vector.broadcast %cst_196 : f32 to vector<8x8xf32>
      %697 = vector.broadcast %cst_197 : f32 to vector<8x8xf32>
      %698 = arith.select %695, %696, %697 : vector<8x8xi1>, vector<8x8xf32>
      %c0_198 = arith.constant 0 : index
      %c0_199 = arith.constant 0 : index
      %c0_200 = arith.constant 0 : index
      %699 = vector.load %arg4[%c0_198, %c0_199, %c0_200] : memref<2x1x8xf32, #tpu.memory_space<vmem>>, vector<2x1x8xf32>
      %700 = vector.shape_cast %698 : vector<8x8xf32> to vector<1x8x8xf32>
      %cst_201 = arith.constant 1.000000e+00 : f32
      %701 = vector.broadcast %cst_201 : f32 to vector<2x1x8xf32>
      %702 = arith.subf %699, %701 : vector<2x1x8xf32>
      %cst_202 = arith.constant 1.000000e+30 : f32
      %703 = vector.broadcast %cst_202 : f32 to vector<2x1x8xf32>
      %704 = arith.mulf %702, %703 : vector<2x1x8xf32>
      %705 = vector.broadcast %700 : vector<1x8x8xf32> to vector<2x8x8xf32>
      %706 = vector.broadcast %704 : vector<2x1x8xf32> to vector<2x8x8xf32>
      %707 = arith.addf %705, %706 : vector<2x8x8xf32>
      %c0_203 = arith.constant 0 : index
      %c0_204 = arith.constant 0 : index
      %c0_205 = arith.constant 0 : index
      %708 = vector.load %arg15[%c0_203, %c0_204, %c0_205] : memref<2x8x8xf32, #tpu.memory_space<vmem>>, vector<2x8x8xf32>
      tpu.vector_store %arg15[%c0_203, %c0_204, %c0_205], %707 {strides = array<i32>} : memref<2x8x8xf32, #tpu.memory_space<vmem>>, vector<2x8x8xf32>,
    } else {
    }
    %c0 = arith.constant 0 : index
    %c0_1 = arith.constant 0 : index
    %c0_2 = arith.constant 0 : index
    %3 = vector.load %arg12[%c0, %c0_1, %c0_2] : memref<1x5x128xf32, #tpu.memory_space<vmem>>, vector<1x5x128xf32>
    %4 = vector.shape_cast %3 : vector<1x5x128xf32> to vector<5x128xf32>
    %5 = vector.extract_strided_slice %4 {offsets = [0, 0], sizes = [1, 128], strides = [1, 1]} : vector<5x128xf32> to vector<1x128xf32>
    %6 = vector.shape_cast %5 : vector<1x128xf32> to vector<128xf32>
    %7 = vector.extract_strided_slice %4 {offsets = [1, 0], sizes = [1, 32], strides = [1, 1]} : vector<5x128xf32> to vector<1x32xf32>
    %8 = vector.shape_cast %7 : vector<1x32xf32> to vector<32xf32>
    %9 = vector.extract_strided_slice %4 {offsets = [1, 32], sizes = [1, 32], strides = [1, 1]} : vector<5x128xf32> to vector<1x32xf32>
    %10 = vector.shape_cast %9 : vector<1x32xf32> to vector<32xf32>
    %11 = vector.extract_strided_slice %4 {offsets = [1, 64], sizes = [1, 32], strides = [1, 1]} : vector<5x128xf32> to vector<1x32xf32>
    %12 = vector.shape_cast %11 : vector<1x32xf32> to vector<32xf32>
    %13 = vector.extract_strided_slice %4 {offsets = [1, 96], sizes = [1, 32], strides = [1, 1]} : vector<5x128xf32> to vector<1x32xf32>
    %14 = vector.shape_cast %13 : vector<1x32xf32> to vector<32xf32>
    %15 = vector.extract_strided_slice %4 {offsets = [2, 0], sizes = [1, 32], strides = [1, 1]} : vector<5x128xf32> to vector<1x32xf32>
    %16 = vector.shape_cast %15 : vector<1x32xf32> to vector<32xf32>
    %17 = vector.extract_strided_slice %4 {offsets = [2, 32], sizes = [1, 32], strides = [1, 1]} : vector<5x128xf32> to vector<1x32xf32>
    %18 = vector.shape_cast %17 : vector<1x32xf32> to vector<32xf32>
    %19 = vector.extract_strided_slice %4 {offsets = [2, 64], sizes = [1, 32], strides = [1, 1]} : vector<5x128xf32> to vector<1x32xf32>
    %20 = vector.shape_cast %19 : vector<1x32xf32> to vector<32xf32>
    %21 = vector.extract_strided_slice %4 {offsets = [2, 96], sizes = [1, 32], strides = [1, 1]} : vector<5x128xf32> to vector<1x32xf32>
    %22 = vector.shape_cast %21 : vector<1x32xf32> to vector<32xf32>
    %23 = vector.extract_strided_slice %4 {offsets = [3, 0], sizes = [1, 32], strides = [1, 1]} : vector<5x128xf32> to vector<1x32xf32>
    %24 = vector.shape_cast %23 : vector<1x32xf32> to vector<32xf32>
    %25 = vector.extract_strided_slice %4 {offsets = [3, 32], sizes = [1, 32], strides = [1, 1]} : vector<5x128xf32> to vector<1x32xf32>
    %26 = vector.shape_cast %25 : vector<1x32xf32> to vector<32xf32>
    %27 = vector.extract_strided_slice %4 {offsets = [3, 64], sizes = [1, 32], strides = [1, 1]} : vector<5x128xf32> to vector<1x32xf32>
    %28 = vector.shape_cast %27 : vector<1x32xf32> to vector<32xf32>
    %29 = vector.extract_strided_slice %4 {offsets = [3, 96], sizes = [1, 32], strides = [1, 1]} : vector<5x128xf32> to vector<1x32xf32>
    %30 = vector.shape_cast %29 : vector<1x32xf32> to vector<32xf32>
    %31 = vector.extract_strided_slice %4 {offsets = [4, 0], sizes = [1, 32], strides = [1, 1]} : vector<5x128xf32> to vector<1x32xf32>
    %32 = vector.shape_cast %31 : vector<1x32xf32> to vector<32xf32>
    %33 = vector.extract_strided_slice %4 {offsets = [4, 32], sizes = [1, 32], strides = [1, 1]} : vector<5x128xf32> to vector<1x32xf32>
    %34 = vector.shape_cast %33 : vector<1x32xf32> to vector<32xf32>
    %35 = vector.extract_strided_slice %4 {offsets = [4, 64], sizes = [1, 32], strides = [1, 1]} : vector<5x128xf32> to vector<1x32xf32>
    %36 = vector.shape_cast %35 : vector<1x32xf32> to vector<32xf32>
    %c0_3 = arith.constant 0 : index
    %c0_4 = arith.constant 0 : index
    %c0_5 = arith.constant 0 : index
    %37 = vector.load %arg6[%c0_3, %c0_4, %c0_5] : memref<1x32x32xbf16, #tpu.memory_space<vmem>>, vector<1x32x32xbf16>
    %38 = vector.shape_cast %37 : vector<1x32x32xbf16> to vector<32x32xbf16>
    %c0_6 = arith.constant 0 : index
    %c0_7 = arith.constant 0 : index
    %c0_8 = arith.constant 0 : index
    %39 = vector.load %arg9[%c0_6, %c0_7, %c0_8] : memref<1x32x32xbf16, #tpu.memory_space<vmem>>, vector<1x32x32xbf16>
    %40 = vector.shape_cast %39 : vector<1x32x32xbf16> to vector<32x32xbf16>
    %c0_9 = arith.constant 0 : index
    %c0_10 = arith.constant 0 : index
    %c0_11 = arith.constant 0 : index
    %41 = vector.load %arg14[%c0_9, %c0_10, %c0_11] : memref<2x8x32xf32, #tpu.memory_space<vmem>>, vector<1x8x32xf32>
    %42 = vector.shape_cast %41 : vector<1x8x32xf32> to vector<8x32xf32>
    %c0_12 = arith.constant 0 : index
    %c0_13 = arith.constant 0 : index
    %c0_14 = arith.constant 0 : index
    %43 = vector.load %arg3[%c0_12, %c0_13, %c0_14] : memref<2x4x32xf32, #tpu.memory_space<vmem>>, vector<1x4x32xf32>
    %44 = vector.shape_cast %43 : vector<1x4x32xf32> to vector<4x32xf32>
    %c0_15 = arith.constant 0 : index
    %c0_16 = arith.constant 0 : index
    %c0_17 = arith.constant 0 : index
    %45 = vector.load %arg15[%c0_15, %c0_16, %c0_17] : memref<2x8x8xf32, #tpu.memory_space<vmem>>, vector<1x8x8xf32>
    %46 = vector.shape_cast %45 : vector<1x8x8xf32> to vector<8x8xf32>
    %47 = arith.truncf %42 : vector<8x32xf32> to vector<8x32xbf16>
    %c0_18 = arith.constant 0 : index
    %c0_19 = arith.constant 0 : index
    %c0_20 = arith.constant 0 : index
    %48 = vector.load %arg5[%c0_18, %c0_19, %c0_20] : memref<1x32x96xbf16, #tpu.memory_space<vmem>>, vector<1x32x96xbf16>
    %49 = vector.shape_cast %48 : vector<1x32x96xbf16> to vector<32x96xbf16>
    %cst = arith.constant dense<0.000000e+00> : vector<8x96xf32>
    %50 = tpu.matmul %47, %49, %cst {dimension_numbers = #tpu.dot_dimension_numbers<[1], [0], [0], [1], [0, 0, 1, 1], [], []>} : vector<8x32xbf16>, vector<32x96xbf16>, vector<8x96xf32> -> vector<8x96xf32>
    %51 = arith.truncf %50 : vector<8x96xf32> to vector<8x96xbf16>
    %52 = vector.extract_strided_slice %51 {offsets = [0, 0], sizes = [8, 32], strides = [1, 1]} : vector<8x96xbf16> to vector<8x32xbf16>
    %53 = arith.extf %52 : vector<8x32xbf16> to vector<8x32xf32>
    %54 = vector.shape_cast %8 : vector<32xf32> to vector<1x32xf32>
    %55 = vector.broadcast %54 : vector<1x32xf32> to vector<8x32xf32>
    %56 = arith.addf %53, %55 : vector<8x32xf32>
    %cst_21 = arith.constant 0.353553385 : f32
    %57 = vector.broadcast %cst_21 : f32 to vector<8x32xf32>
    %58 = arith.mulf %56, %57 : vector<8x32xf32>
    %59 = arith.truncf %58 : vector<8x32xf32> to vector<8x32xbf16>
    %60 = vector.extract_strided_slice %51 {offsets = [0, 32], sizes = [8, 32], strides = [1, 1]} : vector<8x96xbf16> to vector<8x32xbf16>
    %61 = arith.extf %60 : vector<8x32xbf16> to vector<8x32xf32>
    %62 = vector.shape_cast %10 : vector<32xf32> to vector<1x32xf32>
    %63 = vector.broadcast %62 : vector<1x32xf32> to vector<8x32xf32>
    %64 = arith.addf %61, %63 : vector<8x32xf32>
    %65 = arith.truncf %64 : vector<8x32xf32> to vector<8x32xbf16>
    %66 = vector.extract_strided_slice %51 {offsets = [0, 64], sizes = [8, 32], strides = [1, 1]} : vector<8x96xbf16> to vector<8x32xbf16>
    %67 = arith.extf %66 : vector<8x32xbf16> to vector<8x32xf32>
    %68 = vector.shape_cast %12 : vector<32xf32> to vector<1x32xf32>
    %69 = vector.broadcast %68 : vector<1x32xf32> to vector<8x32xf32>
    %70 = arith.addf %67, %69 : vector<8x32xf32>
    %71 = arith.truncf %70 : vector<8x32xf32> to vector<8x32xbf16>
    %72 = vector.extract_strided_slice %59 {offsets = [0, 0], sizes = [8, 8], strides = [1, 1]} : vector<8x32xbf16> to vector<8x8xbf16>
    %73 = vector.extract_strided_slice %65 {offsets = [0, 0], sizes = [8, 8], strides = [1, 1]} : vector<8x32xbf16> to vector<8x8xbf16>
    %cst_22 = arith.constant dense<0.000000e+00> : vector<8x8xf32>
    %74 = tpu.matmul %72, %73, %cst_22 {dimension_numbers = #tpu.dot_dimension_numbers<[1], [1], [0], [0], [0, 0, 1, 0], [], []>} : vector<8x8xbf16>, vector<8x8xbf16>, vector<8x8xf32> -> vector<8x8xf32>
    %75 = arith.addf %74, %46 : vector<8x8xf32>
    %cst_23 = arith.constant dense<0xFF800000> : vector<8xf32>
    %76 = vector.multi_reduction <maximumf>, %75, %cst_23 [1] : vector<8x8xf32> to vector<8xf32>
    %77 = vector.shape_cast %76 : vector<8xf32> to vector<8x1xf32>
    %78 = vector.broadcast %77 : vector<8x1xf32> to vector<8x8xf32>
    %79 = arith.subf %75, %78 : vector<8x8xf32>
    %80 = math.exp %79 : vector<8x8xf32>
    %cst_24 = arith.constant dense<0.000000e+00> : vector<8xf32>
    %81 = vector.multi_reduction <add>, %80, %cst_24 [1] : vector<8x8xf32> to vector<8xf32>
    %82 = vector.shape_cast %81 : vector<8xf32> to vector<8x1xf32>
    %83 = tpu.reciprocal %82 {approx = true} : vector<8x1xf32> -> vector<8x1xf32>
    %84 = vector.broadcast %83 : vector<8x1xf32> to vector<8x8xf32>
    %85 = arith.mulf %80, %84 : vector<8x8xf32>
    %86 = arith.truncf %85 : vector<8x8xf32> to vector<8x8xbf16>
    %87 = vector.extract_strided_slice %71 {offsets = [0, 0], sizes = [8, 8], strides = [1, 1]} : vector<8x32xbf16> to vector<8x8xbf16>
    %cst_25 = arith.constant dense<0.000000e+00> : vector<8x8xf32>
    %88 = tpu.matmul %86, %87, %cst_25 {dimension_numbers = #tpu.dot_dimension_numbers<[1], [0], [0], [1], [0, 0, 1, 1], [], []>} : vector<8x8xbf16>, vector<8x8xbf16>, vector<8x8xf32> -> vector<8x8xf32>
    %89 = arith.truncf %88 : vector<8x8xf32> to vector<8x8xbf16>
    %90 = vector.extract_strided_slice %38 {offsets = [0, 0], sizes = [8, 32], strides = [1, 1]} : vector<32x32xbf16> to vector<8x32xbf16>
    %cst_26 = arith.constant dense<0.000000e+00> : vector<8x32xf32>
    %91 = tpu.matmul %89, %90, %cst_26 {dimension_numbers = #tpu.dot_dimension_numbers<[1], [0], [0], [1], [0, 0, 1, 1], [], []>} : vector<8x8xbf16>, vector<8x32xbf16>, vector<8x32xf32> -> vector<8x32xf32>
    %92 = vector.extract_strided_slice %59 {offsets = [0, 8], sizes = [8, 8], strides = [1, 1]} : vector<8x32xbf16> to vector<8x8xbf16>
    %93 = vector.extract_strided_slice %65 {offsets = [0, 8], sizes = [8, 8], strides = [1, 1]} : vector<8x32xbf16> to vector<8x8xbf16>
    %cst_27 = arith.constant dense<0.000000e+00> : vector<8x8xf32>
    %94 = tpu.matmul %92, %93, %cst_27 {dimension_numbers = #tpu.dot_dimension_numbers<[1], [1], [0], [0], [0, 0, 1, 0], [], []>} : vector<8x8xbf16>, vector<8x8xbf16>, vector<8x8xf32> -> vector<8x8xf32>
    %95 = arith.addf %94, %46 : vector<8x8xf32>
    %cst_28 = arith.constant dense<0xFF800000> : vector<8xf32>
    %96 = vector.multi_reduction <maximumf>, %95, %cst_28 [1] : vector<8x8xf32> to vector<8xf32>
    %97 = vector.shape_cast %96 : vector<8xf32> to vector<8x1xf32>
    %98 = vector.broadcast %97 : vector<8x1xf32> to vector<8x8xf32>
    %99 = arith.subf %95, %98 : vector<8x8xf32>
    %100 = math.exp %99 : vector<8x8xf32>
    %cst_29 = arith.constant dense<0.000000e+00> : vector<8xf32>
    %101 = vector.multi_reduction <add>, %100, %cst_29 [1] : vector<8x8xf32> to vector<8xf32>
    %102 = vector.shape_cast %101 : vector<8xf32> to vector<8x1xf32>
    %103 = tpu.reciprocal %102 {approx = true} : vector<8x1xf32> -> vector<8x1xf32>
    %104 = vector.broadcast %103 : vector<8x1xf32> to vector<8x8xf32>
    %105 = arith.mulf %100, %104 : vector<8x8xf32>
    %106 = arith.truncf %105 : vector<8x8xf32> to vector<8x8xbf16>
    %107 = vector.extract_strided_slice %71 {offsets = [0, 8], sizes = [8, 8], strides = [1, 1]} : vector<8x32xbf16> to vector<8x8xbf16>
    %cst_30 = arith.constant dense<0.000000e+00> : vector<8x8xf32>
    %108 = tpu.matmul %106, %107, %cst_30 {dimension_numbers = #tpu.dot_dimension_numbers<[1], [0], [0], [1], [0, 0, 1, 1], [], []>} : vector<8x8xbf16>, vector<8x8xbf16>, vector<8x8xf32> -> vector<8x8xf32>
    %109 = arith.truncf %108 : vector<8x8xf32> to vector<8x8xbf16>
    %110 = vector.extract_strided_slice %38 {offsets = [8, 0], sizes = [8, 32], strides = [1, 1]} : vector<32x32xbf16> to vector<8x32xbf16>
    %cst_31 = arith.constant dense<0.000000e+00> : vector<8x32xf32>
    %111 = tpu.matmul %109, %110, %cst_31 {dimension_numbers = #tpu.dot_dimension_numbers<[1], [0], [0], [1], [0, 0, 1, 1], [], []>} : vector<8x8xbf16>, vector<8x32xbf16>, vector<8x32xf32> -> vector<8x32xf32>
    %112 = arith.addf %91, %111 : vector<8x32xf32>
    %113 = vector.extract_strided_slice %59 {offsets = [0, 16], sizes = [8, 8], strides = [1, 1]} : vector<8x32xbf16> to vector<8x8xbf16>
    %114 = vector.extract_strided_slice %65 {offsets = [0, 16], sizes = [8, 8], strides = [1, 1]} : vector<8x32xbf16> to vector<8x8xbf16>
    %cst_32 = arith.constant dense<0.000000e+00> : vector<8x8xf32>
    %115 = tpu.matmul %113, %114, %cst_32 {dimension_numbers = #tpu.dot_dimension_numbers<[1], [1], [0], [0], [0, 0, 1, 0], [], []>} : vector<8x8xbf16>, vector<8x8xbf16>, vector<8x8xf32> -> vector<8x8xf32>
    %116 = arith.addf %115, %46 : vector<8x8xf32>
    %cst_33 = arith.constant dense<0xFF800000> : vector<8xf32>
    %117 = vector.multi_reduction <maximumf>, %116, %cst_33 [1] : vector<8x8xf32> to vector<8xf32>
    %118 = vector.shape_cast %117 : vector<8xf32> to vector<8x1xf32>
    %119 = vector.broadcast %118 : vector<8x1xf32> to vector<8x8xf32>
    %120 = arith.subf %116, %119 : vector<8x8xf32>
    %121 = math.exp %120 : vector<8x8xf32>
    %cst_34 = arith.constant dense<0.000000e+00> : vector<8xf32>
    %122 = vector.multi_reduction <add>, %121, %cst_34 [1] : vector<8x8xf32> to vector<8xf32>
    %123 = vector.shape_cast %122 : vector<8xf32> to vector<8x1xf32>
    %124 = tpu.reciprocal %123 {approx = true} : vector<8x1xf32> -> vector<8x1xf32>
    %125 = vector.broadcast %124 : vector<8x1xf32> to vector<8x8xf32>
    %126 = arith.mulf %121, %125 : vector<8x8xf32>
    %127 = arith.truncf %126 : vector<8x8xf32> to vector<8x8xbf16>
    %128 = vector.extract_strided_slice %71 {offsets = [0, 16], sizes = [8, 8], strides = [1, 1]} : vector<8x32xbf16> to vector<8x8xbf16>
    %cst_35 = arith.constant dense<0.000000e+00> : vector<8x8xf32>
    %129 = tpu.matmul %127, %128, %cst_35 {dimension_numbers = #tpu.dot_dimension_numbers<[1], [0], [0], [1], [0, 0, 1, 1], [], []>} : vector<8x8xbf16>, vector<8x8xbf16>, vector<8x8xf32> -> vector<8x8xf32>
    %130 = arith.truncf %129 : vector<8x8xf32> to vector<8x8xbf16>
    %131 = vector.extract_strided_slice %38 {offsets = [16, 0], sizes = [8, 32], strides = [1, 1]} : vector<32x32xbf16> to vector<8x32xbf16>
    %cst_36 = arith.constant dense<0.000000e+00> : vector<8x32xf32>
    %132 = tpu.matmul %130, %131, %cst_36 {dimension_numbers = #tpu.dot_dimension_numbers<[1], [0], [0], [1], [0, 0, 1, 1], [], []>} : vector<8x8xbf16>, vector<8x32xbf16>, vector<8x32xf32> -> vector<8x32xf32>
    %133 = arith.addf %112, %132 : vector<8x32xf32>
    %134 = vector.extract_strided_slice %59 {offsets = [0, 24], sizes = [8, 8], strides = [1, 1]} : vector<8x32xbf16> to vector<8x8xbf16>
    %135 = vector.extract_strided_slice %65 {offsets = [0, 24], sizes = [8, 8], strides = [1, 1]} : vector<8x32xbf16> to vector<8x8xbf16>
    %cst_37 = arith.constant dense<0.000000e+00> : vector<8x8xf32>
    %136 = tpu.matmul %134, %135, %cst_37 {dimension_numbers = #tpu.dot_dimension_numbers<[1], [1], [0], [0], [0, 0, 1, 0], [], []>} : vector<8x8xbf16>, vector<8x8xbf16>, vector<8x8xf32> -> vector<8x8xf32>
    %137 = arith.addf %136, %46 : vector<8x8xf32>
    %cst_38 = arith.constant dense<0xFF800000> : vector<8xf32>
    %138 = vector.multi_reduction <maximumf>, %137, %cst_38 [1] : vector<8x8xf32> to vector<8xf32>
    %139 = vector.shape_cast %138 : vector<8xf32> to vector<8x1xf32>
    %140 = vector.broadcast %139 : vector<8x1xf32> to vector<8x8xf32>
    %141 = arith.subf %137, %140 : vector<8x8xf32>
    %142 = math.exp %141 : vector<8x8xf32>
    %cst_39 = arith.constant dense<0.000000e+00> : vector<8xf32>
    %143 = vector.multi_reduction <add>, %142, %cst_39 [1] : vector<8x8xf32> to vector<8xf32>
    %144 = vector.shape_cast %143 : vector<8xf32> to vector<8x1xf32>
    %145 = tpu.reciprocal %144 {approx = true} : vector<8x1xf32> -> vector<8x1xf32>
    %146 = vector.broadcast %145 : vector<8x1xf32> to vector<8x8xf32>
    %147 = arith.mulf %142, %146 : vector<8x8xf32>
    %148 = arith.truncf %147 : vector<8x8xf32> to vector<8x8xbf16>
    %149 = vector.extract_strided_slice %71 {offsets = [0, 24], sizes = [8, 8], strides = [1, 1]} : vector<8x32xbf16> to vector<8x8xbf16>
    %cst_40 = arith.constant dense<0.000000e+00> : vector<8x8xf32>
    %150 = tpu.matmul %148, %149, %cst_40 {dimension_numbers = #tpu.dot_dimension_numbers<[1], [0], [0], [1], [0, 0, 1, 1], [], []>} : vector<8x8xbf16>, vector<8x8xbf16>, vector<8x8xf32> -> vector<8x8xf32>
    %151 = arith.truncf %150 : vector<8x8xf32> to vector<8x8xbf16>
    %152 = vector.extract_strided_slice %38 {offsets = [24, 0], sizes = [8, 32], strides = [1, 1]} : vector<32x32xbf16> to vector<8x32xbf16>
    %cst_41 = arith.constant dense<0.000000e+00> : vector<8x32xf32>
    %153 = tpu.matmul %151, %152, %cst_41 {dimension_numbers = #tpu.dot_dimension_numbers<[1], [0], [0], [1], [0, 0, 1, 1], [], []>} : vector<8x8xbf16>, vector<8x32xbf16>, vector<8x32xf32> -> vector<8x32xf32>
    %154 = arith.addf %133, %153 : vector<8x32xf32>
    %155 = arith.addf %42, %154 : vector<8x32xf32>
    %156 = vector.shape_cast %14 : vector<32xf32> to vector<1x32xf32>
    %157 = vector.broadcast %156 : vector<1x32xf32> to vector<8x32xf32>
    %158 = arith.addf %155, %157 : vector<8x32xf32>
    %cst_42 = arith.constant dense<0.000000e+00> : vector<8xf32>
    %159 = vector.multi_reduction <add>, %158, %cst_42 [1] : vector<8x32xf32> to vector<8xf32>
    %160 = vector.shape_cast %159 : vector<8xf32> to vector<8x1xf32>
    %cst_43 = arith.constant 3.200000e+01 : f32
    %161 = vector.broadcast %cst_43 : f32 to vector<8x1xf32>
    %162 = arith.divf %160, %161 : vector<8x1xf32>
    %163 = vector.broadcast %162 : vector<8x1xf32> to vector<8x32xf32>
    %164 = arith.subf %158, %163 : vector<8x32xf32>
    %165 = arith.mulf %164, %164 : vector<8x32xf32>
    %cst_44 = arith.constant dense<0.000000e+00> : vector<8xf32>
    %166 = vector.multi_reduction <add>, %165, %cst_44 [1] : vector<8x32xf32> to vector<8xf32>
    %167 = vector.shape_cast %166 : vector<8xf32> to vector<8x1xf32>
    %cst_45 = arith.constant 3.200000e+01 : f32
    %168 = vector.broadcast %cst_45 : f32 to vector<8x1xf32>
    %169 = arith.divf %167, %168 : vector<8x1xf32>
    %170 = vector.broadcast %162 : vector<8x1xf32> to vector<8x32xf32>
    %171 = arith.subf %158, %170 : vector<8x32xf32>
    %cst_46 = arith.constant 9.99999974E-6 : f32
    %172 = vector.broadcast %cst_46 : f32 to vector<8x1xf32>
    %173 = arith.addf %169, %172 : vector<8x1xf32>
    %174 = math.rsqrt %173 : vector<8x1xf32>
    %175 = vector.broadcast %174 : vector<8x1xf32> to vector<8x32xf32>
    %176 = arith.mulf %171, %175 : vector<8x32xf32>
    %177 = vector.shape_cast %24 : vector<32xf32> to vector<1x32xf32>
    %178 = vector.broadcast %177 : vector<1x32xf32> to vector<8x32xf32>
    %179 = arith.mulf %176, %178 : vector<8x32xf32>
    %180 = vector.shape_cast %26 : vector<32xf32> to vector<1x32xf32>
    %181 = vector.broadcast %180 : vector<1x32xf32> to vector<8x32xf32>
    %182 = arith.addf %179, %181 : vector<8x32xf32>
    %183 = arith.truncf %182 : vector<8x32xf32> to vector<8x32xbf16>
    %c0_47 = arith.constant 0 : index
    %c0_48 = arith.constant 0 : index
    %c0_49 = arith.constant 0 : index
    %184 = vector.load %arg7[%c0_47, %c0_48, %c0_49] : memref<1x32x32xbf16, #tpu.memory_space<vmem>>, vector<1x32x32xbf16>
    %185 = vector.shape_cast %184 : vector<1x32x32xbf16> to vector<32x32xbf16>
    %cst_50 = arith.constant dense<0.000000e+00> : vector<8x32xf32>
    %186 = tpu.matmul %183, %185, %cst_50 {dimension_numbers = #tpu.dot_dimension_numbers<[1], [0], [0], [1], [0, 0, 1, 1], [], []>} : vector<8x32xbf16>, vector<32x32xbf16>, vector<8x32xf32> -> vector<8x32xf32>
    %187 = arith.truncf %186 : vector<8x32xf32> to vector<8x32xbf16>
    %188 = arith.extf %187 : vector<8x32xbf16> to vector<8x32xf32>
    %189 = vector.shape_cast %16 : vector<32xf32> to vector<1x32xf32>
    %190 = vector.broadcast %189 : vector<1x32xf32> to vector<8x32xf32>
    %191 = arith.addf %188, %190 : vector<8x32xf32>
    %cst_51 = arith.constant 0.353553385 : f32
    %192 = vector.broadcast %cst_51 : f32 to vector<8x32xf32>
    %193 = arith.mulf %191, %192 : vector<8x32xf32>
    %194 = arith.truncf %193 : vector<8x32xf32> to vector<8x32xbf16>
    %195 = arith.truncf %44 : vector<4x32xf32> to vector<4x32xbf16>
    %c0_52 = arith.constant 0 : index
    %c0_53 = arith.constant 0 : index
    %c0_54 = arith.constant 0 : index
    %196 = vector.load %arg8[%c0_52, %c0_53, %c0_54] : memref<1x32x64xbf16, #tpu.memory_space<vmem>>, vector<1x32x64xbf16>
    %197 = vector.shape_cast %196 : vector<1x32x64xbf16> to vector<32x64xbf16>
    %cst_55 = arith.constant dense<0.000000e+00> : vector<4x64xf32>
    %198 = tpu.matmul %195, %197, %cst_55 {dimension_numbers = #tpu.dot_dimension_numbers<[1], [0], [0], [1], [0, 0, 1, 1], [], []>} : vector<4x32xbf16>, vector<32x64xbf16>, vector<4x64xf32> -> vector<4x64xf32>
    %199 = arith.truncf %198 : vector<4x64xf32> to vector<4x64xbf16>
    %200 = vector.extract_strided_slice %199 {offsets = [0, 0], sizes = [4, 32], strides = [1, 1]} : vector<4x64xbf16> to vector<4x32xbf16>
    %201 = arith.extf %200 : vector<4x32xbf16> to vector<4x32xf32>
    %202 = vector.shape_cast %18 : vector<32xf32> to vector<1x32xf32>
    %203 = vector.broadcast %202 : vector<1x32xf32> to vector<4x32xf32>
    %204 = arith.addf %201, %203 : vector<4x32xf32>
    %205 = arith.truncf %204 : vector<4x32xf32> to vector<4x32xbf16>
    %206 = vector.extract_strided_slice %199 {offsets = [0, 32], sizes = [4, 32], strides = [1, 1]} : vector<4x64xbf16> to vector<4x32xbf16>
    %207 = arith.extf %206 : vector<4x32xbf16> to vector<4x32xf32>
    %208 = vector.shape_cast %20 : vector<32xf32> to vector<1x32xf32>
    %209 = vector.broadcast %208 : vector<1x32xf32> to vector<4x32xf32>
    %210 = arith.addf %207, %209 : vector<4x32xf32>
    %211 = arith.truncf %210 : vector<4x32xf32> to vector<4x32xbf16>
    %212 = vector.extract_strided_slice %194 {offsets = [0, 0], sizes = [8, 8], strides = [1, 1]} : vector<8x32xbf16> to vector<8x8xbf16>
    %213 = vector.extract_strided_slice %205 {offsets = [0, 0], sizes = [4, 8], strides = [1, 1]} : vector<4x32xbf16> to vector<4x8xbf16>
    %cst_56 = arith.constant dense<0.000000e+00> : vector<8x4xf32>
    %214 = tpu.matmul %212, %213, %cst_56 {dimension_numbers = #tpu.dot_dimension_numbers<[1], [1], [0], [0], [0, 0, 1, 0], [], []>} : vector<8x8xbf16>, vector<4x8xbf16>, vector<8x4xf32> -> vector<8x4xf32>
    %cst_57 = arith.constant dense<0xFF800000> : vector<8xf32>
    %215 = vector.multi_reduction <maximumf>, %214, %cst_57 [1] : vector<8x4xf32> to vector<8xf32>
    %216 = vector.shape_cast %215 : vector<8xf32> to vector<8x1xf32>
    %217 = vector.broadcast %216 : vector<8x1xf32> to vector<8x4xf32>
    %218 = arith.subf %214, %217 : vector<8x4xf32>
    %219 = math.exp %218 : vector<8x4xf32>
    %cst_58 = arith.constant dense<0.000000e+00> : vector<8xf32>
    %220 = vector.multi_reduction <add>, %219, %cst_58 [1] : vector<8x4xf32> to vector<8xf32>
    %221 = vector.shape_cast %220 : vector<8xf32> to vector<8x1xf32>
    %222 = tpu.reciprocal %221 {approx = true} : vector<8x1xf32> -> vector<8x1xf32>
    %223 = vector.broadcast %222 : vector<8x1xf32> to vector<8x4xf32>
    %224 = arith.mulf %219, %223 : vector<8x4xf32>
    %225 = arith.truncf %224 : vector<8x4xf32> to vector<8x4xbf16>
    %226 = vector.extract_strided_slice %211 {offsets = [0, 0], sizes = [4, 8], strides = [1, 1]} : vector<4x32xbf16> to vector<4x8xbf16>
    %cst_59 = arith.constant dense<0.000000e+00> : vector<8x8xf32>
    %227 = tpu.matmul %225, %226, %cst_59 {dimension_numbers = #tpu.dot_dimension_numbers<[1], [0], [0], [1], [0, 0, 1, 1], [], []>} : vector<8x4xbf16>, vector<4x8xbf16>, vector<8x8xf32> -> vector<8x8xf32>
    %228 = arith.truncf %227 : vector<8x8xf32> to vector<8x8xbf16>
    %229 = vector.extract_strided_slice %40 {offsets = [0, 0], sizes = [8, 32], strides = [1, 1]} : vector<32x32xbf16> to vector<8x32xbf16>
    %cst_60 = arith.constant dense<0.000000e+00> : vector<8x32xf32>
    %230 = tpu.matmul %228, %229, %cst_60 {dimension_numbers = #tpu.dot_dimension_numbers<[1], [0], [0], [1], [0, 0, 1, 1], [], []>} : vector<8x8xbf16>, vector<8x32xbf16>, vector<8x32xf32> -> vector<8x32xf32>
    %231 = vector.extract_strided_slice %194 {offsets = [0, 8], sizes = [8, 8], strides = [1, 1]} : vector<8x32xbf16> to vector<8x8xbf16>
    %232 = vector.extract_strided_slice %205 {offsets = [0, 8], sizes = [4, 8], strides = [1, 1]} : vector<4x32xbf16> to vector<4x8xbf16>
    %cst_61 = arith.constant dense<0.000000e+00> : vector<8x4xf32>
    %233 = tpu.matmul %231, %232, %cst_61 {dimension_numbers = #tpu.dot_dimension_numbers<[1], [1], [0], [0], [0, 0, 1, 0], [], []>} : vector<8x8xbf16>, vector<4x8xbf16>, vector<8x4xf32> -> vector<8x4xf32>
    %cst_62 = arith.constant dense<0xFF800000> : vector<8xf32>
    %234 = vector.multi_reduction <maximumf>, %233, %cst_62 [1] : vector<8x4xf32> to vector<8xf32>
    %235 = vector.shape_cast %234 : vector<8xf32> to vector<8x1xf32>
    %236 = vector.broadcast %235 : vector<8x1xf32> to vector<8x4xf32>
    %237 = arith.subf %233, %236 : vector<8x4xf32>
    %238 = math.exp %237 : vector<8x4xf32>
    %cst_63 = arith.constant dense<0.000000e+00> : vector<8xf32>
    %239 = vector.multi_reduction <add>, %238, %cst_63 [1] : vector<8x4xf32> to vector<8xf32>
    %240 = vector.shape_cast %239 : vector<8xf32> to vector<8x1xf32>
    %241 = tpu.reciprocal %240 {approx = true} : vector<8x1xf32> -> vector<8x1xf32>
    %242 = vector.broadcast %241 : vector<8x1xf32> to vector<8x4xf32>
    %243 = arith.mulf %238, %242 : vector<8x4xf32>
    %244 = arith.truncf %243 : vector<8x4xf32> to vector<8x4xbf16>
    %245 = vector.extract_strided_slice %211 {offsets = [0, 8], sizes = [4, 8], strides = [1, 1]} : vector<4x32xbf16> to vector<4x8xbf16>
    %cst_64 = arith.constant dense<0.000000e+00> : vector<8x8xf32>
    %246 = tpu.matmul %244, %245, %cst_64 {dimension_numbers = #tpu.dot_dimension_numbers<[1], [0], [0], [1], [0, 0, 1, 1], [], []>} : vector<8x4xbf16>, vector<4x8xbf16>, vector<8x8xf32> -> vector<8x8xf32>
    %247 = arith.truncf %246 : vector<8x8xf32> to vector<8x8xbf16>
    %248 = vector.extract_strided_slice %40 {offsets = [8, 0], sizes = [8, 32], strides = [1, 1]} : vector<32x32xbf16> to vector<8x32xbf16>
    %cst_65 = arith.constant dense<0.000000e+00> : vector<8x32xf32>
    %249 = tpu.matmul %247, %248, %cst_65 {dimension_numbers = #tpu.dot_dimension_numbers<[1], [0], [0], [1], [0, 0, 1, 1], [], []>} : vector<8x8xbf16>, vector<8x32xbf16>, vector<8x32xf32> -> vector<8x32xf32>
    %250 = arith.addf %230, %249 : vector<8x32xf32>
    %251 = vector.extract_strided_slice %194 {offsets = [0, 16], sizes = [8, 8], strides = [1, 1]} : vector<8x32xbf16> to vector<8x8xbf16>
    %252 = vector.extract_strided_slice %205 {offsets = [0, 16], sizes = [4, 8], strides = [1, 1]} : vector<4x32xbf16> to vector<4x8xbf16>
    %cst_66 = arith.constant dense<0.000000e+00> : vector<8x4xf32>
    %253 = tpu.matmul %251, %252, %cst_66 {dimension_numbers = #tpu.dot_dimension_numbers<[1], [1], [0], [0], [0, 0, 1, 0], [], []>} : vector<8x8xbf16>, vector<4x8xbf16>, vector<8x4xf32> -> vector<8x4xf32>
    %cst_67 = arith.constant dense<0xFF800000> : vector<8xf32>
    %254 = vector.multi_reduction <maximumf>, %253, %cst_67 [1] : vector<8x4xf32> to vector<8xf32>
    %255 = vector.shape_cast %254 : vector<8xf32> to vector<8x1xf32>
    %256 = vector.broadcast %255 : vector<8x1xf32> to vector<8x4xf32>
    %257 = arith.subf %253, %256 : vector<8x4xf32>
    %258 = math.exp %257 : vector<8x4xf32>
    %cst_68 = arith.constant dense<0.000000e+00> : vector<8xf32>
    %259 = vector.multi_reduction <add>, %258, %cst_68 [1] : vector<8x4xf32> to vector<8xf32>
    %260 = vector.shape_cast %259 : vector<8xf32> to vector<8x1xf32>
    %261 = tpu.reciprocal %260 {approx = true} : vector<8x1xf32> -> vector<8x1xf32>
    %262 = vector.broadcast %261 : vector<8x1xf32> to vector<8x4xf32>
    %263 = arith.mulf %258, %262 : vector<8x4xf32>
    %264 = arith.truncf %263 : vector<8x4xf32> to vector<8x4xbf16>
    %265 = vector.extract_strided_slice %211 {offsets = [0, 16], sizes = [4, 8], strides = [1, 1]} : vector<4x32xbf16> to vector<4x8xbf16>
    %cst_69 = arith.constant dense<0.000000e+00> : vector<8x8xf32>
    %266 = tpu.matmul %264, %265, %cst_69 {dimension_numbers = #tpu.dot_dimension_numbers<[1], [0], [0], [1], [0, 0, 1, 1], [], []>} : vector<8x4xbf16>, vector<4x8xbf16>, vector<8x8xf32> -> vector<8x8xf32>
    %267 = arith.truncf %266 : vector<8x8xf32> to vector<8x8xbf16>
    %268 = vector.extract_strided_slice %40 {offsets = [16, 0], sizes = [8, 32], strides = [1, 1]} : vector<32x32xbf16> to vector<8x32xbf16>
    %cst_70 = arith.constant dense<0.000000e+00> : vector<8x32xf32>
    %269 = tpu.matmul %267, %268, %cst_70 {dimension_numbers = #tpu.dot_dimension_numbers<[1], [0], [0], [1], [0, 0, 1, 1], [], []>} : vector<8x8xbf16>, vector<8x32xbf16>, vector<8x32xf32> -> vector<8x32xf32>
    %270 = arith.addf %250, %269 : vector<8x32xf32>
    %271 = vector.extract_strided_slice %194 {offsets = [0, 24], sizes = [8, 8], strides = [1, 1]} : vector<8x32xbf16> to vector<8x8xbf16>
    %272 = vector.extract_strided_slice %205 {offsets = [0, 24], sizes = [4, 8], strides = [1, 1]} : vector<4x32xbf16> to vector<4x8xbf16>
    %cst_71 = arith.constant dense<0.000000e+00> : vector<8x4xf32>
    %273 = tpu.matmul %271, %272, %cst_71 {dimension_numbers = #tpu.dot_dimension_numbers<[1], [1], [0], [0], [0, 0, 1, 0], [], []>} : vector<8x8xbf16>, vector<4x8xbf16>, vector<8x4xf32> -> vector<8x4xf32>
    %cst_72 = arith.constant dense<0xFF800000> : vector<8xf32>
    %274 = vector.multi_reduction <maximumf>, %273, %cst_72 [1] : vector<8x4xf32> to vector<8xf32>
    %275 = vector.shape_cast %274 : vector<8xf32> to vector<8x1xf32>
    %276 = vector.broadcast %275 : vector<8x1xf32> to vector<8x4xf32>
    %277 = arith.subf %273, %276 : vector<8x4xf32>
    %278 = math.exp %277 : vector<8x4xf32>
    %cst_73 = arith.constant dense<0.000000e+00> : vector<8xf32>
    %279 = vector.multi_reduction <add>, %278, %cst_73 [1] : vector<8x4xf32> to vector<8xf32>
    %280 = vector.shape_cast %279 : vector<8xf32> to vector<8x1xf32>
    %281 = tpu.reciprocal %280 {approx = true} : vector<8x1xf32> -> vector<8x1xf32>
    %282 = vector.broadcast %281 : vector<8x1xf32> to vector<8x4xf32>
    %283 = arith.mulf %278, %282 : vector<8x4xf32>
    %284 = arith.truncf %283 : vector<8x4xf32> to vector<8x4xbf16>
    %285 = vector.extract_strided_slice %211 {offsets = [0, 24], sizes = [4, 8], strides = [1, 1]} : vector<4x32xbf16> to vector<4x8xbf16>
    %cst_74 = arith.constant dense<0.000000e+00> : vector<8x8xf32>
    %286 = tpu.matmul %284, %285, %cst_74 {dimension_numbers = #tpu.dot_dimension_numbers<[1], [0], [0], [1], [0, 0, 1, 1], [], []>} : vector<8x4xbf16>, vector<4x8xbf16>, vector<8x8xf32> -> vector<8x8xf32>
    %287 = arith.truncf %286 : vector<8x8xf32> to vector<8x8xbf16>
    %288 = vector.extract_strided_slice %40 {offsets = [24, 0], sizes = [8, 32], strides = [1, 1]} : vector<32x32xbf16> to vector<8x32xbf16>
    %cst_75 = arith.constant dense<0.000000e+00> : vector<8x32xf32>
    %289 = tpu.matmul %287, %288, %cst_75 {dimension_numbers = #tpu.dot_dimension_numbers<[1], [0], [0], [1], [0, 0, 1, 1], [], []>} : vector<8x8xbf16>, vector<8x32xbf16>, vector<8x32xf32> -> vector<8x32xf32>
    %290 = arith.addf %270, %289 : vector<8x32xf32>
    %291 = arith.addf %182, %290 : vector<8x32xf32>
    %292 = vector.shape_cast %22 : vector<32xf32> to vector<1x32xf32>
    %293 = vector.broadcast %292 : vector<1x32xf32> to vector<8x32xf32>
    %294 = arith.addf %291, %293 : vector<8x32xf32>
    %cst_76 = arith.constant dense<0.000000e+00> : vector<8xf32>
    %295 = vector.multi_reduction <add>, %294, %cst_76 [1] : vector<8x32xf32> to vector<8xf32>
    %296 = vector.shape_cast %295 : vector<8xf32> to vector<8x1xf32>
    %cst_77 = arith.constant 3.200000e+01 : f32
    %297 = vector.broadcast %cst_77 : f32 to vector<8x1xf32>
    %298 = arith.divf %296, %297 : vector<8x1xf32>
    %299 = vector.broadcast %298 : vector<8x1xf32> to vector<8x32xf32>
    %300 = arith.subf %294, %299 : vector<8x32xf32>
    %301 = arith.mulf %300, %300 : vector<8x32xf32>
    %cst_78 = arith.constant dense<0.000000e+00> : vector<8xf32>
    %302 = vector.multi_reduction <add>, %301, %cst_78 [1] : vector<8x32xf32> to vector<8xf32>
    %303 = vector.shape_cast %302 : vector<8xf32> to vector<8x1xf32>
    %cst_79 = arith.constant 3.200000e+01 : f32
    %304 = vector.broadcast %cst_79 : f32 to vector<8x1xf32>
    %305 = arith.divf %303, %304 : vector<8x1xf32>
    %306 = vector.broadcast %298 : vector<8x1xf32> to vector<8x32xf32>
    %307 = arith.subf %294, %306 : vector<8x32xf32>
    %cst_80 = arith.constant 9.99999974E-6 : f32
    %308 = vector.broadcast %cst_80 : f32 to vector<8x1xf32>
    %309 = arith.addf %305, %308 : vector<8x1xf32>
    %310 = math.rsqrt %309 : vector<8x1xf32>
    %311 = vector.broadcast %310 : vector<8x1xf32> to vector<8x32xf32>
    %312 = arith.mulf %307, %311 : vector<8x32xf32>
    %313 = vector.shape_cast %28 : vector<32xf32> to vector<1x32xf32>
    %314 = vector.broadcast %313 : vector<1x32xf32> to vector<8x32xf32>
    %315 = arith.mulf %312, %314 : vector<8x32xf32>
    %316 = vector.shape_cast %30 : vector<32xf32> to vector<1x32xf32>
    %317 = vector.broadcast %316 : vector<1x32xf32> to vector<8x32xf32>
    %318 = arith.addf %315, %317 : vector<8x32xf32>
    %319 = arith.truncf %318 : vector<8x32xf32> to vector<8x32xbf16>
    %c0_81 = arith.constant 0 : index
    %c0_82 = arith.constant 0 : index
    %c0_83 = arith.constant 0 : index
    %320 = vector.load %arg10[%c0_81, %c0_82, %c0_83] : memref<1x32x128xbf16, #tpu.memory_space<vmem>>, vector<1x32x128xbf16>
    %321 = vector.shape_cast %320 : vector<1x32x128xbf16> to vector<32x128xbf16>
    %cst_84 = arith.constant dense<0.000000e+00> : vector<8x128xf32>
    %322 = tpu.matmul %319, %321, %cst_84 {dimension_numbers = #tpu.dot_dimension_numbers<[1], [0], [0], [1], [0, 0, 1, 1], [], []>} : vector<8x32xbf16>, vector<32x128xbf16>, vector<8x128xf32> -> vector<8x128xf32>
    %323 = vector.shape_cast %6 : vector<128xf32> to vector<1x128xf32>
    %324 = vector.broadcast %323 : vector<1x128xf32> to vector<8x128xf32>
    %325 = arith.addf %322, %324 : vector<8x128xf32>
    %cst_85 = arith.constant 0.000000e+00 : f32
    %326 = vector.broadcast %cst_85 : f32 to vector<8x128xf32>
    %327 = arith.maximumf %325, %326 : vector<8x128xf32>
    %328 = arith.truncf %327 : vector<8x128xf32> to vector<8x128xbf16>
    %c0_86 = arith.constant 0 : index
    %c0_87 = arith.constant 0 : index
    %c0_88 = arith.constant 0 : index
    %329 = vector.load %arg11[%c0_86, %c0_87, %c0_88] : memref<1x128x32xbf16, #tpu.memory_space<vmem>>, vector<1x128x32xbf16>
    %330 = vector.shape_cast %329 : vector<1x128x32xbf16> to vector<128x32xbf16>
    %cst_89 = arith.constant dense<0.000000e+00> : vector<8x32xf32>
    %331 = tpu.matmul %328, %330, %cst_89 {dimension_numbers = #tpu.dot_dimension_numbers<[1], [0], [0], [1], [0, 0, 1, 1], [], []>} : vector<8x128xbf16>, vector<128x32xbf16>, vector<8x32xf32> -> vector<8x32xf32>
    %332 = vector.shape_cast %36 : vector<32xf32> to vector<1x32xf32>
    %333 = vector.broadcast %332 : vector<1x32xf32> to vector<8x32xf32>
    %334 = arith.addf %331, %333 : vector<8x32xf32>
    %335 = arith.addf %318, %334 : vector<8x32xf32>
    %cst_90 = arith.constant dense<0.000000e+00> : vector<8xf32>
    %336 = vector.multi_reduction <add>, %335, %cst_90 [1] : vector<8x32xf32> to vector<8xf32>
    %337 = vector.shape_cast %336 : vector<8xf32> to vector<8x1xf32>
    %cst_91 = arith.constant 3.200000e+01 : f32
    %338 = vector.broadcast %cst_91 : f32 to vector<8x1xf32>
    %339 = arith.divf %337, %338 : vector<8x1xf32>
    %340 = vector.broadcast %339 : vector<8x1xf32> to vector<8x32xf32>
    %341 = arith.subf %335, %340 : vector<8x32xf32>
    %342 = arith.mulf %341, %341 : vector<8x32xf32>
    %cst_92 = arith.constant dense<0.000000e+00> : vector<8xf32>
    %343 = vector.multi_reduction <add>, %342, %cst_92 [1] : vector<8x32xf32> to vector<8xf32>
    %344 = vector.shape_cast %343 : vector<8xf32> to vector<8x1xf32>
    %cst_93 = arith.constant 3.200000e+01 : f32
    %345 = vector.broadcast %cst_93 : f32 to vector<8x1xf32>
    %346 = arith.divf %344, %345 : vector<8x1xf32>
    %347 = vector.broadcast %339 : vector<8x1xf32> to vector<8x32xf32>
    %348 = arith.subf %335, %347 : vector<8x32xf32>
    %cst_94 = arith.constant 9.99999974E-6 : f32
    %349 = vector.broadcast %cst_94 : f32 to vector<8x1xf32>
    %350 = arith.addf %346, %349 : vector<8x1xf32>
    %351 = math.rsqrt %350 : vector<8x1xf32>
    %352 = vector.broadcast %351 : vector<8x1xf32> to vector<8x32xf32>
    %353 = arith.mulf %348, %352 : vector<8x32xf32>
    %354 = vector.shape_cast %32 : vector<32xf32> to vector<1x32xf32>
    %355 = vector.broadcast %354 : vector<1x32xf32> to vector<8x32xf32>
    %356 = arith.mulf %353, %355 : vector<8x32xf32>
    %357 = vector.shape_cast %34 : vector<32xf32> to vector<1x32xf32>
    %358 = vector.broadcast %357 : vector<1x32xf32> to vector<8x32xf32>
    %359 = arith.addf %356, %358 : vector<8x32xf32>
    %c0_95 = arith.constant 0 : index
    %c0_96 = arith.constant 0 : index
    %c0_97 = arith.constant 0 : index
    %360 = vector.load %arg14[%c0_95, %c0_96, %c0_97] : memref<2x8x32xf32, #tpu.memory_space<vmem>>, vector<1x8x32xf32>
    %361 = vector.shape_cast %360 : vector<1x8x32xf32> to vector<8x32xf32>
    %362 = vector.shape_cast %359 : vector<8x32xf32> to vector<1x8x32xf32>
    tpu.vector_store %arg14[%c0_95, %c0_96, %c0_97], %362 {strides = array<i32>} : memref<2x8x32xf32, #tpu.memory_space<vmem>>, vector<1x8x32xf32>,
    %c1_i32 = arith.constant 1 : i32
    %363 = arith.cmpi eq, %arg1, %c1_i32 : i32
    %364 = arith.extui %363 : i1 to i32
    %c0_i32_98 = arith.constant 0 : i32
    %365 = arith.cmpi ne, %364, %c0_i32_98 : i32
    scf.if %365 {
      %c0_190 = arith.constant 0 : index
      %c0_191 = arith.constant 0 : index
      %c0_192 = arith.constant 0 : index
      %691 = vector.load %arg13[%c0_190, %c0_191, %c0_192] : memref<2x8x32xf32, #tpu.memory_space<vmem>>, vector<1x8x32xf32>
      %692 = vector.shape_cast %691 : vector<1x8x32xf32> to vector<8x32xf32>
      %693 = vector.shape_cast %359 : vector<8x32xf32> to vector<1x8x32xf32>
      tpu.vector_store %arg13[%c0_190, %c0_191, %c0_192], %693 {strides = array<i32>} : memref<2x8x32xf32, #tpu.memory_space<vmem>>, vector<1x8x32xf32>,
    } else {
    }
    %c1 = arith.constant 1 : index
    %c0_99 = arith.constant 0 : index
    %c0_100 = arith.constant 0 : index
    %366 = vector.load %arg14[%c1, %c0_99, %c0_100] : memref<2x8x32xf32, #tpu.memory_space<vmem>>, vector<1x8x32xf32>
    %367 = vector.shape_cast %366 : vector<1x8x32xf32> to vector<8x32xf32>
    %c1_101 = arith.constant 1 : index
    %c0_102 = arith.constant 0 : index
    %c0_103 = arith.constant 0 : index
    %368 = vector.load %arg3[%c1_101, %c0_102, %c0_103] : memref<2x4x32xf32, #tpu.memory_space<vmem>>, vector<1x4x32xf32>
    %369 = vector.shape_cast %368 : vector<1x4x32xf32> to vector<4x32xf32>
    %c1_104 = arith.constant 1 : index
    %c0_105 = arith.constant 0 : index
    %c0_106 = arith.constant 0 : index
    %370 = vector.load %arg15[%c1_104, %c0_105, %c0_106] : memref<2x8x8xf32, #tpu.memory_space<vmem>>, vector<1x8x8xf32>
    %371 = vector.shape_cast %370 : vector<1x8x8xf32> to vector<8x8xf32>
    %372 = arith.truncf %367 : vector<8x32xf32> to vector<8x32xbf16>
    %c0_107 = arith.constant 0 : index
    %c0_108 = arith.constant 0 : index
    %c0_109 = arith.constant 0 : index
    %373 = vector.load %arg5[%c0_107, %c0_108, %c0_109] : memref<1x32x96xbf16, #tpu.memory_space<vmem>>, vector<1x32x96xbf16>
    %374 = vector.shape_cast %373 : vector<1x32x96xbf16> to vector<32x96xbf16>
    %cst_110 = arith.constant dense<0.000000e+00> : vector<8x96xf32>
    %375 = tpu.matmul %372, %374, %cst_110 {dimension_numbers = #tpu.dot_dimension_numbers<[1], [0], [0], [1], [0, 0, 1, 1], [], []>} : vector<8x32xbf16>, vector<32x96xbf16>, vector<8x96xf32> -> vector<8x96xf32>
    %376 = arith.truncf %375 : vector<8x96xf32> to vector<8x96xbf16>
    %377 = vector.extract_strided_slice %376 {offsets = [0, 0], sizes = [8, 32], strides = [1, 1]} : vector<8x96xbf16> to vector<8x32xbf16>
    %378 = arith.extf %377 : vector<8x32xbf16> to vector<8x32xf32>
    %379 = vector.shape_cast %8 : vector<32xf32> to vector<1x32xf32>
    %380 = vector.broadcast %379 : vector<1x32xf32> to vector<8x32xf32>
    %381 = arith.addf %378, %380 : vector<8x32xf32>
    %cst_111 = arith.constant 0.353553385 : f32
    %382 = vector.broadcast %cst_111 : f32 to vector<8x32xf32>
    %383 = arith.mulf %381, %382 : vector<8x32xf32>
    %384 = arith.truncf %383 : vector<8x32xf32> to vector<8x32xbf16>
    %385 = vector.extract_strided_slice %376 {offsets = [0, 32], sizes = [8, 32], strides = [1, 1]} : vector<8x96xbf16> to vector<8x32xbf16>
    %386 = arith.extf %385 : vector<8x32xbf16> to vector<8x32xf32>
    %387 = vector.shape_cast %10 : vector<32xf32> to vector<1x32xf32>
    %388 = vector.broadcast %387 : vector<1x32xf32> to vector<8x32xf32>
    %389 = arith.addf %386, %388 : vector<8x32xf32>
    %390 = arith.truncf %389 : vector<8x32xf32> to vector<8x32xbf16>
    %391 = vector.extract_strided_slice %376 {offsets = [0, 64], sizes = [8, 32], strides = [1, 1]} : vector<8x96xbf16> to vector<8x32xbf16>
    %392 = arith.extf %391 : vector<8x32xbf16> to vector<8x32xf32>
    %393 = vector.shape_cast %12 : vector<32xf32> to vector<1x32xf32>
    %394 = vector.broadcast %393 : vector<1x32xf32> to vector<8x32xf32>
    %395 = arith.addf %392, %394 : vector<8x32xf32>
    %396 = arith.truncf %395 : vector<8x32xf32> to vector<8x32xbf16>
    %397 = vector.extract_strided_slice %384 {offsets = [0, 0], sizes = [8, 8], strides = [1, 1]} : vector<8x32xbf16> to vector<8x8xbf16>
    %398 = vector.extract_strided_slice %390 {offsets = [0, 0], sizes = [8, 8], strides = [1, 1]} : vector<8x32xbf16> to vector<8x8xbf16>
    %cst_112 = arith.constant dense<0.000000e+00> : vector<8x8xf32>
    %399 = tpu.matmul %397, %398, %cst_112 {dimension_numbers = #tpu.dot_dimension_numbers<[1], [1], [0], [0], [0, 0, 1, 0], [], []>} : vector<8x8xbf16>, vector<8x8xbf16>, vector<8x8xf32> -> vector<8x8xf32>
    %400 = arith.addf %399, %371 : vector<8x8xf32>
    %cst_113 = arith.constant dense<0xFF800000> : vector<8xf32>
    %401 = vector.multi_reduction <maximumf>, %400, %cst_113 [1] : vector<8x8xf32> to vector<8xf32>
    %402 = vector.shape_cast %401 : vector<8xf32> to vector<8x1xf32>
    %403 = vector.broadcast %402 : vector<8x1xf32> to vector<8x8xf32>
    %404 = arith.subf %400, %403 : vector<8x8xf32>
    %405 = math.exp %404 : vector<8x8xf32>
    %cst_114 = arith.constant dense<0.000000e+00> : vector<8xf32>
    %406 = vector.multi_reduction <add>, %405, %cst_114 [1] : vector<8x8xf32> to vector<8xf32>
    %407 = vector.shape_cast %406 : vector<8xf32> to vector<8x1xf32>
    %408 = tpu.reciprocal %407 {approx = true} : vector<8x1xf32> -> vector<8x1xf32>
    %409 = vector.broadcast %408 : vector<8x1xf32> to vector<8x8xf32>
    %410 = arith.mulf %405, %409 : vector<8x8xf32>
    %411 = arith.truncf %410 : vector<8x8xf32> to vector<8x8xbf16>
    %412 = vector.extract_strided_slice %396 {offsets = [0, 0], sizes = [8, 8], strides = [1, 1]} : vector<8x32xbf16> to vector<8x8xbf16>
    %cst_115 = arith.constant dense<0.000000e+00> : vector<8x8xf32>
    %413 = tpu.matmul %411, %412, %cst_115 {dimension_numbers = #tpu.dot_dimension_numbers<[1], [0], [0], [1], [0, 0, 1, 1], [], []>} : vector<8x8xbf16>, vector<8x8xbf16>, vector<8x8xf32> -> vector<8x8xf32>
    %414 = arith.truncf %413 : vector<8x8xf32> to vector<8x8xbf16>
    %415 = vector.extract_strided_slice %38 {offsets = [0, 0], sizes = [8, 32], strides = [1, 1]} : vector<32x32xbf16> to vector<8x32xbf16>
    %cst_116 = arith.constant dense<0.000000e+00> : vector<8x32xf32>
    %416 = tpu.matmul %414, %415, %cst_116 {dimension_numbers = #tpu.dot_dimension_numbers<[1], [0], [0], [1], [0, 0, 1, 1], [], []>} : vector<8x8xbf16>, vector<8x32xbf16>, vector<8x32xf32> -> vector<8x32xf32>
    %417 = vector.extract_strided_slice %384 {offsets = [0, 8], sizes = [8, 8], strides = [1, 1]} : vector<8x32xbf16> to vector<8x8xbf16>
    %418 = vector.extract_strided_slice %390 {offsets = [0, 8], sizes = [8, 8], strides = [1, 1]} : vector<8x32xbf16> to vector<8x8xbf16>
    %cst_117 = arith.constant dense<0.000000e+00> : vector<8x8xf32>
    %419 = tpu.matmul %417, %418, %cst_117 {dimension_numbers = #tpu.dot_dimension_numbers<[1], [1], [0], [0], [0, 0, 1, 0], [], []>} : vector<8x8xbf16>, vector<8x8xbf16>, vector<8x8xf32> -> vector<8x8xf32>
    %420 = arith.addf %419, %371 : vector<8x8xf32>
    %cst_118 = arith.constant dense<0xFF800000> : vector<8xf32>
    %421 = vector.multi_reduction <maximumf>, %420, %cst_118 [1] : vector<8x8xf32> to vector<8xf32>
    %422 = vector.shape_cast %421 : vector<8xf32> to vector<8x1xf32>
    %423 = vector.broadcast %422 : vector<8x1xf32> to vector<8x8xf32>
    %424 = arith.subf %420, %423 : vector<8x8xf32>
    %425 = math.exp %424 : vector<8x8xf32>
    %cst_119 = arith.constant dense<0.000000e+00> : vector<8xf32>
    %426 = vector.multi_reduction <add>, %425, %cst_119 [1] : vector<8x8xf32> to vector<8xf32>
    %427 = vector.shape_cast %426 : vector<8xf32> to vector<8x1xf32>
    %428 = tpu.reciprocal %427 {approx = true} : vector<8x1xf32> -> vector<8x1xf32>
    %429 = vector.broadcast %428 : vector<8x1xf32> to vector<8x8xf32>
    %430 = arith.mulf %425, %429 : vector<8x8xf32>
    %431 = arith.truncf %430 : vector<8x8xf32> to vector<8x8xbf16>
    %432 = vector.extract_strided_slice %396 {offsets = [0, 8], sizes = [8, 8], strides = [1, 1]} : vector<8x32xbf16> to vector<8x8xbf16>
    %cst_120 = arith.constant dense<0.000000e+00> : vector<8x8xf32>
    %433 = tpu.matmul %431, %432, %cst_120 {dimension_numbers = #tpu.dot_dimension_numbers<[1], [0], [0], [1], [0, 0, 1, 1], [], []>} : vector<8x8xbf16>, vector<8x8xbf16>, vector<8x8xf32> -> vector<8x8xf32>
    %434 = arith.truncf %433 : vector<8x8xf32> to vector<8x8xbf16>
    %435 = vector.extract_strided_slice %38 {offsets = [8, 0], sizes = [8, 32], strides = [1, 1]} : vector<32x32xbf16> to vector<8x32xbf16>
    %cst_121 = arith.constant dense<0.000000e+00> : vector<8x32xf32>
    %436 = tpu.matmul %434, %435, %cst_121 {dimension_numbers = #tpu.dot_dimension_numbers<[1], [0], [0], [1], [0, 0, 1, 1], [], []>} : vector<8x8xbf16>, vector<8x32xbf16>, vector<8x32xf32> -> vector<8x32xf32>
    %437 = arith.addf %416, %436 : vector<8x32xf32>
    %438 = vector.extract_strided_slice %384 {offsets = [0, 16], sizes = [8, 8], strides = [1, 1]} : vector<8x32xbf16> to vector<8x8xbf16>
    %439 = vector.extract_strided_slice %390 {offsets = [0, 16], sizes = [8, 8], strides = [1, 1]} : vector<8x32xbf16> to vector<8x8xbf16>
    %cst_122 = arith.constant dense<0.000000e+00> : vector<8x8xf32>
    %440 = tpu.matmul %438, %439, %cst_122 {dimension_numbers = #tpu.dot_dimension_numbers<[1], [1], [0], [0], [0, 0, 1, 0], [], []>} : vector<8x8xbf16>, vector<8x8xbf16>, vector<8x8xf32> -> vector<8x8xf32>
    %441 = arith.addf %440, %371 : vector<8x8xf32>
    %cst_123 = arith.constant dense<0xFF800000> : vector<8xf32>
    %442 = vector.multi_reduction <maximumf>, %441, %cst_123 [1] : vector<8x8xf32> to vector<8xf32>
    %443 = vector.shape_cast %442 : vector<8xf32> to vector<8x1xf32>
    %444 = vector.broadcast %443 : vector<8x1xf32> to vector<8x8xf32>
    %445 = arith.subf %441, %444 : vector<8x8xf32>
    %446 = math.exp %445 : vector<8x8xf32>
    %cst_124 = arith.constant dense<0.000000e+00> : vector<8xf32>
    %447 = vector.multi_reduction <add>, %446, %cst_124 [1] : vector<8x8xf32> to vector<8xf32>
    %448 = vector.shape_cast %447 : vector<8xf32> to vector<8x1xf32>
    %449 = tpu.reciprocal %448 {approx = true} : vector<8x1xf32> -> vector<8x1xf32>
    %450 = vector.broadcast %449 : vector<8x1xf32> to vector<8x8xf32>
    %451 = arith.mulf %446, %450 : vector<8x8xf32>
    %452 = arith.truncf %451 : vector<8x8xf32> to vector<8x8xbf16>
    %453 = vector.extract_strided_slice %396 {offsets = [0, 16], sizes = [8, 8], strides = [1, 1]} : vector<8x32xbf16> to vector<8x8xbf16>
    %cst_125 = arith.constant dense<0.000000e+00> : vector<8x8xf32>
    %454 = tpu.matmul %452, %453, %cst_125 {dimension_numbers = #tpu.dot_dimension_numbers<[1], [0], [0], [1], [0, 0, 1, 1], [], []>} : vector<8x8xbf16>, vector<8x8xbf16>, vector<8x8xf32> -> vector<8x8xf32>
    %455 = arith.truncf %454 : vector<8x8xf32> to vector<8x8xbf16>
    %456 = vector.extract_strided_slice %38 {offsets = [16, 0], sizes = [8, 32], strides = [1, 1]} : vector<32x32xbf16> to vector<8x32xbf16>
    %cst_126 = arith.constant dense<0.000000e+00> : vector<8x32xf32>
    %457 = tpu.matmul %455, %456, %cst_126 {dimension_numbers = #tpu.dot_dimension_numbers<[1], [0], [0], [1], [0, 0, 1, 1], [], []>} : vector<8x8xbf16>, vector<8x32xbf16>, vector<8x32xf32> -> vector<8x32xf32>
    %458 = arith.addf %437, %457 : vector<8x32xf32>
    %459 = vector.extract_strided_slice %384 {offsets = [0, 24], sizes = [8, 8], strides = [1, 1]} : vector<8x32xbf16> to vector<8x8xbf16>
    %460 = vector.extract_strided_slice %390 {offsets = [0, 24], sizes = [8, 8], strides = [1, 1]} : vector<8x32xbf16> to vector<8x8xbf16>
    %cst_127 = arith.constant dense<0.000000e+00> : vector<8x8xf32>
    %461 = tpu.matmul %459, %460, %cst_127 {dimension_numbers = #tpu.dot_dimension_numbers<[1], [1], [0], [0], [0, 0, 1, 0], [], []>} : vector<8x8xbf16>, vector<8x8xbf16>, vector<8x8xf32> -> vector<8x8xf32>
    %462 = arith.addf %461, %371 : vector<8x8xf32>
    %cst_128 = arith.constant dense<0xFF800000> : vector<8xf32>
    %463 = vector.multi_reduction <maximumf>, %462, %cst_128 [1] : vector<8x8xf32> to vector<8xf32>
    %464 = vector.shape_cast %463 : vector<8xf32> to vector<8x1xf32>
    %465 = vector.broadcast %464 : vector<8x1xf32> to vector<8x8xf32>
    %466 = arith.subf %462, %465 : vector<8x8xf32>
    %467 = math.exp %466 : vector<8x8xf32>
    %cst_129 = arith.constant dense<0.000000e+00> : vector<8xf32>
    %468 = vector.multi_reduction <add>, %467, %cst_129 [1] : vector<8x8xf32> to vector<8xf32>
    %469 = vector.shape_cast %468 : vector<8xf32> to vector<8x1xf32>
    %470 = tpu.reciprocal %469 {approx = true} : vector<8x1xf32> -> vector<8x1xf32>
    %471 = vector.broadcast %470 : vector<8x1xf32> to vector<8x8xf32>
    %472 = arith.mulf %467, %471 : vector<8x8xf32>
    %473 = arith.truncf %472 : vector<8x8xf32> to vector<8x8xbf16>
    %474 = vector.extract_strided_slice %396 {offsets = [0, 24], sizes = [8, 8], strides = [1, 1]} : vector<8x32xbf16> to vector<8x8xbf16>
    %cst_130 = arith.constant dense<0.000000e+00> : vector<8x8xf32>
    %475 = tpu.matmul %473, %474, %cst_130 {dimension_numbers = #tpu.dot_dimension_numbers<[1], [0], [0], [1], [0, 0, 1, 1], [], []>} : vector<8x8xbf16>, vector<8x8xbf16>, vector<8x8xf32> -> vector<8x8xf32>
    %476 = arith.truncf %475 : vector<8x8xf32> to vector<8x8xbf16>
    %477 = vector.extract_strided_slice %38 {offsets = [24, 0], sizes = [8, 32], strides = [1, 1]} : vector<32x32xbf16> to vector<8x32xbf16>
    %cst_131 = arith.constant dense<0.000000e+00> : vector<8x32xf32>
    %478 = tpu.matmul %476, %477, %cst_131 {dimension_numbers = #tpu.dot_dimension_numbers<[1], [0], [0], [1], [0, 0, 1, 1], [], []>} : vector<8x8xbf16>, vector<8x32xbf16>, vector<8x32xf32> -> vector<8x32xf32>
    %479 = arith.addf %458, %478 : vector<8x32xf32>
    %480 = arith.addf %367, %479 : vector<8x32xf32>
    %481 = vector.shape_cast %14 : vector<32xf32> to vector<1x32xf32>
    %482 = vector.broadcast %481 : vector<1x32xf32> to vector<8x32xf32>
    %483 = arith.addf %480, %482 : vector<8x32xf32>
    %cst_132 = arith.constant dense<0.000000e+00> : vector<8xf32>
    %484 = vector.multi_reduction <add>, %483, %cst_132 [1] : vector<8x32xf32> to vector<8xf32>
    %485 = vector.shape_cast %484 : vector<8xf32> to vector<8x1xf32>
    %cst_133 = arith.constant 3.200000e+01 : f32
    %486 = vector.broadcast %cst_133 : f32 to vector<8x1xf32>
    %487 = arith.divf %485, %486 : vector<8x1xf32>
    %488 = vector.broadcast %487 : vector<8x1xf32> to vector<8x32xf32>
    %489 = arith.subf %483, %488 : vector<8x32xf32>
    %490 = arith.mulf %489, %489 : vector<8x32xf32>
    %cst_134 = arith.constant dense<0.000000e+00> : vector<8xf32>
    %491 = vector.multi_reduction <add>, %490, %cst_134 [1] : vector<8x32xf32> to vector<8xf32>
    %492 = vector.shape_cast %491 : vector<8xf32> to vector<8x1xf32>
    %cst_135 = arith.constant 3.200000e+01 : f32
    %493 = vector.broadcast %cst_135 : f32 to vector<8x1xf32>
    %494 = arith.divf %492, %493 : vector<8x1xf32>
    %495 = vector.broadcast %487 : vector<8x1xf32> to vector<8x32xf32>
    %496 = arith.subf %483, %495 : vector<8x32xf32>
    %cst_136 = arith.constant 9.99999974E-6 : f32
    %497 = vector.broadcast %cst_136 : f32 to vector<8x1xf32>
    %498 = arith.addf %494, %497 : vector<8x1xf32>
    %499 = math.rsqrt %498 : vector<8x1xf32>
    %500 = vector.broadcast %499 : vector<8x1xf32> to vector<8x32xf32>
    %501 = arith.mulf %496, %500 : vector<8x32xf32>
    %502 = vector.shape_cast %24 : vector<32xf32> to vector<1x32xf32>
    %503 = vector.broadcast %502 : vector<1x32xf32> to vector<8x32xf32>
    %504 = arith.mulf %501, %503 : vector<8x32xf32>
    %505 = vector.shape_cast %26 : vector<32xf32> to vector<1x32xf32>
    %506 = vector.broadcast %505 : vector<1x32xf32> to vector<8x32xf32>
    %507 = arith.addf %504, %506 : vector<8x32xf32>
    %508 = arith.truncf %507 : vector<8x32xf32> to vector<8x32xbf16>
    %c0_137 = arith.constant 0 : index
    %c0_138 = arith.constant 0 : index
    %c0_139 = arith.constant 0 : index
    %509 = vector.load %arg7[%c0_137, %c0_138, %c0_139] : memref<1x32x32xbf16, #tpu.memory_space<vmem>>, vector<1x32x32xbf16>
    %510 = vector.shape_cast %509 : vector<1x32x32xbf16> to vector<32x32xbf16>
    %cst_140 = arith.constant dense<0.000000e+00> : vector<8x32xf32>
    %511 = tpu.matmul %508, %510, %cst_140 {dimension_numbers = #tpu.dot_dimension_numbers<[1], [0], [0], [1], [0, 0, 1, 1], [], []>} : vector<8x32xbf16>, vector<32x32xbf16>, vector<8x32xf32> -> vector<8x32xf32>
    %512 = arith.truncf %511 : vector<8x32xf32> to vector<8x32xbf16>
    %513 = arith.extf %512 : vector<8x32xbf16> to vector<8x32xf32>
    %514 = vector.shape_cast %16 : vector<32xf32> to vector<1x32xf32>
    %515 = vector.broadcast %514 : vector<1x32xf32> to vector<8x32xf32>
    %516 = arith.addf %513, %515 : vector<8x32xf32>
    %cst_141 = arith.constant 0.353553385 : f32
    %517 = vector.broadcast %cst_141 : f32 to vector<8x32xf32>
    %518 = arith.mulf %516, %517 : vector<8x32xf32>
    %519 = arith.truncf %518 : vector<8x32xf32> to vector<8x32xbf16>
    %520 = arith.truncf %369 : vector<4x32xf32> to vector<4x32xbf16>
    %c0_142 = arith.constant 0 : index
    %c0_143 = arith.constant 0 : index
    %c0_144 = arith.constant 0 : index
    %521 = vector.load %arg8[%c0_142, %c0_143, %c0_144] : memref<1x32x64xbf16, #tpu.memory_space<vmem>>, vector<1x32x64xbf16>
    %522 = vector.shape_cast %521 : vector<1x32x64xbf16> to vector<32x64xbf16>
    %cst_145 = arith.constant dense<0.000000e+00> : vector<4x64xf32>
    %523 = tpu.matmul %520, %522, %cst_145 {dimension_numbers = #tpu.dot_dimension_numbers<[1], [0], [0], [1], [0, 0, 1, 1], [], []>} : vector<4x32xbf16>, vector<32x64xbf16>, vector<4x64xf32> -> vector<4x64xf32>
    %524 = arith.truncf %523 : vector<4x64xf32> to vector<4x64xbf16>
    %525 = vector.extract_strided_slice %524 {offsets = [0, 0], sizes = [4, 32], strides = [1, 1]} : vector<4x64xbf16> to vector<4x32xbf16>
    %526 = arith.extf %525 : vector<4x32xbf16> to vector<4x32xf32>
    %527 = vector.shape_cast %18 : vector<32xf32> to vector<1x32xf32>
    %528 = vector.broadcast %527 : vector<1x32xf32> to vector<4x32xf32>
    %529 = arith.addf %526, %528 : vector<4x32xf32>
    %530 = arith.truncf %529 : vector<4x32xf32> to vector<4x32xbf16>
    %531 = vector.extract_strided_slice %524 {offsets = [0, 32], sizes = [4, 32], strides = [1, 1]} : vector<4x64xbf16> to vector<4x32xbf16>
    %532 = arith.extf %531 : vector<4x32xbf16> to vector<4x32xf32>
    %533 = vector.shape_cast %20 : vector<32xf32> to vector<1x32xf32>
    %534 = vector.broadcast %533 : vector<1x32xf32> to vector<4x32xf32>
    %535 = arith.addf %532, %534 : vector<4x32xf32>
    %536 = arith.truncf %535 : vector<4x32xf32> to vector<4x32xbf16>
    %537 = vector.extract_strided_slice %519 {offsets = [0, 0], sizes = [8, 8], strides = [1, 1]} : vector<8x32xbf16> to vector<8x8xbf16>
    %538 = vector.extract_strided_slice %530 {offsets = [0, 0], sizes = [4, 8], strides = [1, 1]} : vector<4x32xbf16> to vector<4x8xbf16>
    %cst_146 = arith.constant dense<0.000000e+00> : vector<8x4xf32>
    %539 = tpu.matmul %537, %538, %cst_146 {dimension_numbers = #tpu.dot_dimension_numbers<[1], [1], [0], [0], [0, 0, 1, 0], [], []>} : vector<8x8xbf16>, vector<4x8xbf16>, vector<8x4xf32> -> vector<8x4xf32>
    %cst_147 = arith.constant dense<0xFF800000> : vector<8xf32>
    %540 = vector.multi_reduction <maximumf>, %539, %cst_147 [1] : vector<8x4xf32> to vector<8xf32>
    %541 = vector.shape_cast %540 : vector<8xf32> to vector<8x1xf32>
    %542 = vector.broadcast %541 : vector<8x1xf32> to vector<8x4xf32>
    %543 = arith.subf %539, %542 : vector<8x4xf32>
    %544 = math.exp %543 : vector<8x4xf32>
    %cst_148 = arith.constant dense<0.000000e+00> : vector<8xf32>
    %545 = vector.multi_reduction <add>, %544, %cst_148 [1] : vector<8x4xf32> to vector<8xf32>
    %546 = vector.shape_cast %545 : vector<8xf32> to vector<8x1xf32>
    %547 = tpu.reciprocal %546 {approx = true} : vector<8x1xf32> -> vector<8x1xf32>
    %548 = vector.broadcast %547 : vector<8x1xf32> to vector<8x4xf32>
    %549 = arith.mulf %544, %548 : vector<8x4xf32>
    %550 = arith.truncf %549 : vector<8x4xf32> to vector<8x4xbf16>
    %551 = vector.extract_strided_slice %536 {offsets = [0, 0], sizes = [4, 8], strides = [1, 1]} : vector<4x32xbf16> to vector<4x8xbf16>
    %cst_149 = arith.constant dense<0.000000e+00> : vector<8x8xf32>
    %552 = tpu.matmul %550, %551, %cst_149 {dimension_numbers = #tpu.dot_dimension_numbers<[1], [0], [0], [1], [0, 0, 1, 1], [], []>} : vector<8x4xbf16>, vector<4x8xbf16>, vector<8x8xf32> -> vector<8x8xf32>
    %553 = arith.truncf %552 : vector<8x8xf32> to vector<8x8xbf16>
    %554 = vector.extract_strided_slice %40 {offsets = [0, 0], sizes = [8, 32], strides = [1, 1]} : vector<32x32xbf16> to vector<8x32xbf16>
    %cst_150 = arith.constant dense<0.000000e+00> : vector<8x32xf32>
    %555 = tpu.matmul %553, %554, %cst_150 {dimension_numbers = #tpu.dot_dimension_numbers<[1], [0], [0], [1], [0, 0, 1, 1], [], []>} : vector<8x8xbf16>, vector<8x32xbf16>, vector<8x32xf32> -> vector<8x32xf32>
    %556 = vector.extract_strided_slice %519 {offsets = [0, 8], sizes = [8, 8], strides = [1, 1]} : vector<8x32xbf16> to vector<8x8xbf16>
    %557 = vector.extract_strided_slice %530 {offsets = [0, 8], sizes = [4, 8], strides = [1, 1]} : vector<4x32xbf16> to vector<4x8xbf16>
    %cst_151 = arith.constant dense<0.000000e+00> : vector<8x4xf32>
    %558 = tpu.matmul %556, %557, %cst_151 {dimension_numbers = #tpu.dot_dimension_numbers<[1], [1], [0], [0], [0, 0, 1, 0], [], []>} : vector<8x8xbf16>, vector<4x8xbf16>, vector<8x4xf32> -> vector<8x4xf32>
    %cst_152 = arith.constant dense<0xFF800000> : vector<8xf32>
    %559 = vector.multi_reduction <maximumf>, %558, %cst_152 [1] : vector<8x4xf32> to vector<8xf32>
    %560 = vector.shape_cast %559 : vector<8xf32> to vector<8x1xf32>
    %561 = vector.broadcast %560 : vector<8x1xf32> to vector<8x4xf32>
    %562 = arith.subf %558, %561 : vector<8x4xf32>
    %563 = math.exp %562 : vector<8x4xf32>
    %cst_153 = arith.constant dense<0.000000e+00> : vector<8xf32>
    %564 = vector.multi_reduction <add>, %563, %cst_153 [1] : vector<8x4xf32> to vector<8xf32>
    %565 = vector.shape_cast %564 : vector<8xf32> to vector<8x1xf32>
    %566 = tpu.reciprocal %565 {approx = true} : vector<8x1xf32> -> vector<8x1xf32>
    %567 = vector.broadcast %566 : vector<8x1xf32> to vector<8x4xf32>
    %568 = arith.mulf %563, %567 : vector<8x4xf32>
    %569 = arith.truncf %568 : vector<8x4xf32> to vector<8x4xbf16>
    %570 = vector.extract_strided_slice %536 {offsets = [0, 8], sizes = [4, 8], strides = [1, 1]} : vector<4x32xbf16> to vector<4x8xbf16>
    %cst_154 = arith.constant dense<0.000000e+00> : vector<8x8xf32>
    %571 = tpu.matmul %569, %570, %cst_154 {dimension_numbers = #tpu.dot_dimension_numbers<[1], [0], [0], [1], [0, 0, 1, 1], [], []>} : vector<8x4xbf16>, vector<4x8xbf16>, vector<8x8xf32> -> vector<8x8xf32>
    %572 = arith.truncf %571 : vector<8x8xf32> to vector<8x8xbf16>
    %573 = vector.extract_strided_slice %40 {offsets = [8, 0], sizes = [8, 32], strides = [1, 1]} : vector<32x32xbf16> to vector<8x32xbf16>
    %cst_155 = arith.constant dense<0.000000e+00> : vector<8x32xf32>
    %574 = tpu.matmul %572, %573, %cst_155 {dimension_numbers = #tpu.dot_dimension_numbers<[1], [0], [0], [1], [0, 0, 1, 1], [], []>} : vector<8x8xbf16>, vector<8x32xbf16>, vector<8x32xf32> -> vector<8x32xf32>
    %575 = arith.addf %555, %574 : vector<8x32xf32>
    %576 = vector.extract_strided_slice %519 {offsets = [0, 16], sizes = [8, 8], strides = [1, 1]} : vector<8x32xbf16> to vector<8x8xbf16>
    %577 = vector.extract_strided_slice %530 {offsets = [0, 16], sizes = [4, 8], strides = [1, 1]} : vector<4x32xbf16> to vector<4x8xbf16>
    %cst_156 = arith.constant dense<0.000000e+00> : vector<8x4xf32>
    %578 = tpu.matmul %576, %577, %cst_156 {dimension_numbers = #tpu.dot_dimension_numbers<[1], [1], [0], [0], [0, 0, 1, 0], [], []>} : vector<8x8xbf16>, vector<4x8xbf16>, vector<8x4xf32> -> vector<8x4xf32>
    %cst_157 = arith.constant dense<0xFF800000> : vector<8xf32>
    %579 = vector.multi_reduction <maximumf>, %578, %cst_157 [1] : vector<8x4xf32> to vector<8xf32>
    %580 = vector.shape_cast %579 : vector<8xf32> to vector<8x1xf32>
    %581 = vector.broadcast %580 : vector<8x1xf32> to vector<8x4xf32>
    %582 = arith.subf %578, %581 : vector<8x4xf32>
    %583 = math.exp %582 : vector<8x4xf32>
    %cst_158 = arith.constant dense<0.000000e+00> : vector<8xf32>
    %584 = vector.multi_reduction <add>, %583, %cst_158 [1] : vector<8x4xf32> to vector<8xf32>
    %585 = vector.shape_cast %584 : vector<8xf32> to vector<8x1xf32>
    %586 = tpu.reciprocal %585 {approx = true} : vector<8x1xf32> -> vector<8x1xf32>
    %587 = vector.broadcast %586 : vector<8x1xf32> to vector<8x4xf32>
    %588 = arith.mulf %583, %587 : vector<8x4xf32>
    %589 = arith.truncf %588 : vector<8x4xf32> to vector<8x4xbf16>
    %590 = vector.extract_strided_slice %536 {offsets = [0, 16], sizes = [4, 8], strides = [1, 1]} : vector<4x32xbf16> to vector<4x8xbf16>
    %cst_159 = arith.constant dense<0.000000e+00> : vector<8x8xf32>
    %591 = tpu.matmul %589, %590, %cst_159 {dimension_numbers = #tpu.dot_dimension_numbers<[1], [0], [0], [1], [0, 0, 1, 1], [], []>} : vector<8x4xbf16>, vector<4x8xbf16>, vector<8x8xf32> -> vector<8x8xf32>
    %592 = arith.truncf %591 : vector<8x8xf32> to vector<8x8xbf16>
    %593 = vector.extract_strided_slice %40 {offsets = [16, 0], sizes = [8, 32], strides = [1, 1]} : vector<32x32xbf16> to vector<8x32xbf16>
    %cst_160 = arith.constant dense<0.000000e+00> : vector<8x32xf32>
    %594 = tpu.matmul %592, %593, %cst_160 {dimension_numbers = #tpu.dot_dimension_numbers<[1], [0], [0], [1], [0, 0, 1, 1], [], []>} : vector<8x8xbf16>, vector<8x32xbf16>, vector<8x32xf32> -> vector<8x32xf32>
    %595 = arith.addf %575, %594 : vector<8x32xf32>
    %596 = vector.extract_strided_slice %519 {offsets = [0, 24], sizes = [8, 8], strides = [1, 1]} : vector<8x32xbf16> to vector<8x8xbf16>
    %597 = vector.extract_strided_slice %530 {offsets = [0, 24], sizes = [4, 8], strides = [1, 1]} : vector<4x32xbf16> to vector<4x8xbf16>
    %cst_161 = arith.constant dense<0.000000e+00> : vector<8x4xf32>
    %598 = tpu.matmul %596, %597, %cst_161 {dimension_numbers = #tpu.dot_dimension_numbers<[1], [1], [0], [0], [0, 0, 1, 0], [], []>} : vector<8x8xbf16>, vector<4x8xbf16>, vector<8x4xf32> -> vector<8x4xf32>
    %cst_162 = arith.constant dense<0xFF800000> : vector<8xf32>
    %599 = vector.multi_reduction <maximumf>, %598, %cst_162 [1] : vector<8x4xf32> to vector<8xf32>
    %600 = vector.shape_cast %599 : vector<8xf32> to vector<8x1xf32>
    %601 = vector.broadcast %600 : vector<8x1xf32> to vector<8x4xf32>
    %602 = arith.subf %598, %601 : vector<8x4xf32>
    %603 = math.exp %602 : vector<8x4xf32>
    %cst_163 = arith.constant dense<0.000000e+00> : vector<8xf32>
    %604 = vector.multi_reduction <add>, %603, %cst_163 [1] : vector<8x4xf32> to vector<8xf32>
    %605 = vector.shape_cast %604 : vector<8xf32> to vector<8x1xf32>
    %606 = tpu.reciprocal %605 {approx = true} : vector<8x1xf32> -> vector<8x1xf32>
    %607 = vector.broadcast %606 : vector<8x1xf32> to vector<8x4xf32>
    %608 = arith.mulf %603, %607 : vector<8x4xf32>
    %609 = arith.truncf %608 : vector<8x4xf32> to vector<8x4xbf16>
    %610 = vector.extract_strided_slice %536 {offsets = [0, 24], sizes = [4, 8], strides = [1, 1]} : vector<4x32xbf16> to vector<4x8xbf16>
    %cst_164 = arith.constant dense<0.000000e+00> : vector<8x8xf32>
    %611 = tpu.matmul %609, %610, %cst_164 {dimension_numbers = #tpu.dot_dimension_numbers<[1], [0], [0], [1], [0, 0, 1, 1], [], []>} : vector<8x4xbf16>, vector<4x8xbf16>, vector<8x8xf32> -> vector<8x8xf32>
    %612 = arith.truncf %611 : vector<8x8xf32> to vector<8x8xbf16>
    %613 = vector.extract_strided_slice %40 {offsets = [24, 0], sizes = [8, 32], strides = [1, 1]} : vector<32x32xbf16> to vector<8x32xbf16>
    %cst_165 = arith.constant dense<0.000000e+00> : vector<8x32xf32>
    %614 = tpu.matmul %612, %613, %cst_165 {dimension_numbers = #tpu.dot_dimension_numbers<[1], [0], [0], [1], [0, 0, 1, 1], [], []>} : vector<8x8xbf16>, vector<8x32xbf16>, vector<8x32xf32> -> vector<8x32xf32>
    %615 = arith.addf %595, %614 : vector<8x32xf32>
    %616 = arith.addf %507, %615 : vector<8x32xf32>
    %617 = vector.shape_cast %22 : vector<32xf32> to vector<1x32xf32>
    %618 = vector.broadcast %617 : vector<1x32xf32> to vector<8x32xf32>
    %619 = arith.addf %616, %618 : vector<8x32xf32>
    %cst_166 = arith.constant dense<0.000000e+00> : vector<8xf32>
    %620 = vector.multi_reduction <add>, %619, %cst_166 [1] : vector<8x32xf32> to vector<8xf32>
    %621 = vector.shape_cast %620 : vector<8xf32> to vector<8x1xf32>
    %cst_167 = arith.constant 3.200000e+01 : f32
    %622 = vector.broadcast %cst_167 : f32 to vector<8x1xf32>
    %623 = arith.divf %621, %622 : vector<8x1xf32>
    %624 = vector.broadcast %623 : vector<8x1xf32> to vector<8x32xf32>
    %625 = arith.subf %619, %624 : vector<8x32xf32>
    %626 = arith.mulf %625, %625 : vector<8x32xf32>
    %cst_168 = arith.constant dense<0.000000e+00> : vector<8xf32>
    %627 = vector.multi_reduction <add>, %626, %cst_168 [1] : vector<8x32xf32> to vector<8xf32>
    %628 = vector.shape_cast %627 : vector<8xf32> to vector<8x1xf32>
    %cst_169 = arith.constant 3.200000e+01 : f32
    %629 = vector.broadcast %cst_169 : f32 to vector<8x1xf32>
    %630 = arith.divf %628, %629 : vector<8x1xf32>
    %631 = vector.broadcast %623 : vector<8x1xf32> to vector<8x32xf32>
    %632 = arith.subf %619, %631 : vector<8x32xf32>
    %cst_170 = arith.constant 9.99999974E-6 : f32
    %633 = vector.broadcast %cst_170 : f32 to vector<8x1xf32>
    %634 = arith.addf %630, %633 : vector<8x1xf32>
    %635 = math.rsqrt %634 : vector<8x1xf32>
    %636 = vector.broadcast %635 : vector<8x1xf32> to vector<8x32xf32>
    %637 = arith.mulf %632, %636 : vector<8x32xf32>
    %638 = vector.shape_cast %28 : vector<32xf32> to vector<1x32xf32>
    %639 = vector.broadcast %638 : vector<1x32xf32> to vector<8x32xf32>
    %640 = arith.mulf %637, %639 : vector<8x32xf32>
    %641 = vector.shape_cast %30 : vector<32xf32> to vector<1x32xf32>
    %642 = vector.broadcast %641 : vector<1x32xf32> to vector<8x32xf32>
    %643 = arith.addf %640, %642 : vector<8x32xf32>
    %644 = arith.truncf %643 : vector<8x32xf32> to vector<8x32xbf16>
    %c0_171 = arith.constant 0 : index
    %c0_172 = arith.constant 0 : index
    %c0_173 = arith.constant 0 : index
    %645 = vector.load %arg10[%c0_171, %c0_172, %c0_173] : memref<1x32x128xbf16, #tpu.memory_space<vmem>>, vector<1x32x128xbf16>
    %646 = vector.shape_cast %645 : vector<1x32x128xbf16> to vector<32x128xbf16>
    %cst_174 = arith.constant dense<0.000000e+00> : vector<8x128xf32>
    %647 = tpu.matmul %644, %646, %cst_174 {dimension_numbers = #tpu.dot_dimension_numbers<[1], [0], [0], [1], [0, 0, 1, 1], [], []>} : vector<8x32xbf16>, vector<32x128xbf16>, vector<8x128xf32> -> vector<8x128xf32>
    %648 = vector.shape_cast %6 : vector<128xf32> to vector<1x128xf32>
    %649 = vector.broadcast %648 : vector<1x128xf32> to vector<8x128xf32>
    %650 = arith.addf %647, %649 : vector<8x128xf32>
    %cst_175 = arith.constant 0.000000e+00 : f32
    %651 = vector.broadcast %cst_175 : f32 to vector<8x128xf32>
    %652 = arith.maximumf %650, %651 : vector<8x128xf32>
    %653 = arith.truncf %652 : vector<8x128xf32> to vector<8x128xbf16>
    %c0_176 = arith.constant 0 : index
    %c0_177 = arith.constant 0 : index
    %c0_178 = arith.constant 0 : index
    %654 = vector.load %arg11[%c0_176, %c0_177, %c0_178] : memref<1x128x32xbf16, #tpu.memory_space<vmem>>, vector<1x128x32xbf16>
    %655 = vector.shape_cast %654 : vector<1x128x32xbf16> to vector<128x32xbf16>
    %cst_179 = arith.constant dense<0.000000e+00> : vector<8x32xf32>
    %656 = tpu.matmul %653, %655, %cst_179 {dimension_numbers = #tpu.dot_dimension_numbers<[1], [0], [0], [1], [0, 0, 1, 1], [], []>} : vector<8x128xbf16>, vector<128x32xbf16>, vector<8x32xf32> -> vector<8x32xf32>
    %657 = vector.shape_cast %36 : vector<32xf32> to vector<1x32xf32>
    %658 = vector.broadcast %657 : vector<1x32xf32> to vector<8x32xf32>
    %659 = arith.addf %656, %658 : vector<8x32xf32>
    %660 = arith.addf %643, %659 : vector<8x32xf32>
    %cst_180 = arith.constant dense<0.000000e+00> : vector<8xf32>
    %661 = vector.multi_reduction <add>, %660, %cst_180 [1] : vector<8x32xf32> to vector<8xf32>
    %662 = vector.shape_cast %661 : vector<8xf32> to vector<8x1xf32>
    %cst_181 = arith.constant 3.200000e+01 : f32
    %663 = vector.broadcast %cst_181 : f32 to vector<8x1xf32>
    %664 = arith.divf %662, %663 : vector<8x1xf32>
    %665 = vector.broadcast %664 : vector<8x1xf32> to vector<8x32xf32>
    %666 = arith.subf %660, %665 : vector<8x32xf32>
    %667 = arith.mulf %666, %666 : vector<8x32xf32>
    %cst_182 = arith.constant dense<0.000000e+00> : vector<8xf32>
    %668 = vector.multi_reduction <add>, %667, %cst_182 [1] : vector<8x32xf32> to vector<8xf32>
    %669 = vector.shape_cast %668 : vector<8xf32> to vector<8x1xf32>
    %cst_183 = arith.constant 3.200000e+01 : f32
    %670 = vector.broadcast %cst_183 : f32 to vector<8x1xf32>
    %671 = arith.divf %669, %670 : vector<8x1xf32>
    %672 = vector.broadcast %664 : vector<8x1xf32> to vector<8x32xf32>
    %673 = arith.subf %660, %672 : vector<8x32xf32>
    %cst_184 = arith.constant 9.99999974E-6 : f32
    %674 = vector.broadcast %cst_184 : f32 to vector<8x1xf32>
    %675 = arith.addf %671, %674 : vector<8x1xf32>
    %676 = math.rsqrt %675 : vector<8x1xf32>
    %677 = vector.broadcast %676 : vector<8x1xf32> to vector<8x32xf32>
    %678 = arith.mulf %673, %677 : vector<8x32xf32>
    %679 = vector.shape_cast %32 : vector<32xf32> to vector<1x32xf32>
    %680 = vector.broadcast %679 : vector<1x32xf32> to vector<8x32xf32>
    %681 = arith.mulf %678, %680 : vector<8x32xf32>
    %682 = vector.shape_cast %34 : vector<32xf32> to vector<1x32xf32>
    %683 = vector.broadcast %682 : vector<1x32xf32> to vector<8x32xf32>
    %684 = arith.addf %681, %683 : vector<8x32xf32>
    %c1_185 = arith.constant 1 : index
    %c0_186 = arith.constant 0 : index
    %c0_187 = arith.constant 0 : index
    %685 = vector.load %arg14[%c1_185, %c0_186, %c0_187] : memref<2x8x32xf32, #tpu.memory_space<vmem>>, vector<1x8x32xf32>
    %686 = vector.shape_cast %685 : vector<1x8x32xf32> to vector<8x32xf32>
    %687 = vector.shape_cast %684 : vector<8x32xf32> to vector<1x8x32xf32>
    tpu.vector_store %arg14[%c1_185, %c0_186, %c0_187], %687 {strides = array<i32>} : memref<2x8x32xf32, #tpu.memory_space<vmem>>, vector<1x8x32xf32>,
    %c1_i32_188 = arith.constant 1 : i32
    %688 = arith.cmpi eq, %arg1, %c1_i32_188 : i32
    %689 = arith.extui %688 : i1 to i32
    %c0_i32_189 = arith.constant 0 : i32
    %690 = arith.cmpi ne, %689, %c0_i32_189 : i32
    scf.if %690 {
      %c1_190 = arith.constant 1 : index
      %c0_191 = arith.constant 0 : index
      %c0_192 = arith.constant 0 : index
      %691 = vector.load %arg13[%c1_190, %c0_191, %c0_192] : memref<2x8x32xf32, #tpu.memory_space<vmem>>, vector<1x8x32xf32>
      %692 = vector.shape_cast %691 : vector<1x8x32xf32> to vector<8x32xf32>
      %693 = vector.shape_cast %684 : vector<8x32xf32> to vector<1x8x32xf32>
      tpu.vector_store %arg13[%c1_190, %c0_191, %c0_192], %693 {strides = array<i32>} : memref<2x8x32xf32, #tpu.memory_space<vmem>>, vector<1x8x32xf32>,
    } else {
    }
    return
  }
  func.func @transform_0(%arg0: i32, %arg1: i32) -> (i32, i32, i32) {
    %c0_i32 = arith.constant 0 : i32
    %c0_i32_0 = arith.constant 0 : i32
    %c0_i32_1 = arith.constant 0 : i32
    return %arg0, %c0_i32, %c0_i32_0 : i32, i32, i32
  }
  func.func @transform_1(%arg0: i32, %arg1: i32) -> (i32, i32, i32) {
    %c0_i32 = arith.constant 0 : i32
    %c0_i32_0 = arith.constant 0 : i32
    %c0_i32_1 = arith.constant 0 : i32
    return %arg0, %c0_i32, %c0_i32_0 : i32, i32, i32
  }
  func.func @transform_2(%arg0: i32, %arg1: i32) -> (i32, i32, i32) {
    %c0_i32 = arith.constant 0 : i32
    %c0_i32_0 = arith.constant 0 : i32
    %c0_i32_1 = arith.constant 0 : i32
    return %arg0, %c0_i32, %c0_i32_0 : i32, i32, i32
  }
  func.func @transform_3(%arg0: i32, %arg1: i32) -> (i32, i32, i32) {
    %c0_i32 = arith.constant 0 : i32
    %c0_i32_0 = arith.constant 0 : i32
    %c0_i32_1 = arith.constant 0 : i32
    return %arg1, %c0_i32, %c0_i32_0 : i32, i32, i32
  }
  func.func @transform_4(%arg0: i32, %arg1: i32) -> (i32, i32, i32) {
    %c0_i32 = arith.constant 0 : i32
    %c0_i32_0 = arith.constant 0 : i32
    %c0_i32_1 = arith.constant 0 : i32
    return %arg1, %c0_i32, %c0_i32_0 : i32, i32, i32
  }
  func.func @transform_5(%arg0: i32, %arg1: i32) -> (i32, i32, i32) {
    %c0_i32 = arith.constant 0 : i32
    %c0_i32_0 = arith.constant 0 : i32
    %c0_i32_1 = arith.constant 0 : i32
    return %arg1, %c0_i32, %c0_i32_0 : i32, i32, i32
  }
  func.func @transform_6(%arg0: i32, %arg1: i32) -> (i32, i32, i32) {
    %c0_i32 = arith.constant 0 : i32
    %c0_i32_0 = arith.constant 0 : i32
    %c0_i32_1 = arith.constant 0 : i32
    return %arg1, %c0_i32, %c0_i32_0 : i32, i32, i32
  }
  func.func @transform_7(%arg0: i32, %arg1: i32) -> (i32, i32, i32) {
    %c0_i32 = arith.constant 0 : i32
    %c0_i32_0 = arith.constant 0 : i32
    %c0_i32_1 = arith.constant 0 : i32
    return %arg1, %c0_i32, %c0_i32_0 : i32, i32, i32
  }
  func.func @transform_8(%arg0: i32, %arg1: i32) -> (i32, i32, i32) {
    %c0_i32 = arith.constant 0 : i32
    %c0_i32_0 = arith.constant 0 : i32
    %c0_i32_1 = arith.constant 0 : i32
    return %arg1, %c0_i32, %c0_i32_0 : i32, i32, i32
  }
  func.func @transform_9(%arg0: i32, %arg1: i32) -> (i32, i32, i32) {
    %c0_i32 = arith.constant 0 : i32
    %c0_i32_0 = arith.constant 0 : i32
    %c0_i32_1 = arith.constant 0 : i32
    return %arg1, %c0_i32, %c0_i32_0 : i32, i32, i32
  }
  func.func @transform_10(%arg0: i32, %arg1: i32) -> (i32, i32, i32) {
    %c0_i32 = arith.constant 0 : i32
    %c0_i32_0 = arith.constant 0 : i32
    %c0_i32_1 = arith.constant 0 : i32
    return %arg1, %c0_i32, %c0_i32_0 : i32, i32, i32
  }
  func.func @transform_11(%arg0: i32, %arg1: i32) -> (i32, i32, i32) {
    %c0_i32 = arith.constant 0 : i32
    %c0_i32_0 = arith.constant 0 : i32
    %c0_i32_1 = arith.constant 0 : i32
    return %arg0, %c0_i32, %c0_i32_0 : i32, i32, i32
  }
}

</mosaic_0001>

<llo_original>
// kernel: vision_encoder_decoder.4
$region0: #{vision_encoder_decoder.4}
  #allocation0 [shape = 'u32[]', space=smem, size = 0x4, offset = 0x4, fixed_abs, tag = 'smem constant byte address 0x4 - core index']
  #allocation1 [shape = 'u32[144,128]{1,0:T(1,128)}', space=vmem, size = 0x12000, scoped, tag = 'internal scratch']
  %s0 = inlined_call_operand.hbm [shape: f32[2,4,256], index: 0, kind: input, shape index: {}]
  %s1 = inlined_call_operand.hbm [shape: bf16[256,32], index: 1, kind: input, shape index: {}]
  %s2 = inlined_call_operand.hbm [shape: f32[4,32], index: 2, kind: input, shape index: {}]
  %s3 = inlined_call_operand.hbm [shape: f32[2,4,32], index: 3, kind: output, shape index: {}]
  %s4 = sld [smem:[#allocation0]]
  $region34: #{vision_encoder_decoder.4} parent=0
    _
  %s6 = ssub.s32 1, %s4
  %s7 = scalar_select 0, %s6, %s4
  $region1: #{vision_encoder_decoder.4} parent=0
    #allocation2 [shape = 'u8[8192]{0}', space=vmem, size = 0x2000, scoped, tag = 'input window, operand 0, single buffered']
    #allocation3 [shape = 's32[1]{0}', space=sflag, size = 0x4, scoped, tag = 'scoped memory for vision_encoder_decoder.4']
    #allocation4 [shape = 's32[1]{0}', space=sflag, size = 0x4, scoped, tag = 'scoped memory for vision_encoder_decoder.4']
    #allocation5 [shape = 'u8[65536]{0}', space=vmem, size = 0x10000, scoped, tag = 'input window, operand 1, single buffered']
    #allocation6 [shape = 's32[1]{0}', space=sflag, size = 0x4, scoped, tag = 'scoped memory for vision_encoder_decoder.4']
    #allocation7 [shape = 'u8[2048]{0}', space=vmem, size = 0x800, scoped, tag = 'input window, operand 2, single buffered']
    #allocation8 [shape = 'u8[4096]{0}', space=vmem, size = 0x1000, scoped, tag = 'output window, operand 0, single buffered']
    %8 = vsyncpa [#allocation3], 0
    %9 = vsyncpa [#allocation6], 0
    %10 = vsyncpa [#allocation4], 0
    // Predicated region
    $region2: #{vision_encoder_decoder.4} parent=1 // pred_check
      _
    $region3: #{vision_encoder_decoder.4} parent=1 // pred_check_branch
      %12 = sbr.rel (0) target = $region5
    $region4: #{vision_encoder_decoder.4} parent=1 // pred_region
      %s14 = ssub.s32 256, 256
      %15 = vsyncadd [#allocation3], %s14
      %s16 = sshll.u32 [#allocation2], 4
      %s17 = int_to_ptr.vmem [resolvable:$true] %s16
      %22 = dma.hbm_to_vmem [thread:$0]  %s0, 256, %s17, [#allocation3], 128, 128, 8
    $region5: #{vision_encoder_decoder.4} parent=1 // pred_fallthru
      _
    // Predicated region
    $region6: #{vision_encoder_decoder.4} parent=1 // pred_check
      _
    $region7: #{vision_encoder_decoder.4} parent=1 // pred_check_branch
      %24 = sbr.rel (0) target = $region9
    $region8: #{vision_encoder_decoder.4} parent=1 // pred_region
      %s26 = ssub.s32 2048, 2048
      %27 = vsyncadd [#allocation6], %s26
      %s28 = sshll.u32 [#allocation5], 4
      %s29 = int_to_ptr.vmem [resolvable:$true] %s28
      %34 = dma.hbm_to_vmem [thread:$0]  %s1, 2048, %s29, [#allocation6], 64, 64, 4
    $region9: #{vision_encoder_decoder.4} parent=1 // pred_fallthru
      _
    // Predicated region
    $region10: #{vision_encoder_decoder.4} parent=1 // pred_check
      _
    $region11: #{vision_encoder_decoder.4} parent=1 // pred_check_branch
      %36 = sbr.rel (0) target = $region13
    $region12: #{vision_encoder_decoder.4} parent=1 // pred_region
      %s38 = ssub.s32 64, 64
      %39 = vsyncadd [#allocation6], %s38
      %s41 = sshll.u32 [#allocation7], 4
      %s42 = int_to_ptr.vmem [resolvable:$true] %s41
      %44 = dma.hbm_to_vmem [thread:$0]  %s2, 64, %s42, [#allocation6]
    $region13: #{vision_encoder_decoder.4} parent=1 // pred_fallthru
      _
    // Predicated region
    $region14: #{vision_encoder_decoder.4} parent=1 // pred_check
      _
    $region15: #{vision_encoder_decoder.4} parent=1 // pred_check_branch
      %46 = sbr.rel (0) target = $region17
    $region16: #{vision_encoder_decoder.4} parent=1 // pred_region
      %47 = dma.done [#allocation3], 256
    $region17: #{vision_encoder_decoder.4} parent=1 // pred_fallthru
      _
    // Predicated region
    $region18: #{vision_encoder_decoder.4} parent=1 // pred_check
      _
    $region19: #{vision_encoder_decoder.4} parent=1 // pred_check_branch
      %49 = sbr.rel (0) target = $region21
    $region20: #{vision_encoder_decoder.4} parent=1 // pred_region
      %50 = dma.done [#allocation6], 2048
    $region21: #{vision_encoder_decoder.4} parent=1 // pred_fallthru
      _
    // Predicated region
    $region22: #{vision_encoder_decoder.4} parent=1 // pred_check
      _
    $region23: #{vision_encoder_decoder.4} parent=1 // pred_check_branch
      %52 = sbr.rel (0) target = $region25
    $region24: #{vision_encoder_decoder.4} parent=1 // pred_region
      %53 = dma.done [#allocation6], 64
    $region25: #{vision_encoder_decoder.4} parent=1 // pred_fallthru
      _
    %v55 = vld [vmem:[#allocation5] sm:$0xf]
    %v56 = vld [vmem:[#allocation5 + $0x4] sm:$0xf]
    %v57 = vld [vmem:[#allocation5 + $0x8] sm:$0xf]
    %v58 = vld [vmem:[#allocation5 + $0xc] sm:$0xf]
    %v59 = vld [vmem:[#allocation5 + $0x10] sm:$0xf]
    %v60 = vld [vmem:[#allocation5 + $0x14] sm:$0xf]
    %v61 = vld [vmem:[#allocation5 + $0x18] sm:$0xf]
    %v62 = vld [vmem:[#allocation5 + $0x1c] sm:$0xf]
    %v63 = vld [vmem:[#allocation5 + $0x20] sm:$0xf]
    %v64 = vld [vmem:[#allocation5 + $0x24] sm:$0xf]
    %v65 = vld [vmem:[#allocation5 + $0x28] sm:$0xf]
    %v66 = vld [vmem:[#allocation5 + $0x2c] sm:$0xf]
    %v67 = vld [vmem:[#allocation5 + $0x30] sm:$0xf]
    %v68 = vld [vmem:[#allocation5 + $0x34] sm:$0xf]
    %v69 = vld [vmem:[#allocation5 + $0x38] sm:$0xf]
    %v70 = vld [vmem:[#allocation5 + $0x3c] sm:$0xf]
    %v71 = vld [vmem:[#allocation5 + $0x40] sm:$0xf]
    %v72 = vld [vmem:[#allocation5 + $0x44] sm:$0xf]
    %v73 = vld [vmem:[#allocation5 + $0x48] sm:$0xf]
    %v74 = vld [vmem:[#allocation5 + $0x4c] sm:$0xf]
    %v75 = vld [vmem:[#allocation5 + $0x50] sm:$0xf]
    %v76 = vld [vmem:[#allocation5 + $0x54] sm:$0xf]
    %v77 = vld [vmem:[#allocation5 + $0x58] sm:$0xf]
    %v78 = vld [vmem:[#allocation5 + $0x5c] sm:$0xf]
    %v79 = vld [vmem:[#allocation5 + $0x60] sm:$0xf]
    %v80 = vld [vmem:[#allocation5 + $0x64] sm:$0xf]
    %v81 = vld [vmem:[#allocation5 + $0x68] sm:$0xf]
    %v82 = vld [vmem:[#allocation5 + $0x6c] sm:$0xf]
    %v83 = vld [vmem:[#allocation5 + $0x70] sm:$0xf]
    %v84 = vld [vmem:[#allocation5 + $0x74] sm:$0xf]
    %v85 = vld [vmem:[#allocation5 + $0x78] sm:$0xf]
    %v86 = vld [vmem:[#allocation5 + $0x7c] sm:$0xf]
    %v87 = vld [vmem:[#allocation7] sm:$0xf]
    %v88 = vld [vmem:[#allocation2] sm:$0xff]
    %v90 = vcombine.high %v88, %v88
    %v92 = vpack.c.bf16 %v88, %v88
    %v93 = vpack.c.bf16 %v90, %v90
    %v126 = vunpack.c.l.b16 %v55
    %v127 = vunpack.c.l.b16 %v56
    %v128 = vunpack.c.l.b16 %v57
    %v129 = vunpack.c.l.b16 %v58
    %v130 = vunpack.c.l.b16 %v59
    %v131 = vunpack.c.l.b16 %v60
    %v132 = vunpack.c.l.b16 %v61
    %v133 = vunpack.c.l.b16 %v62
    %v134 = vunpack.c.l.b16 %v63
    %v135 = vunpack.c.l.b16 %v64
    %v136 = vunpack.c.l.b16 %v65
    %v137 = vunpack.c.l.b16 %v66
    %v138 = vunpack.c.l.b16 %v67
    %v139 = vunpack.c.l.b16 %v68
    %v140 = vunpack.c.l.b16 %v69
    %v141 = vunpack.c.l.b16 %v70
    %v142 = vunpack.c.l.b16 %v71
    %v143 = vunpack.c.l.b16 %v72
    %v144 = vunpack.c.l.b16 %v73
    %v145 = vunpack.c.l.b16 %v74
    %v146 = vunpack.c.l.b16 %v75
    %v147 = vunpack.c.l.b16 %v76
    %v148 = vunpack.c.l.b16 %v77
    %v149 = vunpack.c.l.b16 %v78
    %v150 = vunpack.c.l.b16 %v79
    %v151 = vunpack.c.l.b16 %v80
    %v152 = vunpack.c.l.b16 %v81
    %v153 = vunpack.c.l.b16 %v82
    %v154 = vunpack.c.l.b16 %v83
    %v155 = vunpack.c.l.b16 %v84
    %v156 = vunpack.c.l.b16 %v85
    %v157 = vunpack.c.l.b16 %v86
    %v158 = vpack.c.b16 %v127, %v126
    %v159 = vpack.c.b16 %v129, %v128
    %v160 = vpack.c.b16 %v131, %v130
    %v161 = vpack.c.b16 %v133, %v132
    %v162 = vpack.c.b16 %v135, %v134
    %v163 = vpack.c.b16 %v137, %v136
    %v164 = vpack.c.b16 %v139, %v138
    %v165 = vpack.c.b16 %v141, %v140
    %v166 = vpack.c.b16 %v143, %v142
    %v167 = vpack.c.b16 %v145, %v144
    %v168 = vpack.c.b16 %v147, %v146
    %v169 = vpack.c.b16 %v149, %v148
    %v170 = vpack.c.b16 %v151, %v150
    %v171 = vpack.c.b16 %v153, %v152
    %v172 = vpack.c.b16 %v155, %v154
    %v173 = vpack.c.b16 %v157, %v156
    %190 = vmatprep.subr.bf16.mxu0 0
    %191 = vmatpush1.bf16.msra.mxu0 %v158
    %192 = vmatprep.subr.bf16.mxu0 0
    %193 = vmatpush1.bf16.msra.mxu0 %v159
    %194 = vmatprep.subr.bf16.mxu0 0
    %195 = vmatpush1.bf16.msra.mxu0 %v160
    %196 = vmatprep.subr.bf16.mxu0 0
    %197 = vmatpush1.bf16.msra.mxu0 %v161
    %198 = vmatprep.subr.bf16.mxu0 0
    %199 = vmatpush1.bf16.msra.mxu0 %v162
    %200 = vmatprep.subr.bf16.mxu0 0
    %201 = vmatpush1.bf16.msra.mxu0 %v163
    %202 = vmatprep.subr.bf16.mxu0 0
    %203 = vmatpush1.bf16.msra.mxu0 %v164
    %204 = vmatprep.subr.bf16.mxu0 0
    %205 = vmatpush1.bf16.msra.mxu0 %v165
    %206 = vmatprep.subr.bf16.mxu0 0
    %207 = vmatpush1.bf16.msra.mxu0 %v166
    %208 = vmatprep.subr.bf16.mxu0 0
    %209 = vmatpush1.bf16.msra.mxu0 %v167
    %210 = vmatprep.subr.bf16.mxu0 0
    %211 = vmatpush1.bf16.msra.mxu0 %v168
    %212 = vmatprep.subr.bf16.mxu0 0
    %213 = vmatpush1.bf16.msra.mxu0 %v169
    %214 = vmatprep.subr.bf16.mxu0 0
    %215 = vmatpush1.bf16.msra.mxu0 %v170
    %216 = vmatprep.subr.bf16.mxu0 0
    %217 = vmatpush1.bf16.msra.mxu0 %v171
    %218 = vmatprep.subr.bf16.mxu0 0
    %219 = vmatpush1.bf16.msra.mxu0 %v172
    %220 = vmatprep.subr.bf16.mxu0 0
    %221 = vmatpush1.bf16.msra.mxu0 %v173
    %222 = vmatprep.mubr.bf16.mxu0 %v93
    %223 = vmatmul.mubr.bf16.gmra.mrb[0].mxu0 %v92
    %v224 = vpop.f32.mrb[0].mxu0
    %v225 = vadd.f32 %v87, %v224
    %v226 = vpop.f32.mrb[0].mxu0
    %v227 = vpop.f32.mrb[0].mxu0
    %v228 = vpop.f32.mrb[0].mxu0
    %229 = vdwg.mxu0
    %vm230 = vcmask 257024
    %231 = vst.msk [vmem:[#allocation8] sm:$0xf] %vm230, %v225
    %s232 = scalar_lea.vmem [#allocation2], 8
    %v233 = vld [vmem:[%s232] sm:$0xff]
    %v235 = vcombine.high %v233, %v233
    %v237 = vpack.c.bf16 %v233, %v233
    %v238 = vpack.c.bf16 %v235, %v235
    %239 = vmatprep.subr.bf16.mxu0 0
    %240 = vmatpush1.bf16.msra.mxu0 %v158
    %241 = vmatprep.subr.bf16.mxu0 0
    %242 = vmatpush1.bf16.msra.mxu0 %v159
    %243 = vmatprep.subr.bf16.mxu0 0
    %244 = vmatpush1.bf16.msra.mxu0 %v160
    %245 = vmatprep.subr.bf16.mxu0 0
    %246 = vmatpush1.bf16.msra.mxu0 %v161
    %247 = vmatprep.subr.bf16.mxu0 0
    %248 = vmatpush1.bf16.msra.mxu0 %v162
    %249 = vmatprep.subr.bf16.mxu0 0
    %250 = vmatpush1.bf16.msra.mxu0 %v163
    %251 = vmatprep.subr.bf16.mxu0 0
    %252 = vmatpush1.bf16.msra.mxu0 %v164
    %253 = vmatprep.subr.bf16.mxu0 0
    %254 = vmatpush1.bf16.msra.mxu0 %v165
    %255 = vmatprep.subr.bf16.mxu0 0
    %256 = vmatpush1.bf16.msra.mxu0 %v166
    %257 = vmatprep.subr.bf16.mxu0 0
    %258 = vmatpush1.bf16.msra.mxu0 %v167
    %259 = vmatprep.subr.bf16.mxu0 0
    %260 = vmatpush1.bf16.msra.mxu0 %v168
    %261 = vmatprep.subr.bf16.mxu0 0
    %262 = vmatpush1.bf16.msra.mxu0 %v169
    %263 = vmatprep.subr.bf16.mxu0 0
    %264 = vmatpush1.bf16.msra.mxu0 %v170
    %265 = vmatprep.subr.bf16.mxu0 0
    %266 = vmatpush1.bf16.msra.mxu0 %v171
    %267 = vmatprep.subr.bf16.mxu0 0
    %268 = vmatpush1.bf16.msra.mxu0 %v172
    %269 = vmatprep.subr.bf16.mxu0 0
    %270 = vmatpush1.bf16.msra.mxu0 %v173
    %271 = vmatprep.mubr.bf16.mxu0 %v238
    %272 = vmatmul.mubr.bf16.gmra.mrb[0].mxu0 %v237
    %v273 = vpop.f32.mrb[0].mxu0
    %v274 = vadd.f32 %v87, %v273
    %v275 = vpop.f32.mrb[0].mxu0
    %v276 = vpop.f32.mrb[0].mxu0
    %v277 = vpop.f32.mrb[0].mxu0
    %278 = vdwg.mxu0
    %s279 = scalar_lea.vmem [#allocation8], 4
    %280 = vst.msk [vmem:[%s279] sm:$0xf] %vm230, %v274
    // Predicated region
    $region26: #{vision_encoder_decoder.4} parent=1 // pred_check
      _
    $region27: #{vision_encoder_decoder.4} parent=1 // pred_check_branch
      %282 = sbr.rel (0) target = $region29
    $region28: #{vision_encoder_decoder.4} parent=1 // pred_region
      %s284 = ssub.s32 128, 128
      %285 = vsyncadd [#allocation4], %s284
      %s286 = sshll.u32 [#allocation8], 4
      %s287 = int_to_ptr.vmem [resolvable:$true] %s286
      %292 = dma.vmem_to_hbm [thread:$0]  %s287, 128, %s3, [#allocation4], 64, 64, 4
    $region29: #{vision_encoder_decoder.4} parent=1 // pred_fallthru
      _
    // Predicated region
    $region30: #{vision_encoder_decoder.4} parent=1 // pred_check
      _
    $region31: #{vision_encoder_decoder.4} parent=1 // pred_check_branch
      %294 = sbr.rel (0) target = $region33
    $region32: #{vision_encoder_decoder.4} parent=1 // pred_region
      %295 = dma.done [#allocation4], 128
    $region33: #{vision_encoder_decoder.4} parent=1 // pred_fallthru
      _
    %296 = vsyncpa [#allocation3], 1
    %297 = vsyncpa [#allocation6], 1
    %298 = vsyncpa [#allocation4], 1

// kernel: vision_encoder_decoder.7
$region0: #{vision_encoder_decoder.7}
  #allocation0 [shape = 'u32[]', space=smem, size = 0x4, offset = 0x4, fixed_abs, tag = 'smem constant byte address 0x4 - core index']
  #allocation1 [shape = 'u32[144,128]{1,0:T(1,128)}', space=vmem, size = 0x12000, scoped, tag = 'internal scratch']
  %s0 = inlined_call_operand.hbm [shape: f32[2,8,32], index: 0, kind: input, shape index: {}]
  %s1 = inlined_call_operand.hbm [shape: bf16[32,64], index: 1, kind: input, shape index: {}]
  %s2 = inlined_call_operand.hbm [shape: f32[1,64], index: 2, kind: input, shape index: {}]
  %s3 = inlined_call_operand.hbm [shape: f32[2,8,64], index: 3, kind: output, shape index: {}]
  %s4 = sld [smem:[#allocation0]]
  $region34: #{vision_encoder_decoder.7} parent=0
    _
  %s6 = ssub.s32 1, %s4
  %s7 = scalar_select 0, %s6, %s4
  $region1: #{vision_encoder_decoder.7} parent=0
    #allocation2 [shape = 'u8[8192]{0}', space=vmem, size = 0x2000, scoped, tag = 'input window, operand 0, single buffered']
    #allocation3 [shape = 's32[1]{0}', space=sflag, size = 0x4, scoped, tag = 'scoped memory for vision_encoder_decoder.7']
    #allocation4 [shape = 's32[1]{0}', space=sflag, size = 0x4, scoped, tag = 'scoped memory for vision_encoder_decoder.7']
    #allocation5 [shape = 'u8[8192]{0}', space=vmem, size = 0x2000, scoped, tag = 'input window, operand 1, single buffered']
    #allocation6 [shape = 's32[1]{0}', space=sflag, size = 0x4, scoped, tag = 'scoped memory for vision_encoder_decoder.7']
    #allocation7 [shape = 'u8[512]{0}', space=vmem, size = 0x400, scoped, tag = 'input window, operand 2, single buffered']
    #allocation8 [shape = 'u8[8192]{0}', space=vmem, size = 0x2000, scoped, tag = 'output window, operand 0, single buffered']
    %8 = vsyncpa [#allocation3], 0
    %9 = vsyncpa [#allocation6], 0
    %10 = vsyncpa [#allocation4], 0
    // Predicated region
    $region2: #{vision_encoder_decoder.7} parent=1 // pred_check
      _
    $region3: #{vision_encoder_decoder.7} parent=1 // pred_check_branch
      %12 = sbr.rel (0) target = $region5
    $region4: #{vision_encoder_decoder.7} parent=1 // pred_region
      %s14 = ssub.s32 256, 256
      %15 = vsyncadd [#allocation3], %s14
      %s16 = sshll.u32 [#allocation2], 4
      %s17 = int_to_ptr.vmem [resolvable:$true] %s16
      %22 = dma.hbm_to_vmem [thread:$0]  %s0, 256, %s17, [#allocation3], 128, 128, 8
    $region5: #{vision_encoder_decoder.7} parent=1 // pred_fallthru
      _
    // Predicated region
    $region6: #{vision_encoder_decoder.7} parent=1 // pred_check
      _
    $region7: #{vision_encoder_decoder.7} parent=1 // pred_check_branch
      %24 = sbr.rel (0) target = $region9
    $region8: #{vision_encoder_decoder.7} parent=1 // pred_region
      %s26 = ssub.s32 256, 256
      %27 = vsyncadd [#allocation6], %s26
      %s28 = sshll.u32 [#allocation5], 4
      %s29 = int_to_ptr.vmem [resolvable:$true] %s28
      %34 = dma.hbm_to_vmem [thread:$0]  %s1, 256, %s29, [#allocation6], 64, 64, 4
    $region9: #{vision_encoder_decoder.7} parent=1 // pred_fallthru
      _
    // Predicated region
    $region10: #{vision_encoder_decoder.7} parent=1 // pred_check
      _
    $region11: #{vision_encoder_decoder.7} parent=1 // pred_check_branch
      %36 = sbr.rel (0) target = $region13
    $region12: #{vision_encoder_decoder.7} parent=1 // pred_region
      %s38 = ssub.s32 16, 16
      %39 = vsyncadd [#allocation6], %s38
      %s41 = sshll.u32 [#allocation7], 4
      %s42 = int_to_ptr.vmem [resolvable:$true] %s41
      %44 = dma.hbm_to_vmem [thread:$0]  %s2, 16, %s42, [#allocation6]
    $region13: #{vision_encoder_decoder.7} parent=1 // pred_fallthru
      _
    // Predicated region
    $region14: #{vision_encoder_decoder.7} parent=1 // pred_check
      _
    $region15: #{vision_encoder_decoder.7} parent=1 // pred_check_branch
      %46 = sbr.rel (0) target = $region17
    $region16: #{vision_encoder_decoder.7} parent=1 // pred_region
      %47 = dma.done [#allocation3], 256
    $region17: #{vision_encoder_decoder.7} parent=1 // pred_fallthru
      _
    // Predicated region
    $region18: #{vision_encoder_decoder.7} parent=1 // pred_check
      _
    $region19: #{vision_encoder_decoder.7} parent=1 // pred_check_branch
      %49 = sbr.rel (0) target = $region21
    $region20: #{vision_encoder_decoder.7} parent=1 // pred_region
      %50 = dma.done [#allocation6], 256
    $region21: #{vision_encoder_decoder.7} parent=1 // pred_fallthru
      _
    // Predicated region
    $region22: #{vision_encoder_decoder.7} parent=1 // pred_check
      _
    $region23: #{vision_encoder_decoder.7} parent=1 // pred_check_branch
      %52 = sbr.rel (0) target = $region25
    $region24: #{vision_encoder_decoder.7} parent=1 // pred_region
      %53 = dma.done [#allocation6], 16
    $region25: #{vision_encoder_decoder.7} parent=1 // pred_fallthru
      _
    %v55 = vld [vmem:[#allocation5] sm:$0xf]
    %v56 = vld [vmem:[#allocation5 + $0x4] sm:$0xf]
    %v57 = vld [vmem:[#allocation5 + $0x8] sm:$0xf]
    %v58 = vld [vmem:[#allocation5 + $0xc] sm:$0xf]
    %v59 = vld [vmem:[#allocation7] sm:$0x1]
    %v60 = vld [vmem:[#allocation2] sm:$0xff]
    %v61 = vpack.c.bf16 %v60, %v60
    %v63 = vlaneseq
    %v64 = vshrl.u32 %v63, 7
    %v65 = vsub.s32 0, %v64
    %v66 = vrot.slane %v59, %v65
    %v72 = vunpack.c.l.b16 %v55
    %v73 = vunpack.c.l.b16 %v56
    %v74 = vunpack.c.l.b16 %v57
    %v75 = vunpack.c.l.b16 %v58
    %v76 = vpack.c.b16 %v73, %v72
    %v77 = vpack.c.b16 %v75, %v74
    %vm80 = vcmask 261120
    %v82 = vsel %vm80, %v61, 0
    %84 = vmatprep.subr.bf16.mxu0 0
    %85 = vmatpush1.bf16.msra.mxu0 %v76
    %86 = vmatprep.subr.bf16.mxu0 0
    %87 = vmatpush1.bf16.msra.mxu0 %v77
    %88 = vmatprep.subr.bf16.mxu0 0
    %89 = vmatpush1.bf16.msra.mxu0 0
    %90 = vmatprep.subr.bf16.mxu0 0
    %91 = vmatpush1.bf16.msra.mxu0 0
    %92 = vmatprep.subr.bf16.mxu0 0
    %93 = vmatpush1.bf16.msra.mxu0 0
    %94 = vmatprep.subr.bf16.mxu0 0
    %95 = vmatpush1.bf16.msra.mxu0 0
    %96 = vmatprep.subr.bf16.mxu0 0
    %97 = vmatpush1.bf16.msra.mxu0 0
    %98 = vmatprep.subr.bf16.mxu0 0
    %99 = vmatpush1.bf16.msra.mxu0 0
    %100 = vmatprep.subr.bf16.mxu0 0
    %101 = vmatpush1.bf16.msra.mxu0 0
    %102 = vmatprep.subr.bf16.mxu0 0
    %103 = vmatpush1.bf16.msra.mxu0 0
    %104 = vmatprep.subr.bf16.mxu0 0
    %105 = vmatpush1.bf16.msra.mxu0 0
    %106 = vmatprep.subr.bf16.mxu0 0
    %107 = vmatpush1.bf16.msra.mxu0 0
    %108 = vmatprep.subr.bf16.mxu0 0
    %109 = vmatpush1.bf16.msra.mxu0 0
    %110 = vmatprep.subr.bf16.mxu0 0
    %111 = vmatpush1.bf16.msra.mxu0 0
    %112 = vmatprep.subr.bf16.mxu0 0
    %113 = vmatpush1.bf16.msra.mxu0 0
    %114 = vmatprep.subr.bf16.mxu0 0
    %115 = vmatpush1.bf16.msra.mxu0 0
    %116 = vmatprep.mubr.bf16.mxu0 0
    %117 = vmatmul.mubr.bf16.gmra.mrb[0].mxu0 %v82
    %v118 = vpop.f32.mrb[0].mxu0
    %v119 = vadd.f32 %v66, %v118
    %v120 = vpop.f32.mrb[0].mxu0
    %v121 = vpop.f32.mrb[0].mxu0
    %v122 = vpop.f32.mrb[0].mxu0
    %123 = vdwg.mxu0
    %vm124 = vcmask 523264
    %125 = vst.msk [vmem:[#allocation8] sm:$0xff] %vm124, %v119
    %s126 = scalar_lea.vmem [#allocation2], 8
    %v127 = vld [vmem:[%s126] sm:$0xff]
    %v128 = vpack.c.bf16 %v127, %v127
    %v130 = vsel %vm80, %v128, 0
    %132 = vmatprep.subr.bf16.mxu0 0
    %133 = vmatpush1.bf16.msra.mxu0 %v76
    %134 = vmatprep.subr.bf16.mxu0 0
    %135 = vmatpush1.bf16.msra.mxu0 %v77
    %136 = vmatprep.subr.bf16.mxu0 0
    %137 = vmatpush1.bf16.msra.mxu0 0
    %138 = vmatprep.subr.bf16.mxu0 0
    %139 = vmatpush1.bf16.msra.mxu0 0
    %140 = vmatprep.subr.bf16.mxu0 0
    %141 = vmatpush1.bf16.msra.mxu0 0
    %142 = vmatprep.subr.bf16.mxu0 0
    %143 = vmatpush1.bf16.msra.mxu0 0
    %144 = vmatprep.subr.bf16.mxu0 0
    %145 = vmatpush1.bf16.msra.mxu0 0
    %146 = vmatprep.subr.bf16.mxu0 0
    %147 = vmatpush1.bf16.msra.mxu0 0
    %148 = vmatprep.subr.bf16.mxu0 0
    %149 = vmatpush1.bf16.msra.mxu0 0
    %150 = vmatprep.subr.bf16.mxu0 0
    %151 = vmatpush1.bf16.msra.mxu0 0
    %152 = vmatprep.subr.bf16.mxu0 0
    %153 = vmatpush1.bf16.msra.mxu0 0
    %154 = vmatprep.subr.bf16.mxu0 0
    %155 = vmatpush1.bf16.msra.mxu0 0
    %156 = vmatprep.subr.bf16.mxu0 0
    %157 = vmatpush1.bf16.msra.mxu0 0
    %158 = vmatprep.subr.bf16.mxu0 0
    %159 = vmatpush1.bf16.msra.mxu0 0
    %160 = vmatprep.subr.bf16.mxu0 0
    %161 = vmatpush1.bf16.msra.mxu0 0
    %162 = vmatprep.subr.bf16.mxu0 0
    %163 = vmatpush1.bf16.msra.mxu0 0
    %164 = vmatprep.mubr.bf16.mxu0 0
    %165 = vmatmul.mubr.bf16.gmra.mrb[0].mxu0 %v130
    %v166 = vpop.f32.mrb[0].mxu0
    %v167 = vadd.f32 %v66, %v166
    %v168 = vpop.f32.mrb[0].mxu0
    %v169 = vpop.f32.mrb[0].mxu0
    %v170 = vpop.f32.mrb[0].mxu0
    %171 = vdwg.mxu0
    %s172 = scalar_lea.vmem [#allocation8], 8
    %173 = vst.msk [vmem:[%s172] sm:$0xff] %vm124, %v167
    // Predicated region
    $region26: #{vision_encoder_decoder.7} parent=1 // pred_check
      _
    $region27: #{vision_encoder_decoder.7} parent=1 // pred_check_branch
      %175 = sbr.rel (0) target = $region29
    $region28: #{vision_encoder_decoder.7} parent=1 // pred_region
      %s177 = ssub.s32 256, 256
      %178 = vsyncadd [#allocation4], %s177
      %s179 = sshll.u32 [#allocation8], 4
      %s180 = int_to_ptr.vmem [resolvable:$true] %s179
      %185 = dma.vmem_to_hbm [thread:$0]  %s180, 256, %s3, [#allocation4], 128, 128, 8
    $region29: #{vision_encoder_decoder.7} parent=1 // pred_fallthru
      _
    // Predicated region
    $region30: #{vision_encoder_decoder.7} parent=1 // pred_check
      _
    $region31: #{vision_encoder_decoder.7} parent=1 // pred_check_branch
      %187 = sbr.rel (0) target = $region33
    $region32: #{vision_encoder_decoder.7} parent=1 // pred_region
      %188 = dma.done [#allocation4], 256
    $region33: #{vision_encoder_decoder.7} parent=1 // pred_fallthru
      _
    %189 = vsyncpa [#allocation3], 1
    %190 = vsyncpa [#allocation6], 1
    %191 = vsyncpa [#allocation4], 1

// kernel: vision_encoder_decoder.5
$region0: #{vision_encoder_decoder.5}
  #allocation0 [shape = 'u32[]', space=smem, size = 0x4, offset = 0x4, fixed_abs, tag = 'smem constant byte address 0x4 - core index']
  #allocation1 [shape = 'u32[144,128]{1,0:T(1,128)}', space=vmem, size = 0x12000, scoped, tag = 'internal scratch']
  #allocation2 [shape = 'f32[2,4,32]{2,1,0:T(4,128)}', space=vmem, size = 0x1000, scoped, tag = 'scratch operand']
  %s0 = inlined_call_operand.hbm [shape: f32[2,4,32], index: 0, kind: input, shape index: {}]
  %s1 = inlined_call_operand.hbm [shape: bf16[2,32,96], index: 1, kind: input, shape index: {}]
  %s2 = inlined_call_operand.hbm [shape: bf16[2,32,32], index: 2, kind: input, shape index: {}]
  %s3 = inlined_call_operand.hbm [shape: bf16[2,32,128], index: 3, kind: input, shape index: {}]
  %s4 = inlined_call_operand.hbm [shape: bf16[2,128,32], index: 4, kind: input, shape index: {}]
  %s5 = inlined_call_operand.hbm [shape: f32[2,4,128], index: 5, kind: input, shape index: {}]
  %s6 = inlined_call_operand.hbm [shape: f32[2,4,32], index: 6, kind: output, shape index: {}]
  %s7 = sld [smem:[#allocation0]]
  $region93: #{vision_encoder_decoder.5} parent=0
    _
  %s9 = ssub.s32 1, %s7
  %s10 = scalar_select 0, %s9, %s7
  $region1: #{vision_encoder_decoder.5} parent=0
    #allocation3 [shape = 'u8[4096]{0}', space=vmem, size = 0x1000, scoped, tag = 'input window, operand 0, single buffered']
    #allocation4 [shape = 's32[2]{0}', space=sflag, size = 0x8, scoped, tag = 'scoped memory for vision_encoder_decoder.5']
    #allocation5 [shape = 's32[2]{0}', space=sflag, size = 0x8, scoped, tag = 'scoped memory for vision_encoder_decoder.5']
    #allocation6 [shape = 'u8[16384]{0}', space=vmem, size = 0x4000, scoped, tag = 'input window, operand 1']
    #allocation7 [shape = 's32[2]{0}', space=sflag, size = 0x8, scoped, tag = 'scoped memory for vision_encoder_decoder.5']
    #allocation8 [shape = 'u8[16384]{0}', space=vmem, size = 0x4000, scoped, tag = 'input window, operand 2']
    #allocation9 [shape = 'u8[16384]{0}', space=vmem, size = 0x4000, scoped, tag = 'input window, operand 3']
    #allocation10 [shape = 's32[2]{0}', space=sflag, size = 0x8, scoped, tag = 'scoped memory for vision_encoder_decoder.5']
    #allocation11 [shape = 'u8[65536]{0}', space=vmem, size = 0x10000, scoped, tag = 'input window, operand 4']
    #allocation12 [shape = 'u8[4096]{0}', space=vmem, size = 0x1000, scoped, tag = 'input window, operand 5']
    #allocation13 [shape = 's32[2]{0}', space=sflag, size = 0x8, scoped, tag = 'scoped memory for vision_encoder_decoder.5']
    #allocation14 [shape = 'u8[4096]{0}', space=vmem, size = 0x1000, scoped, tag = 'output window, operand 0, single buffered']
    %11 = vsyncpa [#allocation4], 0
    %12 = vsyncpa [#allocation7], 0
    %s13 = scalar_lea.sflag [#allocation7], 1
    %14 = vsyncpa %s13, 0
    %15 = vsyncpa [#allocation10], 0
    %s16 = scalar_lea.sflag [#allocation10], 1
    %17 = vsyncpa %s16, 0
    %18 = vsyncpa [#allocation13], 0
    %s19 = scalar_lea.sflag [#allocation13], 1
    %20 = vsyncpa %s19, 0
    %21 = vsyncpa [#allocation5], 0
    loop: start=0, step=1, limit=4
    $region2: #{vision_encoder_decoder.5} parent=1 // loop_pre_header
      _
    $region3: #{vision_encoder_decoder.5} parent=1 // loop_header
      %s23 = sphi 0, %s27
      %p24 = scmp.ge.s32.totalorder %s23, 4
      %s30 = sphi 0, %s42
      %s31 = sphi 0, %s38
      %s32 = sphi 0, %s30
      %s33 = sphi 0, %s31
      %s34 = sphi 0, %s32
      %s35 = sphi 0, %s33
      %s45 = sphi 0, %s47
      %s48 = sphi 0, %s45
      %s49 = sphi 0, %s48
      %s65 = sphi 0, %s49
      %s71 = sphi 0, %s73
      %s74 = sphi 0, %s71
      %s75 = sphi 0, %s74
      %s91 = sphi 0, %s75
      %s97 = sphi 0, %s99
      %s100 = sphi 0, %s97
      %s101 = sphi 0, %s100
      %s117 = sphi 0, %s101
      %s123 = sphi 0, %s125
      %s126 = sphi 0, %s123
      %s127 = sphi 0, %s126
      %s143 = sphi 0, %s127
      %s149 = sphi 0, %s151
      %s152 = sphi 0, %s149
      %s153 = sphi 0, %s152
      %s169 = sphi 0, %s153
      %s175 = sphi 0, %s177
      %s178 = sphi 0, %s175
      %s179 = sphi 0, %s178
      %s195 = sphi 0, %s179
      %s201 = sphi 0, %s203
      %s204 = sphi 0, %s201
      %s205 = sphi 0, %s204
      %s221 = sphi 0, %s205
    $region4: #{vision_encoder_decoder.5} parent=1 // loop_header_branch
      %26 = sbr.rel (%p24) target = $region8
    $region5: #{vision_encoder_decoder.5} parent=1 // loop_body
      %s28 = ssub.s32 %s23, 1
      %s29 = ssub.s32 %s23, 2
      %s36 = sadd.s32 1, %s31
      %p37 = scmp.ge.s32.totalorder %s36, 2
      %s38 = scalar_select %p37, 0, %s36
      %s39 = sadd.s32 1, %s30
      %s40 = scalar_select %p37, %s39, %s30
      %p41 = scmp.ge.s32.totalorder %s40, 1
      %s42 = scalar_select %p41, 0, %s40
      %s43 = ssub.s32 %s30, %s42
      %p44 = scmp.eq.s32.totalorder %s43, 0
      %s46 = sadd.s32 %s45, 1
      %s47 = scalar_select %p44, %s45, %s46
      %p50 = pneg %p44
      %p51 = scmp.eq.s32.totalorder %s23, 1
      %p52 = por %p50, %p51
      %p53 = scmp.ne.s32.totalorder %s45, %s48
      %p54 = scmp.eq.s32.totalorder %s23, 0
      %p55 = por %p53, %p54
      %p56 = scmp.ne.s32.totalorder %s45, %s48
      %p57 = scmp.eq.s32.totalorder %s28, 1
      %p58 = por %p56, %p57
      %p59 = scmp.ne.s32.totalorder %s48, %s49
      %p60 = scmp.eq.s32.totalorder %s28, 0
      %p61 = por %p59, %p60
      %p62 = scmp.ne.s32.totalorder %s48, %s49
      %p63 = scmp.eq.s32.totalorder %s29, 1
      %p64 = por %p62, %p63
      %p66 = scmp.ne.s32.totalorder %s49, %s65
      %p67 = scmp.eq.s32.totalorder %s29, 0
      %p68 = por %p66, %p67
      %s69 = ssub.s32 %s31, %s38
      %p70 = scmp.eq.s32.totalorder %s69, 0
      %s72 = sadd.s32 %s71, 1
      %s73 = scalar_select %p70, %s71, %s72
      %p76 = pneg %p70
      %p77 = scmp.eq.s32.totalorder %s23, 1
      %p78 = por %p76, %p77
      %p79 = scmp.ne.s32.totalorder %s71, %s74
      %p80 = scmp.eq.s32.totalorder %s23, 0
      %p81 = por %p79, %p80
      %p82 = scmp.ne.s32.totalorder %s71, %s74
      %p83 = scmp.eq.s32.totalorder %s28, 1
      %p84 = por %p82, %p83
      %p85 = scmp.ne.s32.totalorder %s74, %s75
      %p86 = scmp.eq.s32.totalorder %s28, 0
      %p87 = por %p85, %p86
      %p88 = scmp.ne.s32.totalorder %s74, %s75
      %p89 = scmp.eq.s32.totalorder %s29, 1
      %p90 = por %p88, %p89
      %p92 = scmp.ne.s32.totalorder %s75, %s91
      %p93 = scmp.eq.s32.totalorder %s29, 0
      %p94 = por %p92, %p93
      %s95 = ssub.s32 %s31, %s38
      %p96 = scmp.eq.s32.totalorder %s95, 0
      %s98 = sadd.s32 %s97, 1
      %s99 = scalar_select %p96, %s97, %s98
      %p102 = pneg %p96
      %p103 = scmp.eq.s32.totalorder %s23, 1
      %p104 = por %p102, %p103
      %p105 = scmp.ne.s32.totalorder %s97, %s100
      %p106 = scmp.eq.s32.totalorder %s23, 0
      %p107 = por %p105, %p106
      %p108 = scmp.ne.s32.totalorder %s97, %s100
      %p109 = scmp.eq.s32.totalorder %s28, 1
      %p110 = por %p108, %p109
      %p111 = scmp.ne.s32.totalorder %s100, %s101
      %p112 = scmp.eq.s32.totalorder %s28, 0
      %p113 = por %p111, %p112
      %p114 = scmp.ne.s32.totalorder %s100, %s101
      %p115 = scmp.eq.s32.totalorder %s29, 1
      %p116 = por %p114, %p115
      %p118 = scmp.ne.s32.totalorder %s101, %s117
      %p119 = scmp.eq.s32.totalorder %s29, 0
      %p120 = por %p118, %p119
      %s121 = ssub.s32 %s31, %s38
      %p122 = scmp.eq.s32.totalorder %s121, 0
      %s124 = sadd.s32 %s123, 1
      %s125 = scalar_select %p122, %s123, %s124
      %p128 = pneg %p122
      %p129 = scmp.eq.s32.totalorder %s23, 1
      %p130 = por %p128, %p129
      %p131 = scmp.ne.s32.totalorder %s123, %s126
      %p132 = scmp.eq.s32.totalorder %s23, 0
      %p133 = por %p131, %p132
      %p134 = scmp.ne.s32.totalorder %s123, %s126
      %p135 = scmp.eq.s32.totalorder %s28, 1
      %p136 = por %p134, %p135
      %p137 = scmp.ne.s32.totalorder %s126, %s127
      %p138 = scmp.eq.s32.totalorder %s28, 0
      %p139 = por %p137, %p138
      %p140 = scmp.ne.s32.totalorder %s126, %s127
      %p141 = scmp.eq.s32.totalorder %s29, 1
      %p142 = por %p140, %p141
      %p144 = scmp.ne.s32.totalorder %s127, %s143
      %p145 = scmp.eq.s32.totalorder %s29, 0
      %p146 = por %p144, %p145
      %s147 = ssub.s32 %s31, %s38
      %p148 = scmp.eq.s32.totalorder %s147, 0
      %s150 = sadd.s32 %s149, 1
      %s151 = scalar_select %p148, %s149, %s150
      %p154 = pneg %p148
      %p155 = scmp.eq.s32.totalorder %s23, 1
      %p156 = por %p154, %p155
      %p157 = scmp.ne.s32.totalorder %s149, %s152
      %p158 = scmp.eq.s32.totalorder %s23, 0
      %p159 = por %p157, %p158
      %p160 = scmp.ne.s32.totalorder %s149, %s152
      %p161 = scmp.eq.s32.totalorder %s28, 1
      %p162 = por %p160, %p161
      %p163 = scmp.ne.s32.totalorder %s152, %s153
      %p164 = scmp.eq.s32.totalorder %s28, 0
      %p165 = por %p163, %p164
      %p166 = scmp.ne.s32.totalorder %s152, %s153
      %p167 = scmp.eq.s32.totalorder %s29, 1
      %p168 = por %p166, %p167
      %p170 = scmp.ne.s32.totalorder %s153, %s169
      %p171 = scmp.eq.s32.totalorder %s29, 0
      %p172 = por %p170, %p171
      %s173 = ssub.s32 %s31, %s38
      %p174 = scmp.eq.s32.totalorder %s173, 0
      %s176 = sadd.s32 %s175, 1
      %s177 = scalar_select %p174, %s175, %s176
      %p180 = pneg %p174
      %p181 = scmp.eq.s32.totalorder %s23, 1
      %p182 = por %p180, %p181
      %p183 = scmp.ne.s32.totalorder %s175, %s178
      %p184 = scmp.eq.s32.totalorder %s23, 0
      %p185 = por %p183, %p184
      %p186 = scmp.ne.s32.totalorder %s175, %s178
      %p187 = scmp.eq.s32.totalorder %s28, 1
      %p188 = por %p186, %p187
      %p189 = scmp.ne.s32.totalorder %s178, %s179
      %p190 = scmp.eq.s32.totalorder %s28, 0
      %p191 = por %p189, %p190
      %p192 = scmp.ne.s32.totalorder %s178, %s179
      %p193 = scmp.eq.s32.totalorder %s29, 1
      %p194 = por %p192, %p193
      %p196 = scmp.ne.s32.totalorder %s179, %s195
      %p197 = scmp.eq.s32.totalorder %s29, 0
      %p198 = por %p196, %p197
      %s199 = ssub.s32 %s30, %s42
      %p200 = scmp.eq.s32.totalorder %s199, 0
      %s202 = sadd.s32 %s201, 1
      %s203 = scalar_select %p200, %s201, %s202
      %p206 = pneg %p200
      %p207 = scmp.eq.s32.totalorder %s23, 1
      %p208 = por %p206, %p207
      %p209 = scmp.ne.s32.totalorder %s201, %s204
      %p210 = scmp.eq.s32.totalorder %s23, 0
      %p211 = por %p209, %p210
      %p212 = scmp.ne.s32.totalorder %s201, %s204
      %p213 = scmp.eq.s32.totalorder %s28, 1
      %p214 = por %p212, %p213
      %p215 = scmp.ne.s32.totalorder %s204, %s205
      %p216 = scmp.eq.s32.totalorder %s28, 0
      %p217 = por %p215, %p216
      %p218 = scmp.ne.s32.totalorder %s204, %s205
      %p219 = scmp.eq.s32.totalorder %s29, 1
      %p220 = por %p218, %p219
      %p222 = scmp.ne.s32.totalorder %s205, %s221
      %p223 = scmp.eq.s32.totalorder %s29, 0
      %p224 = por %p222, %p223
      %p225 = scmp.le.s32.totalorder 1, %s23
      %p226 = scmp.lt.s32.totalorder %s23, 3
      %p227 = pnand %p225, %p226
      %p228 = pneg %p227
      // Predicated region
      $region9: #{vision_encoder_decoder.5} parent=5 // pred_check
        _
      $region10: #{vision_encoder_decoder.5} parent=5 // pred_check_branch
        %230 = sbr.rel (%p227) target = $region12
      $region11: #{vision_encoder_decoder.5} parent=5 // pred_region
        %s231 = ssub.s32 %s23, 1
        // Predicated region
        $region13: #{vision_encoder_decoder.5} parent=11 // pred_check
          %p232 = pneg %p61
        $region14: #{vision_encoder_decoder.5} parent=11 // pred_check_branch
          %234 = sbr.rel (%p232) target = $region16
        $region15: #{vision_encoder_decoder.5} parent=11 // pred_region
          %s235 = smul.u32 2, %s32
          %s237 = ssub.s32 128, 128
          %238 = vsyncadd [#allocation4], %s237
          %s239 = smul.addr %s235, 64
          %s240 = scalar_lea.hbm %s0, %s239
          %s241 = sshll.u32 [#allocation3], 4
          %s242 = int_to_ptr.vmem [resolvable:$true] %s241
          %247 = dma.hbm_to_vmem [thread:$0]  %s240, 128, %s242, [#allocation4], 64, 64, 4
        $region16: #{vision_encoder_decoder.5} parent=11 // pred_fallthru
          _
      $region12: #{vision_encoder_decoder.5} parent=5 // pred_fallthru
        _
      %p248 = scmp.lt.s32.totalorder %s23, 2
      // Predicated region
      $region17: #{vision_encoder_decoder.5} parent=5 // pred_check
        %p249 = pneg %p248
      $region18: #{vision_encoder_decoder.5} parent=5 // pred_check_branch
        %251 = sbr.rel (%p249) target = $region20
      $region19: #{vision_encoder_decoder.5} parent=5 // pred_region
        // Predicated region
        $region21: #{vision_encoder_decoder.5} parent=19 // pred_check
          %p252 = pneg %p81
        $region22: #{vision_encoder_decoder.5} parent=19 // pred_check_branch
          %254 = sbr.rel (%p252) target = $region24
        $region23: #{vision_encoder_decoder.5} parent=19 // pred_region
          %s255 = sand.u32 %s23, 1
          %s256 = scalar_lea.sflag [#allocation7], %s255
          %s257 = sand.u32 %s71, 1
          %s258 = smul.addr %s257, 16
          %s259 = scalar_lea.vmem [#allocation6], %s258
          %s261 = ssub.s32 256, 256
          %262 = vsyncadd %s256, %s261
          %s263 = smul.addr %s31, 4
          %s264 = smul.addr %s263, 64
          %s265 = scalar_lea.hbm %s1, %s264
          %s266 = sshll.u32 %s259, 4
          %s267 = int_to_ptr.vmem [resolvable:$true] %s266
          %272 = dma.hbm_to_vmem [thread:$0]  %s265, 256, %s267, %s256, 64, 64, 4
        $region24: #{vision_encoder_decoder.5} parent=19 // pred_fallthru
          _
        // Predicated region
        $region25: #{vision_encoder_decoder.5} parent=19 // pred_check
          %p273 = pneg %p107
        $region26: #{vision_encoder_decoder.5} parent=19 // pred_check_branch
          %275 = sbr.rel (%p273) target = $region28
        $region27: #{vision_encoder_decoder.5} parent=19 // pred_region
          %s276 = sand.u32 %s23, 1
          %s277 = scalar_lea.sflag [#allocation7], %s276
          %s278 = sand.u32 %s97, 1
          %s279 = smul.addr %s278, 16
          %s280 = scalar_lea.vmem [#allocation8], %s279
          %s282 = ssub.s32 256, 256
          %283 = vsyncadd %s277, %s282
          %s284 = smul.addr %s31, 4
          %s285 = smul.addr %s284, 64
          %s286 = scalar_lea.hbm %s2, %s285
          %s287 = sshll.u32 %s280, 4
          %s288 = int_to_ptr.vmem [resolvable:$true] %s287
          %293 = dma.hbm_to_vmem [thread:$0]  %s286, 256, %s288, %s277, 64, 64, 4
        $region28: #{vision_encoder_decoder.5} parent=19 // pred_fallthru
          _
        // Predicated region
        $region29: #{vision_encoder_decoder.5} parent=19 // pred_check
          %p294 = pneg %p133
        $region30: #{vision_encoder_decoder.5} parent=19 // pred_check_branch
          %296 = sbr.rel (%p294) target = $region32
        $region31: #{vision_encoder_decoder.5} parent=19 // pred_region
          %s297 = sand.u32 %s23, 1
          %s298 = scalar_lea.sflag [#allocation10], %s297
          %s299 = sand.u32 %s123, 1
          %s300 = smul.addr %s299, 16
          %s301 = scalar_lea.vmem [#allocation9], %s300
          %s303 = ssub.s32 256, 256
          %304 = vsyncadd %s298, %s303
          %s305 = smul.addr %s31, 4
          %s306 = smul.addr %s305, 64
          %s307 = scalar_lea.hbm %s3, %s306
          %s308 = sshll.u32 %s301, 4
          %s309 = int_to_ptr.vmem [resolvable:$true] %s308
          %314 = dma.hbm_to_vmem [thread:$0]  %s307, 256, %s309, %s298, 64, 64, 4
        $region32: #{vision_encoder_decoder.5} parent=19 // pred_fallthru
          _
        // Predicated region
        $region33: #{vision_encoder_decoder.5} parent=19 // pred_check
          %p315 = pneg %p159
        $region34: #{vision_encoder_decoder.5} parent=19 // pred_check_branch
          %317 = sbr.rel (%p315) target = $region36
        $region35: #{vision_encoder_decoder.5} parent=19 // pred_region
          %s318 = sand.u32 %s23, 1
          %s319 = scalar_lea.sflag [#allocation10], %s318
          %s320 = sand.u32 %s149, 1
          %s321 = smul.addr %s320, 64
          %s322 = scalar_lea.vmem [#allocation11], %s321
          %s324 = ssub.s32 1024, 1024
          %325 = vsyncadd %s319, %s324
          %s326 = smul.addr %s31, 16
          %s327 = smul.addr %s326, 64
          %s328 = scalar_lea.hbm %s4, %s327
          %s329 = sshll.u32 %s322, 4
          %s330 = int_to_ptr.vmem [resolvable:$true] %s329
          %335 = dma.hbm_to_vmem [thread:$0]  %s328, 1024, %s330, %s319, 64, 64, 4
        $region36: #{vision_encoder_decoder.5} parent=19 // pred_fallthru
          _
        // Predicated region
        $region37: #{vision_encoder_decoder.5} parent=19 // pred_check
          %p336 = pneg %p185
        $region38: #{vision_encoder_decoder.5} parent=19 // pred_check_branch
          %338 = sbr.rel (%p336) target = $region40
        $region39: #{vision_encoder_decoder.5} parent=19 // pred_region
          %s339 = sand.u32 %s175, 1
          %s340 = scalar_lea.sflag [#allocation13], %s339
          %s341 = sand.u32 %s175, 1
          %s342 = smul.addr %s341, 4
          %s343 = scalar_lea.vmem [#allocation12], %s342
          %s345 = ssub.s32 64, 64
          %346 = vsyncadd %s340, %s345
          %s347 = smul.addr %s31, 64
          %s348 = scalar_lea.hbm %s5, %s347
          %s350 = sshll.u32 %s343, 4
          %s351 = int_to_ptr.vmem [resolvable:$true] %s350
          %353 = dma.hbm_to_vmem [thread:$0]  %s348, 64, %s351, %s340
        $region40: #{vision_encoder_decoder.5} parent=19 // pred_fallthru
          _
      $region20: #{vision_encoder_decoder.5} parent=5 // pred_fallthru
        _
      %p354 = scmp.le.s32.totalorder 1, %s23
      %p355 = scmp.lt.s32.totalorder %s23, 3
      %p356 = pnand %p354, %p355
      %p357 = pneg %p356
      // Predicated region
      $region41: #{vision_encoder_decoder.5} parent=5 // pred_check
        _
      $region42: #{vision_encoder_decoder.5} parent=5 // pred_check_branch
        %359 = sbr.rel (%p356) target = $region44
      $region43: #{vision_encoder_decoder.5} parent=5 // pred_region
        %s360 = ssub.s32 %s23, 1
        // Predicated region
        $region45: #{vision_encoder_decoder.5} parent=43 // pred_check
          %p361 = pneg %p61
        $region46: #{vision_encoder_decoder.5} parent=43 // pred_check_branch
          %363 = sbr.rel (%p361) target = $region48
        $region47: #{vision_encoder_decoder.5} parent=43 // pred_region
          %364 = dma.done [#allocation4], 128
        $region48: #{vision_encoder_decoder.5} parent=43 // pred_fallthru
          _
        %s365 = sand.u32 %s28, 1
        %s366 = scalar_lea.sflag [#allocation7], %s365
        %s367 = sand.u32 %s74, 1
        %s368 = smul.addr %s367, 16
        %s369 = scalar_lea.vmem [#allocation6], %s368
        // Predicated region
        $region49: #{vision_encoder_decoder.5} parent=43 // pred_check
          %p370 = pneg %p87
        $region50: #{vision_encoder_decoder.5} parent=43 // pred_check_branch
          %372 = sbr.rel (%p370) target = $region52
        $region51: #{vision_encoder_decoder.5} parent=43 // pred_region
          %373 = dma.done %s366, 256
        $region52: #{vision_encoder_decoder.5} parent=43 // pred_fallthru
          _
        %s374 = sand.u32 %s28, 1
        %s375 = scalar_lea.sflag [#allocation7], %s374
        %s376 = sand.u32 %s100, 1
        %s377 = smul.addr %s376, 16
        %s378 = scalar_lea.vmem [#allocation8], %s377
        // Predicated region
        $region53: #{vision_encoder_decoder.5} parent=43 // pred_check
          %p379 = pneg %p113
        $region54: #{vision_encoder_decoder.5} parent=43 // pred_check_branch
          %381 = sbr.rel (%p379) target = $region56
        $region55: #{vision_encoder_decoder.5} parent=43 // pred_region
          %382 = dma.done %s375, 256
        $region56: #{vision_encoder_decoder.5} parent=43 // pred_fallthru
          _
        %s383 = sand.u32 %s28, 1
        %s384 = scalar_lea.sflag [#allocation10], %s383
        %s385 = sand.u32 %s126, 1
        %s386 = smul.addr %s385, 16
        %s387 = scalar_lea.vmem [#allocation9], %s386
        // Predicated region
        $region57: #{vision_encoder_decoder.5} parent=43 // pred_check
          %p388 = pneg %p139
        $region58: #{vision_encoder_decoder.5} parent=43 // pred_check_branch
          %390 = sbr.rel (%p388) target = $region60
        $region59: #{vision_encoder_decoder.5} parent=43 // pred_region
          %391 = dma.done %s384, 256
        $region60: #{vision_encoder_decoder.5} parent=43 // pred_fallthru
          _
        %s392 = sand.u32 %s28, 1
        %s393 = scalar_lea.sflag [#allocation10], %s392
        %s394 = sand.u32 %s152, 1
        %s395 = smul.addr %s394, 64
        %s396 = scalar_lea.vmem [#allocation11], %s395
        // Predicated region
        $region61: #{vision_encoder_decoder.5} parent=43 // pred_check
          %p397 = pneg %p165
        $region62: #{vision_encoder_decoder.5} parent=43 // pred_check_branch
          %399 = sbr.rel (%p397) target = $region64
        $region63: #{vision_encoder_decoder.5} parent=43 // pred_region
          %400 = dma.done %s393, 1024
        $region64: #{vision_encoder_decoder.5} parent=43 // pred_fallthru
          _
        %s401 = sand.u32 %s178, 1
        %s402 = scalar_lea.sflag [#allocation13], %s401
        %s403 = sand.u32 %s178, 1
        %s404 = smul.addr %s403, 4
        %s405 = scalar_lea.vmem [#allocation12], %s404
        // Predicated region
        $region65: #{vision_encoder_decoder.5} parent=43 // pred_check
          %p406 = pneg %p191
        $region66: #{vision_encoder_decoder.5} parent=43 // pred_check_branch
          %408 = sbr.rel (%p406) target = $region68
        $region67: #{vision_encoder_decoder.5} parent=43 // pred_region
          %409 = dma.done %s402, 64
        $region68: #{vision_encoder_decoder.5} parent=43 // pred_fallthru
          _
        %p410 = pneg %p61
        %p411 = pneg %p58
        %s412 = sand.u32 %s28, 1
        %s413 = scalar_lea.sflag [#allocation7], %s412
        %s414 = sand.u32 %s74, 1
        %s415 = smul.addr %s414, 16
        %s416 = scalar_lea.vmem [#allocation6], %s415
        %p417 = pneg %p87
        %p418 = pneg %p84
        %s419 = sand.u32 %s28, 1
        %s420 = scalar_lea.sflag [#allocation7], %s419
        %s421 = sand.u32 %s100, 1
        %s422 = smul.addr %s421, 16
        %s423 = scalar_lea.vmem [#allocation8], %s422
        %p424 = pneg %p113
        %p425 = pneg %p110
        %s426 = sand.u32 %s28, 1
        %s427 = scalar_lea.sflag [#allocation10], %s426
        %s428 = sand.u32 %s126, 1
        %s429 = smul.addr %s428, 16
        %s430 = scalar_lea.vmem [#allocation9], %s429
        %p431 = pneg %p139
        %p432 = pneg %p136
        %s433 = sand.u32 %s28, 1
        %s434 = scalar_lea.sflag [#allocation10], %s433
        %s435 = sand.u32 %s152, 1
        %s436 = smul.addr %s435, 64
        %s437 = scalar_lea.vmem [#allocation11], %s436
        %p438 = pneg %p165
        %p439 = pneg %p162
        %s440 = sand.u32 %s178, 1
        %s441 = scalar_lea.sflag [#allocation13], %s440
        %s442 = sand.u32 %s178, 1
        %s443 = smul.addr %s442, 4
        %s444 = scalar_lea.vmem [#allocation12], %s443
        %p445 = pneg %p191
        %p446 = pneg %p188
        %p447 = pneg %p217
        %p448 = pneg %p214
        %s449 = smul.u32 2, %s32
        %s450 = smul.u32 2, %s32
        %p452 = scmp.eq.s32.totalorder %s33, 0
        // Predicated region
        $region69: #{vision_encoder_decoder.5} parent=43 // pred_check
          %p453 = pneg %p452
        $region70: #{vision_encoder_decoder.5} parent=43 // pred_check_branch
          %455 = sbr.rel (%p453) target = $region72
        $region71: #{vision_encoder_decoder.5} parent=43 // pred_region
          %v456 = vld [vmem:[#allocation3] sm:$0xf]
          %v457 = vld [vmem:[#allocation3 + $0x4] sm:$0xf]
          %vm458 = vcmask 257024
          %459 = vst.msk [vmem:[#allocation2] sm:$0xf] %vm458, %v456
          %460 = vst.msk [vmem:[#allocation2 + $0x4] sm:$0xf] %vm458, %v457
        $region72: #{vision_encoder_decoder.5} parent=43 // pred_fallthru
          _
        %v461 = vld [vmem:[%s405] sm:$0xf]
        %v462 = vld [vmem:[%s378] sm:$0xf]
        %v463 = vld [vmem:[%s378 + $0x4] sm:$0xf]
        %v464 = vld [vmem:[%s378 + $0x8] sm:$0xf]
        %v465 = vld [vmem:[%s378 + $0xc] sm:$0xf]
        %v466 = vld [vmem:[#allocation2] sm:$0xf]
        %v467 = vpack.c.bf16 %v466, %v466
        %v468 = vld [vmem:[%s369] sm:$0xf]
        %v469 = vld [vmem:[%s369 + $0x4] sm:$0xf]
        %v470 = vld [vmem:[%s369 + $0x8] sm:$0xf]
        %v471 = vld [vmem:[%s369 + $0xc] sm:$0xf]
        %v476 = vunpack.c.l.b16 %v468
        %v477 = vunpack.c.l.b16 %v469
        %v478 = vunpack.c.l.b16 %v470
        %v479 = vunpack.c.l.b16 %v471
        %v480 = vpack.c.b16 %v477, %v476
        %v481 = vpack.c.b16 %v479, %v478
        %vm484 = vcmask 261120
        %v486 = vsel %vm484, %v467, 0
        %488 = vmatprep.subr.bf16.mxu0 0
        %489 = vmatpush1.bf16.msra.mxu0 %v480
        %490 = vmatprep.subr.bf16.mxu0 0
        %491 = vmatpush1.bf16.msra.mxu0 %v481
        %492 = vmatprep.subr.bf16.mxu0 0
        %493 = vmatpush1.bf16.msra.mxu0 0
        %494 = vmatprep.subr.bf16.mxu0 0
        %495 = vmatpush1.bf16.msra.mxu0 0
        %496 = vmatprep.subr.bf16.mxu0 0
        %497 = vmatpush1.bf16.msra.mxu0 0
        %498 = vmatprep.subr.bf16.mxu0 0
        %499 = vmatpush1.bf16.msra.mxu0 0
        %500 = vmatprep.subr.bf16.mxu0 0
        %501 = vmatpush1.bf16.msra.mxu0 0
        %502 = vmatprep.subr.bf16.mxu0 0
        %503 = vmatpush1.bf16.msra.mxu0 0
        %504 = vmatprep.subr.bf16.mxu0 0
        %505 = vmatpush1.bf16.msra.mxu0 0
        %506 = vmatprep.subr.bf16.mxu0 0
        %507 = vmatpush1.bf16.msra.mxu0 0
        %508 = vmatprep.subr.bf16.mxu0 0
        %509 = vmatpush1.bf16.msra.mxu0 0
        %510 = vmatprep.subr.bf16.mxu0 0
        %511 = vmatpush1.bf16.msra.mxu0 0
        %512 = vmatprep.subr.bf16.mxu0 0
        %513 = vmatpush1.bf16.msra.mxu0 0
        %514 = vmatprep.subr.bf16.mxu0 0
        %515 = vmatpush1.bf16.msra.mxu0 0
        %516 = vmatprep.subr.bf16.mxu0 0
        %517 = vmatpush1.bf16.msra.mxu0 0
        %518 = vmatprep.subr.bf16.mxu0 0
        %519 = vmatpush1.bf16.msra.mxu0 0
        %520 = vmatprep.mubr.bf16.mxu0 0
        %521 = vmatmul.mubr.bf16.gmra.mrb[0].mxu0 %v486
        %v522 = vpop.f32.mrb[0].mxu0
        %v523 = vadd.f32 0.0, %v522
        %v524 = vpop.f32.mrb[0].mxu0
        %v525 = vpop.f32.mrb[0].mxu0
        %v526 = vpop.f32.mrb[0].mxu0
        %527 = vdwg.mxu0
        %v528 = vpack.c.bf16 %v523, %v523
        %v529 = vunpack.c.l.bf16 %v528
        %v530 = vlaneseq
        %v531 = vshrl.u32 %v530, 7
        %v532 = vsub.s32 1, %v531
        %v533 = vrot.slane %v461, %v532
        %v534 = vadd.f32 %v529, %v533
        %v535 = vmul.f32 %v534, 0.35355338
        %v536 = vpack.c.bf16 %v535, %v535
        %v537 = vpack.c.bf16 %v534, %v534
        %539 = vrot.lane.b32.xlu0 %v537, 96
        %v540 = vpop.permute.xlu0 %539
        %vm541 = vcmask 64512
        %v543 = vsel %vm541, %v536, 0
        %v546 = vsel %vm541, %v540, 0
        %548 = vmatprep.subr.bf16.mxu0 0
        %549 = vmatpush1.bf16.xpose.msra.mxu0 %v546
        %550 = vmatprep.subr.bf16.mxu0 0
        %551 = vmatpush1.bf16.xpose.msra.mxu0 0
        %552 = vmatprep.subr.bf16.mxu0 0
        %553 = vmatpush1.bf16.xpose.msra.mxu0 0
        %554 = vmatprep.subr.bf16.mxu0 0
        %555 = vmatpush1.bf16.xpose.msra.mxu0 0
        %556 = vmatprep.subr.bf16.mxu0 0
        %557 = vmatpush1.bf16.xpose.msra.mxu0 0
        %558 = vmatprep.subr.bf16.mxu0 0
        %559 = vmatpush1.bf16.xpose.msra.mxu0 0
        %560 = vmatprep.subr.bf16.mxu0 0
        %561 = vmatpush1.bf16.xpose.msra.mxu0 0
        %562 = vmatprep.subr.bf16.mxu0 0
        %563 = vmatpush1.bf16.xpose.msra.mxu0 0
        %564 = vmatprep.subr.bf16.mxu0 0
        %565 = vmatpush1.bf16.xpose.msra.mxu0 0
        %566 = vmatprep.subr.bf16.mxu0 0
        %567 = vmatpush1.bf16.xpose.msra.mxu0 0
        %568 = vmatprep.subr.bf16.mxu0 0
        %569 = vmatpush1.bf16.xpose.msra.mxu0 0
        %570 = vmatprep.subr.bf16.mxu0 0
        %571 = vmatpush1.bf16.xpose.msra.mxu0 0
        %572 = vmatprep.subr.bf16.mxu0 0
        %573 = vmatpush1.bf16.xpose.msra.mxu0 0
        %574 = vmatprep.subr.bf16.mxu0 0
        %575 = vmatpush1.bf16.xpose.msra.mxu0 0
        %576 = vmatprep.subr.bf16.mxu0 0
        %577 = vmatpush1.bf16.xpose.msra.mxu0 0
        %578 = vmatprep.subr.bf16.mxu0 0
        %579 = vmatpush1.bf16.xpose.msra.mxu0 0
        %580 = vmatprep.mubr.bf16.mxu0 0
        %581 = vmatmul.mubr.bf16.gmra.mrb[0].mxu0 %v543
        %v582 = vpop.f32.mrb[0].mxu0
        %v583 = vadd.f32 0.0, %v582
        %v584 = vpop.f32.mrb[0].mxu0
        %v585 = vpop.f32.mrb[0].mxu0
        %v586 = vpop.f32.mrb[0].mxu0
        %587 = vdwg.mxu0
        %vm588 = vcmask 27648
        %v589 = vsel %vm588, %v583, -inf
        %590 = vmax.xlane.f32.xlu0 %v589
        %v591 = vpop.xlane.xlu0 %590
        %v592 = vsub.f32 %v583, %v591
        %v593 = vmul.f32 %v592, 1.442695
        %v594 = vpow.pop %v593
        %v595 = vsel %vm588, %v594, 0.0
        %596 = vadd.xlane.f32.xlu0 %v595
        %v597 = vpop.xlane.xlu0 %596
        %v598 = vrcp.pop %v597
        %v599 = vmul.f32 %v594, %v598
        %v600 = vpack.c.bf16 %v599, %v599
        %601 = vrot.lane.b32.xlu0 %v537, 64
        %v602 = vpop.permute.xlu0 %601
        %vm603 = vcmask 31744
        %v605 = vsel %vm603, %v600, 0
        %vm607 = vcmask 1041408
        %v609 = vsel %vm607, %v602, 0
        %611 = vmatprep.subr.bf16.mxu0 0
        %612 = vmatpush1.bf16.msra.mxu0 %v609
        %613 = vmatprep.subr.bf16.mxu0 0
        %614 = vmatpush1.bf16.msra.mxu0 0
        %615 = vmatprep.subr.bf16.mxu0 0
        %616 = vmatpush1.bf16.msra.mxu0 0
        %617 = vmatprep.subr.bf16.mxu0 0
        %618 = vmatpush1.bf16.msra.mxu0 0
        %619 = vmatprep.subr.bf16.mxu0 0
        %620 = vmatpush1.bf16.msra.mxu0 0
        %621 = vmatprep.subr.bf16.mxu0 0
        %622 = vmatpush1.bf16.msra.mxu0 0
        %623 = vmatprep.subr.bf16.mxu0 0
        %624 = vmatpush1.bf16.msra.mxu0 0
        %625 = vmatprep.subr.bf16.mxu0 0
        %626 = vmatpush1.bf16.msra.mxu0 0
        %627 = vmatprep.subr.bf16.mxu0 0
        %628 = vmatpush1.bf16.msra.mxu0 0
        %629 = vmatprep.subr.bf16.mxu0 0
        %630 = vmatpush1.bf16.msra.mxu0 0
        %631 = vmatprep.subr.bf16.mxu0 0
        %632 = vmatpush1.bf16.msra.mxu0 0
        %633 = vmatprep.subr.bf16.mxu0 0
        %634 = vmatpush1.bf16.msra.mxu0 0
        %635 = vmatprep.subr.bf16.mxu0 0
        %636 = vmatpush1.bf16.msra.mxu0 0
        %637 = vmatprep.subr.bf16.mxu0 0
        %638 = vmatpush1.bf16.msra.mxu0 0
        %639 = vmatprep.subr.bf16.mxu0 0
        %640 = vmatpush1.bf16.msra.mxu0 0
        %641 = vmatprep.subr.bf16.mxu0 0
        %642 = vmatpush1.bf16.msra.mxu0 0
        %643 = vmatprep.mubr.bf16.mxu0 0
        %644 = vmatmul.mubr.bf16.gmra.mrb[0].mxu0 %v605
        %v645 = vpop.f32.mrb[0].mxu0
        %v646 = vadd.f32 0.0, %v645
        %v647 = vpop.f32.mrb[0].mxu0
        %v648 = vpop.f32.mrb[0].mxu0
        %v649 = vpop.f32.mrb[0].mxu0
        %650 = vdwg.mxu0
        %v651 = vpack.c.bf16 %v646, %v646
        %653 = vrot.lane.b32.xlu0 %v536, 120
        %v654 = vpop.permute.xlu0 %653
        %655 = vrot.lane.b32.xlu0 %v537, 88
        %v656 = vpop.permute.xlu0 %655
        %v658 = vsel %vm541, %v654, 0
        %v661 = vsel %vm541, %v656, 0
        %663 = vmatprep.subr.bf16.mxu0 0
        %664 = vmatpush1.bf16.xpose.msra.mxu0 %v661
        %665 = vmatprep.subr.bf16.mxu0 0
        %666 = vmatpush1.bf16.xpose.msra.mxu0 0
        %667 = vmatprep.subr.bf16.mxu0 0
        %668 = vmatpush1.bf16.xpose.msra.mxu0 0
        %669 = vmatprep.subr.bf16.mxu0 0
        %670 = vmatpush1.bf16.xpose.msra.mxu0 0
        %671 = vmatprep.subr.bf16.mxu0 0
        %672 = vmatpush1.bf16.xpose.msra.mxu0 0
        %673 = vmatprep.subr.bf16.mxu0 0
        %674 = vmatpush1.bf16.xpose.msra.mxu0 0
        %675 = vmatprep.subr.bf16.mxu0 0
        %676 = vmatpush1.bf16.xpose.msra.mxu0 0
        %677 = vmatprep.subr.bf16.mxu0 0
        %678 = vmatpush1.bf16.xpose.msra.mxu0 0
        %679 = vmatprep.subr.bf16.mxu0 0
        %680 = vmatpush1.bf16.xpose.msra.mxu0 0
        %681 = vmatprep.subr.bf16.mxu0 0
        %682 = vmatpush1.bf16.xpose.msra.mxu0 0
        %683 = vmatprep.subr.bf16.mxu0 0
        %684 = vmatpush1.bf16.xpose.msra.mxu0 0
        %685 = vmatprep.subr.bf16.mxu0 0
        %686 = vmatpush1.bf16.xpose.msra.mxu0 0
        %687 = vmatprep.subr.bf16.mxu0 0
        %688 = vmatpush1.bf16.xpose.msra.mxu0 0
        %689 = vmatprep.subr.bf16.mxu0 0
        %690 = vmatpush1.bf16.xpose.msra.mxu0 0
        %691 = vmatprep.subr.bf16.mxu0 0
        %692 = vmatpush1.bf16.xpose.msra.mxu0 0
        %693 = vmatprep.subr.bf16.mxu0 0
        %694 = vmatpush1.bf16.xpose.msra.mxu0 0
        %695 = vmatprep.mubr.bf16.mxu0 0
        %696 = vmatmul.mubr.bf16.gmra.mrb[0].mxu0 %v658
        %v697 = vpop.f32.mrb[0].mxu0
        %v698 = vadd.f32 0.0, %v697
        %v699 = vpop.f32.mrb[0].mxu0
        %v700 = vpop.f32.mrb[0].mxu0
        %v701 = vpop.f32.mrb[0].mxu0
        %702 = vdwg.mxu0
        %v703 = vsel %vm588, %v698, -inf
        %704 = vmax.xlane.f32.xlu0 %v703
        %v705 = vpop.xlane.xlu0 %704
        %v706 = vsub.f32 %v698, %v705
        %v707 = vmul.f32 %v706, 1.442695
        %v708 = vpow.pop %v707
        %v709 = vsel %vm588, %v708, 0.0
        %710 = vadd.xlane.f32.xlu0 %v709
        %v711 = vpop.xlane.xlu0 %710
        %v712 = vrcp.pop %v711
        %v713 = vmul.f32 %v708, %v712
        %v714 = vpack.c.bf16 %v713, %v713
        %715 = vrot.lane.b32.xlu0 %v537, 56
        %v716 = vpop.permute.xlu0 %715
        %v718 = vsel %vm603, %v714, 0
        %v721 = vsel %vm607, %v716, 0
        %723 = vmatprep.subr.bf16.mxu0 0
        %724 = vmatpush1.bf16.msra.mxu0 %v721
        %725 = vmatprep.subr.bf16.mxu0 0
        %726 = vmatpush1.bf16.msra.mxu0 0
        %727 = vmatprep.subr.bf16.mxu0 0
        %728 = vmatpush1.bf16.msra.mxu0 0
        %729 = vmatprep.subr.bf16.mxu0 0
        %730 = vmatpush1.bf16.msra.mxu0 0
        %731 = vmatprep.subr.bf16.mxu0 0
        %732 = vmatpush1.bf16.msra.mxu0 0
        %733 = vmatprep.subr.bf16.mxu0 0
        %734 = vmatpush1.bf16.msra.mxu0 0
        %735 = vmatprep.subr.bf16.mxu0 0
        %736 = vmatpush1.bf16.msra.mxu0 0
        %737 = vmatprep.subr.bf16.mxu0 0
        %738 = vmatpush1.bf16.msra.mxu0 0
        %739 = vmatprep.subr.bf16.mxu0 0
        %740 = vmatpush1.bf16.msra.mxu0 0
        %741 = vmatprep.subr.bf16.mxu0 0
        %742 = vmatpush1.bf16.msra.mxu0 0
        %743 = vmatprep.subr.bf16.mxu0 0
        %744 = vmatpush1.bf16.msra.mxu0 0
        %745 = vmatprep.subr.bf16.mxu0 0
        %746 = vmatpush1.bf16.msra.mxu0 0
        %747 = vmatprep.subr.bf16.mxu0 0
        %748 = vmatpush1.bf16.msra.mxu0 0
        %749 = vmatprep.subr.bf16.mxu0 0
        %750 = vmatpush1.bf16.msra.mxu0 0
        %751 = vmatprep.subr.bf16.mxu0 0
        %752 = vmatpush1.bf16.msra.mxu0 0
        %753 = vmatprep.subr.bf16.mxu0 0
        %754 = vmatpush1.bf16.msra.mxu0 0
        %755 = vmatprep.mubr.bf16.mxu0 0
        %756 = vmatmul.mubr.bf16.gmra.mrb[0].mxu0 %v718
        %v757 = vpop.f32.mrb[0].mxu0
        %v758 = vadd.f32 0.0, %v757
        %v759 = vpop.f32.mrb[0].mxu0
        %v760 = vpop.f32.mrb[0].mxu0
        %v761 = vpop.f32.mrb[0].mxu0
        %762 = vdwg.mxu0
        %v763 = vpack.c.bf16 %v758, %v758
        %v765 = vsel %vm541, %v763, 0
        %vm767 = vcmask 1043456
        %v769 = vsel %vm767, %v463, 0
        %771 = vmatprep.subr.bf16.mxu0 0
        %772 = vmatpush1.bf16.msra.mxu0 %v769
        %773 = vmatprep.subr.bf16.mxu0 0
        %774 = vmatpush1.bf16.msra.mxu0 0
        %775 = vmatprep.subr.bf16.mxu0 0
        %776 = vmatpush1.bf16.msra.mxu0 0
        %777 = vmatprep.subr.bf16.mxu0 0
        %778 = vmatpush1.bf16.msra.mxu0 0
        %779 = vmatprep.subr.bf16.mxu0 0
        %780 = vmatpush1.bf16.msra.mxu0 0
        %781 = vmatprep.subr.bf16.mxu0 0
        %782 = vmatpush1.bf16.msra.mxu0 0
        %783 = vmatprep.subr.bf16.mxu0 0
        %784 = vmatpush1.bf16.msra.mxu0 0
        %785 = vmatprep.subr.bf16.mxu0 0
        %786 = vmatpush1.bf16.msra.mxu0 0
        %787 = vmatprep.subr.bf16.mxu0 0
        %788 = vmatpush1.bf16.msra.mxu0 0
        %789 = vmatprep.subr.bf16.mxu0 0
        %790 = vmatpush1.bf16.msra.mxu0 0
        %791 = vmatprep.subr.bf16.mxu0 0
        %792 = vmatpush1.bf16.msra.mxu0 0
        %793 = vmatprep.subr.bf16.mxu0 0
        %794 = vmatpush1.bf16.msra.mxu0 0
        %795 = vmatprep.subr.bf16.mxu0 0
        %796 = vmatpush1.bf16.msra.mxu0 0
        %797 = vmatprep.subr.bf16.mxu0 0
        %798 = vmatpush1.bf16.msra.mxu0 0
        %799 = vmatprep.subr.bf16.mxu0 0
        %800 = vmatpush1.bf16.msra.mxu0 0
        %801 = vmatprep.subr.bf16.mxu0 0
        %802 = vmatpush1.bf16.msra.mxu0 0
        %803 = vmatprep.mubr.bf16.mxu0 0
        %804 = vmatmul.mubr.bf16.gmra.mrb[0].mxu0 %v765
        %v805 = vpop.f32.mrb[0].mxu0
        %v806 = vadd.f32 0.0, %v805
        %v807 = vpop.f32.mrb[0].mxu0
        %v808 = vpop.f32.mrb[0].mxu0
        %v809 = vpop.f32.mrb[0].mxu0
        %810 = vdwg.mxu0
        %v812 = vsel %vm541, %v651, 0
        %v815 = vsel %vm767, %v462, 0
        %817 = vmatprep.subr.bf16.mxu0 0
        %818 = vmatpush1.bf16.msra.mxu0 %v815
        %819 = vmatprep.subr.bf16.mxu0 0
        %820 = vmatpush1.bf16.msra.mxu0 0
        %821 = vmatprep.subr.bf16.mxu0 0
        %822 = vmatpush1.bf16.msra.mxu0 0
        %823 = vmatprep.subr.bf16.mxu0 0
        %824 = vmatpush1.bf16.msra.mxu0 0
        %825 = vmatprep.subr.bf16.mxu0 0
        %826 = vmatpush1.bf16.msra.mxu0 0
        %827 = vmatprep.subr.bf16.mxu0 0
        %828 = vmatpush1.bf16.msra.mxu0 0
        %829 = vmatprep.subr.bf16.mxu0 0
        %830 = vmatpush1.bf16.msra.mxu0 0
        %831 = vmatprep.subr.bf16.mxu0 0
        %832 = vmatpush1.bf16.msra.mxu0 0
        %833 = vmatprep.subr.bf16.mxu0 0
        %834 = vmatpush1.bf16.msra.mxu0 0
        %835 = vmatprep.subr.bf16.mxu0 0
        %836 = vmatpush1.bf16.msra.mxu0 0
        %837 = vmatprep.subr.bf16.mxu0 0
        %838 = vmatpush1.bf16.msra.mxu0 0
        %839 = vmatprep.subr.bf16.mxu0 0
        %840 = vmatpush1.bf16.msra.mxu0 0
        %841 = vmatprep.subr.bf16.mxu0 0
        %842 = vmatpush1.bf16.msra.mxu0 0
        %843 = vmatprep.subr.bf16.mxu0 0
        %844 = vmatpush1.bf16.msra.mxu0 0
        %845 = vmatprep.subr.bf16.mxu0 0
        %846 = vmatpush1.bf16.msra.mxu0 0
        %847 = vmatprep.subr.bf16.mxu0 0
        %848 = vmatpush1.bf16.msra.mxu0 0
        %849 = vmatprep.mubr.bf16.mxu0 0
        %850 = vmatmul.mubr.bf16.gmra.mrb[0].mxu0 %v812
        %v851 = vpop.f32.mrb[0].mxu0
        %v852 = vadd.f32 %v806, %v851
        %v853 = vpop.f32.mrb[0].mxu0
        %v854 = vpop.f32.mrb[0].mxu0
        %v855 = vpop.f32.mrb[0].mxu0
        %856 = vdwg.mxu0
        %857 = vrot.lane.b32.xlu0 %v536, 112
        %v858 = vpop.permute.xlu0 %857
        %859 = vrot.lane.b32.xlu0 %v537, 80
        %v860 = vpop.permute.xlu0 %859
        %v862 = vsel %vm541, %v858, 0
        %v865 = vsel %vm541, %v860, 0
        %867 = vmatprep.subr.bf16.mxu0 0
        %868 = vmatpush1.bf16.xpose.msra.mxu0 %v865
        %869 = vmatprep.subr.bf16.mxu0 0
        %870 = vmatpush1.bf16.xpose.msra.mxu0 0
        %871 = vmatprep.subr.bf16.mxu0 0
        %872 = vmatpush1.bf16.xpose.msra.mxu0 0
        %873 = vmatprep.subr.bf16.mxu0 0
        %874 = vmatpush1.bf16.xpose.msra.mxu0 0
        %875 = vmatprep.subr.bf16.mxu0 0
        %876 = vmatpush1.bf16.xpose.msra.mxu0 0
        %877 = vmatprep.subr.bf16.mxu0 0
        %878 = vmatpush1.bf16.xpose.msra.mxu0 0
        %879 = vmatprep.subr.bf16.mxu0 0
        %880 = vmatpush1.bf16.xpose.msra.mxu0 0
        %881 = vmatprep.subr.bf16.mxu0 0
        %882 = vmatpush1.bf16.xpose.msra.mxu0 0
        %883 = vmatprep.subr.bf16.mxu0 0
        %884 = vmatpush1.bf16.xpose.msra.mxu0 0
        %885 = vmatprep.subr.bf16.mxu0 0
        %886 = vmatpush1.bf16.xpose.msra.mxu0 0
        %887 = vmatprep.subr.bf16.mxu0 0
        %888 = vmatpush1.bf16.xpose.msra.mxu0 0
        %889 = vmatprep.subr.bf16.mxu0 0
        %890 = vmatpush1.bf16.xpose.msra.mxu0 0
        %891 = vmatprep.subr.bf16.mxu0 0
        %892 = vmatpush1.bf16.xpose.msra.mxu0 0
        %893 = vmatprep.subr.bf16.mxu0 0
        %894 = vmatpush1.bf16.xpose.msra.mxu0 0
        %895 = vmatprep.subr.bf16.mxu0 0
        %896 = vmatpush1.bf16.xpose.msra.mxu0 0
        %897 = vmatprep.subr.bf16.mxu0 0
        %898 = vmatpush1.bf16.xpose.msra.mxu0 0
        %899 = vmatprep.mubr.bf16.mxu0 0
        %900 = vmatmul.mubr.bf16.gmra.mrb[0].mxu0 %v862
        %v901 = vpop.f32.mrb[0].mxu0
        %v902 = vadd.f32 0.0, %v901
        %v903 = vpop.f32.mrb[0].mxu0
        %v904 = vpop.f32.mrb[0].mxu0
        %v905 = vpop.f32.mrb[0].mxu0
        %906 = vdwg.mxu0
        %v907 = vsel %vm588, %v902, -inf
        %908 = vmax.xlane.f32.xlu0 %v907
        %v909 = vpop.xlane.xlu0 %908
        %v910 = vsub.f32 %v902, %v909
        %v911 = vmul.f32 %v910, 1.442695
        %v912 = vpow.pop %v911
        %v913 = vsel %vm588, %v912, 0.0
        %914 = vadd.xlane.f32.xlu0 %v913
        %v915 = vpop.xlane.xlu0 %914
        %v916 = vrcp.pop %v915
        %v917 = vmul.f32 %v912, %v916
        %v918 = vpack.c.bf16 %v917, %v917
        %919 = vrot.lane.b32.xlu0 %v537, 48
        %v920 = vpop.permute.xlu0 %919
        %v922 = vsel %vm603, %v918, 0
        %v925 = vsel %vm607, %v920, 0
        %927 = vmatprep.subr.bf16.mxu0 0
        %928 = vmatpush1.bf16.msra.mxu0 %v925
        %929 = vmatprep.subr.bf16.mxu0 0
        %930 = vmatpush1.bf16.msra.mxu0 0
        %931 = vmatprep.subr.bf16.mxu0 0
        %932 = vmatpush1.bf16.msra.mxu0 0
        %933 = vmatprep.subr.bf16.mxu0 0
        %934 = vmatpush1.bf16.msra.mxu0 0
        %935 = vmatprep.subr.bf16.mxu0 0
        %936 = vmatpush1.bf16.msra.mxu0 0
        %937 = vmatprep.subr.bf16.mxu0 0
        %938 = vmatpush1.bf16.msra.mxu0 0
        %939 = vmatprep.subr.bf16.mxu0 0
        %940 = vmatpush1.bf16.msra.mxu0 0
        %941 = vmatprep.subr.bf16.mxu0 0
        %942 = vmatpush1.bf16.msra.mxu0 0
        %943 = vmatprep.subr.bf16.mxu0 0
        %944 = vmatpush1.bf16.msra.mxu0 0
        %945 = vmatprep.subr.bf16.mxu0 0
        %946 = vmatpush1.bf16.msra.mxu0 0
        %947 = vmatprep.subr.bf16.mxu0 0
        %948 = vmatpush1.bf16.msra.mxu0 0
        %949 = vmatprep.subr.bf16.mxu0 0
        %950 = vmatpush1.bf16.msra.mxu0 0
        %951 = vmatprep.subr.bf16.mxu0 0
        %952 = vmatpush1.bf16.msra.mxu0 0
        %953 = vmatprep.subr.bf16.mxu0 0
        %954 = vmatpush1.bf16.msra.mxu0 0
        %955 = vmatprep.subr.bf16.mxu0 0
        %956 = vmatpush1.bf16.msra.mxu0 0
        %957 = vmatprep.subr.bf16.mxu0 0
        %958 = vmatpush1.bf16.msra.mxu0 0
        %959 = vmatprep.mubr.bf16.mxu0 0
        %960 = vmatmul.mubr.bf16.gmra.mrb[0].mxu0 %v922
        %v961 = vpop.f32.mrb[0].mxu0
        %v962 = vadd.f32 0.0, %v961
        %v963 = vpop.f32.mrb[0].mxu0
        %v964 = vpop.f32.mrb[0].mxu0
        %v965 = vpop.f32.mrb[0].mxu0
        %966 = vdwg.mxu0
        %v967 = vpack.c.bf16 %v962, %v962
        %v969 = vsel %vm541, %v967, 0
        %v972 = vsel %vm767, %v464, 0
        %974 = vmatprep.subr.bf16.mxu0 0
        %975 = vmatpush1.bf16.msra.mxu0 %v972
        %976 = vmatprep.subr.bf16.mxu0 0
        %977 = vmatpush1.bf16.msra.mxu0 0
        %978 = vmatprep.subr.bf16.mxu0 0
        %979 = vmatpush1.bf16.msra.mxu0 0
        %980 = vmatprep.subr.bf16.mxu0 0
        %981 = vmatpush1.bf16.msra.mxu0 0
        %982 = vmatprep.subr.bf16.mxu0 0
        %983 = vmatpush1.bf16.msra.mxu0 0
        %984 = vmatprep.subr.bf16.mxu0 0
        %985 = vmatpush1.bf16.msra.mxu0 0
        %986 = vmatprep.subr.bf16.mxu0 0
        %987 = vmatpush1.bf16.msra.mxu0 0
        %988 = vmatprep.subr.bf16.mxu0 0
        %989 = vmatpush1.bf16.msra.mxu0 0
        %990 = vmatprep.subr.bf16.mxu0 0
        %991 = vmatpush1.bf16.msra.mxu0 0
        %992 = vmatprep.subr.bf16.mxu0 0
        %993 = vmatpush1.bf16.msra.mxu0 0
        %994 = vmatprep.subr.bf16.mxu0 0
        %995 = vmatpush1.bf16.msra.mxu0 0
        %996 = vmatprep.subr.bf16.mxu0 0
        %997 = vmatpush1.bf16.msra.mxu0 0
        %998 = vmatprep.subr.bf16.mxu0 0
        %999 = vmatpush1.bf16.msra.mxu0 0
        %1000 = vmatprep.subr.bf16.mxu0 0
        %1001 = vmatpush1.bf16.msra.mxu0 0
        %1002 = vmatprep.subr.bf16.mxu0 0
        %1003 = vmatpush1.bf16.msra.mxu0 0
        %1004 = vmatprep.subr.bf16.mxu0 0
        %1005 = vmatpush1.bf16.msra.mxu0 0
        %1006 = vmatprep.mubr.bf16.mxu0 0
        %1007 = vmatmul.mubr.bf16.gmra.mrb[0].mxu0 %v969
        %v1008 = vpop.f32.mrb[0].mxu0
        %v1009 = vadd.f32 0.0, %v1008
        %v1010 = vpop.f32.mrb[0].mxu0
        %v1011 = vpop.f32.mrb[0].mxu0
        %v1012 = vpop.f32.mrb[0].mxu0
        %1013 = vdwg.mxu0
        %v1014 = vadd.f32 %v852, %v1009
        %1015 = vrot.lane.b32.xlu0 %v536, 104
        %v1016 = vpop.permute.xlu0 %1015
        %1017 = vrot.lane.b32.xlu0 %v537, 72
        %v1018 = vpop.permute.xlu0 %1017
        %v1020 = vsel %vm541, %v1016, 0
        %v1023 = vsel %vm541, %v1018, 0
        %1025 = vmatprep.subr.bf16.mxu0 0
        %1026 = vmatpush1.bf16.xpose.msra.mxu0 %v1023
        %1027 = vmatprep.subr.bf16.mxu0 0
        %1028 = vmatpush1.bf16.xpose.msra.mxu0 0
        %1029 = vmatprep.subr.bf16.mxu0 0
        %1030 = vmatpush1.bf16.xpose.msra.mxu0 0
        %1031 = vmatprep.subr.bf16.mxu0 0
        %1032 = vmatpush1.bf16.xpose.msra.mxu0 0
        %1033 = vmatprep.subr.bf16.mxu0 0
        %1034 = vmatpush1.bf16.xpose.msra.mxu0 0
        %1035 = vmatprep.subr.bf16.mxu0 0
        %1036 = vmatpush1.bf16.xpose.msra.mxu0 0
        %1037 = vmatprep.subr.bf16.mxu0 0
        %1038 = vmatpush1.bf16.xpose.msra.mxu0 0
        %1039 = vmatprep.subr.bf16.mxu0 0
        %1040 = vmatpush1.bf16.xpose.msra.mxu0 0
        %1041 = vmatprep.subr.bf16.mxu0 0
        %1042 = vmatpush1.bf16.xpose.msra.mxu0 0
        %1043 = vmatprep.subr.bf16.mxu0 0
        %1044 = vmatpush1.bf16.xpose.msra.mxu0 0
        %1045 = vmatprep.subr.bf16.mxu0 0
        %1046 = vmatpush1.bf16.xpose.msra.mxu0 0
        %1047 = vmatprep.subr.bf16.mxu0 0
        %1048 = vmatpush1.bf16.xpose.msra.mxu0 0
        %1049 = vmatprep.subr.bf16.mxu0 0
        %1050 = vmatpush1.bf16.xpose.msra.mxu0 0
        %1051 = vmatprep.subr.bf16.mxu0 0
        %1052 = vmatpush1.bf16.xpose.msra.mxu0 0
        %1053 = vmatprep.subr.bf16.mxu0 0
        %1054 = vmatpush1.bf16.xpose.msra.mxu0 0
        %1055 = vmatprep.subr.bf16.mxu0 0
        %1056 = vmatpush1.bf16.xpose.msra.mxu0 0
        %1057 = vmatprep.mubr.bf16.mxu0 0
        %1058 = vmatmul.mubr.bf16.gmra.mrb[0].mxu0 %v1020
        %v1059 = vpop.f32.mrb[0].mxu0
        %v1060 = vadd.f32 0.0, %v1059
        %v1061 = vpop.f32.mrb[0].mxu0
        %v1062 = vpop.f32.mrb[0].mxu0
        %v1063 = vpop.f32.mrb[0].mxu0
        %1064 = vdwg.mxu0
        %v1065 = vsel %vm588, %v1060, -inf
        %1066 = vmax.xlane.f32.xlu0 %v1065
        %v1067 = vpop.xlane.xlu0 %1066
        %v1068 = vsub.f32 %v1060, %v1067
        %v1069 = vmul.f32 %v1068, 1.442695
        %v1070 = vpow.pop %v1069
        %v1071 = vsel %vm588, %v1070, 0.0
        %1072 = vadd.xlane.f32.xlu0 %v1071
        %v1073 = vpop.xlane.xlu0 %1072
        %v1074 = vrcp.pop %v1073
        %v1075 = vmul.f32 %v1070, %v1074
        %v1076 = vpack.c.bf16 %v1075, %v1075
        %1077 = vrot.lane.b32.xlu0 %v537, 40
        %v1078 = vpop.permute.xlu0 %1077
        %v1080 = vsel %vm603, %v1076, 0
        %v1083 = vsel %vm607, %v1078, 0
        %1085 = vmatprep.subr.bf16.mxu0 0
        %1086 = vmatpush1.bf16.msra.mxu0 %v1083
        %1087 = vmatprep.subr.bf16.mxu0 0
        %1088 = vmatpush1.bf16.msra.mxu0 0
        %1089 = vmatprep.subr.bf16.mxu0 0
        %1090 = vmatpush1.bf16.msra.mxu0 0
        %1091 = vmatprep.subr.bf16.mxu0 0
        %1092 = vmatpush1.bf16.msra.mxu0 0
        %1093 = vmatprep.subr.bf16.mxu0 0
        %1094 = vmatpush1.bf16.msra.mxu0 0
        %1095 = vmatprep.subr.bf16.mxu0 0
        %1096 = vmatpush1.bf16.msra.mxu0 0
        %1097 = vmatprep.subr.bf16.mxu0 0
        %1098 = vmatpush1.bf16.msra.mxu0 0
        %1099 = vmatprep.subr.bf16.mxu0 0
        %1100 = vmatpush1.bf16.msra.mxu0 0
        %1101 = vmatprep.subr.bf16.mxu0 0
        %1102 = vmatpush1.bf16.msra.mxu0 0
        %1103 = vmatprep.subr.bf16.mxu0 0
        %1104 = vmatpush1.bf16.msra.mxu0 0
        %1105 = vmatprep.subr.bf16.mxu0 0
        %1106 = vmatpush1.bf16.msra.mxu0 0
        %1107 = vmatprep.subr.bf16.mxu0 0
        %1108 = vmatpush1.bf16.msra.mxu0 0
        %1109 = vmatprep.subr.bf16.mxu0 0
        %1110 = vmatpush1.bf16.msra.mxu0 0
        %1111 = vmatprep.subr.bf16.mxu0 0
        %1112 = vmatpush1.bf16.msra.mxu0 0
        %1113 = vmatprep.subr.bf16.mxu0 0
        %1114 = vmatpush1.bf16.msra.mxu0 0
        %1115 = vmatprep.subr.bf16.mxu0 0
        %1116 = vmatpush1.bf16.msra.mxu0 0
        %1117 = vmatprep.mubr.bf16.mxu0 0
        %1118 = vmatmul.mubr.bf16.gmra.mrb[0].mxu0 %v1080
        %v1119 = vpop.f32.mrb[0].mxu0
        %v1120 = vadd.f32 0.0, %v1119
        %v1121 = vpop.f32.mrb[0].mxu0
        %v1122 = vpop.f32.mrb[0].mxu0
        %v1123 = vpop.f32.mrb[0].mxu0
        %1124 = vdwg.mxu0
        %v1125 = vpack.c.bf16 %v1120, %v1120
        %v1127 = vsel %vm541, %v1125, 0
        %v1130 = vsel %vm767, %v465, 0
        %1132 = vmatprep.subr.bf16.mxu0 0
        %1133 = vmatpush1.bf16.msra.mxu0 %v1130
        %1134 = vmatprep.subr.bf16.mxu0 0
        %1135 = vmatpush1.bf16.msra.mxu0 0
        %1136 = vmatprep.subr.bf16.mxu0 0
        %1137 = vmatpush1.bf16.msra.mxu0 0
        %1138 = vmatprep.subr.bf16.mxu0 0
        %1139 = vmatpush1.bf16.msra.mxu0 0
        %1140 = vmatprep.subr.bf16.mxu0 0
        %1141 = vmatpush1.bf16.msra.mxu0 0
        %1142 = vmatprep.subr.bf16.mxu0 0
        %1143 = vmatpush1.bf16.msra.mxu0 0
        %1144 = vmatprep.subr.bf16.mxu0 0
        %1145 = vmatpush1.bf16.msra.mxu0 0
        %1146 = vmatprep.subr.bf16.mxu0 0
        %1147 = vmatpush1.bf16.msra.mxu0 0
        %1148 = vmatprep.subr.bf16.mxu0 0
        %1149 = vmatpush1.bf16.msra.mxu0 0
        %1150 = vmatprep.subr.bf16.mxu0 0
        %1151 = vmatpush1.bf16.msra.mxu0 0
        %1152 = vmatprep.subr.bf16.mxu0 0
        %1153 = vmatpush1.bf16.msra.mxu0 0
        %1154 = vmatprep.subr.bf16.mxu0 0
        %1155 = vmatpush1.bf16.msra.mxu0 0
        %1156 = vmatprep.subr.bf16.mxu0 0
        %1157 = vmatpush1.bf16.msra.mxu0 0
        %1158 = vmatprep.subr.bf16.mxu0 0
        %1159 = vmatpush1.bf16.msra.mxu0 0
        %1160 = vmatprep.subr.bf16.mxu0 0
        %1161 = vmatpush1.bf16.msra.mxu0 0
        %1162 = vmatprep.subr.bf16.mxu0 0
        %1163 = vmatpush1.bf16.msra.mxu0 0
        %1164 = vmatprep.mubr.bf16.mxu0 0
        %1165 = vmatmul.mubr.bf16.gmra.mrb[0].mxu0 %v1127
        %v1166 = vpop.f32.mrb[0].mxu0
        %v1167 = vadd.f32 0.0, %v1166
        %v1168 = vpop.f32.mrb[0].mxu0
        %v1169 = vpop.f32.mrb[0].mxu0
        %v1170 = vpop.f32.mrb[0].mxu0
        %1171 = vdwg.mxu0
        %v1172 = vadd.f32 %v1014, %v1167
        %v1173 = vadd.f32 %v466, %v1172
        %1175 = vrot.lane.b32.xlu0 %v533, 32
        %v1176 = vpop.permute.xlu0 %1175
        %v1178 = vadd.f32 %v1173, %v1176
        %vm1179 = vcmask 257024
        %v1180 = vsel %vm1179, %v1178, 0.0
        %1181 = vadd.xlane.f32.xlu0 %v1180
        %v1182 = vpop.xlane.xlu0 %1181
        %v1183 = vrcp.pop 32.0
        %v1184 = vmul.f32 %v1182, %v1183
        %v1185 = vsub.f32 %v1178, %v1184
        %v1186 = vmul.f32 %v1185, %v1185
        %v1187 = vsel %vm1179, %v1186, 0.0
        %1188 = vadd.xlane.f32.xlu0 %v1187
        %v1189 = vpop.xlane.xlu0 %1188
        %v1190 = vmul.f32 %v1189, %v1183
        %v1191 = vadd.f32 %v1190, 1e-05
        %v1192 = vrsqrt.pop %v1191
        %v1193 = vmul.f32 %v1185, %v1192
        %v1194 = vlaneseq
        %v1195 = vshrl.u32 %v1194, 7
        %v1196 = vsub.s32 2, %v1195
        %v1197 = vrot.slane %v461, %v1196
        %v1198 = vmul.f32 %v1193, %v1197
        %1200 = vrot.lane.b32.xlu0 %v1197, 96
        %v1201 = vpop.permute.xlu0 %1200
        %v1203 = vadd.f32 %v1198, %v1201
        %v1204 = vpack.c.bf16 %v1203, %v1203
        %v1205 = vld [vmem:[%s387] sm:$0xf]
        %v1206 = vld [vmem:[%s387 + $0x4] sm:$0xf]
        %v1207 = vld [vmem:[%s387 + $0x8] sm:$0xf]
        %v1208 = vld [vmem:[%s387 + $0xc] sm:$0xf]
        %v1209 = vlaneseq
        %v1210 = vshrl.u32 %v1209, 7
        %v1211 = vsub.s32 0, %v1210
        %v1212 = vrot.slane %v461, %v1211
        %v1217 = vunpack.c.l.b16 %v1205
        %v1218 = vunpack.c.l.b16 %v1206
        %v1219 = vunpack.c.l.b16 %v1207
        %v1220 = vunpack.c.l.b16 %v1208
        %v1221 = vpack.c.b16 %v1218, %v1217
        %v1222 = vpack.c.b16 %v1220, %v1219
        %v1226 = vsel %vm484, %v1204, 0
        %1228 = vmatprep.subr.bf16.mxu0 0
        %1229 = vmatpush1.bf16.msra.mxu0 %v1221
        %1230 = vmatprep.subr.bf16.mxu0 0
        %1231 = vmatpush1.bf16.msra.mxu0 %v1222
        %1232 = vmatprep.subr.bf16.mxu0 0
        %1233 = vmatpush1.bf16.msra.mxu0 0
        %1234 = vmatprep.subr.bf16.mxu0 0
        %1235 = vmatpush1.bf16.msra.mxu0 0
        %1236 = vmatprep.subr.bf16.mxu0 0
        %1237 = vmatpush1.bf16.msra.mxu0 0
        %1238 = vmatprep.subr.bf16.mxu0 0
        %1239 = vmatpush1.bf16.msra.mxu0 0
        %1240 = vmatprep.subr.bf16.mxu0 0
        %1241 = vmatpush1.bf16.msra.mxu0 0
        %1242 = vmatprep.subr.bf16.mxu0 0
        %1243 = vmatpush1.bf16.msra.mxu0 0
        %1244 = vmatprep.subr.bf16.mxu0 0
        %1245 = vmatpush1.bf16.msra.mxu0 0
        %1246 = vmatprep.subr.bf16.mxu0 0
        %1247 = vmatpush1.bf16.msra.mxu0 0
        %1248 = vmatprep.subr.bf16.mxu0 0
        %1249 = vmatpush1.bf16.msra.mxu0 0
        %1250 = vmatprep.subr.bf16.mxu0 0
        %1251 = vmatpush1.bf16.msra.mxu0 0
        %1252 = vmatprep.subr.bf16.mxu0 0
        %1253 = vmatpush1.bf16.msra.mxu0 0
        %1254 = vmatprep.subr.bf16.mxu0 0
        %1255 = vmatpush1.bf16.msra.mxu0 0
        %1256 = vmatprep.subr.bf16.mxu0 0
        %1257 = vmatpush1.bf16.msra.mxu0 0
        %1258 = vmatprep.subr.bf16.mxu0 0
        %1259 = vmatpush1.bf16.msra.mxu0 0
        %1260 = vmatprep.mubr.bf16.mxu0 0
        %1261 = vmatmul.mubr.bf16.gmra.mrb[0].mxu0 %v1226
        %v1262 = vpop.f32.mrb[0].mxu0
        %v1263 = vadd.f32 %v1212, %v1262
        %v1264 = vpop.f32.mrb[0].mxu0
        %v1265 = vpop.f32.mrb[0].mxu0
        %v1266 = vpop.f32.mrb[0].mxu0
        %1267 = vdwg.mxu0
        %v1268 = vmax.f32 %v1263, 0.0
        %v1269 = vpack.c.bf16 %v1268, %v1268
        %v1270 = vld [vmem:[%s396] sm:$0xf]
        %v1271 = vld [vmem:[%s396 + $0x4] sm:$0xf]
        %v1272 = vld [vmem:[%s396 + $0x8] sm:$0xf]
        %v1273 = vld [vmem:[%s396 + $0xc] sm:$0xf]
        %v1274 = vld [vmem:[%s396 + $0x10] sm:$0xf]
        %v1275 = vld [vmem:[%s396 + $0x14] sm:$0xf]
        %v1276 = vld [vmem:[%s396 + $0x18] sm:$0xf]
        %v1277 = vld [vmem:[%s396 + $0x1c] sm:$0xf]
        %v1278 = vld [vmem:[%s396 + $0x20] sm:$0xf]
        %v1279 = vld [vmem:[%s396 + $0x24] sm:$0xf]
        %v1280 = vld [vmem:[%s396 + $0x28] sm:$0xf]
        %v1281 = vld [vmem:[%s396 + $0x2c] sm:$0xf]
        %v1282 = vld [vmem:[%s396 + $0x30] sm:$0xf]
        %v1283 = vld [vmem:[%s396 + $0x34] sm:$0xf]
        %v1284 = vld [vmem:[%s396 + $0x38] sm:$0xf]
        %v1285 = vld [vmem:[%s396 + $0x3c] sm:$0xf]
        %v1286 = vlaneseq
        %v1287 = vshrl.u32 %v1286, 7
        %v1288 = vsub.s32 3, %v1287
        %v1289 = vrot.slane %v461, %v1288
        %v1306 = vunpack.c.l.b16 %v1270
        %v1307 = vunpack.c.l.b16 %v1271
        %v1308 = vunpack.c.l.b16 %v1272
        %v1309 = vunpack.c.l.b16 %v1273
        %v1310 = vunpack.c.l.b16 %v1274
        %v1311 = vunpack.c.l.b16 %v1275
        %v1312 = vunpack.c.l.b16 %v1276
        %v1313 = vunpack.c.l.b16 %v1277
        %v1314 = vunpack.c.l.b16 %v1278
        %v1315 = vunpack.c.l.b16 %v1279
        %v1316 = vunpack.c.l.b16 %v1280
        %v1317 = vunpack.c.l.b16 %v1281
        %v1318 = vunpack.c.l.b16 %v1282
        %v1319 = vunpack.c.l.b16 %v1283
        %v1320 = vunpack.c.l.b16 %v1284
        %v1321 = vunpack.c.l.b16 %v1285
        %v1322 = vpack.c.b16 %v1307, %v1306
        %v1323 = vpack.c.b16 %v1309, %v1308
        %v1324 = vpack.c.b16 %v1311, %v1310
        %v1325 = vpack.c.b16 %v1313, %v1312
        %v1326 = vpack.c.b16 %v1315, %v1314
        %v1327 = vpack.c.b16 %v1317, %v1316
        %v1328 = vpack.c.b16 %v1319, %v1318
        %v1329 = vpack.c.b16 %v1321, %v1320
        %1338 = vmatprep.subr.bf16.mxu0 0
        %1339 = vmatpush1.bf16.msra.mxu0 %v1322
        %1340 = vmatprep.subr.bf16.mxu0 0
        %1341 = vmatpush1.bf16.msra.mxu0 %v1323
        %1342 = vmatprep.subr.bf16.mxu0 0
        %1343 = vmatpush1.bf16.msra.mxu0 %v1324
        %1344 = vmatprep.subr.bf16.mxu0 0
        %1345 = vmatpush1.bf16.msra.mxu0 %v1325
        %1346 = vmatprep.subr.bf16.mxu0 0
        %1347 = vmatpush1.bf16.msra.mxu0 %v1326
        %1348 = vmatprep.subr.bf16.mxu0 0
        %1349 = vmatpush1.bf16.msra.mxu0 %v1327
        %1350 = vmatprep.subr.bf16.mxu0 0
        %1351 = vmatpush1.bf16.msra.mxu0 %v1328
        %1352 = vmatprep.subr.bf16.mxu0 0
        %1353 = vmatpush1.bf16.msra.mxu0 %v1329
        %1354 = vmatprep.subr.bf16.mxu0 0
        %1355 = vmatpush1.bf16.msra.mxu0 0
        %1356 = vmatprep.subr.bf16.mxu0 0
        %1357 = vmatpush1.bf16.msra.mxu0 0
        %1358 = vmatprep.subr.bf16.mxu0 0
        %1359 = vmatpush1.bf16.msra.mxu0 0
        %1360 = vmatprep.subr.bf16.mxu0 0
        %1361 = vmatpush1.bf16.msra.mxu0 0
        %1362 = vmatprep.subr.bf16.mxu0 0
        %1363 = vmatpush1.bf16.msra.mxu0 0
        %1364 = vmatprep.subr.bf16.mxu0 0
        %1365 = vmatpush1.bf16.msra.mxu0 0
        %1366 = vmatprep.subr.bf16.mxu0 0
        %1367 = vmatpush1.bf16.msra.mxu0 0
        %1368 = vmatprep.subr.bf16.mxu0 0
        %1369 = vmatpush1.bf16.msra.mxu0 0
        %1370 = vmatprep.mubr.bf16.mxu0 0
        %1371 = vmatmul.mubr.bf16.gmra.mrb[0].mxu0 %v1269
        %v1372 = vpop.f32.mrb[0].mxu0
        %v1373 = vadd.f32 %v1289, %v1372
        %v1374 = vpop.f32.mrb[0].mxu0
        %v1375 = vpop.f32.mrb[0].mxu0
        %v1376 = vpop.f32.mrb[0].mxu0
        %1377 = vdwg.mxu0
        %v1378 = vadd.f32 %v1203, %v1373
        %v1379 = vsel %vm1179, %v1378, 0.0
        %1380 = vadd.xlane.f32.xlu0 %v1379
        %v1381 = vpop.xlane.xlu0 %1380
        %v1382 = vmul.f32 %v1381, %v1183
        %v1383 = vsub.f32 %v1378, %v1382
        %v1384 = vmul.f32 %v1383, %v1383
        %v1385 = vsel %vm1179, %v1384, 0.0
        %1386 = vadd.xlane.f32.xlu0 %v1385
        %v1387 = vpop.xlane.xlu0 %1386
        %v1388 = vmul.f32 %v1387, %v1183
        %v1389 = vadd.f32 %v1388, 1e-05
        %v1390 = vrsqrt.pop %v1389
        %v1391 = vmul.f32 %v1383, %v1390
        %1392 = vrot.lane.b32.xlu0 %v1197, 64
        %v1393 = vpop.permute.xlu0 %1392
        %v1395 = vmul.f32 %v1391, %v1393
        %1396 = vrot.lane.b32.xlu0 %v1197, 32
        %v1397 = vpop.permute.xlu0 %1396
        %v1399 = vadd.f32 %v1395, %v1397
        %1400 = vst.msk [vmem:[#allocation2] sm:$0xf] %vm1179, %v1399
        %p1401 = scmp.eq.s32.totalorder %s33, 1
        // Predicated region
        $region73: #{vision_encoder_decoder.5} parent=43 // pred_check
          %p1402 = pneg %p1401
        $region74: #{vision_encoder_decoder.5} parent=43 // pred_check_branch
          %1404 = sbr.rel (%p1402) target = $region76
        $region75: #{vision_encoder_decoder.5} parent=43 // pred_region
          %1405 = vst.msk [vmem:[#allocation14] sm:$0xf] %vm1179, %v1399
        $region76: #{vision_encoder_decoder.5} parent=43 // pred_fallthru
          _
        %s1406 = scalar_lea.vmem [#allocation2], 4
        %v1407 = vld [vmem:[%s1406] sm:$0xf]
        %v1408 = vpack.c.bf16 %v1407, %v1407
        %v1409 = vld [vmem:[%s369] sm:$0xf]
        %v1410 = vld [vmem:[%s369 + $0x4] sm:$0xf]
        %v1411 = vld [vmem:[%s369 + $0x8] sm:$0xf]
        %v1412 = vld [vmem:[%s369 + $0xc] sm:$0xf]
        %v1417 = vunpack.c.l.b16 %v1409
        %v1418 = vunpack.c.l.b16 %v1410
        %v1419 = vunpack.c.l.b16 %v1411
        %v1420 = vunpack.c.l.b16 %v1412
        %v1421 = vpack.c.b16 %v1418, %v1417
        %v1422 = vpack.c.b16 %v1420, %v1419
        %v1426 = vsel %vm484, %v1408, 0
        %1428 = vmatprep.subr.bf16.mxu0 0
        %1429 = vmatpush1.bf16.msra.mxu0 %v1421
        %1430 = vmatprep.subr.bf16.mxu0 0
        %1431 = vmatpush1.bf16.msra.mxu0 %v1422
        %1432 = vmatprep.subr.bf16.mxu0 0
        %1433 = vmatpush1.bf16.msra.mxu0 0
        %1434 = vmatprep.subr.bf16.mxu0 0
        %1435 = vmatpush1.bf16.msra.mxu0 0
        %1436 = vmatprep.subr.bf16.mxu0 0
        %1437 = vmatpush1.bf16.msra.mxu0 0
        %1438 = vmatprep.subr.bf16.mxu0 0
        %1439 = vmatpush1.bf16.msra.mxu0 0
        %1440 = vmatprep.subr.bf16.mxu0 0
        %1441 = vmatpush1.bf16.msra.mxu0 0
        %1442 = vmatprep.subr.bf16.mxu0 0
        %1443 = vmatpush1.bf16.msra.mxu0 0
        %1444 = vmatprep.subr.bf16.mxu0 0
        %1445 = vmatpush1.bf16.msra.mxu0 0
        %1446 = vmatprep.subr.bf16.mxu0 0
        %1447 = vmatpush1.bf16.msra.mxu0 0
        %1448 = vmatprep.subr.bf16.mxu0 0
        %1449 = vmatpush1.bf16.msra.mxu0 0
        %1450 = vmatprep.subr.bf16.mxu0 0
        %1451 = vmatpush1.bf16.msra.mxu0 0
        %1452 = vmatprep.subr.bf16.mxu0 0
        %1453 = vmatpush1.bf16.msra.mxu0 0
        %1454 = vmatprep.subr.bf16.mxu0 0
        %1455 = vmatpush1.bf16.msra.mxu0 0
        %1456 = vmatprep.subr.bf16.mxu0 0
        %1457 = vmatpush1.bf16.msra.mxu0 0
        %1458 = vmatprep.subr.bf16.mxu0 0
        %1459 = vmatpush1.bf16.msra.mxu0 0
        %1460 = vmatprep.mubr.bf16.mxu0 0
        %1461 = vmatmul.mubr.bf16.gmra.mrb[0].mxu0 %v1426
        %v1462 = vpop.f32.mrb[0].mxu0
        %v1463 = vadd.f32 0.0, %v1462
        %v1464 = vpop.f32.mrb[0].mxu0
        %v1465 = vpop.f32.mrb[0].mxu0
        %v1466 = vpop.f32.mrb[0].mxu0
        %1467 = vdwg.mxu0
        %v1468 = vpack.c.bf16 %v1463, %v1463
        %v1469 = vunpack.c.l.bf16 %v1468
        %v1470 = vadd.f32 %v1469, %v533
        %v1471 = vmul.f32 %v1470, 0.35355338
        %v1472 = vpack.c.bf16 %v1471, %v1471
        %v1473 = vpack.c.bf16 %v1470, %v1470
        %1475 = vrot.lane.b32.xlu0 %v1473, 96
        %v1476 = vpop.permute.xlu0 %1475
        %v1478 = vsel %vm541, %v1472, 0
        %v1481 = vsel %vm541, %v1476, 0
        %1483 = vmatprep.subr.bf16.mxu0 0
        %1484 = vmatpush1.bf16.xpose.msra.mxu0 %v1481
        %1485 = vmatprep.subr.bf16.mxu0 0
        %1486 = vmatpush1.bf16.xpose.msra.mxu0 0
        %1487 = vmatprep.subr.bf16.mxu0 0
        %1488 = vmatpush1.bf16.xpose.msra.mxu0 0
        %1489 = vmatprep.subr.bf16.mxu0 0
        %1490 = vmatpush1.bf16.xpose.msra.mxu0 0
        %1491 = vmatprep.subr.bf16.mxu0 0
        %1492 = vmatpush1.bf16.xpose.msra.mxu0 0
        %1493 = vmatprep.subr.bf16.mxu0 0
        %1494 = vmatpush1.bf16.xpose.msra.mxu0 0
        %1495 = vmatprep.subr.bf16.mxu0 0
        %1496 = vmatpush1.bf16.xpose.msra.mxu0 0
        %1497 = vmatprep.subr.bf16.mxu0 0
        %1498 = vmatpush1.bf16.xpose.msra.mxu0 0
        %1499 = vmatprep.subr.bf16.mxu0 0
        %1500 = vmatpush1.bf16.xpose.msra.mxu0 0
        %1501 = vmatprep.subr.bf16.mxu0 0
        %1502 = vmatpush1.bf16.xpose.msra.mxu0 0
        %1503 = vmatprep.subr.bf16.mxu0 0
        %1504 = vmatpush1.bf16.xpose.msra.mxu0 0
        %1505 = vmatprep.subr.bf16.mxu0 0
        %1506 = vmatpush1.bf16.xpose.msra.mxu0 0
        %1507 = vmatprep.subr.bf16.mxu0 0
        %1508 = vmatpush1.bf16.xpose.msra.mxu0 0
        %1509 = vmatprep.subr.bf16.mxu0 0
        %1510 = vmatpush1.bf16.xpose.msra.mxu0 0
        %1511 = vmatprep.subr.bf16.mxu0 0
        %1512 = vmatpush1.bf16.xpose.msra.mxu0 0
        %1513 = vmatprep.subr.bf16.mxu0 0
        %1514 = vmatpush1.bf16.xpose.msra.mxu0 0
        %1515 = vmatprep.mubr.bf16.mxu0 0
        %1516 = vmatmul.mubr.bf16.gmra.mrb[0].mxu0 %v1478
        %v1517 = vpop.f32.mrb[0].mxu0
        %v1518 = vadd.f32 0.0, %v1517
        %v1519 = vpop.f32.mrb[0].mxu0
        %v1520 = vpop.f32.mrb[0].mxu0
        %v1521 = vpop.f32.mrb[0].mxu0
        %1522 = vdwg.mxu0
        %v1523 = vsel %vm588, %v1518, -inf
        %1524 = vmax.xlane.f32.xlu0 %v1523
        %v1525 = vpop.xlane.xlu0 %1524
        %v1526 = vsub.f32 %v1518, %v1525
        %v1527 = vmul.f32 %v1526, 1.442695
        %v1528 = vpow.pop %v1527
        %v1529 = vsel %vm588, %v1528, 0.0
        %1530 = vadd.xlane.f32.xlu0 %v1529
        %v1531 = vpop.xlane.xlu0 %1530
        %v1532 = vrcp.pop %v1531
        %v1533 = vmul.f32 %v1528, %v1532
        %v1534 = vpack.c.bf16 %v1533, %v1533
        %1535 = vrot.lane.b32.xlu0 %v1473, 64
        %v1536 = vpop.permute.xlu0 %1535
        %v1538 = vsel %vm603, %v1534, 0
        %v1541 = vsel %vm607, %v1536, 0
        %1543 = vmatprep.subr.bf16.mxu0 0
        %1544 = vmatpush1.bf16.msra.mxu0 %v1541
        %1545 = vmatprep.subr.bf16.mxu0 0
        %1546 = vmatpush1.bf16.msra.mxu0 0
        %1547 = vmatprep.subr.bf16.mxu0 0
        %1548 = vmatpush1.bf16.msra.mxu0 0
        %1549 = vmatprep.subr.bf16.mxu0 0
        %1550 = vmatpush1.bf16.msra.mxu0 0
        %1551 = vmatprep.subr.bf16.mxu0 0
        %1552 = vmatpush1.bf16.msra.mxu0 0
        %1553 = vmatprep.subr.bf16.mxu0 0
        %1554 = vmatpush1.bf16.msra.mxu0 0
        %1555 = vmatprep.subr.bf16.mxu0 0
        %1556 = vmatpush1.bf16.msra.mxu0 0
        %1557 = vmatprep.subr.bf16.mxu0 0
        %1558 = vmatpush1.bf16.msra.mxu0 0
        %1559 = vmatprep.subr.bf16.mxu0 0
        %1560 = vmatpush1.bf16.msra.mxu0 0
        %1561 = vmatprep.subr.bf16.mxu0 0
        %1562 = vmatpush1.bf16.msra.mxu0 0
        %1563 = vmatprep.subr.bf16.mxu0 0
        %1564 = vmatpush1.bf16.msra.mxu0 0
        %1565 = vmatprep.subr.bf16.mxu0 0
        %1566 = vmatpush1.bf16.msra.mxu0 0
        %1567 = vmatprep.subr.bf16.mxu0 0
        %1568 = vmatpush1.bf16.msra.mxu0 0
        %1569 = vmatprep.subr.bf16.mxu0 0
        %1570 = vmatpush1.bf16.msra.mxu0 0
        %1571 = vmatprep.subr.bf16.mxu0 0
        %1572 = vmatpush1.bf16.msra.mxu0 0
        %1573 = vmatprep.subr.bf16.mxu0 0
        %1574 = vmatpush1.bf16.msra.mxu0 0
        %1575 = vmatprep.mubr.bf16.mxu0 0
        %1576 = vmatmul.mubr.bf16.gmra.mrb[0].mxu0 %v1538
        %v1577 = vpop.f32.mrb[0].mxu0
        %v1578 = vadd.f32 0.0, %v1577
        %v1579 = vpop.f32.mrb[0].mxu0
        %v1580 = vpop.f32.mrb[0].mxu0
        %v1581 = vpop.f32.mrb[0].mxu0
        %1582 = vdwg.mxu0
        %v1583 = vpack.c.bf16 %v1578, %v1578
        %1585 = vrot.lane.b32.xlu0 %v1472, 120
        %v1586 = vpop.permute.xlu0 %1585
        %1587 = vrot.lane.b32.xlu0 %v1473, 88
        %v1588 = vpop.permute.xlu0 %1587
        %v1590 = vsel %vm541, %v1586, 0
        %v1593 = vsel %vm541, %v1588, 0
        %1595 = vmatprep.subr.bf16.mxu0 0
        %1596 = vmatpush1.bf16.xpose.msra.mxu0 %v1593
        %1597 = vmatprep.subr.bf16.mxu0 0
        %1598 = vmatpush1.bf16.xpose.msra.mxu0 0
        %1599 = vmatprep.subr.bf16.mxu0 0
        %1600 = vmatpush1.bf16.xpose.msra.mxu0 0
        %1601 = vmatprep.subr.bf16.mxu0 0
        %1602 = vmatpush1.bf16.xpose.msra.mxu0 0
        %1603 = vmatprep.subr.bf16.mxu0 0
        %1604 = vmatpush1.bf16.xpose.msra.mxu0 0
        %1605 = vmatprep.subr.bf16.mxu0 0
        %1606 = vmatpush1.bf16.xpose.msra.mxu0 0
        %1607 = vmatprep.subr.bf16.mxu0 0
        %1608 = vmatpush1.bf16.xpose.msra.mxu0 0
        %1609 = vmatprep.subr.bf16.mxu0 0
        %1610 = vmatpush1.bf16.xpose.msra.mxu0 0
        %1611 = vmatprep.subr.bf16.mxu0 0
        %1612 = vmatpush1.bf16.xpose.msra.mxu0 0
        %1613 = vmatprep.subr.bf16.mxu0 0
        %1614 = vmatpush1.bf16.xpose.msra.mxu0 0
        %1615 = vmatprep.subr.bf16.mxu0 0
        %1616 = vmatpush1.bf16.xpose.msra.mxu0 0
        %1617 = vmatprep.subr.bf16.mxu0 0
        %1618 = vmatpush1.bf16.xpose.msra.mxu0 0
        %1619 = vmatprep.subr.bf16.mxu0 0
        %1620 = vmatpush1.bf16.xpose.msra.mxu0 0
        %1621 = vmatprep.subr.bf16.mxu0 0
        %1622 = vmatpush1.bf16.xpose.msra.mxu0 0
        %1623 = vmatprep.subr.bf16.mxu0 0
        %1624 = vmatpush1.bf16.xpose.msra.mxu0 0
        %1625 = vmatprep.subr.bf16.mxu0 0
        %1626 = vmatpush1.bf16.xpose.msra.mxu0 0
        %1627 = vmatprep.mubr.bf16.mxu0 0
        %1628 = vmatmul.mubr.bf16.gmra.mrb[0].mxu0 %v1590
        %v1629 = vpop.f32.mrb[0].mxu0
        %v1630 = vadd.f32 0.0, %v1629
        %v1631 = vpop.f32.mrb[0].mxu0
        %v1632 = vpop.f32.mrb[0].mxu0
        %v1633 = vpop.f32.mrb[0].mxu0
        %1634 = vdwg.mxu0
        %v1635 = vsel %vm588, %v1630, -inf
        %1636 = vmax.xlane.f32.xlu0 %v1635
        %v1637 = vpop.xlane.xlu0 %1636
        %v1638 = vsub.f32 %v1630, %v1637
        %v1639 = vmul.f32 %v1638, 1.442695
        %v1640 = vpow.pop %v1639
        %v1641 = vsel %vm588, %v1640, 0.0
        %1642 = vadd.xlane.f32.xlu0 %v1641
        %v1643 = vpop.xlane.xlu0 %1642
        %v1644 = vrcp.pop %v1643
        %v1645 = vmul.f32 %v1640, %v1644
        %v1646 = vpack.c.bf16 %v1645, %v1645
        %1647 = vrot.lane.b32.xlu0 %v1473, 56
        %v1648 = vpop.permute.xlu0 %1647
        %v1650 = vsel %vm603, %v1646, 0
        %v1653 = vsel %vm607, %v1648, 0
        %1655 = vmatprep.subr.bf16.mxu0 0
        %1656 = vmatpush1.bf16.msra.mxu0 %v1653
        %1657 = vmatprep.subr.bf16.mxu0 0
        %1658 = vmatpush1.bf16.msra.mxu0 0
        %1659 = vmatprep.subr.bf16.mxu0 0
        %1660 = vmatpush1.bf16.msra.mxu0 0
        %1661 = vmatprep.subr.bf16.mxu0 0
        %1662 = vmatpush1.bf16.msra.mxu0 0
        %1663 = vmatprep.subr.bf16.mxu0 0
        %1664 = vmatpush1.bf16.msra.mxu0 0
        %1665 = vmatprep.subr.bf16.mxu0 0
        %1666 = vmatpush1.bf16.msra.mxu0 0
        %1667 = vmatprep.subr.bf16.mxu0 0
        %1668 = vmatpush1.bf16.msra.mxu0 0
        %1669 = vmatprep.subr.bf16.mxu0 0
        %1670 = vmatpush1.bf16.msra.mxu0 0
        %1671 = vmatprep.subr.bf16.mxu0 0
        %1672 = vmatpush1.bf16.msra.mxu0 0
        %1673 = vmatprep.subr.bf16.mxu0 0
        %1674 = vmatpush1.bf16.msra.mxu0 0
        %1675 = vmatprep.subr.bf16.mxu0 0
        %1676 = vmatpush1.bf16.msra.mxu0 0
        %1677 = vmatprep.subr.bf16.mxu0 0
        %1678 = vmatpush1.bf16.msra.mxu0 0
        %1679 = vmatprep.subr.bf16.mxu0 0
        %1680 = vmatpush1.bf16.msra.mxu0 0
        %1681 = vmatprep.subr.bf16.mxu0 0
        %1682 = vmatpush1.bf16.msra.mxu0 0
        %1683 = vmatprep.subr.bf16.mxu0 0
        %1684 = vmatpush1.bf16.msra.mxu0 0
        %1685 = vmatprep.subr.bf16.mxu0 0
        %1686 = vmatpush1.bf16.msra.mxu0 0
        %1687 = vmatprep.mubr.bf16.mxu0 0
        %1688 = vmatmul.mubr.bf16.gmra.mrb[0].mxu0 %v1650
        %v1689 = vpop.f32.mrb[0].mxu0
        %v1690 = vadd.f32 0.0, %v1689
        %v1691 = vpop.f32.mrb[0].mxu0
        %v1692 = vpop.f32.mrb[0].mxu0
        %v1693 = vpop.f32.mrb[0].mxu0
        %1694 = vdwg.mxu0
        %v1695 = vpack.c.bf16 %v1690, %v1690
        %v1697 = vsel %vm541, %v1695, 0
        %1699 = vmatprep.subr.bf16.mxu0 0
        %1700 = vmatpush1.bf16.msra.mxu0 %v769
        %1701 = vmatprep.subr.bf16.mxu0 0
        %1702 = vmatpush1.bf16.msra.mxu0 0
        %1703 = vmatprep.subr.bf16.mxu0 0
        %1704 = vmatpush1.bf16.msra.mxu0 0
        %1705 = vmatprep.subr.bf16.mxu0 0
        %1706 = vmatpush1.bf16.msra.mxu0 0
        %1707 = vmatprep.subr.bf16.mxu0 0
        %1708 = vmatpush1.bf16.msra.mxu0 0
        %1709 = vmatprep.subr.bf16.mxu0 0
        %1710 = vmatpush1.bf16.msra.mxu0 0
        %1711 = vmatprep.subr.bf16.mxu0 0
        %1712 = vmatpush1.bf16.msra.mxu0 0
        %1713 = vmatprep.subr.bf16.mxu0 0
        %1714 = vmatpush1.bf16.msra.mxu0 0
        %1715 = vmatprep.subr.bf16.mxu0 0
        %1716 = vmatpush1.bf16.msra.mxu0 0
        %1717 = vmatprep.subr.bf16.mxu0 0
        %1718 = vmatpush1.bf16.msra.mxu0 0
        %1719 = vmatprep.subr.bf16.mxu0 0
        %1720 = vmatpush1.bf16.msra.mxu0 0
        %1721 = vmatprep.subr.bf16.mxu0 0
        %1722 = vmatpush1.bf16.msra.mxu0 0
        %1723 = vmatprep.subr.bf16.mxu0 0
        %1724 = vmatpush1.bf16.msra.mxu0 0
        %1725 = vmatprep.subr.bf16.mxu0 0
        %1726 = vmatpush1.bf16.msra.mxu0 0
        %1727 = vmatprep.subr.bf16.mxu0 0
        %1728 = vmatpush1.bf16.msra.mxu0 0
        %1729 = vmatprep.subr.bf16.mxu0 0
        %1730 = vmatpush1.bf16.msra.mxu0 0
        %1731 = vmatprep.mubr.bf16.mxu0 0
        %1732 = vmatmul.mubr.bf16.gmra.mrb[0].mxu0 %v1697
        %v1733 = vpop.f32.mrb[0].mxu0
        %v1734 = vadd.f32 0.0, %v1733
        %v1735 = vpop.f32.mrb[0].mxu0
        %v1736 = vpop.f32.mrb[0].mxu0
        %v1737 = vpop.f32.mrb[0].mxu0
        %1738 = vdwg.mxu0
        %v1740 = vsel %vm541, %v1583, 0
        %1742 = vmatprep.subr.bf16.mxu0 0
        %1743 = vmatpush1.bf16.msra.mxu0 %v815
        %1744 = vmatprep.subr.bf16.mxu0 0
        %1745 = vmatpush1.bf16.msra.mxu0 0
        %1746 = vmatprep.subr.bf16.mxu0 0
        %1747 = vmatpush1.bf16.msra.mxu0 0
        %1748 = vmatprep.subr.bf16.mxu0 0
        %1749 = vmatpush1.bf16.msra.mxu0 0
        %1750 = vmatprep.subr.bf16.mxu0 0
        %1751 = vmatpush1.bf16.msra.mxu0 0
        %1752 = vmatprep.subr.bf16.mxu0 0
        %1753 = vmatpush1.bf16.msra.mxu0 0
        %1754 = vmatprep.subr.bf16.mxu0 0
        %1755 = vmatpush1.bf16.msra.mxu0 0
        %1756 = vmatprep.subr.bf16.mxu0 0
        %1757 = vmatpush1.bf16.msra.mxu0 0
        %1758 = vmatprep.subr.bf16.mxu0 0
        %1759 = vmatpush1.bf16.msra.mxu0 0
        %1760 = vmatprep.subr.bf16.mxu0 0
        %1761 = vmatpush1.bf16.msra.mxu0 0
        %1762 = vmatprep.subr.bf16.mxu0 0
        %1763 = vmatpush1.bf16.msra.mxu0 0
        %1764 = vmatprep.subr.bf16.mxu0 0
        %1765 = vmatpush1.bf16.msra.mxu0 0
        %1766 = vmatprep.subr.bf16.mxu0 0
        %1767 = vmatpush1.bf16.msra.mxu0 0
        %1768 = vmatprep.subr.bf16.mxu0 0
        %1769 = vmatpush1.bf16.msra.mxu0 0
        %1770 = vmatprep.subr.bf16.mxu0 0
        %1771 = vmatpush1.bf16.msra.mxu0 0
        %1772 = vmatprep.subr.bf16.mxu0 0
        %1773 = vmatpush1.bf16.msra.mxu0 0
        %1774 = vmatprep.mubr.bf16.mxu0 0
        %1775 = vmatmul.mubr.bf16.gmra.mrb[0].mxu0 %v1740
        %v1776 = vpop.f32.mrb[0].mxu0
        %v1777 = vadd.f32 %v1734, %v1776
        %v1778 = vpop.f32.mrb[0].mxu0
        %v1779 = vpop.f32.mrb[0].mxu0
        %v1780 = vpop.f32.mrb[0].mxu0
        %1781 = vdwg.mxu0
        %1782 = vrot.lane.b32.xlu0 %v1472, 112
        %v1783 = vpop.permute.xlu0 %1782
        %1784 = vrot.lane.b32.xlu0 %v1473, 80
        %v1785 = vpop.permute.xlu0 %1784
        %v1787 = vsel %vm541, %v1783, 0
        %v1790 = vsel %vm541, %v1785, 0
        %1792 = vmatprep.subr.bf16.mxu0 0
        %1793 = vmatpush1.bf16.xpose.msra.mxu0 %v1790
        %1794 = vmatprep.subr.bf16.mxu0 0
        %1795 = vmatpush1.bf16.xpose.msra.mxu0 0
        %1796 = vmatprep.subr.bf16.mxu0 0
        %1797 = vmatpush1.bf16.xpose.msra.mxu0 0
        %1798 = vmatprep.subr.bf16.mxu0 0
        %1799 = vmatpush1.bf16.xpose.msra.mxu0 0
        %1800 = vmatprep.subr.bf16.mxu0 0
        %1801 = vmatpush1.bf16.xpose.msra.mxu0 0
        %1802 = vmatprep.subr.bf16.mxu0 0
        %1803 = vmatpush1.bf16.xpose.msra.mxu0 0
        %1804 = vmatprep.subr.bf16.mxu0 0
        %1805 = vmatpush1.bf16.xpose.msra.mxu0 0
        %1806 = vmatprep.subr.bf16.mxu0 0
        %1807 = vmatpush1.bf16.xpose.msra.mxu0 0
        %1808 = vmatprep.subr.bf16.mxu0 0
        %1809 = vmatpush1.bf16.xpose.msra.mxu0 0
        %1810 = vmatprep.subr.bf16.mxu0 0
        %1811 = vmatpush1.bf16.xpose.msra.mxu0 0
        %1812 = vmatprep.subr.bf16.mxu0 0
        %1813 = vmatpush1.bf16.xpose.msra.mxu0 0
        %1814 = vmatprep.subr.bf16.mxu0 0
        %1815 = vmatpush1.bf16.xpose.msra.mxu0 0
        %1816 = vmatprep.subr.bf16.mxu0 0
        %1817 = vmatpush1.bf16.xpose.msra.mxu0 0
        %1818 = vmatprep.subr.bf16.mxu0 0
        %1819 = vmatpush1.bf16.xpose.msra.mxu0 0
        %1820 = vmatprep.subr.bf16.mxu0 0
        %1821 = vmatpush1.bf16.xpose.msra.mxu0 0
        %1822 = vmatprep.subr.bf16.mxu0 0
        %1823 = vmatpush1.bf16.xpose.msra.mxu0 0
        %1824 = vmatprep.mubr.bf16.mxu0 0
        %1825 = vmatmul.mubr.bf16.gmra.mrb[0].mxu0 %v1787
        %v1826 = vpop.f32.mrb[0].mxu0
        %v1827 = vadd.f32 0.0, %v1826
        %v1828 = vpop.f32.mrb[0].mxu0
        %v1829 = vpop.f32.mrb[0].mxu0
        %v1830 = vpop.f32.mrb[0].mxu0
        %1831 = vdwg.mxu0
        %v1832 = vsel %vm588, %v1827, -inf
        %1833 = vmax.xlane.f32.xlu0 %v1832
        %v1834 = vpop.xlane.xlu0 %1833
        %v1835 = vsub.f32 %v1827, %v1834
        %v1836 = vmul.f32 %v1835, 1.442695
        %v1837 = vpow.pop %v1836
        %v1838 = vsel %vm588, %v1837, 0.0
        %1839 = vadd.xlane.f32.xlu0 %v1838
        %v1840 = vpop.xlane.xlu0 %1839
        %v1841 = vrcp.pop %v1840
        %v1842 = vmul.f32 %v1837, %v1841
        %v1843 = vpack.c.bf16 %v1842, %v1842
        %1844 = vrot.lane.b32.xlu0 %v1473, 48
        %v1845 = vpop.permute.xlu0 %1844
        %v1847 = vsel %vm603, %v1843, 0
        %v1850 = vsel %vm607, %v1845, 0
        %1852 = vmatprep.subr.bf16.mxu0 0
        %1853 = vmatpush1.bf16.msra.mxu0 %v1850
        %1854 = vmatprep.subr.bf16.mxu0 0
        %1855 = vmatpush1.bf16.msra.mxu0 0
        %1856 = vmatprep.subr.bf16.mxu0 0
        %1857 = vmatpush1.bf16.msra.mxu0 0
        %1858 = vmatprep.subr.bf16.mxu0 0
        %1859 = vmatpush1.bf16.msra.mxu0 0
        %1860 = vmatprep.subr.bf16.mxu0 0
        %1861 = vmatpush1.bf16.msra.mxu0 0
        %1862 = vmatprep.subr.bf16.mxu0 0
        %1863 = vmatpush1.bf16.msra.mxu0 0
        %1864 = vmatprep.subr.bf16.mxu0 0
        %1865 = vmatpush1.bf16.msra.mxu0 0
        %1866 = vmatprep.subr.bf16.mxu0 0
        %1867 = vmatpush1.bf16.msra.mxu0 0
        %1868 = vmatprep.subr.bf16.mxu0 0
        %1869 = vmatpush1.bf16.msra.mxu0 0
        %1870 = vmatprep.subr.bf16.mxu0 0
        %1871 = vmatpush1.bf16.msra.mxu0 0
        %1872 = vmatprep.subr.bf16.mxu0 0
        %1873 = vmatpush1.bf16.msra.mxu0 0
        %1874 = vmatprep.subr.bf16.mxu0 0
        %1875 = vmatpush1.bf16.msra.mxu0 0
        %1876 = vmatprep.subr.bf16.mxu0 0
        %1877 = vmatpush1.bf16.msra.mxu0 0
        %1878 = vmatprep.subr.bf16.mxu0 0
        %1879 = vmatpush1.bf16.msra.mxu0 0
        %1880 = vmatprep.subr.bf16.mxu0 0
        %1881 = vmatpush1.bf16.msra.mxu0 0
        %1882 = vmatprep.subr.bf16.mxu0 0
        %1883 = vmatpush1.bf16.msra.mxu0 0
        %1884 = vmatprep.mubr.bf16.mxu0 0
        %1885 = vmatmul.mubr.bf16.gmra.mrb[0].mxu0 %v1847
        %v1886 = vpop.f32.mrb[0].mxu0
        %v1887 = vadd.f32 0.0, %v1886
        %v1888 = vpop.f32.mrb[0].mxu0
        %v1889 = vpop.f32.mrb[0].mxu0
        %v1890 = vpop.f32.mrb[0].mxu0
        %1891 = vdwg.mxu0
        %v1892 = vpack.c.bf16 %v1887, %v1887
        %v1894 = vsel %vm541, %v1892, 0
        %1896 = vmatprep.subr.bf16.mxu0 0
        %1897 = vmatpush1.bf16.msra.mxu0 %v972
        %1898 = vmatprep.subr.bf16.mxu0 0
        %1899 = vmatpush1.bf16.msra.mxu0 0
        %1900 = vmatprep.subr.bf16.mxu0 0
        %1901 = vmatpush1.bf16.msra.mxu0 0
        %1902 = vmatprep.subr.bf16.mxu0 0
        %1903 = vmatpush1.bf16.msra.mxu0 0
        %1904 = vmatprep.subr.bf16.mxu0 0
        %1905 = vmatpush1.bf16.msra.mxu0 0
        %1906 = vmatprep.subr.bf16.mxu0 0
        %1907 = vmatpush1.bf16.msra.mxu0 0
        %1908 = vmatprep.subr.bf16.mxu0 0
        %1909 = vmatpush1.bf16.msra.mxu0 0
        %1910 = vmatprep.subr.bf16.mxu0 0
        %1911 = vmatpush1.bf16.msra.mxu0 0
        %1912 = vmatprep.subr.bf16.mxu0 0
        %1913 = vmatpush1.bf16.msra.mxu0 0
        %1914 = vmatprep.subr.bf16.mxu0 0
        %1915 = vmatpush1.bf16.msra.mxu0 0
        %1916 = vmatprep.subr.bf16.mxu0 0
        %1917 = vmatpush1.bf16.msra.mxu0 0
        %1918 = vmatprep.subr.bf16.mxu0 0
        %1919 = vmatpush1.bf16.msra.mxu0 0
        %1920 = vmatprep.subr.bf16.mxu0 0
        %1921 = vmatpush1.bf16.msra.mxu0 0
        %1922 = vmatprep.subr.bf16.mxu0 0
        %1923 = vmatpush1.bf16.msra.mxu0 0
        %1924 = vmatprep.subr.bf16.mxu0 0
        %1925 = vmatpush1.bf16.msra.mxu0 0
        %1926 = vmatprep.subr.bf16.mxu0 0
        %1927 = vmatpush1.bf16.msra.mxu0 0
        %1928 = vmatprep.mubr.bf16.mxu0 0
        %1929 = vmatmul.mubr.bf16.gmra.mrb[0].mxu0 %v1894
        %v1930 = vpop.f32.mrb[0].mxu0
        %v1931 = vadd.f32 0.0, %v1930
        %v1932 = vpop.f32.mrb[0].mxu0
        %v1933 = vpop.f32.mrb[0].mxu0
        %v1934 = vpop.f32.mrb[0].mxu0
        %1935 = vdwg.mxu0
        %v1936 = vadd.f32 %v1777, %v1931
        %1937 = vrot.lane.b32.xlu0 %v1472, 104
        %v1938 = vpop.permute.xlu0 %1937
        %1939 = vrot.lane.b32.xlu0 %v1473, 72
        %v1940 = vpop.permute.xlu0 %1939
        %v1942 = vsel %vm541, %v1938, 0
        %v1945 = vsel %vm541, %v1940, 0
        %1947 = vmatprep.subr.bf16.mxu0 0
        %1948 = vmatpush1.bf16.xpose.msra.mxu0 %v1945
        %1949 = vmatprep.subr.bf16.mxu0 0
        %1950 = vmatpush1.bf16.xpose.msra.mxu0 0
        %1951 = vmatprep.subr.bf16.mxu0 0
        %1952 = vmatpush1.bf16.xpose.msra.mxu0 0
        %1953 = vmatprep.subr.bf16.mxu0 0
        %1954 = vmatpush1.bf16.xpose.msra.mxu0 0
        %1955 = vmatprep.subr.bf16.mxu0 0
        %1956 = vmatpush1.bf16.xpose.msra.mxu0 0
        %1957 = vmatprep.subr.bf16.mxu0 0
        %1958 = vmatpush1.bf16.xpose.msra.mxu0 0
        %1959 = vmatprep.subr.bf16.mxu0 0
        %1960 = vmatpush1.bf16.xpose.msra.mxu0 0
        %1961 = vmatprep.subr.bf16.mxu0 0
        %1962 = vmatpush1.bf16.xpose.msra.mxu0 0
        %1963 = vmatprep.subr.bf16.mxu0 0
        %1964 = vmatpush1.bf16.xpose.msra.mxu0 0
        %1965 = vmatprep.subr.bf16.mxu0 0
        %1966 = vmatpush1.bf16.xpose.msra.mxu0 0
        %1967 = vmatprep.subr.bf16.mxu0 0
        %1968 = vmatpush1.bf16.xpose.msra.mxu0 0
        %1969 = vmatprep.subr.bf16.mxu0 0
        %1970 = vmatpush1.bf16.xpose.msra.mxu0 0
        %1971 = vmatprep.subr.bf16.mxu0 0
        %1972 = vmatpush1.bf16.xpose.msra.mxu0 0
        %1973 = vmatprep.subr.bf16.mxu0 0
        %1974 = vmatpush1.bf16.xpose.msra.mxu0 0
        %1975 = vmatprep.subr.bf16.mxu0 0
        %1976 = vmatpush1.bf16.xpose.msra.mxu0 0
        %1977 = vmatprep.subr.bf16.mxu0 0
        %1978 = vmatpush1.bf16.xpose.msra.mxu0 0
        %1979 = vmatprep.mubr.bf16.mxu0 0
        %1980 = vmatmul.mubr.bf16.gmra.mrb[0].mxu0 %v1942
        %v1981 = vpop.f32.mrb[0].mxu0
        %v1982 = vadd.f32 0.0, %v1981
        %v1983 = vpop.f32.mrb[0].mxu0
        %v1984 = vpop.f32.mrb[0].mxu0
        %v1985 = vpop.f32.mrb[0].mxu0
        %1986 = vdwg.mxu0
        %v1987 = vsel %vm588, %v1982, -inf
        %1988 = vmax.xlane.f32.xlu0 %v1987
        %v1989 = vpop.xlane.xlu0 %1988
        %v1990 = vsub.f32 %v1982, %v1989
        %v1991 = vmul.f32 %v1990, 1.442695
        %v1992 = vpow.pop %v1991
        %v1993 = vsel %vm588, %v1992, 0.0
        %1994 = vadd.xlane.f32.xlu0 %v1993
        %v1995 = vpop.xlane.xlu0 %1994
        %v1996 = vrcp.pop %v1995
        %v1997 = vmul.f32 %v1992, %v1996
        %v1998 = vpack.c.bf16 %v1997, %v1997
        %1999 = vrot.lane.b32.xlu0 %v1473, 40
        %v2000 = vpop.permute.xlu0 %1999
        %v2002 = vsel %vm603, %v1998, 0
        %v2005 = vsel %vm607, %v2000, 0
        %2007 = vmatprep.subr.bf16.mxu0 0
        %2008 = vmatpush1.bf16.msra.mxu0 %v2005
        %2009 = vmatprep.subr.bf16.mxu0 0
        %2010 = vmatpush1.bf16.msra.mxu0 0
        %2011 = vmatprep.subr.bf16.mxu0 0
        %2012 = vmatpush1.bf16.msra.mxu0 0
        %2013 = vmatprep.subr.bf16.mxu0 0
        %2014 = vmatpush1.bf16.msra.mxu0 0
        %2015 = vmatprep.subr.bf16.mxu0 0
        %2016 = vmatpush1.bf16.msra.mxu0 0
        %2017 = vmatprep.subr.bf16.mxu0 0
        %2018 = vmatpush1.bf16.msra.mxu0 0
        %2019 = vmatprep.subr.bf16.mxu0 0
        %2020 = vmatpush1.bf16.msra.mxu0 0
        %2021 = vmatprep.subr.bf16.mxu0 0
        %2022 = vmatpush1.bf16.msra.mxu0 0
        %2023 = vmatprep.subr.bf16.mxu0 0
        %2024 = vmatpush1.bf16.msra.mxu0 0
        %2025 = vmatprep.subr.bf16.mxu0 0
        %2026 = vmatpush1.bf16.msra.mxu0 0
        %2027 = vmatprep.subr.bf16.mxu0 0
        %2028 = vmatpush1.bf16.msra.mxu0 0
        %2029 = vmatprep.subr.bf16.mxu0 0
        %2030 = vmatpush1.bf16.msra.mxu0 0
        %2031 = vmatprep.subr.bf16.mxu0 0
        %2032 = vmatpush1.bf16.msra.mxu0 0
        %2033 = vmatprep.subr.bf16.mxu0 0
        %2034 = vmatpush1.bf16.msra.mxu0 0
        %2035 = vmatprep.subr.bf16.mxu0 0
        %2036 = vmatpush1.bf16.msra.mxu0 0
        %2037 = vmatprep.subr.bf16.mxu0 0
        %2038 = vmatpush1.bf16.msra.mxu0 0
        %2039 = vmatprep.mubr.bf16.mxu0 0
        %2040 = vmatmul.mubr.bf16.gmra.mrb[0].mxu0 %v2002
        %v2041 = vpop.f32.mrb[0].mxu0
        %v2042 = vadd.f32 0.0, %v2041
        %v2043 = vpop.f32.mrb[0].mxu0
        %v2044 = vpop.f32.mrb[0].mxu0
        %v2045 = vpop.f32.mrb[0].mxu0
        %2046 = vdwg.mxu0
        %v2047 = vpack.c.bf16 %v2042, %v2042
        %v2049 = vsel %vm541, %v2047, 0
        %2051 = vmatprep.subr.bf16.mxu0 0
        %2052 = vmatpush1.bf16.msra.mxu0 %v1130
        %2053 = vmatprep.subr.bf16.mxu0 0
        %2054 = vmatpush1.bf16.msra.mxu0 0
        %2055 = vmatprep.subr.bf16.mxu0 0
        %2056 = vmatpush1.bf16.msra.mxu0 0
        %2057 = vmatprep.subr.bf16.mxu0 0
        %2058 = vmatpush1.bf16.msra.mxu0 0
        %2059 = vmatprep.subr.bf16.mxu0 0
        %2060 = vmatpush1.bf16.msra.mxu0 0
        %2061 = vmatprep.subr.bf16.mxu0 0
        %2062 = vmatpush1.bf16.msra.mxu0 0
        %2063 = vmatprep.subr.bf16.mxu0 0
        %2064 = vmatpush1.bf16.msra.mxu0 0
        %2065 = vmatprep.subr.bf16.mxu0 0
        %2066 = vmatpush1.bf16.msra.mxu0 0
        %2067 = vmatprep.subr.bf16.mxu0 0
        %2068 = vmatpush1.bf16.msra.mxu0 0
        %2069 = vmatprep.subr.bf16.mxu0 0
        %2070 = vmatpush1.bf16.msra.mxu0 0
        %2071 = vmatprep.subr.bf16.mxu0 0
        %2072 = vmatpush1.bf16.msra.mxu0 0
        %2073 = vmatprep.subr.bf16.mxu0 0
        %2074 = vmatpush1.bf16.msra.mxu0 0
        %2075 = vmatprep.subr.bf16.mxu0 0
        %2076 = vmatpush1.bf16.msra.mxu0 0
        %2077 = vmatprep.subr.bf16.mxu0 0
        %2078 = vmatpush1.bf16.msra.mxu0 0
        %2079 = vmatprep.subr.bf16.mxu0 0
        %2080 = vmatpush1.bf16.msra.mxu0 0
        %2081 = vmatprep.subr.bf16.mxu0 0
        %2082 = vmatpush1.bf16.msra.mxu0 0
        %2083 = vmatprep.mubr.bf16.mxu0 0
        %2084 = vmatmul.mubr.bf16.gmra.mrb[0].mxu0 %v2049
        %v2085 = vpop.f32.mrb[0].mxu0
        %v2086 = vadd.f32 0.0, %v2085
        %v2087 = vpop.f32.mrb[0].mxu0
        %v2088 = vpop.f32.mrb[0].mxu0
        %v2089 = vpop.f32.mrb[0].mxu0
        %2090 = vdwg.mxu0
        %v2091 = vadd.f32 %v1936, %v2086
        %v2092 = vadd.f32 %v1407, %v2091
        %v2093 = vadd.f32 %v2092, %v1176
        %v2094 = vsel %vm1179, %v2093, 0.0
        %2095 = vadd.xlane.f32.xlu0 %v2094
        %v2096 = vpop.xlane.xlu0 %2095
        %v2097 = vmul.f32 %v2096, %v1183
        %v2098 = vsub.f32 %v2093, %v2097
        %v2099 = vmul.f32 %v2098, %v2098
        %v2100 = vsel %vm1179, %v2099, 0.0
        %2101 = vadd.xlane.f32.xlu0 %v2100
        %v2102 = vpop.xlane.xlu0 %2101
        %v2103 = vmul.f32 %v2102, %v1183
        %v2104 = vadd.f32 %v2103, 1e-05
        %v2105 = vrsqrt.pop %v2104
        %v2106 = vmul.f32 %v2098, %v2105
        %v2107 = vmul.f32 %v2106, %v1197
        %v2108 = vadd.f32 %v2107, %v1201
        %v2109 = vpack.c.bf16 %v2108, %v2108
        %v2110 = vld [vmem:[%s387] sm:$0xf]
        %v2111 = vld [vmem:[%s387 + $0x4] sm:$0xf]
        %v2112 = vld [vmem:[%s387 + $0x8] sm:$0xf]
        %v2113 = vld [vmem:[%s387 + $0xc] sm:$0xf]
        %v2118 = vunpack.c.l.b16 %v2110
        %v2119 = vunpack.c.l.b16 %v2111
        %v2120 = vunpack.c.l.b16 %v2112
        %v2121 = vunpack.c.l.b16 %v2113
        %v2122 = vpack.c.b16 %v2119, %v2118
        %v2123 = vpack.c.b16 %v2121, %v2120
        %v2127 = vsel %vm484, %v2109, 0
        %2129 = vmatprep.subr.bf16.mxu0 0
        %2130 = vmatpush1.bf16.msra.mxu0 %v2122
        %2131 = vmatprep.subr.bf16.mxu0 0
        %2132 = vmatpush1.bf16.msra.mxu0 %v2123
        %2133 = vmatprep.subr.bf16.mxu0 0
        %2134 = vmatpush1.bf16.msra.mxu0 0
        %2135 = vmatprep.subr.bf16.mxu0 0
        %2136 = vmatpush1.bf16.msra.mxu0 0
        %2137 = vmatprep.subr.bf16.mxu0 0
        %2138 = vmatpush1.bf16.msra.mxu0 0
        %2139 = vmatprep.subr.bf16.mxu0 0
        %2140 = vmatpush1.bf16.msra.mxu0 0
        %2141 = vmatprep.subr.bf16.mxu0 0
        %2142 = vmatpush1.bf16.msra.mxu0 0
        %2143 = vmatprep.subr.bf16.mxu0 0
        %2144 = vmatpush1.bf16.msra.mxu0 0
        %2145 = vmatprep.subr.bf16.mxu0 0
        %2146 = vmatpush1.bf16.msra.mxu0 0
        %2147 = vmatprep.subr.bf16.mxu0 0
        %2148 = vmatpush1.bf16.msra.mxu0 0
        %2149 = vmatprep.subr.bf16.mxu0 0
        %2150 = vmatpush1.bf16.msra.mxu0 0
        %2151 = vmatprep.subr.bf16.mxu0 0
        %2152 = vmatpush1.bf16.msra.mxu0 0
        %2153 = vmatprep.subr.bf16.mxu0 0
        %2154 = vmatpush1.bf16.msra.mxu0 0
        %2155 = vmatprep.subr.bf16.mxu0 0
        %2156 = vmatpush1.bf16.msra.mxu0 0
        %2157 = vmatprep.subr.bf16.mxu0 0
        %2158 = vmatpush1.bf16.msra.mxu0 0
        %2159 = vmatprep.subr.bf16.mxu0 0
        %2160 = vmatpush1.bf16.msra.mxu0 0
        %2161 = vmatprep.mubr.bf16.mxu0 0
        %2162 = vmatmul.mubr.bf16.gmra.mrb[0].mxu0 %v2127
        %v2163 = vpop.f32.mrb[0].mxu0
        %v2164 = vadd.f32 %v1212, %v2163
        %v2165 = vpop.f32.mrb[0].mxu0
        %v2166 = vpop.f32.mrb[0].mxu0
        %v2167 = vpop.f32.mrb[0].mxu0
        %2168 = vdwg.mxu0
        %v2169 = vmax.f32 %v2164, 0.0
        %v2170 = vpack.c.bf16 %v2169, %v2169
        %v2171 = vld [vmem:[%s396] sm:$0xf]
        %v2172 = vld [vmem:[%s396 + $0x4] sm:$0xf]
        %v2173 = vld [vmem:[%s396 + $0x8] sm:$0xf]
        %v2174 = vld [vmem:[%s396 + $0xc] sm:$0xf]
        %v2175 = vld [vmem:[%s396 + $0x10] sm:$0xf]
        %v2176 = vld [vmem:[%s396 + $0x14] sm:$0xf]
        %v2177 = vld [vmem:[%s396 + $0x18] sm:$0xf]
        %v2178 = vld [vmem:[%s396 + $0x1c] sm:$0xf]
        %v2179 = vld [vmem:[%s396 + $0x20] sm:$0xf]
        %v2180 = vld [vmem:[%s396 + $0x24] sm:$0xf]
        %v2181 = vld [vmem:[%s396 + $0x28] sm:$0xf]
        %v2182 = vld [vmem:[%s396 + $0x2c] sm:$0xf]
        %v2183 = vld [vmem:[%s396 + $0x30] sm:$0xf]
        %v2184 = vld [vmem:[%s396 + $0x34] sm:$0xf]
        %v2185 = vld [vmem:[%s396 + $0x38] sm:$0xf]
        %v2186 = vld [vmem:[%s396 + $0x3c] sm:$0xf]
        %v2203 = vunpack.c.l.b16 %v2171
        %v2204 = vunpack.c.l.b16 %v2172
        %v2205 = vunpack.c.l.b16 %v2173
        %v2206 = vunpack.c.l.b16 %v2174
        %v2207 = vunpack.c.l.b16 %v2175
        %v2208 = vunpack.c.l.b16 %v2176
        %v2209 = vunpack.c.l.b16 %v2177
        %v2210 = vunpack.c.l.b16 %v2178
        %v2211 = vunpack.c.l.b16 %v2179
        %v2212 = vunpack.c.l.b16 %v2180
        %v2213 = vunpack.c.l.b16 %v2181
        %v2214 = vunpack.c.l.b16 %v2182
        %v2215 = vunpack.c.l.b16 %v2183
        %v2216 = vunpack.c.l.b16 %v2184
        %v2217 = vunpack.c.l.b16 %v2185
        %v2218 = vunpack.c.l.b16 %v2186
        %v2219 = vpack.c.b16 %v2204, %v2203
        %v2220 = vpack.c.b16 %v2206, %v2205
        %v2221 = vpack.c.b16 %v2208, %v2207
        %v2222 = vpack.c.b16 %v2210, %v2209
        %v2223 = vpack.c.b16 %v2212, %v2211
        %v2224 = vpack.c.b16 %v2214, %v2213
        %v2225 = vpack.c.b16 %v2216, %v2215
        %v2226 = vpack.c.b16 %v2218, %v2217
        %2235 = vmatprep.subr.bf16.mxu0 0
        %2236 = vmatpush1.bf16.msra.mxu0 %v2219
        %2237 = vmatprep.subr.bf16.mxu0 0
        %2238 = vmatpush1.bf16.msra.mxu0 %v2220
        %2239 = vmatprep.subr.bf16.mxu0 0
        %2240 = vmatpush1.bf16.msra.mxu0 %v2221
        %2241 = vmatprep.subr.bf16.mxu0 0
        %2242 = vmatpush1.bf16.msra.mxu0 %v2222
        %2243 = vmatprep.subr.bf16.mxu0 0
        %2244 = vmatpush1.bf16.msra.mxu0 %v2223
        %2245 = vmatprep.subr.bf16.mxu0 0
        %2246 = vmatpush1.bf16.msra.mxu0 %v2224
        %2247 = vmatprep.subr.bf16.mxu0 0
        %2248 = vmatpush1.bf16.msra.mxu0 %v2225
        %2249 = vmatprep.subr.bf16.mxu0 0
        %2250 = vmatpush1.bf16.msra.mxu0 %v2226
        %2251 = vmatprep.subr.bf16.mxu0 0
        %2252 = vmatpush1.bf16.msra.mxu0 0
        %2253 = vmatprep.subr.bf16.mxu0 0
        %2254 = vmatpush1.bf16.msra.mxu0 0
        %2255 = vmatprep.subr.bf16.mxu0 0
        %2256 = vmatpush1.bf16.msra.mxu0 0
        %2257 = vmatprep.subr.bf16.mxu0 0
        %2258 = vmatpush1.bf16.msra.mxu0 0
        %2259 = vmatprep.subr.bf16.mxu0 0
        %2260 = vmatpush1.bf16.msra.mxu0 0
        %2261 = vmatprep.subr.bf16.mxu0 0
        %2262 = vmatpush1.bf16.msra.mxu0 0
        %2263 = vmatprep.subr.bf16.mxu0 0
        %2264 = vmatpush1.bf16.msra.mxu0 0
        %2265 = vmatprep.subr.bf16.mxu0 0
        %2266 = vmatpush1.bf16.msra.mxu0 0
        %2267 = vmatprep.mubr.bf16.mxu0 0
        %2268 = vmatmul.mubr.bf16.gmra.mrb[0].mxu0 %v2170
        %v2269 = vpop.f32.mrb[0].mxu0
        %v2270 = vadd.f32 %v1289, %v2269
        %v2271 = vpop.f32.mrb[0].mxu0
        %v2272 = vpop.f32.mrb[0].mxu0
        %v2273 = vpop.f32.mrb[0].mxu0
        %2274 = vdwg.mxu0
        %v2275 = vadd.f32 %v2108, %v2270
        %v2276 = vsel %vm1179, %v2275, 0.0
        %2277 = vadd.xlane.f32.xlu0 %v2276
        %v2278 = vpop.xlane.xlu0 %2277
        %v2279 = vmul.f32 %v2278, %v1183
        %v2280 = vsub.f32 %v2275, %v2279
        %v2281 = vmul.f32 %v2280, %v2280
        %v2282 = vsel %vm1179, %v2281, 0.0
        %2283 = vadd.xlane.f32.xlu0 %v2282
        %v2284 = vpop.xlane.xlu0 %2283
        %v2285 = vmul.f32 %v2284, %v1183
        %v2286 = vadd.f32 %v2285, 1e-05
        %v2287 = vrsqrt.pop %v2286
        %v2288 = vmul.f32 %v2280, %v2287
        %v2289 = vmul.f32 %v2288, %v1393
        %v2290 = vadd.f32 %v2289, %v1397
        %2291 = vst.msk [vmem:[%s1406] sm:$0xf] %vm1179, %v2290
        // Predicated region
        $region77: #{vision_encoder_decoder.5} parent=43 // pred_check
          %p2292 = pneg %p1401
        $region78: #{vision_encoder_decoder.5} parent=43 // pred_check_branch
          %2294 = sbr.rel (%p2292) target = $region80
        $region79: #{vision_encoder_decoder.5} parent=43 // pred_region
          %s2295 = scalar_lea.vmem [#allocation14], 4
          %2296 = vst.msk [vmem:[%s2295] sm:$0xf] %vm1179, %v2290
        $region80: #{vision_encoder_decoder.5} parent=43 // pred_fallthru
          _
        // Predicated region
        $region81: #{vision_encoder_decoder.5} parent=43 // pred_check
          %p2297 = pneg %p214
        $region82: #{vision_encoder_decoder.5} parent=43 // pred_check_branch
          %2299 = sbr.rel (%p2297) target = $region84
        $region83: #{vision_encoder_decoder.5} parent=43 // pred_region
          %s2300 = smul.u32 2, %s32
          %s2302 = ssub.s32 128, 128
          %2303 = vsyncadd [#allocation5], %s2302
          %s2304 = smul.addr %s2300, 64
          %s2305 = scalar_lea.hbm %s6, %s2304
          %s2306 = sshll.u32 [#allocation14], 4
          %s2307 = int_to_ptr.vmem [resolvable:$true] %s2306
          %2312 = dma.vmem_to_hbm [thread:$0]  %s2307, 128, %s2305, [#allocation5], 64, 64, 4
        $region84: #{vision_encoder_decoder.5} parent=43 // pred_fallthru
          _
        // Predicated region
        $region85: #{vision_encoder_decoder.5} parent=43 // pred_check
          %p2313 = pneg %p214
        $region86: #{vision_encoder_decoder.5} parent=43 // pred_check_branch
          %2315 = sbr.rel (%p2313) target = $region88
        $region87: #{vision_encoder_decoder.5} parent=43 // pred_region
          %2316 = dma.done [#allocation5], 128
        $region88: #{vision_encoder_decoder.5} parent=43 // pred_fallthru
          _
      $region44: #{vision_encoder_decoder.5} parent=5 // pred_fallthru
        _
      %p2317 = scmp.le.s32.totalorder 2, %s23
      // Predicated region
      $region89: #{vision_encoder_decoder.5} parent=5 // pred_check
        %p2318 = pneg %p2317
      $region90: #{vision_encoder_decoder.5} parent=5 // pred_check_branch
        %2320 = sbr.rel (%p2318) target = $region92
      $region91: #{vision_encoder_decoder.5} parent=5 // pred_region
        %s2321 = ssub.s32 %s23, 2
      $region92: #{vision_encoder_decoder.5} parent=5 // pred_fallthru
        _
    $region6: #{vision_encoder_decoder.5} parent=1 // loop_footer
      %s27 = sadd.s32 1, %s23
    $region7: #{vision_encoder_decoder.5} parent=1 // loop_footer_branch
      %22 = sbr.rel target = $region3
    $region8: #{vision_encoder_decoder.5} parent=1 // loop_exit
      _
    %2322 = vsyncpa [#allocation4], 1
    %s2323 = scalar_lea.sflag [#allocation4], 1
    %2324 = vsyncpa %s2323, 1
    %2325 = vsyncpa [#allocation7], 1
    %s2326 = scalar_lea.sflag [#allocation7], 1
    %2327 = vsyncpa %s2326, 1
    %2328 = vsyncpa [#allocation10], 1
    %s2329 = scalar_lea.sflag [#allocation10], 1
    %2330 = vsyncpa %s2329, 1
    %2331 = vsyncpa [#allocation13], 1
    %s2332 = scalar_lea.sflag [#allocation13], 1
    %2333 = vsyncpa %s2332, 1
    %2334 = vsyncpa [#allocation5], 1
    %s2335 = scalar_lea.sflag [#allocation5], 1
    %2336 = vsyncpa %s2335, 1

// kernel: vision_encoder_decoder.6
$region0: #{vision_encoder_decoder.6}
  #allocation0 [shape = 'u32[]', space=smem, size = 0x4, offset = 0x4, fixed_abs, tag = 'smem constant byte address 0x4 - core index']
  #allocation1 [shape = 'u32[144,128]{1,0:T(1,128)}', space=vmem, size = 0x12000, scoped, tag = 'internal scratch']
  #allocation2 [shape = 'f32[2,8,32]{2,1,0:T(8,128)}', space=vmem, size = 0x2000, scoped, tag = 'scratch operand']
  #allocation3 [shape = 'f32[2,8,8]{2,1,0:T(8,128)}', space=vmem, size = 0x2000, scoped, tag = 'scratch operand']
  %s0 = inlined_call_operand.hbm [shape: f32[2,8,32], index: 0, kind: input, shape index: {}]
  %s1 = inlined_call_operand.hbm [shape: f32[2,4,32], index: 1, kind: input, shape index: {}]
  %s2 = inlined_call_operand.hbm [shape: f32[2,1,8], index: 2, kind: input, shape index: {}]
  %s3 = inlined_call_operand.hbm [shape: bf16[2,32,96], index: 3, kind: input, shape index: {}]
  %s4 = inlined_call_operand.hbm [shape: bf16[2,32,32], index: 4, kind: input, shape index: {}]
  %s5 = inlined_call_operand.hbm [shape: bf16[2,32,32], index: 5, kind: input, shape index: {}]
  %s6 = inlined_call_operand.hbm [shape: bf16[2,32,64], index: 6, kind: input, shape index: {}]
  %s7 = inlined_call_operand.hbm [shape: bf16[2,32,32], index: 7, kind: input, shape index: {}]
  %s8 = inlined_call_operand.hbm [shape: bf16[2,32,128], index: 8, kind: input, shape index: {}]
  %s9 = inlined_call_operand.hbm [shape: bf16[2,128,32], index: 9, kind: input, shape index: {}]
  %s10 = inlined_call_operand.hbm [shape: f32[2,5,128], index: 10, kind: input, shape index: {}]
  %s11 = inlined_call_operand.hbm [shape: f32[2,8,32], index: 11, kind: output, shape index: {}]
  %s12 = sld [smem:[#allocation0]]
  $region133: #{vision_encoder_decoder.6} parent=0
    _
  %s14 = ssub.s32 1, %s12
  %s15 = scalar_select 0, %s14, %s12
  $region1: #{vision_encoder_decoder.6} parent=0
    #allocation4 [shape = 'u8[8192]{0}', space=vmem, size = 0x2000, scoped, tag = 'input window, operand 0, single buffered']
    #allocation5 [shape = 's32[2]{0}', space=sflag, size = 0x8, scoped, tag = 'scoped memory for vision_encoder_decoder.6']
    #allocation6 [shape = 's32[2]{0}', space=sflag, size = 0x8, scoped, tag = 'scoped memory for vision_encoder_decoder.6']
    #allocation7 [shape = 'u8[4096]{0}', space=vmem, size = 0x1000, scoped, tag = 'input window, operand 1, single buffered']
    #allocation8 [shape = 's32[1]{0}', space=sflag, size = 0x4, scoped, tag = 'scoped memory for vision_encoder_decoder.6']
    #allocation9 [shape = 'u8[1024]{0}', space=vmem, size = 0x400, scoped, tag = 'input window, operand 2, single buffered']
    #allocation10 [shape = 'u8[16384]{0}', space=vmem, size = 0x4000, scoped, tag = 'input window, operand 3']
    #allocation11 [shape = 's32[2]{0}', space=sflag, size = 0x8, scoped, tag = 'scoped memory for vision_encoder_decoder.6']
    #allocation12 [shape = 'u8[16384]{0}', space=vmem, size = 0x4000, scoped, tag = 'input window, operand 4']
    #allocation13 [shape = 'u8[16384]{0}', space=vmem, size = 0x4000, scoped, tag = 'input window, operand 5']
    #allocation14 [shape = 's32[2]{0}', space=sflag, size = 0x8, scoped, tag = 'scoped memory for vision_encoder_decoder.6']
    #allocation15 [shape = 'u8[16384]{0}', space=vmem, size = 0x4000, scoped, tag = 'input window, operand 6']
    #allocation16 [shape = 'u8[16384]{0}', space=vmem, size = 0x4000, scoped, tag = 'input window, operand 7']
    #allocation17 [shape = 's32[2]{0}', space=sflag, size = 0x8, scoped, tag = 'scoped memory for vision_encoder_decoder.6']
    #allocation18 [shape = 'u8[16384]{0}', space=vmem, size = 0x4000, scoped, tag = 'input window, operand 8']
    #allocation19 [shape = 'u8[65536]{0}', space=vmem, size = 0x10000, scoped, tag = 'input window, operand 9']
    #allocation20 [shape = 's32[2]{0}', space=sflag, size = 0x8, scoped, tag = 'scoped memory for vision_encoder_decoder.6']
    #allocation21 [shape = 'u8[8192]{0}', space=vmem, size = 0x2000, scoped, tag = 'input window, operand 10']
    #allocation22 [shape = 'u8[8192]{0}', space=vmem, size = 0x2000, scoped, tag = 'output window, operand 0, single buffered']
    %16 = vsyncpa [#allocation5], 0
    %17 = vsyncpa [#allocation8], 0
    %18 = vsyncpa [#allocation11], 0
    %s19 = scalar_lea.sflag [#allocation11], 1
    %20 = vsyncpa %s19, 0
    %21 = vsyncpa [#allocation14], 0
    %s22 = scalar_lea.sflag [#allocation14], 1
    %23 = vsyncpa %s22, 0
    %24 = vsyncpa [#allocation17], 0
    %s25 = scalar_lea.sflag [#allocation17], 1
    %26 = vsyncpa %s25, 0
    %27 = vsyncpa [#allocation20], 0
    %s28 = scalar_lea.sflag [#allocation20], 1
    %29 = vsyncpa %s28, 0
    %30 = vsyncpa [#allocation6], 0
    loop: start=0, step=1, limit=4
    $region2: #{vision_encoder_decoder.6} parent=1 // loop_pre_header
      _
    $region3: #{vision_encoder_decoder.6} parent=1 // loop_header
      %s32 = sphi 0, %s36
      %p33 = scmp.ge.s32.totalorder %s32, 4
      %s39 = sphi 0, %s51
      %s40 = sphi 0, %s47
      %s41 = sphi 0, %s39
      %s42 = sphi 0, %s40
      %s43 = sphi 0, %s41
      %s44 = sphi 0, %s42
      %s54 = sphi 0, %s56
      %s57 = sphi 0, %s54
      %s58 = sphi 0, %s57
      %s74 = sphi 0, %s58
      %s80 = sphi 0, %s82
      %s83 = sphi 0, %s80
      %s84 = sphi 0, %s83
      %s100 = sphi 0, %s84
      %s106 = sphi 0, %s108
      %s109 = sphi 0, %s106
      %s110 = sphi 0, %s109
      %s126 = sphi 0, %s110
      %s132 = sphi 0, %s134
      %s135 = sphi 0, %s132
      %s136 = sphi 0, %s135
      %s152 = sphi 0, %s136
      %s158 = sphi 0, %s160
      %s161 = sphi 0, %s158
      %s162 = sphi 0, %s161
      %s178 = sphi 0, %s162
      %s184 = sphi 0, %s186
      %s187 = sphi 0, %s184
      %s188 = sphi 0, %s187
      %s204 = sphi 0, %s188
      %s210 = sphi 0, %s212
      %s213 = sphi 0, %s210
      %s214 = sphi 0, %s213
      %s230 = sphi 0, %s214
      %s236 = sphi 0, %s238
      %s239 = sphi 0, %s236
      %s240 = sphi 0, %s239
      %s256 = sphi 0, %s240
      %s262 = sphi 0, %s264
      %s265 = sphi 0, %s262
      %s266 = sphi 0, %s265
      %s282 = sphi 0, %s266
      %s288 = sphi 0, %s290
      %s291 = sphi 0, %s288
      %s292 = sphi 0, %s291
      %s308 = sphi 0, %s292
      %s314 = sphi 0, %s316
      %s317 = sphi 0, %s314
      %s318 = sphi 0, %s317
      %s334 = sphi 0, %s318
      %s340 = sphi 0, %s342
      %s343 = sphi 0, %s340
      %s344 = sphi 0, %s343
      %s360 = sphi 0, %s344
    $region4: #{vision_encoder_decoder.6} parent=1 // loop_header_branch
      %35 = sbr.rel (%p33) target = $region8
    $region5: #{vision_encoder_decoder.6} parent=1 // loop_body
      %s37 = ssub.s32 %s32, 1
      %s38 = ssub.s32 %s32, 2
      %s45 = sadd.s32 1, %s40
      %p46 = scmp.ge.s32.totalorder %s45, 2
      %s47 = scalar_select %p46, 0, %s45
      %s48 = sadd.s32 1, %s39
      %s49 = scalar_select %p46, %s48, %s39
      %p50 = scmp.ge.s32.totalorder %s49, 1
      %s51 = scalar_select %p50, 0, %s49
      %s52 = ssub.s32 %s39, %s51
      %p53 = scmp.eq.s32.totalorder %s52, 0
      %s55 = sadd.s32 %s54, 1
      %s56 = scalar_select %p53, %s54, %s55
      %p59 = pneg %p53
      %p60 = scmp.eq.s32.totalorder %s32, 1
      %p61 = por %p59, %p60
      %p62 = scmp.ne.s32.totalorder %s54, %s57
      %p63 = scmp.eq.s32.totalorder %s32, 0
      %p64 = por %p62, %p63
      %p65 = scmp.ne.s32.totalorder %s54, %s57
      %p66 = scmp.eq.s32.totalorder %s37, 1
      %p67 = por %p65, %p66
      %p68 = scmp.ne.s32.totalorder %s57, %s58
      %p69 = scmp.eq.s32.totalorder %s37, 0
      %p70 = por %p68, %p69
      %p71 = scmp.ne.s32.totalorder %s57, %s58
      %p72 = scmp.eq.s32.totalorder %s38, 1
      %p73 = por %p71, %p72
      %p75 = scmp.ne.s32.totalorder %s58, %s74
      %p76 = scmp.eq.s32.totalorder %s38, 0
      %p77 = por %p75, %p76
      %s78 = ssub.s32 %s39, %s51
      %p79 = scmp.eq.s32.totalorder %s78, 0
      %s81 = sadd.s32 %s80, 1
      %s82 = scalar_select %p79, %s80, %s81
      %p85 = pneg %p79
      %p86 = scmp.eq.s32.totalorder %s32, 1
      %p87 = por %p85, %p86
      %p88 = scmp.ne.s32.totalorder %s80, %s83
      %p89 = scmp.eq.s32.totalorder %s32, 0
      %p90 = por %p88, %p89
      %p91 = scmp.ne.s32.totalorder %s80, %s83
      %p92 = scmp.eq.s32.totalorder %s37, 1
      %p93 = por %p91, %p92
      %p94 = scmp.ne.s32.totalorder %s83, %s84
      %p95 = scmp.eq.s32.totalorder %s37, 0
      %p96 = por %p94, %p95
      %p97 = scmp.ne.s32.totalorder %s83, %s84
      %p98 = scmp.eq.s32.totalorder %s38, 1
      %p99 = por %p97, %p98
      %p101 = scmp.ne.s32.totalorder %s84, %s100
      %p102 = scmp.eq.s32.totalorder %s38, 0
      %p103 = por %p101, %p102
      %s104 = ssub.s32 %s39, %s51
      %p105 = scmp.eq.s32.totalorder %s104, 0
      %s107 = sadd.s32 %s106, 1
      %s108 = scalar_select %p105, %s106, %s107
      %p111 = pneg %p105
      %p112 = scmp.eq.s32.totalorder %s32, 1
      %p113 = por %p111, %p112
      %p114 = scmp.ne.s32.totalorder %s106, %s109
      %p115 = scmp.eq.s32.totalorder %s32, 0
      %p116 = por %p114, %p115
      %p117 = scmp.ne.s32.totalorder %s106, %s109
      %p118 = scmp.eq.s32.totalorder %s37, 1
      %p119 = por %p117, %p118
      %p120 = scmp.ne.s32.totalorder %s109, %s110
      %p121 = scmp.eq.s32.totalorder %s37, 0
      %p122 = por %p120, %p121
      %p123 = scmp.ne.s32.totalorder %s109, %s110
      %p124 = scmp.eq.s32.totalorder %s38, 1
      %p125 = por %p123, %p124
      %p127 = scmp.ne.s32.totalorder %s110, %s126
      %p128 = scmp.eq.s32.totalorder %s38, 0
      %p129 = por %p127, %p128
      %s130 = ssub.s32 %s40, %s47
      %p131 = scmp.eq.s32.totalorder %s130, 0
      %s133 = sadd.s32 %s132, 1
      %s134 = scalar_select %p131, %s132, %s133
      %p137 = pneg %p131
      %p138 = scmp.eq.s32.totalorder %s32, 1
      %p139 = por %p137, %p138
      %p140 = scmp.ne.s32.totalorder %s132, %s135
      %p141 = scmp.eq.s32.totalorder %s32, 0
      %p142 = por %p140, %p141
      %p143 = scmp.ne.s32.totalorder %s132, %s135
      %p144 = scmp.eq.s32.totalorder %s37, 1
      %p145 = por %p143, %p144
      %p146 = scmp.ne.s32.totalorder %s135, %s136
      %p147 = scmp.eq.s32.totalorder %s37, 0
      %p148 = por %p146, %p147
      %p149 = scmp.ne.s32.totalorder %s135, %s136
      %p150 = scmp.eq.s32.totalorder %s38, 1
      %p151 = por %p149, %p150
      %p153 = scmp.ne.s32.totalorder %s136, %s152
      %p154 = scmp.eq.s32.totalorder %s38, 0
      %p155 = por %p153, %p154
      %s156 = ssub.s32 %s40, %s47
      %p157 = scmp.eq.s32.totalorder %s156, 0
      %s159 = sadd.s32 %s158, 1
      %s160 = scalar_select %p157, %s158, %s159
      %p163 = pneg %p157
      %p164 = scmp.eq.s32.totalorder %s32, 1
      %p165 = por %p163, %p164
      %p166 = scmp.ne.s32.totalorder %s158, %s161
      %p167 = scmp.eq.s32.totalorder %s32, 0
      %p168 = por %p166, %p167
      %p169 = scmp.ne.s32.totalorder %s158, %s161
      %p170 = scmp.eq.s32.totalorder %s37, 1
      %p171 = por %p169, %p170
      %p172 = scmp.ne.s32.totalorder %s161, %s162
      %p173 = scmp.eq.s32.totalorder %s37, 0
      %p174 = por %p172, %p173
      %p175 = scmp.ne.s32.totalorder %s161, %s162
      %p176 = scmp.eq.s32.totalorder %s38, 1
      %p177 = por %p175, %p176
      %p179 = scmp.ne.s32.totalorder %s162, %s178
      %p180 = scmp.eq.s32.totalorder %s38, 0
      %p181 = por %p179, %p180
      %s182 = ssub.s32 %s40, %s47
      %p183 = scmp.eq.s32.totalorder %s182, 0
      %s185 = sadd.s32 %s184, 1
      %s186 = scalar_select %p183, %s184, %s185
      %p189 = pneg %p183
      %p190 = scmp.eq.s32.totalorder %s32, 1
      %p191 = por %p189, %p190
      %p192 = scmp.ne.s32.totalorder %s184, %s187
      %p193 = scmp.eq.s32.totalorder %s32, 0
      %p194 = por %p192, %p193
      %p195 = scmp.ne.s32.totalorder %s184, %s187
      %p196 = scmp.eq.s32.totalorder %s37, 1
      %p197 = por %p195, %p196
      %p198 = scmp.ne.s32.totalorder %s187, %s188
      %p199 = scmp.eq.s32.totalorder %s37, 0
      %p200 = por %p198, %p199
      %p201 = scmp.ne.s32.totalorder %s187, %s188
      %p202 = scmp.eq.s32.totalorder %s38, 1
      %p203 = por %p201, %p202
      %p205 = scmp.ne.s32.totalorder %s188, %s204
      %p206 = scmp.eq.s32.totalorder %s38, 0
      %p207 = por %p205, %p206
      %s208 = ssub.s32 %s40, %s47
      %p209 = scmp.eq.s32.totalorder %s208, 0
      %s211 = sadd.s32 %s210, 1
      %s212 = scalar_select %p209, %s210, %s211
      %p215 = pneg %p209
      %p216 = scmp.eq.s32.totalorder %s32, 1
      %p217 = por %p215, %p216
      %p218 = scmp.ne.s32.totalorder %s210, %s213
      %p219 = scmp.eq.s32.totalorder %s32, 0
      %p220 = por %p218, %p219
      %p221 = scmp.ne.s32.totalorder %s210, %s213
      %p222 = scmp.eq.s32.totalorder %s37, 1
      %p223 = por %p221, %p222
      %p224 = scmp.ne.s32.totalorder %s213, %s214
      %p225 = scmp.eq.s32.totalorder %s37, 0
      %p226 = por %p224, %p225
      %p227 = scmp.ne.s32.totalorder %s213, %s214
      %p228 = scmp.eq.s32.totalorder %s38, 1
      %p229 = por %p227, %p228
      %p231 = scmp.ne.s32.totalorder %s214, %s230
      %p232 = scmp.eq.s32.totalorder %s38, 0
      %p233 = por %p231, %p232
      %s234 = ssub.s32 %s40, %s47
      %p235 = scmp.eq.s32.totalorder %s234, 0
      %s237 = sadd.s32 %s236, 1
      %s238 = scalar_select %p235, %s236, %s237
      %p241 = pneg %p235
      %p242 = scmp.eq.s32.totalorder %s32, 1
      %p243 = por %p241, %p242
      %p244 = scmp.ne.s32.totalorder %s236, %s239
      %p245 = scmp.eq.s32.totalorder %s32, 0
      %p246 = por %p244, %p245
      %p247 = scmp.ne.s32.totalorder %s236, %s239
      %p248 = scmp.eq.s32.totalorder %s37, 1
      %p249 = por %p247, %p248
      %p250 = scmp.ne.s32.totalorder %s239, %s240
      %p251 = scmp.eq.s32.totalorder %s37, 0
      %p252 = por %p250, %p251
      %p253 = scmp.ne.s32.totalorder %s239, %s240
      %p254 = scmp.eq.s32.totalorder %s38, 1
      %p255 = por %p253, %p254
      %p257 = scmp.ne.s32.totalorder %s240, %s256
      %p258 = scmp.eq.s32.totalorder %s38, 0
      %p259 = por %p257, %p258
      %s260 = ssub.s32 %s40, %s47
      %p261 = scmp.eq.s32.totalorder %s260, 0
      %s263 = sadd.s32 %s262, 1
      %s264 = scalar_select %p261, %s262, %s263
      %p267 = pneg %p261
      %p268 = scmp.eq.s32.totalorder %s32, 1
      %p269 = por %p267, %p268
      %p270 = scmp.ne.s32.totalorder %s262, %s265
      %p271 = scmp.eq.s32.totalorder %s32, 0
      %p272 = por %p270, %p271
      %p273 = scmp.ne.s32.totalorder %s262, %s265
      %p274 = scmp.eq.s32.totalorder %s37, 1
      %p275 = por %p273, %p274
      %p276 = scmp.ne.s32.totalorder %s265, %s266
      %p277 = scmp.eq.s32.totalorder %s37, 0
      %p278 = por %p276, %p277
      %p279 = scmp.ne.s32.totalorder %s265, %s266
      %p280 = scmp.eq.s32.totalorder %s38, 1
      %p281 = por %p279, %p280
      %p283 = scmp.ne.s32.totalorder %s266, %s282
      %p284 = scmp.eq.s32.totalorder %s38, 0
      %p285 = por %p283, %p284
      %s286 = ssub.s32 %s40, %s47
      %p287 = scmp.eq.s32.totalorder %s286, 0
      %s289 = sadd.s32 %s288, 1
      %s290 = scalar_select %p287, %s288, %s289
      %p293 = pneg %p287
      %p294 = scmp.eq.s32.totalorder %s32, 1
      %p295 = por %p293, %p294
      %p296 = scmp.ne.s32.totalorder %s288, %s291
      %p297 = scmp.eq.s32.totalorder %s32, 0
      %p298 = por %p296, %p297
      %p299 = scmp.ne.s32.totalorder %s288, %s291
      %p300 = scmp.eq.s32.totalorder %s37, 1
      %p301 = por %p299, %p300
      %p302 = scmp.ne.s32.totalorder %s291, %s292
      %p303 = scmp.eq.s32.totalorder %s37, 0
      %p304 = por %p302, %p303
      %p305 = scmp.ne.s32.totalorder %s291, %s292
      %p306 = scmp.eq.s32.totalorder %s38, 1
      %p307 = por %p305, %p306
      %p309 = scmp.ne.s32.totalorder %s292, %s308
      %p310 = scmp.eq.s32.totalorder %s38, 0
      %p311 = por %p309, %p310
      %s312 = ssub.s32 %s40, %s47
      %p313 = scmp.eq.s32.totalorder %s312, 0
      %s315 = sadd.s32 %s314, 1
      %s316 = scalar_select %p313, %s314, %s315
      %p319 = pneg %p313
      %p320 = scmp.eq.s32.totalorder %s32, 1
      %p321 = por %p319, %p320
      %p322 = scmp.ne.s32.totalorder %s314, %s317
      %p323 = scmp.eq.s32.totalorder %s32, 0
      %p324 = por %p322, %p323
      %p325 = scmp.ne.s32.totalorder %s314, %s317
      %p326 = scmp.eq.s32.totalorder %s37, 1
      %p327 = por %p325, %p326
      %p328 = scmp.ne.s32.totalorder %s317, %s318
      %p329 = scmp.eq.s32.totalorder %s37, 0
      %p330 = por %p328, %p329
      %p331 = scmp.ne.s32.totalorder %s317, %s318
      %p332 = scmp.eq.s32.totalorder %s38, 1
      %p333 = por %p331, %p332
      %p335 = scmp.ne.s32.totalorder %s318, %s334
      %p336 = scmp.eq.s32.totalorder %s38, 0
      %p337 = por %p335, %p336
      %s338 = ssub.s32 %s39, %s51
      %p339 = scmp.eq.s32.totalorder %s338, 0
      %s341 = sadd.s32 %s340, 1
      %s342 = scalar_select %p339, %s340, %s341
      %p345 = pneg %p339
      %p346 = scmp.eq.s32.totalorder %s32, 1
      %p347 = por %p345, %p346
      %p348 = scmp.ne.s32.totalorder %s340, %s343
      %p349 = scmp.eq.s32.totalorder %s32, 0
      %p350 = por %p348, %p349
      %p351 = scmp.ne.s32.totalorder %s340, %s343
      %p352 = scmp.eq.s32.totalorder %s37, 1
      %p353 = por %p351, %p352
      %p354 = scmp.ne.s32.totalorder %s343, %s344
      %p355 = scmp.eq.s32.totalorder %s37, 0
      %p356 = por %p354, %p355
      %p357 = scmp.ne.s32.totalorder %s343, %s344
      %p358 = scmp.eq.s32.totalorder %s38, 1
      %p359 = por %p357, %p358
      %p361 = scmp.ne.s32.totalorder %s344, %s360
      %p362 = scmp.eq.s32.totalorder %s38, 0
      %p363 = por %p361, %p362
      %p364 = scmp.le.s32.totalorder 1, %s32
      %p365 = scmp.lt.s32.totalorder %s32, 3
      %p366 = pnand %p364, %p365
      %p367 = pneg %p366
      // Predicated region
      $region9: #{vision_encoder_decoder.6} parent=5 // pred_check
        _
      $region10: #{vision_encoder_decoder.6} parent=5 // pred_check_branch
        %369 = sbr.rel (%p366) target = $region12
      $region11: #{vision_encoder_decoder.6} parent=5 // pred_region
        %s370 = ssub.s32 %s32, 1
        // Predicated region
        $region13: #{vision_encoder_decoder.6} parent=11 // pred_check
          %p371 = pneg %p70
        $region14: #{vision_encoder_decoder.6} parent=11 // pred_check_branch
          %373 = sbr.rel (%p371) target = $region16
        $region15: #{vision_encoder_decoder.6} parent=11 // pred_region
          %s374 = smul.u32 2, %s41
          %s376 = ssub.s32 256, 256
          %377 = vsyncadd [#allocation5], %s376
          %s378 = smul.addr %s374, 128
          %s379 = scalar_lea.hbm %s0, %s378
          %s380 = sshll.u32 [#allocation4], 4
          %s381 = int_to_ptr.vmem [resolvable:$true] %s380
          %386 = dma.hbm_to_vmem [thread:$0]  %s379, 256, %s381, [#allocation5], 128, 128, 8
        $region16: #{vision_encoder_decoder.6} parent=11 // pred_fallthru
          _
        // Predicated region
        $region17: #{vision_encoder_decoder.6} parent=11 // pred_check
          %p387 = pneg %p96
        $region18: #{vision_encoder_decoder.6} parent=11 // pred_check_branch
          %389 = sbr.rel (%p387) target = $region20
        $region19: #{vision_encoder_decoder.6} parent=11 // pred_region
          %s390 = smul.u32 2, %s41
          %s392 = ssub.s32 128, 128
          %393 = vsyncadd [#allocation8], %s392
          %s394 = smul.addr %s390, 64
          %s395 = scalar_lea.hbm %s1, %s394
          %s396 = sshll.u32 [#allocation7], 4
          %s397 = int_to_ptr.vmem [resolvable:$true] %s396
          %402 = dma.hbm_to_vmem [thread:$0]  %s395, 128, %s397, [#allocation8], 64, 64, 4
        $region20: #{vision_encoder_decoder.6} parent=11 // pred_fallthru
          _
        // Predicated region
        $region21: #{vision_encoder_decoder.6} parent=11 // pred_check
          %p403 = pneg %p122
        $region22: #{vision_encoder_decoder.6} parent=11 // pred_check_branch
          %405 = sbr.rel (%p403) target = $region24
        $region23: #{vision_encoder_decoder.6} parent=11 // pred_region
          %s406 = smul.u32 2, %s41
          %s408 = ssub.s32 32, 32
          %409 = vsyncadd [#allocation8], %s408
          %s410 = smul.addr %s406, 16
          %s411 = scalar_lea.hbm %s2, %s410
          %s412 = sshll.u32 [#allocation9], 4
          %s413 = int_to_ptr.vmem [resolvable:$true] %s412
          %418 = dma.hbm_to_vmem [thread:$0]  %s411, 32, %s413, [#allocation8], 16, 16, 1
        $region24: #{vision_encoder_decoder.6} parent=11 // pred_fallthru
          _
      $region12: #{vision_encoder_decoder.6} parent=5 // pred_fallthru
        _
      %p419 = scmp.lt.s32.totalorder %s32, 2
      // Predicated region
      $region25: #{vision_encoder_decoder.6} parent=5 // pred_check
        %p420 = pneg %p419
      $region26: #{vision_encoder_decoder.6} parent=5 // pred_check_branch
        %422 = sbr.rel (%p420) target = $region28
      $region27: #{vision_encoder_decoder.6} parent=5 // pred_region
        // Predicated region
        $region29: #{vision_encoder_decoder.6} parent=27 // pred_check
          %p423 = pneg %p142
        $region30: #{vision_encoder_decoder.6} parent=27 // pred_check_branch
          %425 = sbr.rel (%p423) target = $region32
        $region31: #{vision_encoder_decoder.6} parent=27 // pred_region
          %s426 = sand.u32 %s32, 1
          %s427 = scalar_lea.sflag [#allocation11], %s426
          %s428 = sand.u32 %s132, 1
          %s429 = smul.addr %s428, 16
          %s430 = scalar_lea.vmem [#allocation10], %s429
          %s432 = ssub.s32 256, 256
          %433 = vsyncadd %s427, %s432
          %s434 = smul.addr %s40, 4
          %s435 = smul.addr %s434, 64
          %s436 = scalar_lea.hbm %s3, %s435
          %s437 = sshll.u32 %s430, 4
          %s438 = int_to_ptr.vmem [resolvable:$true] %s437
          %443 = dma.hbm_to_vmem [thread:$0]  %s436, 256, %s438, %s427, 64, 64, 4
        $region32: #{vision_encoder_decoder.6} parent=27 // pred_fallthru
          _
        // Predicated region
        $region33: #{vision_encoder_decoder.6} parent=27 // pred_check
          %p444 = pneg %p168
        $region34: #{vision_encoder_decoder.6} parent=27 // pred_check_branch
          %446 = sbr.rel (%p444) target = $region36
        $region35: #{vision_encoder_decoder.6} parent=27 // pred_region
          %s447 = sand.u32 %s32, 1
          %s448 = scalar_lea.sflag [#allocation11], %s447
          %s449 = sand.u32 %s158, 1
          %s450 = smul.addr %s449, 16
          %s451 = scalar_lea.vmem [#allocation12], %s450
          %s453 = ssub.s32 256, 256
          %454 = vsyncadd %s448, %s453
          %s455 = smul.addr %s40, 4
          %s456 = smul.addr %s455, 64
          %s457 = scalar_lea.hbm %s4, %s456
          %s458 = sshll.u32 %s451, 4
          %s459 = int_to_ptr.vmem [resolvable:$true] %s458
          %464 = dma.hbm_to_vmem [thread:$0]  %s457, 256, %s459, %s448, 64, 64, 4
        $region36: #{vision_encoder_decoder.6} parent=27 // pred_fallthru
          _
        // Predicated region
        $region37: #{vision_encoder_decoder.6} parent=27 // pred_check
          %p465 = pneg %p194
        $region38: #{vision_encoder_decoder.6} parent=27 // pred_check_branch
          %467 = sbr.rel (%p465) target = $region40
        $region39: #{vision_encoder_decoder.6} parent=27 // pred_region
          %s468 = sand.u32 %s32, 1
          %s469 = scalar_lea.sflag [#allocation14], %s468
          %s470 = sand.u32 %s184, 1
          %s471 = smul.addr %s470, 16
          %s472 = scalar_lea.vmem [#allocation13], %s471
          %s474 = ssub.s32 256, 256
          %475 = vsyncadd %s469, %s474
          %s476 = smul.addr %s40, 4
          %s477 = smul.addr %s476, 64
          %s478 = scalar_lea.hbm %s5, %s477
          %s479 = sshll.u32 %s472, 4
          %s480 = int_to_ptr.vmem [resolvable:$true] %s479
          %485 = dma.hbm_to_vmem [thread:$0]  %s478, 256, %s480, %s469, 64, 64, 4
        $region40: #{vision_encoder_decoder.6} parent=27 // pred_fallthru
          _
        // Predicated region
        $region41: #{vision_encoder_decoder.6} parent=27 // pred_check
          %p486 = pneg %p220
        $region42: #{vision_encoder_decoder.6} parent=27 // pred_check_branch
          %488 = sbr.rel (%p486) target = $region44
        $region43: #{vision_encoder_decoder.6} parent=27 // pred_region
          %s489 = sand.u32 %s32, 1
          %s490 = scalar_lea.sflag [#allocation14], %s489
          %s491 = sand.u32 %s210, 1
          %s492 = smul.addr %s491, 16
          %s493 = scalar_lea.vmem [#allocation15], %s492
          %s495 = ssub.s32 256, 256
          %496 = vsyncadd %s490, %s495
          %s497 = smul.addr %s40, 4
          %s498 = smul.addr %s497, 64
          %s499 = scalar_lea.hbm %s6, %s498
          %s500 = sshll.u32 %s493, 4
          %s501 = int_to_ptr.vmem [resolvable:$true] %s500
          %506 = dma.hbm_to_vmem [thread:$0]  %s499, 256, %s501, %s490, 64, 64, 4
        $region44: #{vision_encoder_decoder.6} parent=27 // pred_fallthru
          _
        // Predicated region
        $region45: #{vision_encoder_decoder.6} parent=27 // pred_check
          %p507 = pneg %p246
        $region46: #{vision_encoder_decoder.6} parent=27 // pred_check_branch
          %509 = sbr.rel (%p507) target = $region48
        $region47: #{vision_encoder_decoder.6} parent=27 // pred_region
          %s510 = sand.u32 %s32, 1
          %s511 = scalar_lea.sflag [#allocation17], %s510
          %s512 = sand.u32 %s236, 1
          %s513 = smul.addr %s512, 16
          %s514 = scalar_lea.vmem [#allocation16], %s513
          %s516 = ssub.s32 256, 256
          %517 = vsyncadd %s511, %s516
          %s518 = smul.addr %s40, 4
          %s519 = smul.addr %s518, 64
          %s520 = scalar_lea.hbm %s7, %s519
          %s521 = sshll.u32 %s514, 4
          %s522 = int_to_ptr.vmem [resolvable:$true] %s521
          %527 = dma.hbm_to_vmem [thread:$0]  %s520, 256, %s522, %s511, 64, 64, 4
        $region48: #{vision_encoder_decoder.6} parent=27 // pred_fallthru
          _
        // Predicated region
        $region49: #{vision_encoder_decoder.6} parent=27 // pred_check
          %p528 = pneg %p272
        $region50: #{vision_encoder_decoder.6} parent=27 // pred_check_branch
          %530 = sbr.rel (%p528) target = $region52
        $region51: #{vision_encoder_decoder.6} parent=27 // pred_region
          %s531 = sand.u32 %s32, 1
          %s532 = scalar_lea.sflag [#allocation17], %s531
          %s533 = sand.u32 %s262, 1
          %s534 = smul.addr %s533, 16
          %s535 = scalar_lea.vmem [#allocation18], %s534
          %s537 = ssub.s32 256, 256
          %538 = vsyncadd %s532, %s537
          %s539 = smul.addr %s40, 4
          %s540 = smul.addr %s539, 64
          %s541 = scalar_lea.hbm %s8, %s540
          %s542 = sshll.u32 %s535, 4
          %s543 = int_to_ptr.vmem [resolvable:$true] %s542
          %548 = dma.hbm_to_vmem [thread:$0]  %s541, 256, %s543, %s532, 64, 64, 4
        $region52: #{vision_encoder_decoder.6} parent=27 // pred_fallthru
          _
        // Predicated region
        $region53: #{vision_encoder_decoder.6} parent=27 // pred_check
          %p549 = pneg %p298
        $region54: #{vision_encoder_decoder.6} parent=27 // pred_check_branch
          %551 = sbr.rel (%p549) target = $region56
        $region55: #{vision_encoder_decoder.6} parent=27 // pred_region
          %s552 = sand.u32 %s32, 1
          %s553 = scalar_lea.sflag [#allocation20], %s552
          %s554 = sand.u32 %s288, 1
          %s555 = smul.addr %s554, 64
          %s556 = scalar_lea.vmem [#allocation19], %s555
          %s558 = ssub.s32 1024, 1024
          %559 = vsyncadd %s553, %s558
          %s560 = smul.addr %s40, 16
          %s561 = smul.addr %s560, 64
          %s562 = scalar_lea.hbm %s9, %s561
          %s563 = sshll.u32 %s556, 4
          %s564 = int_to_ptr.vmem [resolvable:$true] %s563
          %569 = dma.hbm_to_vmem [thread:$0]  %s562, 1024, %s564, %s553, 64, 64, 4
        $region56: #{vision_encoder_decoder.6} parent=27 // pred_fallthru
          _
        // Predicated region
        $region57: #{vision_encoder_decoder.6} parent=27 // pred_check
          %p570 = pneg %p324
        $region58: #{vision_encoder_decoder.6} parent=27 // pred_check_branch
          %572 = sbr.rel (%p570) target = $region60
        $region59: #{vision_encoder_decoder.6} parent=27 // pred_region
          %s573 = sand.u32 %s32, 1
          %s574 = scalar_lea.sflag [#allocation20], %s573
          %s575 = sand.u32 %s314, 1
          %s576 = smul.addr %s575, 8
          %s577 = scalar_lea.vmem [#allocation21], %s576
          %s579 = ssub.s32 128, 128
          %580 = vsyncadd %s574, %s579
          %s581 = smul.addr %s40, 128
          %s582 = scalar_lea.hbm %s10, %s581
          %s584 = sshll.u32 %s577, 4
          %s585 = int_to_ptr.vmem [resolvable:$true] %s584
          %587 = dma.hbm_to_vmem [thread:$0]  %s582, 128, %s585, %s574
        $region60: #{vision_encoder_decoder.6} parent=27 // pred_fallthru
          _
      $region28: #{vision_encoder_decoder.6} parent=5 // pred_fallthru
        _
      %p588 = scmp.le.s32.totalorder 1, %s32
      %p589 = scmp.lt.s32.totalorder %s32, 3
      %p590 = pnand %p588, %p589
      %p591 = pneg %p590
      // Predicated region
      $region61: #{vision_encoder_decoder.6} parent=5 // pred_check
        _
      $region62: #{vision_encoder_decoder.6} parent=5 // pred_check_branch
        %593 = sbr.rel (%p590) target = $region64
      $region63: #{vision_encoder_decoder.6} parent=5 // pred_region
        %s594 = ssub.s32 %s32, 1
        // Predicated region
        $region65: #{vision_encoder_decoder.6} parent=63 // pred_check
          %p595 = pneg %p70
        $region66: #{vision_encoder_decoder.6} parent=63 // pred_check_branch
          %597 = sbr.rel (%p595) target = $region68
        $region67: #{vision_encoder_decoder.6} parent=63 // pred_region
          %598 = dma.done [#allocation5], 256
        $region68: #{vision_encoder_decoder.6} parent=63 // pred_fallthru
          _
        // Predicated region
        $region69: #{vision_encoder_decoder.6} parent=63 // pred_check
          %p599 = pneg %p96
        $region70: #{vision_encoder_decoder.6} parent=63 // pred_check_branch
          %601 = sbr.rel (%p599) target = $region72
        $region71: #{vision_encoder_decoder.6} parent=63 // pred_region
          %602 = dma.done [#allocation8], 128
        $region72: #{vision_encoder_decoder.6} parent=63 // pred_fallthru
          _
        // Predicated region
        $region73: #{vision_encoder_decoder.6} parent=63 // pred_check
          %p603 = pneg %p122
        $region74: #{vision_encoder_decoder.6} parent=63 // pred_check_branch
          %605 = sbr.rel (%p603) target = $region76
        $region75: #{vision_encoder_decoder.6} parent=63 // pred_region
          %606 = dma.done [#allocation8], 32
        $region76: #{vision_encoder_decoder.6} parent=63 // pred_fallthru
          _
        %s607 = sand.u32 %s37, 1
        %s608 = scalar_lea.sflag [#allocation11], %s607
        %s609 = sand.u32 %s135, 1
        %s610 = smul.addr %s609, 16
        %s611 = scalar_lea.vmem [#allocation10], %s610
        // Predicated region
        $region77: #{vision_encoder_decoder.6} parent=63 // pred_check
          %p612 = pneg %p148
        $region78: #{vision_encoder_decoder.6} parent=63 // pred_check_branch
          %614 = sbr.rel (%p612) target = $region80
        $region79: #{vision_encoder_decoder.6} parent=63 // pred_region
          %615 = dma.done %s608, 256
        $region80: #{vision_encoder_decoder.6} parent=63 // pred_fallthru
          _
        %s616 = sand.u32 %s37, 1
        %s617 = scalar_lea.sflag [#allocation11], %s616
        %s618 = sand.u32 %s161, 1
        %s619 = smul.addr %s618, 16
        %s620 = scalar_lea.vmem [#allocation12], %s619
        // Predicated region
        $region81: #{vision_encoder_decoder.6} parent=63 // pred_check
          %p621 = pneg %p174
        $region82: #{vision_encoder_decoder.6} parent=63 // pred_check_branch
          %623 = sbr.rel (%p621) target = $region84
        $region83: #{vision_encoder_decoder.6} parent=63 // pred_region
          %624 = dma.done %s617, 256
        $region84: #{vision_encoder_decoder.6} parent=63 // pred_fallthru
          _
        %s625 = sand.u32 %s37, 1
        %s626 = scalar_lea.sflag [#allocation14], %s625
        %s627 = sand.u32 %s187, 1
        %s628 = smul.addr %s627, 16
        %s629 = scalar_lea.vmem [#allocation13], %s628
        // Predicated region
        $region85: #{vision_encoder_decoder.6} parent=63 // pred_check
          %p630 = pneg %p200
        $region86: #{vision_encoder_decoder.6} parent=63 // pred_check_branch
          %632 = sbr.rel (%p630) target = $region88
        $region87: #{vision_encoder_decoder.6} parent=63 // pred_region
          %633 = dma.done %s626, 256
        $region88: #{vision_encoder_decoder.6} parent=63 // pred_fallthru
          _
        %s634 = sand.u32 %s37, 1
        %s635 = scalar_lea.sflag [#allocation14], %s634
        %s636 = sand.u32 %s213, 1
        %s637 = smul.addr %s636, 16
        %s638 = scalar_lea.vmem [#allocation15], %s637
        // Predicated region
        $region89: #{vision_encoder_decoder.6} parent=63 // pred_check
          %p639 = pneg %p226
        $region90: #{vision_encoder_decoder.6} parent=63 // pred_check_branch
          %641 = sbr.rel (%p639) target = $region92
        $region91: #{vision_encoder_decoder.6} parent=63 // pred_region
          %642 = dma.done %s635, 256
        $region92: #{vision_encoder_decoder.6} parent=63 // pred_fallthru
          _
        %s643 = sand.u32 %s37, 1
        %s644 = scalar_lea.sflag [#allocation17], %s643
        %s645 = sand.u32 %s239, 1
        %s646 = smul.addr %s645, 16
        %s647 = scalar_lea.vmem [#allocation16], %s646
        // Predicated region
        $region93: #{vision_encoder_decoder.6} parent=63 // pred_check
          %p648 = pneg %p252
        $region94: #{vision_encoder_decoder.6} parent=63 // pred_check_branch
          %650 = sbr.rel (%p648) target = $region96
        $region95: #{vision_encoder_decoder.6} parent=63 // pred_region
          %651 = dma.done %s644, 256
        $region96: #{vision_encoder_decoder.6} parent=63 // pred_fallthru
          _
        %s652 = sand.u32 %s37, 1
        %s653 = scalar_lea.sflag [#allocation17], %s652
        %s654 = sand.u32 %s265, 1
        %s655 = smul.addr %s654, 16
        %s656 = scalar_lea.vmem [#allocation18], %s655
        // Predicated region
        $region97: #{vision_encoder_decoder.6} parent=63 // pred_check
          %p657 = pneg %p278
        $region98: #{vision_encoder_decoder.6} parent=63 // pred_check_branch
          %659 = sbr.rel (%p657) target = $region100
        $region99: #{vision_encoder_decoder.6} parent=63 // pred_region
          %660 = dma.done %s653, 256
        $region100: #{vision_encoder_decoder.6} parent=63 // pred_fallthru
          _
        %s661 = sand.u32 %s37, 1
        %s662 = scalar_lea.sflag [#allocation20], %s661
        %s663 = sand.u32 %s291, 1
        %s664 = smul.addr %s663, 64
        %s665 = scalar_lea.vmem [#allocation19], %s664
        // Predicated region
        $region101: #{vision_encoder_decoder.6} parent=63 // pred_check
          %p666 = pneg %p304
        $region102: #{vision_encoder_decoder.6} parent=63 // pred_check_branch
          %668 = sbr.rel (%p666) target = $region104
        $region103: #{vision_encoder_decoder.6} parent=63 // pred_region
          %669 = dma.done %s662, 1024
        $region104: #{vision_encoder_decoder.6} parent=63 // pred_fallthru
          _
        %s670 = sand.u32 %s37, 1
        %s671 = scalar_lea.sflag [#allocation20], %s670
        %s672 = sand.u32 %s317, 1
        %s673 = smul.addr %s672, 8
        %s674 = scalar_lea.vmem [#allocation21], %s673
        // Predicated region
        $region105: #{vision_encoder_decoder.6} parent=63 // pred_check
          %p675 = pneg %p330
        $region106: #{vision_encoder_decoder.6} parent=63 // pred_check_branch
          %677 = sbr.rel (%p675) target = $region108
        $region107: #{vision_encoder_decoder.6} parent=63 // pred_region
          %678 = dma.done %s671, 128
        $region108: #{vision_encoder_decoder.6} parent=63 // pred_fallthru
          _
        %p679 = pneg %p70
        %p680 = pneg %p67
        %p681 = pneg %p96
        %p682 = pneg %p93
        %p683 = pneg %p122
        %p684 = pneg %p119
        %s685 = sand.u32 %s37, 1
        %s686 = scalar_lea.sflag [#allocation11], %s685
        %s687 = sand.u32 %s135, 1
        %s688 = smul.addr %s687, 16
        %s689 = scalar_lea.vmem [#allocation10], %s688
        %p690 = pneg %p148
        %p691 = pneg %p145
        %s692 = sand.u32 %s37, 1
        %s693 = scalar_lea.sflag [#allocation11], %s692
        %s694 = sand.u32 %s161, 1
        %s695 = smul.addr %s694, 16
        %s696 = scalar_lea.vmem [#allocation12], %s695
        %p697 = pneg %p174
        %p698 = pneg %p171
        %s699 = sand.u32 %s37, 1
        %s700 = scalar_lea.sflag [#allocation14], %s699
        %s701 = sand.u32 %s187, 1
        %s702 = smul.addr %s701, 16
        %s703 = scalar_lea.vmem [#allocation13], %s702
        %p704 = pneg %p200
        %p705 = pneg %p197
        %s706 = sand.u32 %s37, 1
        %s707 = scalar_lea.sflag [#allocation14], %s706
        %s708 = sand.u32 %s213, 1
        %s709 = smul.addr %s708, 16
        %s710 = scalar_lea.vmem [#allocation15], %s709
        %p711 = pneg %p226
        %p712 = pneg %p223
        %s713 = sand.u32 %s37, 1
        %s714 = scalar_lea.sflag [#allocation17], %s713
        %s715 = sand.u32 %s239, 1
        %s716 = smul.addr %s715, 16
        %s717 = scalar_lea.vmem [#allocation16], %s716
        %p718 = pneg %p252
        %p719 = pneg %p249
        %s720 = sand.u32 %s37, 1
        %s721 = scalar_lea.sflag [#allocation17], %s720
        %s722 = sand.u32 %s265, 1
        %s723 = smul.addr %s722, 16
        %s724 = scalar_lea.vmem [#allocation18], %s723
        %p725 = pneg %p278
        %p726 = pneg %p275
        %s727 = sand.u32 %s37, 1
        %s728 = scalar_lea.sflag [#allocation20], %s727
        %s729 = sand.u32 %s291, 1
        %s730 = smul.addr %s729, 64
        %s731 = scalar_lea.vmem [#allocation19], %s730
        %p732 = pneg %p304
        %p733 = pneg %p301
        %s734 = sand.u32 %s37, 1
        %s735 = scalar_lea.sflag [#allocation20], %s734
        %s736 = sand.u32 %s317, 1
        %s737 = smul.addr %s736, 8
        %s738 = scalar_lea.vmem [#allocation21], %s737
        %p739 = pneg %p330
        %p740 = pneg %p327
        %p741 = pneg %p356
        %p742 = pneg %p353
        %s743 = smul.u32 2, %s41
        %s744 = smul.u32 2, %s41
        %s745 = smul.u32 2, %s41
        %s746 = smul.u32 2, %s41
        %p748 = scmp.eq.s32.totalorder %s42, 0
        // Predicated region
        $region109: #{vision_encoder_decoder.6} parent=63 // pred_check
          %p749 = pneg %p748
        $region110: #{vision_encoder_decoder.6} parent=63 // pred_check_branch
          %751 = sbr.rel (%p749) target = $region112
        $region111: #{vision_encoder_decoder.6} parent=63 // pred_region
          %v752 = vld [vmem:[#allocation4] sm:$0xff]
          %v753 = vld [vmem:[#allocation4 + $0x8] sm:$0xff]
          %vm754 = vcmask 261120
          %755 = vst.msk [vmem:[#allocation2] sm:$0xff] %vm754, %v752
          %756 = vst.msk [vmem:[#allocation2 + $0x8] sm:$0xff] %vm754, %v753
          %v757 = vlaneseq
          %v758 = vshrl.u32 %v757, 7
          %v759 = vlaneseq
          %v760 = vand.u32 %v759, 127
          %vm761 = vcmp.gt.s32.totalorder %v760, %v758
          %v762 = vsel %vm761, -1e+30, 0.0
          %v763 = vld [vmem:[#allocation9] sm:$0x1]
          %v764 = vld [vmem:[#allocation9 + $0x1] sm:$0x1]
          %v765 = vsub.f32 %v763, 1.0
          %v766 = vsub.f32 %v764, 1.0
          %v767 = vmul.f32 %v765, 1e+30
          %v768 = vmul.f32 %v766, 1e+30
          %v771 = vlaneseq
          %v772 = vshrl.u32 %v771, 7
          %v773 = vsub.s32 0, %v772
          %v774 = vrot.slane %v767, %v773
          %v775 = vlaneseq
          %v776 = vshrl.u32 %v775, 7
          %v777 = vsub.s32 0, %v776
          %v778 = vrot.slane %v768, %v777
          %v781 = vadd.f32 %v762, %v774
          %v782 = vadd.f32 %v762, %v778
          %vm783 = vcmask 64512
          %784 = vst.msk [vmem:[#allocation3] sm:$0xff] %vm783, %v781
          %785 = vst.msk [vmem:[#allocation3 + $0x8] sm:$0xff] %vm783, %v782
        $region112: #{vision_encoder_decoder.6} parent=63 // pred_fallthru
          _
        %v786 = vld [vmem:[%s674] sm:$0x1f]
        %v787 = vld [vmem:[%s620] sm:$0xf]
        %v788 = vld [vmem:[%s620 + $0x4] sm:$0xf]
        %v789 = vld [vmem:[%s620 + $0x8] sm:$0xf]
        %v790 = vld [vmem:[%s620 + $0xc] sm:$0xf]
        %v791 = vld [vmem:[%s647] sm:$0xf]
        %v792 = vld [vmem:[%s647 + $0x4] sm:$0xf]
        %v793 = vld [vmem:[%s647 + $0x8] sm:$0xf]
        %v794 = vld [vmem:[%s647 + $0xc] sm:$0xf]
        %v795 = vld [vmem:[#allocation2] sm:$0xff]
        %v796 = vld [vmem:[#allocation7] sm:$0xf]
        %v797 = vld [vmem:[#allocation3] sm:$0xff]
        %v798 = vpack.c.bf16 %v795, %v795
        %v799 = vld [vmem:[%s611] sm:$0xf]
        %v800 = vld [vmem:[%s611 + $0x4] sm:$0xf]
        %v801 = vld [vmem:[%s611 + $0x8] sm:$0xf]
        %v802 = vld [vmem:[%s611 + $0xc] sm:$0xf]
        %v807 = vunpack.c.l.b16 %v799
        %v808 = vunpack.c.l.b16 %v800
        %v809 = vunpack.c.l.b16 %v801
        %v810 = vunpack.c.l.b16 %v802
        %v811 = vpack.c.b16 %v808, %v807
        %v812 = vpack.c.b16 %v810, %v809
        %vm815 = vcmask 261120
        %v817 = vsel %vm815, %v798, 0
        %819 = vmatprep.subr.bf16.mxu0 0
        %820 = vmatpush1.bf16.msra.mxu0 %v811
        %821 = vmatprep.subr.bf16.mxu0 0
        %822 = vmatpush1.bf16.msra.mxu0 %v812
        %823 = vmatprep.subr.bf16.mxu0 0
        %824 = vmatpush1.bf16.msra.mxu0 0
        %825 = vmatprep.subr.bf16.mxu0 0
        %826 = vmatpush1.bf16.msra.mxu0 0
        %827 = vmatprep.subr.bf16.mxu0 0
        %828 = vmatpush1.bf16.msra.mxu0 0
        %829 = vmatprep.subr.bf16.mxu0 0
        %830 = vmatpush1.bf16.msra.mxu0 0
        %831 = vmatprep.subr.bf16.mxu0 0
        %832 = vmatpush1.bf16.msra.mxu0 0
        %833 = vmatprep.subr.bf16.mxu0 0
        %834 = vmatpush1.bf16.msra.mxu0 0
        %835 = vmatprep.subr.bf16.mxu0 0
        %836 = vmatpush1.bf16.msra.mxu0 0
        %837 = vmatprep.subr.bf16.mxu0 0
        %838 = vmatpush1.bf16.msra.mxu0 0
        %839 = vmatprep.subr.bf16.mxu0 0
        %840 = vmatpush1.bf16.msra.mxu0 0
        %841 = vmatprep.subr.bf16.mxu0 0
        %842 = vmatpush1.bf16.msra.mxu0 0
        %843 = vmatprep.subr.bf16.mxu0 0
        %844 = vmatpush1.bf16.msra.mxu0 0
        %845 = vmatprep.subr.bf16.mxu0 0
        %846 = vmatpush1.bf16.msra.mxu0 0
        %847 = vmatprep.subr.bf16.mxu0 0
        %848 = vmatpush1.bf16.msra.mxu0 0
        %849 = vmatprep.subr.bf16.mxu0 0
        %850 = vmatpush1.bf16.msra.mxu0 0
        %851 = vmatprep.mubr.bf16.mxu0 0
        %852 = vmatmul.mubr.bf16.gmra.mrb[0].mxu0 %v817
        %v853 = vpop.f32.mrb[0].mxu0
        %v854 = vadd.f32 0.0, %v853
        %v855 = vpop.f32.mrb[0].mxu0
        %v856 = vpop.f32.mrb[0].mxu0
        %v857 = vpop.f32.mrb[0].mxu0
        %858 = vdwg.mxu0
        %v859 = vpack.c.bf16 %v854, %v854
        %v860 = vunpack.c.l.bf16 %v859
        %v861 = vlaneseq
        %v862 = vshrl.u32 %v861, 7
        %v863 = vsub.s32 1, %v862
        %v864 = vrot.slane %v786, %v863
        %v865 = vadd.f32 %v860, %v864
        %v866 = vmul.f32 %v865, 0.35355338
        %v867 = vpack.c.bf16 %v866, %v866
        %v868 = vpack.c.bf16 %v865, %v865
        %870 = vrot.lane.b32.xlu0 %v868, 96
        %v871 = vpop.permute.xlu0 %870
        %vm872 = vcmask 64512
        %v874 = vsel %vm872, %v867, 0
        %v877 = vsel %vm872, %v871, 0
        %879 = vmatprep.subr.bf16.mxu0 0
        %880 = vmatpush1.bf16.xpose.msra.mxu0 %v877
        %881 = vmatprep.subr.bf16.mxu0 0
        %882 = vmatpush1.bf16.xpose.msra.mxu0 0
        %883 = vmatprep.subr.bf16.mxu0 0
        %884 = vmatpush1.bf16.xpose.msra.mxu0 0
        %885 = vmatprep.subr.bf16.mxu0 0
        %886 = vmatpush1.bf16.xpose.msra.mxu0 0
        %887 = vmatprep.subr.bf16.mxu0 0
        %888 = vmatpush1.bf16.xpose.msra.mxu0 0
        %889 = vmatprep.subr.bf16.mxu0 0
        %890 = vmatpush1.bf16.xpose.msra.mxu0 0
        %891 = vmatprep.subr.bf16.mxu0 0
        %892 = vmatpush1.bf16.xpose.msra.mxu0 0
        %893 = vmatprep.subr.bf16.mxu0 0
        %894 = vmatpush1.bf16.xpose.msra.mxu0 0
        %895 = vmatprep.subr.bf16.mxu0 0
        %896 = vmatpush1.bf16.xpose.msra.mxu0 0
        %897 = vmatprep.subr.bf16.mxu0 0
        %898 = vmatpush1.bf16.xpose.msra.mxu0 0
        %899 = vmatprep.subr.bf16.mxu0 0
        %900 = vmatpush1.bf16.xpose.msra.mxu0 0
        %901 = vmatprep.subr.bf16.mxu0 0
        %902 = vmatpush1.bf16.xpose.msra.mxu0 0
        %903 = vmatprep.subr.bf16.mxu0 0
        %904 = vmatpush1.bf16.xpose.msra.mxu0 0
        %905 = vmatprep.subr.bf16.mxu0 0
        %906 = vmatpush1.bf16.xpose.msra.mxu0 0
        %907 = vmatprep.subr.bf16.mxu0 0
        %908 = vmatpush1.bf16.xpose.msra.mxu0 0
        %909 = vmatprep.subr.bf16.mxu0 0
        %910 = vmatpush1.bf16.xpose.msra.mxu0 0
        %911 = vmatprep.mubr.bf16.mxu0 0
        %912 = vmatmul.mubr.bf16.gmra.mrb[0].mxu0 %v874
        %v913 = vpop.f32.mrb[0].mxu0
        %v914 = vadd.f32 %v797, %v913
        %v915 = vpop.f32.mrb[0].mxu0
        %v916 = vpop.f32.mrb[0].mxu0
        %v917 = vpop.f32.mrb[0].mxu0
        %918 = vdwg.mxu0
        %v919 = vsel %vm872, %v914, -inf
        %920 = vmax.xlane.f32.xlu0 %v919
        %v921 = vpop.xlane.xlu0 %920
        %v922 = vsub.f32 %v914, %v921
        %v923 = vmul.f32 %v922, 1.442695
        %v924 = vpow.pop %v923
        %v925 = vsel %vm872, %v924, 0.0
        %926 = vadd.xlane.f32.xlu0 %v925
        %v927 = vpop.xlane.xlu0 %926
        %v928 = vrcp.pop %v927
        %v929 = vmul.f32 %v924, %v928
        %v930 = vpack.c.bf16 %v929, %v929
        %931 = vrot.lane.b32.xlu0 %v868, 64
        %v932 = vpop.permute.xlu0 %931
        %v934 = vsel %vm872, %v930, 0
        %vm936 = vcmask 1043456
        %v938 = vsel %vm936, %v932, 0
        %940 = vmatprep.subr.bf16.mxu0 0
        %941 = vmatpush1.bf16.msra.mxu0 %v938
        %942 = vmatprep.subr.bf16.mxu0 0
        %943 = vmatpush1.bf16.msra.mxu0 0
        %944 = vmatprep.subr.bf16.mxu0 0
        %945 = vmatpush1.bf16.msra.mxu0 0
        %946 = vmatprep.subr.bf16.mxu0 0
        %947 = vmatpush1.bf16.msra.mxu0 0
        %948 = vmatprep.subr.bf16.mxu0 0
        %949 = vmatpush1.bf16.msra.mxu0 0
        %950 = vmatprep.subr.bf16.mxu0 0
        %951 = vmatpush1.bf16.msra.mxu0 0
        %952 = vmatprep.subr.bf16.mxu0 0
        %953 = vmatpush1.bf16.msra.mxu0 0
        %954 = vmatprep.subr.bf16.mxu0 0
        %955 = vmatpush1.bf16.msra.mxu0 0
        %956 = vmatprep.subr.bf16.mxu0 0
        %957 = vmatpush1.bf16.msra.mxu0 0
        %958 = vmatprep.subr.bf16.mxu0 0
        %959 = vmatpush1.bf16.msra.mxu0 0
        %960 = vmatprep.subr.bf16.mxu0 0
        %961 = vmatpush1.bf16.msra.mxu0 0
        %962 = vmatprep.subr.bf16.mxu0 0
        %963 = vmatpush1.bf16.msra.mxu0 0
        %964 = vmatprep.subr.bf16.mxu0 0
        %965 = vmatpush1.bf16.msra.mxu0 0
        %966 = vmatprep.subr.bf16.mxu0 0
        %967 = vmatpush1.bf16.msra.mxu0 0
        %968 = vmatprep.subr.bf16.mxu0 0
        %969 = vmatpush1.bf16.msra.mxu0 0
        %970 = vmatprep.subr.bf16.mxu0 0
        %971 = vmatpush1.bf16.msra.mxu0 0
        %972 = vmatprep.mubr.bf16.mxu0 0
        %973 = vmatmul.mubr.bf16.gmra.mrb[0].mxu0 %v934
        %v974 = vpop.f32.mrb[0].mxu0
        %v975 = vadd.f32 0.0, %v974
        %v976 = vpop.f32.mrb[0].mxu0
        %v977 = vpop.f32.mrb[0].mxu0
        %v978 = vpop.f32.mrb[0].mxu0
        %979 = vdwg.mxu0
        %v980 = vpack.c.bf16 %v975, %v975
        %982 = vrot.lane.b32.xlu0 %v867, 120
        %v983 = vpop.permute.xlu0 %982
        %984 = vrot.lane.b32.xlu0 %v868, 88
        %v985 = vpop.permute.xlu0 %984
        %v987 = vsel %vm872, %v983, 0
        %v990 = vsel %vm872, %v985, 0
        %992 = vmatprep.subr.bf16.mxu0 0
        %993 = vmatpush1.bf16.xpose.msra.mxu0 %v990
        %994 = vmatprep.subr.bf16.mxu0 0
        %995 = vmatpush1.bf16.xpose.msra.mxu0 0
        %996 = vmatprep.subr.bf16.mxu0 0
        %997 = vmatpush1.bf16.xpose.msra.mxu0 0
        %998 = vmatprep.subr.bf16.mxu0 0
        %999 = vmatpush1.bf16.xpose.msra.mxu0 0
        %1000 = vmatprep.subr.bf16.mxu0 0
        %1001 = vmatpush1.bf16.xpose.msra.mxu0 0
        %1002 = vmatprep.subr.bf16.mxu0 0
        %1003 = vmatpush1.bf16.xpose.msra.mxu0 0
        %1004 = vmatprep.subr.bf16.mxu0 0
        %1005 = vmatpush1.bf16.xpose.msra.mxu0 0
        %1006 = vmatprep.subr.bf16.mxu0 0
        %1007 = vmatpush1.bf16.xpose.msra.mxu0 0
        %1008 = vmatprep.subr.bf16.mxu0 0
        %1009 = vmatpush1.bf16.xpose.msra.mxu0 0
        %1010 = vmatprep.subr.bf16.mxu0 0
        %1011 = vmatpush1.bf16.xpose.msra.mxu0 0
        %1012 = vmatprep.subr.bf16.mxu0 0
        %1013 = vmatpush1.bf16.xpose.msra.mxu0 0
        %1014 = vmatprep.subr.bf16.mxu0 0
        %1015 = vmatpush1.bf16.xpose.msra.mxu0 0
        %1016 = vmatprep.subr.bf16.mxu0 0
        %1017 = vmatpush1.bf16.xpose.msra.mxu0 0
        %1018 = vmatprep.subr.bf16.mxu0 0
        %1019 = vmatpush1.bf16.xpose.msra.mxu0 0
        %1020 = vmatprep.subr.bf16.mxu0 0
        %1021 = vmatpush1.bf16.xpose.msra.mxu0 0
        %1022 = vmatprep.subr.bf16.mxu0 0
        %1023 = vmatpush1.bf16.xpose.msra.mxu0 0
        %1024 = vmatprep.mubr.bf16.mxu0 0
        %1025 = vmatmul.mubr.bf16.gmra.mrb[0].mxu0 %v987
        %v1026 = vpop.f32.mrb[0].mxu0
        %v1027 = vadd.f32 %v797, %v1026
        %v1028 = vpop.f32.mrb[0].mxu0
        %v1029 = vpop.f32.mrb[0].mxu0
        %v1030 = vpop.f32.mrb[0].mxu0
        %1031 = vdwg.mxu0
        %v1032 = vsel %vm872, %v1027, -inf
        %1033 = vmax.xlane.f32.xlu0 %v1032
        %v1034 = vpop.xlane.xlu0 %1033
        %v1035 = vsub.f32 %v1027, %v1034
        %v1036 = vmul.f32 %v1035, 1.442695
        %v1037 = vpow.pop %v1036
        %v1038 = vsel %vm872, %v1037, 0.0
        %1039 = vadd.xlane.f32.xlu0 %v1038
        %v1040 = vpop.xlane.xlu0 %1039
        %v1041 = vrcp.pop %v1040
        %v1042 = vmul.f32 %v1037, %v1041
        %v1043 = vpack.c.bf16 %v1042, %v1042
        %1044 = vrot.lane.b32.xlu0 %v868, 56
        %v1045 = vpop.permute.xlu0 %1044
        %v1047 = vsel %vm872, %v1043, 0
        %v1050 = vsel %vm936, %v1045, 0
        %1052 = vmatprep.subr.bf16.mxu0 0
        %1053 = vmatpush1.bf16.msra.mxu0 %v1050
        %1054 = vmatprep.subr.bf16.mxu0 0
        %1055 = vmatpush1.bf16.msra.mxu0 0
        %1056 = vmatprep.subr.bf16.mxu0 0
        %1057 = vmatpush1.bf16.msra.mxu0 0
        %1058 = vmatprep.subr.bf16.mxu0 0
        %1059 = vmatpush1.bf16.msra.mxu0 0
        %1060 = vmatprep.subr.bf16.mxu0 0
        %1061 = vmatpush1.bf16.msra.mxu0 0
        %1062 = vmatprep.subr.bf16.mxu0 0
        %1063 = vmatpush1.bf16.msra.mxu0 0
        %1064 = vmatprep.subr.bf16.mxu0 0
        %1065 = vmatpush1.bf16.msra.mxu0 0
        %1066 = vmatprep.subr.bf16.mxu0 0
        %1067 = vmatpush1.bf16.msra.mxu0 0
        %1068 = vmatprep.subr.bf16.mxu0 0
        %1069 = vmatpush1.bf16.msra.mxu0 0
        %1070 = vmatprep.subr.bf16.mxu0 0
        %1071 = vmatpush1.bf16.msra.mxu0 0
        %1072 = vmatprep.subr.bf16.mxu0 0
        %1073 = vmatpush1.bf16.msra.mxu0 0
        %1074 = vmatprep.subr.bf16.mxu0 0
        %1075 = vmatpush1.bf16.msra.mxu0 0
        %1076 = vmatprep.subr.bf16.mxu0 0
        %1077 = vmatpush1.bf16.msra.mxu0 0
        %1078 = vmatprep.subr.bf16.mxu0 0
        %1079 = vmatpush1.bf16.msra.mxu0 0
        %1080 = vmatprep.subr.bf16.mxu0 0
        %1081 = vmatpush1.bf16.msra.mxu0 0
        %1082 = vmatprep.subr.bf16.mxu0 0
        %1083 = vmatpush1.bf16.msra.mxu0 0
        %1084 = vmatprep.mubr.bf16.mxu0 0
        %1085 = vmatmul.mubr.bf16.gmra.mrb[0].mxu0 %v1047
        %v1086 = vpop.f32.mrb[0].mxu0
        %v1087 = vadd.f32 0.0, %v1086
        %v1088 = vpop.f32.mrb[0].mxu0
        %v1089 = vpop.f32.mrb[0].mxu0
        %v1090 = vpop.f32.mrb[0].mxu0
        %1091 = vdwg.mxu0
        %v1092 = vpack.c.bf16 %v1087, %v1087
        %v1094 = vsel %vm872, %v1092, 0
        %v1097 = vsel %vm936, %v788, 0
        %1099 = vmatprep.subr.bf16.mxu0 0
        %1100 = vmatpush1.bf16.msra.mxu0 %v1097
        %1101 = vmatprep.subr.bf16.mxu0 0
        %1102 = vmatpush1.bf16.msra.mxu0 0
        %1103 = vmatprep.subr.bf16.mxu0 0
        %1104 = vmatpush1.bf16.msra.mxu0 0
        %1105 = vmatprep.subr.bf16.mxu0 0
        %1106 = vmatpush1.bf16.msra.mxu0 0
        %1107 = vmatprep.subr.bf16.mxu0 0
        %1108 = vmatpush1.bf16.msra.mxu0 0
        %1109 = vmatprep.subr.bf16.mxu0 0
        %1110 = vmatpush1.bf16.msra.mxu0 0
        %1111 = vmatprep.subr.bf16.mxu0 0
        %1112 = vmatpush1.bf16.msra.mxu0 0
        %1113 = vmatprep.subr.bf16.mxu0 0
        %1114 = vmatpush1.bf16.msra.mxu0 0
        %1115 = vmatprep.subr.bf16.mxu0 0
        %1116 = vmatpush1.bf16.msra.mxu0 0
        %1117 = vmatprep.subr.bf16.mxu0 0
        %1118 = vmatpush1.bf16.msra.mxu0 0
        %1119 = vmatprep.subr.bf16.mxu0 0
        %1120 = vmatpush1.bf16.msra.mxu0 0
        %1121 = vmatprep.subr.bf16.mxu0 0
        %1122 = vmatpush1.bf16.msra.mxu0 0
        %1123 = vmatprep.subr.bf16.mxu0 0
        %1124 = vmatpush1.bf16.msra.mxu0 0
        %1125 = vmatprep.subr.bf16.mxu0 0
        %1126 = vmatpush1.bf16.msra.mxu0 0
        %1127 = vmatprep.subr.bf16.mxu0 0
        %1128 = vmatpush1.bf16.msra.mxu0 0
        %1129 = vmatprep.subr.bf16.mxu0 0
        %1130 = vmatpush1.bf16.msra.mxu0 0
        %1131 = vmatprep.mubr.bf16.mxu0 0
        %1132 = vmatmul.mubr.bf16.gmra.mrb[0].mxu0 %v1094
        %v1133 = vpop.f32.mrb[0].mxu0
        %v1134 = vadd.f32 0.0, %v1133
        %v1135 = vpop.f32.mrb[0].mxu0
        %v1136 = vpop.f32.mrb[0].mxu0
        %v1137 = vpop.f32.mrb[0].mxu0
        %1138 = vdwg.mxu0
        %v1140 = vsel %vm872, %v980, 0
        %v1143 = vsel %vm936, %v787, 0
        %1145 = vmatprep.subr.bf16.mxu0 0
        %1146 = vmatpush1.bf16.msra.mxu0 %v1143
        %1147 = vmatprep.subr.bf16.mxu0 0
        %1148 = vmatpush1.bf16.msra.mxu0 0
        %1149 = vmatprep.subr.bf16.mxu0 0
        %1150 = vmatpush1.bf16.msra.mxu0 0
        %1151 = vmatprep.subr.bf16.mxu0 0
        %1152 = vmatpush1.bf16.msra.mxu0 0
        %1153 = vmatprep.subr.bf16.mxu0 0
        %1154 = vmatpush1.bf16.msra.mxu0 0
        %1155 = vmatprep.subr.bf16.mxu0 0
        %1156 = vmatpush1.bf16.msra.mxu0 0
        %1157 = vmatprep.subr.bf16.mxu0 0
        %1158 = vmatpush1.bf16.msra.mxu0 0
        %1159 = vmatprep.subr.bf16.mxu0 0
        %1160 = vmatpush1.bf16.msra.mxu0 0
        %1161 = vmatprep.subr.bf16.mxu0 0
        %1162 = vmatpush1.bf16.msra.mxu0 0
        %1163 = vmatprep.subr.bf16.mxu0 0
        %1164 = vmatpush1.bf16.msra.mxu0 0
        %1165 = vmatprep.subr.bf16.mxu0 0
        %1166 = vmatpush1.bf16.msra.mxu0 0
        %1167 = vmatprep.subr.bf16.mxu0 0
        %1168 = vmatpush1.bf16.msra.mxu0 0
        %1169 = vmatprep.subr.bf16.mxu0 0
        %1170 = vmatpush1.bf16.msra.mxu0 0
        %1171 = vmatprep.subr.bf16.mxu0 0
        %1172 = vmatpush1.bf16.msra.mxu0 0
        %1173 = vmatprep.subr.bf16.mxu0 0
        %1174 = vmatpush1.bf16.msra.mxu0 0
        %1175 = vmatprep.subr.bf16.mxu0 0
        %1176 = vmatpush1.bf16.msra.mxu0 0
        %1177 = vmatprep.mubr.bf16.mxu0 0
        %1178 = vmatmul.mubr.bf16.gmra.mrb[0].mxu0 %v1140
        %v1179 = vpop.f32.mrb[0].mxu0
        %v1180 = vadd.f32 %v1134, %v1179
        %v1181 = vpop.f32.mrb[0].mxu0
        %v1182 = vpop.f32.mrb[0].mxu0
        %v1183 = vpop.f32.mrb[0].mxu0
        %1184 = vdwg.mxu0
        %1185 = vrot.lane.b32.xlu0 %v867, 112
        %v1186 = vpop.permute.xlu0 %1185
        %1187 = vrot.lane.b32.xlu0 %v868, 80
        %v1188 = vpop.permute.xlu0 %1187
        %v1190 = vsel %vm872, %v1186, 0
        %v1193 = vsel %vm872, %v1188, 0
        %1195 = vmatprep.subr.bf16.mxu0 0
        %1196 = vmatpush1.bf16.xpose.msra.mxu0 %v1193
        %1197 = vmatprep.subr.bf16.mxu0 0
        %1198 = vmatpush1.bf16.xpose.msra.mxu0 0
        %1199 = vmatprep.subr.bf16.mxu0 0
        %1200 = vmatpush1.bf16.xpose.msra.mxu0 0
        %1201 = vmatprep.subr.bf16.mxu0 0
        %1202 = vmatpush1.bf16.xpose.msra.mxu0 0
        %1203 = vmatprep.subr.bf16.mxu0 0
        %1204 = vmatpush1.bf16.xpose.msra.mxu0 0
        %1205 = vmatprep.subr.bf16.mxu0 0
        %1206 = vmatpush1.bf16.xpose.msra.mxu0 0
        %1207 = vmatprep.subr.bf16.mxu0 0
        %1208 = vmatpush1.bf16.xpose.msra.mxu0 0
        %1209 = vmatprep.subr.bf16.mxu0 0
        %1210 = vmatpush1.bf16.xpose.msra.mxu0 0
        %1211 = vmatprep.subr.bf16.mxu0 0
        %1212 = vmatpush1.bf16.xpose.msra.mxu0 0
        %1213 = vmatprep.subr.bf16.mxu0 0
        %1214 = vmatpush1.bf16.xpose.msra.mxu0 0
        %1215 = vmatprep.subr.bf16.mxu0 0
        %1216 = vmatpush1.bf16.xpose.msra.mxu0 0
        %1217 = vmatprep.subr.bf16.mxu0 0
        %1218 = vmatpush1.bf16.xpose.msra.mxu0 0
        %1219 = vmatprep.subr.bf16.mxu0 0
        %1220 = vmatpush1.bf16.xpose.msra.mxu0 0
        %1221 = vmatprep.subr.bf16.mxu0 0
        %1222 = vmatpush1.bf16.xpose.msra.mxu0 0
        %1223 = vmatprep.subr.bf16.mxu0 0
        %1224 = vmatpush1.bf16.xpose.msra.mxu0 0
        %1225 = vmatprep.subr.bf16.mxu0 0
        %1226 = vmatpush1.bf16.xpose.msra.mxu0 0
        %1227 = vmatprep.mubr.bf16.mxu0 0
        %1228 = vmatmul.mubr.bf16.gmra.mrb[0].mxu0 %v1190
        %v1229 = vpop.f32.mrb[0].mxu0
        %v1230 = vadd.f32 %v797, %v1229
        %v1231 = vpop.f32.mrb[0].mxu0
        %v1232 = vpop.f32.mrb[0].mxu0
        %v1233 = vpop.f32.mrb[0].mxu0
        %1234 = vdwg.mxu0
        %v1235 = vsel %vm872, %v1230, -inf
        %1236 = vmax.xlane.f32.xlu0 %v1235
        %v1237 = vpop.xlane.xlu0 %1236
        %v1238 = vsub.f32 %v1230, %v1237
        %v1239 = vmul.f32 %v1238, 1.442695
        %v1240 = vpow.pop %v1239
        %v1241 = vsel %vm872, %v1240, 0.0
        %1242 = vadd.xlane.f32.xlu0 %v1241
        %v1243 = vpop.xlane.xlu0 %1242
        %v1244 = vrcp.pop %v1243
        %v1245 = vmul.f32 %v1240, %v1244
        %v1246 = vpack.c.bf16 %v1245, %v1245
        %1247 = vrot.lane.b32.xlu0 %v868, 48
        %v1248 = vpop.permute.xlu0 %1247
        %v1250 = vsel %vm872, %v1246, 0
        %v1253 = vsel %vm936, %v1248, 0
        %1255 = vmatprep.subr.bf16.mxu0 0
        %1256 = vmatpush1.bf16.msra.mxu0 %v1253
        %1257 = vmatprep.subr.bf16.mxu0 0
        %1258 = vmatpush1.bf16.msra.mxu0 0
        %1259 = vmatprep.subr.bf16.mxu0 0
        %1260 = vmatpush1.bf16.msra.mxu0 0
        %1261 = vmatprep.subr.bf16.mxu0 0
        %1262 = vmatpush1.bf16.msra.mxu0 0
        %1263 = vmatprep.subr.bf16.mxu0 0
        %1264 = vmatpush1.bf16.msra.mxu0 0
        %1265 = vmatprep.subr.bf16.mxu0 0
        %1266 = vmatpush1.bf16.msra.mxu0 0
        %1267 = vmatprep.subr.bf16.mxu0 0
        %1268 = vmatpush1.bf16.msra.mxu0 0
        %1269 = vmatprep.subr.bf16.mxu0 0
        %1270 = vmatpush1.bf16.msra.mxu0 0
        %1271 = vmatprep.subr.bf16.mxu0 0
        %1272 = vmatpush1.bf16.msra.mxu0 0
        %1273 = vmatprep.subr.bf16.mxu0 0
        %1274 = vmatpush1.bf16.msra.mxu0 0
        %1275 = vmatprep.subr.bf16.mxu0 0
        %1276 = vmatpush1.bf16.msra.mxu0 0
        %1277 = vmatprep.subr.bf16.mxu0 0
        %1278 = vmatpush1.bf16.msra.mxu0 0
        %1279 = vmatprep.subr.bf16.mxu0 0
        %1280 = vmatpush1.bf16.msra.mxu0 0
        %1281 = vmatprep.subr.bf16.mxu0 0
        %1282 = vmatpush1.bf16.msra.mxu0 0
        %1283 = vmatprep.subr.bf16.mxu0 0
        %1284 = vmatpush1.bf16.msra.mxu0 0
        %1285 = vmatprep.subr.bf16.mxu0 0
        %1286 = vmatpush1.bf16.msra.mxu0 0
        %1287 = vmatprep.mubr.bf16.mxu0 0
        %1288 = vmatmul.mubr.bf16.gmra.mrb[0].mxu0 %v1250
        %v1289 = vpop.f32.mrb[0].mxu0
        %v1290 = vadd.f32 0.0, %v1289
        %v1291 = vpop.f32.mrb[0].mxu0
        %v1292 = vpop.f32.mrb[0].mxu0
        %v1293 = vpop.f32.mrb[0].mxu0
        %1294 = vdwg.mxu0
        %v1295 = vpack.c.bf16 %v1290, %v1290
        %v1297 = vsel %vm872, %v1295, 0
        %v1300 = vsel %vm936, %v789, 0
        %1302 = vmatprep.subr.bf16.mxu0 0
        %1303 = vmatpush1.bf16.msra.mxu0 %v1300
        %1304 = vmatprep.subr.bf16.mxu0 0
        %1305 = vmatpush1.bf16.msra.mxu0 0
        %1306 = vmatprep.subr.bf16.mxu0 0
        %1307 = vmatpush1.bf16.msra.mxu0 0
        %1308 = vmatprep.subr.bf16.mxu0 0
        %1309 = vmatpush1.bf16.msra.mxu0 0
        %1310 = vmatprep.subr.bf16.mxu0 0
        %1311 = vmatpush1.bf16.msra.mxu0 0
        %1312 = vmatprep.subr.bf16.mxu0 0
        %1313 = vmatpush1.bf16.msra.mxu0 0
        %1314 = vmatprep.subr.bf16.mxu0 0
        %1315 = vmatpush1.bf16.msra.mxu0 0
        %1316 = vmatprep.subr.bf16.mxu0 0
        %1317 = vmatpush1.bf16.msra.mxu0 0
        %1318 = vmatprep.subr.bf16.mxu0 0
        %1319 = vmatpush1.bf16.msra.mxu0 0
        %1320 = vmatprep.subr.bf16.mxu0 0
        %1321 = vmatpush1.bf16.msra.mxu0 0
        %1322 = vmatprep.subr.bf16.mxu0 0
        %1323 = vmatpush1.bf16.msra.mxu0 0
        %1324 = vmatprep.subr.bf16.mxu0 0
        %1325 = vmatpush1.bf16.msra.mxu0 0
        %1326 = vmatprep.subr.bf16.mxu0 0
        %1327 = vmatpush1.bf16.msra.mxu0 0
        %1328 = vmatprep.subr.bf16.mxu0 0
        %1329 = vmatpush1.bf16.msra.mxu0 0
        %1330 = vmatprep.subr.bf16.mxu0 0
        %1331 = vmatpush1.bf16.msra.mxu0 0
        %1332 = vmatprep.subr.bf16.mxu0 0
        %1333 = vmatpush1.bf16.msra.mxu0 0
        %1334 = vmatprep.mubr.bf16.mxu0 0
        %1335 = vmatmul.mubr.bf16.gmra.mrb[0].mxu0 %v1297
        %v1336 = vpop.f32.mrb[0].mxu0
        %v1337 = vadd.f32 0.0, %v1336
        %v1338 = vpop.f32.mrb[0].mxu0
        %v1339 = vpop.f32.mrb[0].mxu0
        %v1340 = vpop.f32.mrb[0].mxu0
        %1341 = vdwg.mxu0
        %v1342 = vadd.f32 %v1180, %v1337
        %1343 = vrot.lane.b32.xlu0 %v867, 104
        %v1344 = vpop.permute.xlu0 %1343
        %1345 = vrot.lane.b32.xlu0 %v868, 72
        %v1346 = vpop.permute.xlu0 %1345
        %v1348 = vsel %vm872, %v1344, 0
        %v1351 = vsel %vm872, %v1346, 0
        %1353 = vmatprep.subr.bf16.mxu0 0
        %1354 = vmatpush1.bf16.xpose.msra.mxu0 %v1351
        %1355 = vmatprep.subr.bf16.mxu0 0
        %1356 = vmatpush1.bf16.xpose.msra.mxu0 0
        %1357 = vmatprep.subr.bf16.mxu0 0
        %1358 = vmatpush1.bf16.xpose.msra.mxu0 0
        %1359 = vmatprep.subr.bf16.mxu0 0
        %1360 = vmatpush1.bf16.xpose.msra.mxu0 0
        %1361 = vmatprep.subr.bf16.mxu0 0
        %1362 = vmatpush1.bf16.xpose.msra.mxu0 0
        %1363 = vmatprep.subr.bf16.mxu0 0
        %1364 = vmatpush1.bf16.xpose.msra.mxu0 0
        %1365 = vmatprep.subr.bf16.mxu0 0
        %1366 = vmatpush1.bf16.xpose.msra.mxu0 0
        %1367 = vmatprep.subr.bf16.mxu0 0
        %1368 = vmatpush1.bf16.xpose.msra.mxu0 0
        %1369 = vmatprep.subr.bf16.mxu0 0
        %1370 = vmatpush1.bf16.xpose.msra.mxu0 0
        %1371 = vmatprep.subr.bf16.mxu0 0
        %1372 = vmatpush1.bf16.xpose.msra.mxu0 0
        %1373 = vmatprep.subr.bf16.mxu0 0
        %1374 = vmatpush1.bf16.xpose.msra.mxu0 0
        %1375 = vmatprep.subr.bf16.mxu0 0
        %1376 = vmatpush1.bf16.xpose.msra.mxu0 0
        %1377 = vmatprep.subr.bf16.mxu0 0
        %1378 = vmatpush1.bf16.xpose.msra.mxu0 0
        %1379 = vmatprep.subr.bf16.mxu0 0
        %1380 = vmatpush1.bf16.xpose.msra.mxu0 0
        %1381 = vmatprep.subr.bf16.mxu0 0
        %1382 = vmatpush1.bf16.xpose.msra.mxu0 0
        %1383 = vmatprep.subr.bf16.mxu0 0
        %1384 = vmatpush1.bf16.xpose.msra.mxu0 0
        %1385 = vmatprep.mubr.bf16.mxu0 0
        %1386 = vmatmul.mubr.bf16.gmra.mrb[0].mxu0 %v1348
        %v1387 = vpop.f32.mrb[0].mxu0
        %v1388 = vadd.f32 %v797, %v1387
        %v1389 = vpop.f32.mrb[0].mxu0
        %v1390 = vpop.f32.mrb[0].mxu0
        %v1391 = vpop.f32.mrb[0].mxu0
        %1392 = vdwg.mxu0
        %v1393 = vsel %vm872, %v1388, -inf
        %1394 = vmax.xlane.f32.xlu0 %v1393
        %v1395 = vpop.xlane.xlu0 %1394
        %v1396 = vsub.f32 %v1388, %v1395
        %v1397 = vmul.f32 %v1396, 1.442695
        %v1398 = vpow.pop %v1397
        %v1399 = vsel %vm872, %v1398, 0.0
        %1400 = vadd.xlane.f32.xlu0 %v1399
        %v1401 = vpop.xlane.xlu0 %1400
        %v1402 = vrcp.pop %v1401
        %v1403 = vmul.f32 %v1398, %v1402
        %v1404 = vpack.c.bf16 %v1403, %v1403
        %1405 = vrot.lane.b32.xlu0 %v868, 40
        %v1406 = vpop.permute.xlu0 %1405
        %v1408 = vsel %vm872, %v1404, 0
        %v1411 = vsel %vm936, %v1406, 0
        %1413 = vmatprep.subr.bf16.mxu0 0
        %1414 = vmatpush1.bf16.msra.mxu0 %v1411
        %1415 = vmatprep.subr.bf16.mxu0 0
        %1416 = vmatpush1.bf16.msra.mxu0 0
        %1417 = vmatprep.subr.bf16.mxu0 0
        %1418 = vmatpush1.bf16.msra.mxu0 0
        %1419 = vmatprep.subr.bf16.mxu0 0
        %1420 = vmatpush1.bf16.msra.mxu0 0
        %1421 = vmatprep.subr.bf16.mxu0 0
        %1422 = vmatpush1.bf16.msra.mxu0 0
        %1423 = vmatprep.subr.bf16.mxu0 0
        %1424 = vmatpush1.bf16.msra.mxu0 0
        %1425 = vmatprep.subr.bf16.mxu0 0
        %1426 = vmatpush1.bf16.msra.mxu0 0
        %1427 = vmatprep.subr.bf16.mxu0 0
        %1428 = vmatpush1.bf16.msra.mxu0 0
        %1429 = vmatprep.subr.bf16.mxu0 0
        %1430 = vmatpush1.bf16.msra.mxu0 0
        %1431 = vmatprep.subr.bf16.mxu0 0
        %1432 = vmatpush1.bf16.msra.mxu0 0
        %1433 = vmatprep.subr.bf16.mxu0 0
        %1434 = vmatpush1.bf16.msra.mxu0 0
        %1435 = vmatprep.subr.bf16.mxu0 0
        %1436 = vmatpush1.bf16.msra.mxu0 0
        %1437 = vmatprep.subr.bf16.mxu0 0
        %1438 = vmatpush1.bf16.msra.mxu0 0
        %1439 = vmatprep.subr.bf16.mxu0 0
        %1440 = vmatpush1.bf16.msra.mxu0 0
        %1441 = vmatprep.subr.bf16.mxu0 0
        %1442 = vmatpush1.bf16.msra.mxu0 0
        %1443 = vmatprep.subr.bf16.mxu0 0
        %1444 = vmatpush1.bf16.msra.mxu0 0
        %1445 = vmatprep.mubr.bf16.mxu0 0
        %1446 = vmatmul.mubr.bf16.gmra.mrb[0].mxu0 %v1408
        %v1447 = vpop.f32.mrb[0].mxu0
        %v1448 = vadd.f32 0.0, %v1447
        %v1449 = vpop.f32.mrb[0].mxu0
        %v1450 = vpop.f32.mrb[0].mxu0
        %v1451 = vpop.f32.mrb[0].mxu0
        %1452 = vdwg.mxu0
        %v1453 = vpack.c.bf16 %v1448, %v1448
        %v1455 = vsel %vm872, %v1453, 0
        %v1458 = vsel %vm936, %v790, 0
        %1460 = vmatprep.subr.bf16.mxu0 0
        %1461 = vmatpush1.bf16.msra.mxu0 %v1458
        %1462 = vmatprep.subr.bf16.mxu0 0
        %1463 = vmatpush1.bf16.msra.mxu0 0
        %1464 = vmatprep.subr.bf16.mxu0 0
        %1465 = vmatpush1.bf16.msra.mxu0 0
        %1466 = vmatprep.subr.bf16.mxu0 0
        %1467 = vmatpush1.bf16.msra.mxu0 0
        %1468 = vmatprep.subr.bf16.mxu0 0
        %1469 = vmatpush1.bf16.msra.mxu0 0
        %1470 = vmatprep.subr.bf16.mxu0 0
        %1471 = vmatpush1.bf16.msra.mxu0 0
        %1472 = vmatprep.subr.bf16.mxu0 0
        %1473 = vmatpush1.bf16.msra.mxu0 0
        %1474 = vmatprep.subr.bf16.mxu0 0
        %1475 = vmatpush1.bf16.msra.mxu0 0
        %1476 = vmatprep.subr.bf16.mxu0 0
        %1477 = vmatpush1.bf16.msra.mxu0 0
        %1478 = vmatprep.subr.bf16.mxu0 0
        %1479 = vmatpush1.bf16.msra.mxu0 0
        %1480 = vmatprep.subr.bf16.mxu0 0
        %1481 = vmatpush1.bf16.msra.mxu0 0
        %1482 = vmatprep.subr.bf16.mxu0 0
        %1483 = vmatpush1.bf16.msra.mxu0 0
        %1484 = vmatprep.subr.bf16.mxu0 0
        %1485 = vmatpush1.bf16.msra.mxu0 0
        %1486 = vmatprep.subr.bf16.mxu0 0
        %1487 = vmatpush1.bf16.msra.mxu0 0
        %1488 = vmatprep.subr.bf16.mxu0 0
        %1489 = vmatpush1.bf16.msra.mxu0 0
        %1490 = vmatprep.subr.bf16.mxu0 0
        %1491 = vmatpush1.bf16.msra.mxu0 0
        %1492 = vmatprep.mubr.bf16.mxu0 0
        %1493 = vmatmul.mubr.bf16.gmra.mrb[0].mxu0 %v1455
        %v1494 = vpop.f32.mrb[0].mxu0
        %v1495 = vadd.f32 0.0, %v1494
        %v1496 = vpop.f32.mrb[0].mxu0
        %v1497 = vpop.f32.mrb[0].mxu0
        %v1498 = vpop.f32.mrb[0].mxu0
        %1499 = vdwg.mxu0
        %v1500 = vadd.f32 %v1342, %v1495
        %v1501 = vadd.f32 %v795, %v1500
        %1503 = vrot.lane.b32.xlu0 %v864, 32
        %v1504 = vpop.permute.xlu0 %1503
        %v1506 = vadd.f32 %v1501, %v1504
        %v1507 = vsel %vm815, %v1506, 0.0
        %1508 = vadd.xlane.f32.xlu0 %v1507
        %v1509 = vpop.xlane.xlu0 %1508
        %v1510 = vrcp.pop 32.0
        %v1511 = vmul.f32 %v1509, %v1510
        %v1512 = vsub.f32 %v1506, %v1511
        %v1513 = vmul.f32 %v1512, %v1512
        %v1514 = vsel %vm815, %v1513, 0.0
        %1515 = vadd.xlane.f32.xlu0 %v1514
        %v1516 = vpop.xlane.xlu0 %1515
        %v1517 = vmul.f32 %v1516, %v1510
        %v1518 = vadd.f32 %v1517, 1e-05
        %v1519 = vrsqrt.pop %v1518
        %v1520 = vmul.f32 %v1512, %v1519
        %v1521 = vlaneseq
        %v1522 = vshrl.u32 %v1521, 7
        %v1523 = vsub.s32 3, %v1522
        %v1524 = vrot.slane %v786, %v1523
        %v1525 = vmul.f32 %v1520, %v1524
        %1527 = vrot.lane.b32.xlu0 %v1524, 96
        %v1528 = vpop.permute.xlu0 %1527
        %v1530 = vadd.f32 %v1525, %v1528
        %v1531 = vpack.c.bf16 %v1530, %v1530
        %v1532 = vld [vmem:[%s629] sm:$0xf]
        %v1533 = vld [vmem:[%s629 + $0x4] sm:$0xf]
        %v1534 = vld [vmem:[%s629 + $0x8] sm:$0xf]
        %v1535 = vld [vmem:[%s629 + $0xc] sm:$0xf]
        %v1540 = vunpack.c.l.b16 %v1532
        %v1541 = vunpack.c.l.b16 %v1533
        %v1542 = vunpack.c.l.b16 %v1534
        %v1543 = vunpack.c.l.b16 %v1535
        %v1544 = vpack.c.b16 %v1541, %v1540
        %v1545 = vpack.c.b16 %v1543, %v1542
        %v1549 = vsel %vm815, %v1531, 0
        %1551 = vmatprep.subr.bf16.mxu0 0
        %1552 = vmatpush1.bf16.msra.mxu0 %v1544
        %1553 = vmatprep.subr.bf16.mxu0 0
        %1554 = vmatpush1.bf16.msra.mxu0 %v1545
        %1555 = vmatprep.subr.bf16.mxu0 0
        %1556 = vmatpush1.bf16.msra.mxu0 0
        %1557 = vmatprep.subr.bf16.mxu0 0
        %1558 = vmatpush1.bf16.msra.mxu0 0
        %1559 = vmatprep.subr.bf16.mxu0 0
        %1560 = vmatpush1.bf16.msra.mxu0 0
        %1561 = vmatprep.subr.bf16.mxu0 0
        %1562 = vmatpush1.bf16.msra.mxu0 0
        %1563 = vmatprep.subr.bf16.mxu0 0
        %1564 = vmatpush1.bf16.msra.mxu0 0
        %1565 = vmatprep.subr.bf16.mxu0 0
        %1566 = vmatpush1.bf16.msra.mxu0 0
        %1567 = vmatprep.subr.bf16.mxu0 0
        %1568 = vmatpush1.bf16.msra.mxu0 0
        %1569 = vmatprep.subr.bf16.mxu0 0
        %1570 = vmatpush1.bf16.msra.mxu0 0
        %1571 = vmatprep.subr.bf16.mxu0 0
        %1572 = vmatpush1.bf16.msra.mxu0 0
        %1573 = vmatprep.subr.bf16.mxu0 0
        %1574 = vmatpush1.bf16.msra.mxu0 0
        %1575 = vmatprep.subr.bf16.mxu0 0
        %1576 = vmatpush1.bf16.msra.mxu0 0
        %1577 = vmatprep.subr.bf16.mxu0 0
        %1578 = vmatpush1.bf16.msra.mxu0 0
        %1579 = vmatprep.subr.bf16.mxu0 0
        %1580 = vmatpush1.bf16.msra.mxu0 0
        %1581 = vmatprep.subr.bf16.mxu0 0
        %1582 = vmatpush1.bf16.msra.mxu0 0
        %1583 = vmatprep.mubr.bf16.mxu0 0
        %1584 = vmatmul.mubr.bf16.gmra.mrb[0].mxu0 %v1549
        %v1585 = vpop.f32.mrb[0].mxu0
        %v1586 = vadd.f32 0.0, %v1585
        %v1587 = vpop.f32.mrb[0].mxu0
        %v1588 = vpop.f32.mrb[0].mxu0
        %v1589 = vpop.f32.mrb[0].mxu0
        %1590 = vdwg.mxu0
        %v1591 = vpack.c.bf16 %v1586, %v1586
        %v1592 = vunpack.c.l.bf16 %v1591
        %v1593 = vlaneseq
        %v1594 = vshrl.u32 %v1593, 7
        %v1595 = vsub.s32 2, %v1594
        %v1596 = vrot.slane %v786, %v1595
        %v1597 = vadd.f32 %v1592, %v1596
        %v1598 = vmul.f32 %v1597, 0.35355338
        %v1599 = vpack.c.bf16 %v1598, %v1598
        %v1600 = vpack.c.bf16 %v796, %v796
        %v1601 = vld [vmem:[%s638] sm:$0xf]
        %v1602 = vld [vmem:[%s638 + $0x4] sm:$0xf]
        %v1603 = vld [vmem:[%s638 + $0x8] sm:$0xf]
        %v1604 = vld [vmem:[%s638 + $0xc] sm:$0xf]
        %v1609 = vunpack.c.l.b16 %v1601
        %v1610 = vunpack.c.l.b16 %v1602
        %v1611 = vunpack.c.l.b16 %v1603
        %v1612 = vunpack.c.l.b16 %v1604
        %v1613 = vpack.c.b16 %v1610, %v1609
        %v1614 = vpack.c.b16 %v1612, %v1611
        %v1618 = vsel %vm815, %v1600, 0
        %1620 = vmatprep.subr.bf16.mxu0 0
        %1621 = vmatpush1.bf16.msra.mxu0 %v1613
        %1622 = vmatprep.subr.bf16.mxu0 0
        %1623 = vmatpush1.bf16.msra.mxu0 %v1614
        %1624 = vmatprep.subr.bf16.mxu0 0
        %1625 = vmatpush1.bf16.msra.mxu0 0
        %1626 = vmatprep.subr.bf16.mxu0 0
        %1627 = vmatpush1.bf16.msra.mxu0 0
        %1628 = vmatprep.subr.bf16.mxu0 0
        %1629 = vmatpush1.bf16.msra.mxu0 0
        %1630 = vmatprep.subr.bf16.mxu0 0
        %1631 = vmatpush1.bf16.msra.mxu0 0
        %1632 = vmatprep.subr.bf16.mxu0 0
        %1633 = vmatpush1.bf16.msra.mxu0 0
        %1634 = vmatprep.subr.bf16.mxu0 0
        %1635 = vmatpush1.bf16.msra.mxu0 0
        %1636 = vmatprep.subr.bf16.mxu0 0
        %1637 = vmatpush1.bf16.msra.mxu0 0
        %1638 = vmatprep.subr.bf16.mxu0 0
        %1639 = vmatpush1.bf16.msra.mxu0 0
        %1640 = vmatprep.subr.bf16.mxu0 0
        %1641 = vmatpush1.bf16.msra.mxu0 0
        %1642 = vmatprep.subr.bf16.mxu0 0
        %1643 = vmatpush1.bf16.msra.mxu0 0
        %1644 = vmatprep.subr.bf16.mxu0 0
        %1645 = vmatpush1.bf16.msra.mxu0 0
        %1646 = vmatprep.subr.bf16.mxu0 0
        %1647 = vmatpush1.bf16.msra.mxu0 0
        %1648 = vmatprep.subr.bf16.mxu0 0
        %1649 = vmatpush1.bf16.msra.mxu0 0
        %1650 = vmatprep.subr.bf16.mxu0 0
        %1651 = vmatpush1.bf16.msra.mxu0 0
        %1652 = vmatprep.mubr.bf16.mxu0 0
        %1653 = vmatmul.mubr.bf16.gmra.mrb[0].mxu0 %v1618
        %v1654 = vpop.f32.mrb[0].mxu0
        %v1655 = vadd.f32 0.0, %v1654
        %v1656 = vpop.f32.mrb[0].mxu0
        %v1657 = vpop.f32.mrb[0].mxu0
        %v1658 = vpop.f32.mrb[0].mxu0
        %1659 = vdwg.mxu0
        %v1660 = vpack.c.bf16 %v1655, %v1655
        %v1661 = vunpack.c.l.bf16 %v1660
        %1663 = vrot.lane.b32.xlu0 %v1596, 96
        %v1664 = vpop.permute.xlu0 %1663
        %v1666 = vadd.f32 %v1661, %v1664
        %v1667 = vpack.c.bf16 %v1666, %v1666
        %v1669 = vsel %vm872, %v1599, 0
        %v1672 = vsel %vm872, %v1667, 0
        %1674 = vmatprep.subr.bf16.mxu0 0
        %1675 = vmatpush1.bf16.xpose.msra.mxu0 %v1672
        %1676 = vmatprep.subr.bf16.mxu0 0
        %1677 = vmatpush1.bf16.xpose.msra.mxu0 0
        %1678 = vmatprep.subr.bf16.mxu0 0
        %1679 = vmatpush1.bf16.xpose.msra.mxu0 0
        %1680 = vmatprep.subr.bf16.mxu0 0
        %1681 = vmatpush1.bf16.xpose.msra.mxu0 0
        %1682 = vmatprep.subr.bf16.mxu0 0
        %1683 = vmatpush1.bf16.xpose.msra.mxu0 0
        %1684 = vmatprep.subr.bf16.mxu0 0
        %1685 = vmatpush1.bf16.xpose.msra.mxu0 0
        %1686 = vmatprep.subr.bf16.mxu0 0
        %1687 = vmatpush1.bf16.xpose.msra.mxu0 0
        %1688 = vmatprep.subr.bf16.mxu0 0
        %1689 = vmatpush1.bf16.xpose.msra.mxu0 0
        %1690 = vmatprep.subr.bf16.mxu0 0
        %1691 = vmatpush1.bf16.xpose.msra.mxu0 0
        %1692 = vmatprep.subr.bf16.mxu0 0
        %1693 = vmatpush1.bf16.xpose.msra.mxu0 0
        %1694 = vmatprep.subr.bf16.mxu0 0
        %1695 = vmatpush1.bf16.xpose.msra.mxu0 0
        %1696 = vmatprep.subr.bf16.mxu0 0
        %1697 = vmatpush1.bf16.xpose.msra.mxu0 0
        %1698 = vmatprep.subr.bf16.mxu0 0
        %1699 = vmatpush1.bf16.xpose.msra.mxu0 0
        %1700 = vmatprep.subr.bf16.mxu0 0
        %1701 = vmatpush1.bf16.xpose.msra.mxu0 0
        %1702 = vmatprep.subr.bf16.mxu0 0
        %1703 = vmatpush1.bf16.xpose.msra.mxu0 0
        %1704 = vmatprep.subr.bf16.mxu0 0
        %1705 = vmatpush1.bf16.xpose.msra.mxu0 0
        %1706 = vmatprep.mubr.bf16.mxu0 0
        %1707 = vmatmul.mubr.bf16.gmra.mrb[0].mxu0 %v1669
        %v1708 = vpop.f32.mrb[0].mxu0
        %v1709 = vadd.f32 0.0, %v1708
        %v1710 = vpop.f32.mrb[0].mxu0
        %v1711 = vpop.f32.mrb[0].mxu0
        %v1712 = vpop.f32.mrb[0].mxu0
        %1713 = vdwg.mxu0
        %vm1714 = vcmask 31744
        %v1715 = vsel %vm1714, %v1709, -inf
        %1716 = vmax.xlane.f32.xlu0 %v1715
        %v1717 = vpop.xlane.xlu0 %1716
        %v1718 = vsub.f32 %v1709, %v1717
        %v1719 = vmul.f32 %v1718, 1.442695
        %v1720 = vpow.pop %v1719
        %v1721 = vsel %vm1714, %v1720, 0.0
        %1722 = vadd.xlane.f32.xlu0 %v1721
        %v1723 = vpop.xlane.xlu0 %1722
        %v1724 = vrcp.pop %v1723
        %v1725 = vmul.f32 %v1720, %v1724
        %v1726 = vpack.c.bf16 %v1725, %v1725
        %1728 = vrot.lane.b32.xlu0 %v1667, 96
        %v1729 = vpop.permute.xlu0 %1728
        %v1731 = vsel %vm1714, %v1726, 0
        %vm1733 = vcmask 1041408
        %v1735 = vsel %vm1733, %v1729, 0
        %1737 = vmatprep.subr.bf16.mxu0 0
        %1738 = vmatpush1.bf16.msra.mxu0 %v1735
        %1739 = vmatprep.subr.bf16.mxu0 0
        %1740 = vmatpush1.bf16.msra.mxu0 0
        %1741 = vmatprep.subr.bf16.mxu0 0
        %1742 = vmatpush1.bf16.msra.mxu0 0
        %1743 = vmatprep.subr.bf16.mxu0 0
        %1744 = vmatpush1.bf16.msra.mxu0 0
        %1745 = vmatprep.subr.bf16.mxu0 0
        %1746 = vmatpush1.bf16.msra.mxu0 0
        %1747 = vmatprep.subr.bf16.mxu0 0
        %1748 = vmatpush1.bf16.msra.mxu0 0
        %1749 = vmatprep.subr.bf16.mxu0 0
        %1750 = vmatpush1.bf16.msra.mxu0 0
        %1751 = vmatprep.subr.bf16.mxu0 0
        %1752 = vmatpush1.bf16.msra.mxu0 0
        %1753 = vmatprep.subr.bf16.mxu0 0
        %1754 = vmatpush1.bf16.msra.mxu0 0
        %1755 = vmatprep.subr.bf16.mxu0 0
        %1756 = vmatpush1.bf16.msra.mxu0 0
        %1757 = vmatprep.subr.bf16.mxu0 0
        %1758 = vmatpush1.bf16.msra.mxu0 0
        %1759 = vmatprep.subr.bf16.mxu0 0
        %1760 = vmatpush1.bf16.msra.mxu0 0
        %1761 = vmatprep.subr.bf16.mxu0 0
        %1762 = vmatpush1.bf16.msra.mxu0 0
        %1763 = vmatprep.subr.bf16.mxu0 0
        %1764 = vmatpush1.bf16.msra.mxu0 0
        %1765 = vmatprep.subr.bf16.mxu0 0
        %1766 = vmatpush1.bf16.msra.mxu0 0
        %1767 = vmatprep.subr.bf16.mxu0 0
        %1768 = vmatpush1.bf16.msra.mxu0 0
        %1769 = vmatprep.mubr.bf16.mxu0 0
        %1770 = vmatmul.mubr.bf16.gmra.mrb[0].mxu0 %v1731
        %v1771 = vpop.f32.mrb[0].mxu0
        %v1772 = vadd.f32 0.0, %v1771
        %v1773 = vpop.f32.mrb[0].mxu0
        %v1774 = vpop.f32.mrb[0].mxu0
        %v1775 = vpop.f32.mrb[0].mxu0
        %1776 = vdwg.mxu0
        %v1777 = vpack.c.bf16 %v1772, %v1772
        %1779 = vrot.lane.b32.xlu0 %v1599, 120
        %v1780 = vpop.permute.xlu0 %1779
        %1781 = vrot.lane.b32.xlu0 %v1667, 120
        %v1782 = vpop.permute.xlu0 %1781
        %v1784 = vsel %vm872, %v1780, 0
        %v1787 = vsel %vm872, %v1782, 0
        %1789 = vmatprep.subr.bf16.mxu0 0
        %1790 = vmatpush1.bf16.xpose.msra.mxu0 %v1787
        %1791 = vmatprep.subr.bf16.mxu0 0
        %1792 = vmatpush1.bf16.xpose.msra.mxu0 0
        %1793 = vmatprep.subr.bf16.mxu0 0
        %1794 = vmatpush1.bf16.xpose.msra.mxu0 0
        %1795 = vmatprep.subr.bf16.mxu0 0
        %1796 = vmatpush1.bf16.xpose.msra.mxu0 0
        %1797 = vmatprep.subr.bf16.mxu0 0
        %1798 = vmatpush1.bf16.xpose.msra.mxu0 0
        %1799 = vmatprep.subr.bf16.mxu0 0
        %1800 = vmatpush1.bf16.xpose.msra.mxu0 0
        %1801 = vmatprep.subr.bf16.mxu0 0
        %1802 = vmatpush1.bf16.xpose.msra.mxu0 0
        %1803 = vmatprep.subr.bf16.mxu0 0
        %1804 = vmatpush1.bf16.xpose.msra.mxu0 0
        %1805 = vmatprep.subr.bf16.mxu0 0
        %1806 = vmatpush1.bf16.xpose.msra.mxu0 0
        %1807 = vmatprep.subr.bf16.mxu0 0
        %1808 = vmatpush1.bf16.xpose.msra.mxu0 0
        %1809 = vmatprep.subr.bf16.mxu0 0
        %1810 = vmatpush1.bf16.xpose.msra.mxu0 0
        %1811 = vmatprep.subr.bf16.mxu0 0
        %1812 = vmatpush1.bf16.xpose.msra.mxu0 0
        %1813 = vmatprep.subr.bf16.mxu0 0
        %1814 = vmatpush1.bf16.xpose.msra.mxu0 0
        %1815 = vmatprep.subr.bf16.mxu0 0
        %1816 = vmatpush1.bf16.xpose.msra.mxu0 0
        %1817 = vmatprep.subr.bf16.mxu0 0
        %1818 = vmatpush1.bf16.xpose.msra.mxu0 0
        %1819 = vmatprep.subr.bf16.mxu0 0
        %1820 = vmatpush1.bf16.xpose.msra.mxu0 0
        %1821 = vmatprep.mubr.bf16.mxu0 0
        %1822 = vmatmul.mubr.bf16.gmra.mrb[0].mxu0 %v1784
        %v1823 = vpop.f32.mrb[0].mxu0
        %v1824 = vadd.f32 0.0, %v1823
        %v1825 = vpop.f32.mrb[0].mxu0
        %v1826 = vpop.f32.mrb[0].mxu0
        %v1827 = vpop.f32.mrb[0].mxu0
        %1828 = vdwg.mxu0
        %v1829 = vsel %vm1714, %v1824, -inf
        %1830 = vmax.xlane.f32.xlu0 %v1829
        %v1831 = vpop.xlane.xlu0 %1830
        %v1832 = vsub.f32 %v1824, %v1831
        %v1833 = vmul.f32 %v1832, 1.442695
        %v1834 = vpow.pop %v1833
        %v1835 = vsel %vm1714, %v1834, 0.0
        %1836 = vadd.xlane.f32.xlu0 %v1835
        %v1837 = vpop.xlane.xlu0 %1836
        %v1838 = vrcp.pop %v1837
        %v1839 = vmul.f32 %v1834, %v1838
        %v1840 = vpack.c.bf16 %v1839, %v1839
        %1841 = vrot.lane.b32.xlu0 %v1667, 88
        %v1842 = vpop.permute.xlu0 %1841
        %v1844 = vsel %vm1714, %v1840, 0
        %v1847 = vsel %vm1733, %v1842, 0
        %1849 = vmatprep.subr.bf16.mxu0 0
        %1850 = vmatpush1.bf16.msra.mxu0 %v1847
        %1851 = vmatprep.subr.bf16.mxu0 0
        %1852 = vmatpush1.bf16.msra.mxu0 0
        %1853 = vmatprep.subr.bf16.mxu0 0
        %1854 = vmatpush1.bf16.msra.mxu0 0
        %1855 = vmatprep.subr.bf16.mxu0 0
        %1856 = vmatpush1.bf16.msra.mxu0 0
        %1857 = vmatprep.subr.bf16.mxu0 0
        %1858 = vmatpush1.bf16.msra.mxu0 0
        %1859 = vmatprep.subr.bf16.mxu0 0
        %1860 = vmatpush1.bf16.msra.mxu0 0
        %1861 = vmatprep.subr.bf16.mxu0 0
        %1862 = vmatpush1.bf16.msra.mxu0 0
        %1863 = vmatprep.subr.bf16.mxu0 0
        %1864 = vmatpush1.bf16.msra.mxu0 0
        %1865 = vmatprep.subr.bf16.mxu0 0
        %1866 = vmatpush1.bf16.msra.mxu0 0
        %1867 = vmatprep.subr.bf16.mxu0 0
        %1868 = vmatpush1.bf16.msra.mxu0 0
        %1869 = vmatprep.subr.bf16.mxu0 0
        %1870 = vmatpush1.bf16.msra.mxu0 0
        %1871 = vmatprep.subr.bf16.mxu0 0
        %1872 = vmatpush1.bf16.msra.mxu0 0
        %1873 = vmatprep.subr.bf16.mxu0 0
        %1874 = vmatpush1.bf16.msra.mxu0 0
        %1875 = vmatprep.subr.bf16.mxu0 0
        %1876 = vmatpush1.bf16.msra.mxu0 0
        %1877 = vmatprep.subr.bf16.mxu0 0
        %1878 = vmatpush1.bf16.msra.mxu0 0
        %1879 = vmatprep.subr.bf16.mxu0 0
        %1880 = vmatpush1.bf16.msra.mxu0 0
        %1881 = vmatprep.mubr.bf16.mxu0 0
        %1882 = vmatmul.mubr.bf16.gmra.mrb[0].mxu0 %v1844
        %v1883 = vpop.f32.mrb[0].mxu0
        %v1884 = vadd.f32 0.0, %v1883
        %v1885 = vpop.f32.mrb[0].mxu0
        %v1886 = vpop.f32.mrb[0].mxu0
        %v1887 = vpop.f32.mrb[0].mxu0
        %1888 = vdwg.mxu0
        %v1889 = vpack.c.bf16 %v1884, %v1884
        %v1891 = vsel %vm872, %v1889, 0
        %v1894 = vsel %vm936, %v792, 0
        %1896 = vmatprep.subr.bf16.mxu0 0
        %1897 = vmatpush1.bf16.msra.mxu0 %v1894
        %1898 = vmatprep.subr.bf16.mxu0 0
        %1899 = vmatpush1.bf16.msra.mxu0 0
        %1900 = vmatprep.subr.bf16.mxu0 0
        %1901 = vmatpush1.bf16.msra.mxu0 0
        %1902 = vmatprep.subr.bf16.mxu0 0
        %1903 = vmatpush1.bf16.msra.mxu0 0
        %1904 = vmatprep.subr.bf16.mxu0 0
        %1905 = vmatpush1.bf16.msra.mxu0 0
        %1906 = vmatprep.subr.bf16.mxu0 0
        %1907 = vmatpush1.bf16.msra.mxu0 0
        %1908 = vmatprep.subr.bf16.mxu0 0
        %1909 = vmatpush1.bf16.msra.mxu0 0
        %1910 = vmatprep.subr.bf16.mxu0 0
        %1911 = vmatpush1.bf16.msra.mxu0 0
        %1912 = vmatprep.subr.bf16.mxu0 0
        %1913 = vmatpush1.bf16.msra.mxu0 0
        %1914 = vmatprep.subr.bf16.mxu0 0
        %1915 = vmatpush1.bf16.msra.mxu0 0
        %1916 = vmatprep.subr.bf16.mxu0 0
        %1917 = vmatpush1.bf16.msra.mxu0 0
        %1918 = vmatprep.subr.bf16.mxu0 0
        %1919 = vmatpush1.bf16.msra.mxu0 0
        %1920 = vmatprep.subr.bf16.mxu0 0
        %1921 = vmatpush1.bf16.msra.mxu0 0
        %1922 = vmatprep.subr.bf16.mxu0 0
        %1923 = vmatpush1.bf16.msra.mxu0 0
        %1924 = vmatprep.subr.bf16.mxu0 0
        %1925 = vmatpush1.bf16.msra.mxu0 0
        %1926 = vmatprep.subr.bf16.mxu0 0
        %1927 = vmatpush1.bf16.msra.mxu0 0
        %1928 = vmatprep.mubr.bf16.mxu0 0
        %1929 = vmatmul.mubr.bf16.gmra.mrb[0].mxu0 %v1891
        %v1930 = vpop.f32.mrb[0].mxu0
        %v1931 = vadd.f32 0.0, %v1930
        %v1932 = vpop.f32.mrb[0].mxu0
        %v1933 = vpop.f32.mrb[0].mxu0
        %v1934 = vpop.f32.mrb[0].mxu0
        %1935 = vdwg.mxu0
        %v1937 = vsel %vm872, %v1777, 0
        %v1940 = vsel %vm936, %v791, 0
        %1942 = vmatprep.subr.bf16.mxu0 0
        %1943 = vmatpush1.bf16.msra.mxu0 %v1940
        %1944 = vmatprep.subr.bf16.mxu0 0
        %1945 = vmatpush1.bf16.msra.mxu0 0
        %1946 = vmatprep.subr.bf16.mxu0 0
        %1947 = vmatpush1.bf16.msra.mxu0 0
        %1948 = vmatprep.subr.bf16.mxu0 0
        %1949 = vmatpush1.bf16.msra.mxu0 0
        %1950 = vmatprep.subr.bf16.mxu0 0
        %1951 = vmatpush1.bf16.msra.mxu0 0
        %1952 = vmatprep.subr.bf16.mxu0 0
        %1953 = vmatpush1.bf16.msra.mxu0 0
        %1954 = vmatprep.subr.bf16.mxu0 0
        %1955 = vmatpush1.bf16.msra.mxu0 0
        %1956 = vmatprep.subr.bf16.mxu0 0
        %1957 = vmatpush1.bf16.msra.mxu0 0
        %1958 = vmatprep.subr.bf16.mxu0 0
        %1959 = vmatpush1.bf16.msra.mxu0 0
        %1960 = vmatprep.subr.bf16.mxu0 0
        %1961 = vmatpush1.bf16.msra.mxu0 0
        %1962 = vmatprep.subr.bf16.mxu0 0
        %1963 = vmatpush1.bf16.msra.mxu0 0
        %1964 = vmatprep.subr.bf16.mxu0 0
        %1965 = vmatpush1.bf16.msra.mxu0 0
        %1966 = vmatprep.subr.bf16.mxu0 0
        %1967 = vmatpush1.bf16.msra.mxu0 0
        %1968 = vmatprep.subr.bf16.mxu0 0
        %1969 = vmatpush1.bf16.msra.mxu0 0
        %1970 = vmatprep.subr.bf16.mxu0 0
        %1971 = vmatpush1.bf16.msra.mxu0 0
        %1972 = vmatprep.subr.bf16.mxu0 0
        %1973 = vmatpush1.bf16.msra.mxu0 0
        %1974 = vmatprep.mubr.bf16.mxu0 0
        %1975 = vmatmul.mubr.bf16.gmra.mrb[0].mxu0 %v1937
        %v1976 = vpop.f32.mrb[0].mxu0
        %v1977 = vadd.f32 %v1931, %v1976
        %v1978 = vpop.f32.mrb[0].mxu0
        %v1979 = vpop.f32.mrb[0].mxu0
        %v1980 = vpop.f32.mrb[0].mxu0
        %1981 = vdwg.mxu0
        %1982 = vrot.lane.b32.xlu0 %v1599, 112
        %v1983 = vpop.permute.xlu0 %1982
        %1984 = vrot.lane.b32.xlu0 %v1667, 112
        %v1985 = vpop.permute.xlu0 %1984
        %v1987 = vsel %vm872, %v1983, 0
        %v1990 = vsel %vm872, %v1985, 0
        %1992 = vmatprep.subr.bf16.mxu0 0
        %1993 = vmatpush1.bf16.xpose.msra.mxu0 %v1990
        %1994 = vmatprep.subr.bf16.mxu0 0
        %1995 = vmatpush1.bf16.xpose.msra.mxu0 0
        %1996 = vmatprep.subr.bf16.mxu0 0
        %1997 = vmatpush1.bf16.xpose.msra.mxu0 0
        %1998 = vmatprep.subr.bf16.mxu0 0
        %1999 = vmatpush1.bf16.xpose.msra.mxu0 0
        %2000 = vmatprep.subr.bf16.mxu0 0
        %2001 = vmatpush1.bf16.xpose.msra.mxu0 0
        %2002 = vmatprep.subr.bf16.mxu0 0
        %2003 = vmatpush1.bf16.xpose.msra.mxu0 0
        %2004 = vmatprep.subr.bf16.mxu0 0
        %2005 = vmatpush1.bf16.xpose.msra.mxu0 0
        %2006 = vmatprep.subr.bf16.mxu0 0
        %2007 = vmatpush1.bf16.xpose.msra.mxu0 0
        %2008 = vmatprep.subr.bf16.mxu0 0
        %2009 = vmatpush1.bf16.xpose.msra.mxu0 0
        %2010 = vmatprep.subr.bf16.mxu0 0
        %2011 = vmatpush1.bf16.xpose.msra.mxu0 0
        %2012 = vmatprep.subr.bf16.mxu0 0
        %2013 = vmatpush1.bf16.xpose.msra.mxu0 0
        %2014 = vmatprep.subr.bf16.mxu0 0
        %2015 = vmatpush1.bf16.xpose.msra.mxu0 0
        %2016 = vmatprep.subr.bf16.mxu0 0
        %2017 = vmatpush1.bf16.xpose.msra.mxu0 0
        %2018 = vmatprep.subr.bf16.mxu0 0
        %2019 = vmatpush1.bf16.xpose.msra.mxu0 0
        %2020 = vmatprep.subr.bf16.mxu0 0
        %2021 = vmatpush1.bf16.xpose.msra.mxu0 0
        %2022 = vmatprep.subr.bf16.mxu0 0
        %2023 = vmatpush1.bf16.xpose.msra.mxu0 0
        %2024 = vmatprep.mubr.bf16.mxu0 0
        %2025 = vmatmul.mubr.bf16.gmra.mrb[0].mxu0 %v1987
        %v2026 = vpop.f32.mrb[0].mxu0
        %v2027 = vadd.f32 0.0, %v2026
        %v2028 = vpop.f32.mrb[0].mxu0
        %v2029 = vpop.f32.mrb[0].mxu0
        %v2030 = vpop.f32.mrb[0].mxu0
        %2031 = vdwg.mxu0
        %v2032 = vsel %vm1714, %v2027, -inf
        %2033 = vmax.xlane.f32.xlu0 %v2032
        %v2034 = vpop.xlane.xlu0 %2033
        %v2035 = vsub.f32 %v2027, %v2034
        %v2036 = vmul.f32 %v2035, 1.442695
        %v2037 = vpow.pop %v2036
        %v2038 = vsel %vm1714, %v2037, 0.0
        %2039 = vadd.xlane.f32.xlu0 %v2038
        %v2040 = vpop.xlane.xlu0 %2039
        %v2041 = vrcp.pop %v2040
        %v2042 = vmul.f32 %v2037, %v2041
        %v2043 = vpack.c.bf16 %v2042, %v2042
        %2044 = vrot.lane.b32.xlu0 %v1667, 80
        %v2045 = vpop.permute.xlu0 %2044
        %v2047 = vsel %vm1714, %v2043, 0
        %v2050 = vsel %vm1733, %v2045, 0
        %2052 = vmatprep.subr.bf16.mxu0 0
        %2053 = vmatpush1.bf16.msra.mxu0 %v2050
        %2054 = vmatprep.subr.bf16.mxu0 0
        %2055 = vmatpush1.bf16.msra.mxu0 0
        %2056 = vmatprep.subr.bf16.mxu0 0
        %2057 = vmatpush1.bf16.msra.mxu0 0
        %2058 = vmatprep.subr.bf16.mxu0 0
        %2059 = vmatpush1.bf16.msra.mxu0 0
        %2060 = vmatprep.subr.bf16.mxu0 0
        %2061 = vmatpush1.bf16.msra.mxu0 0
        %2062 = vmatprep.subr.bf16.mxu0 0
        %2063 = vmatpush1.bf16.msra.mxu0 0
        %2064 = vmatprep.subr.bf16.mxu0 0
        %2065 = vmatpush1.bf16.msra.mxu0 0
        %2066 = vmatprep.subr.bf16.mxu0 0
        %2067 = vmatpush1.bf16.msra.mxu0 0
        %2068 = vmatprep.subr.bf16.mxu0 0
        %2069 = vmatpush1.bf16.msra.mxu0 0
        %2070 = vmatprep.subr.bf16.mxu0 0
        %2071 = vmatpush1.bf16.msra.mxu0 0
        %2072 = vmatprep.subr.bf16.mxu0 0
        %2073 = vmatpush1.bf16.msra.mxu0 0
        %2074 = vmatprep.subr.bf16.mxu0 0
        %2075 = vmatpush1.bf16.msra.mxu0 0
        %2076 = vmatprep.subr.bf16.mxu0 0
        %2077 = vmatpush1.bf16.msra.mxu0 0
        %2078 = vmatprep.subr.bf16.mxu0 0
        %2079 = vmatpush1.bf16.msra.mxu0 0
        %2080 = vmatprep.subr.bf16.mxu0 0
        %2081 = vmatpush1.bf16.msra.mxu0 0
        %2082 = vmatprep.subr.bf16.mxu0 0
        %2083 = vmatpush1.bf16.msra.mxu0 0
        %2084 = vmatprep.mubr.bf16.mxu0 0
        %2085 = vmatmul.mubr.bf16.gmra.mrb[0].mxu0 %v2047
        %v2086 = vpop.f32.mrb[0].mxu0
        %v2087 = vadd.f32 0.0, %v2086
        %v2088 = vpop.f32.mrb[0].mxu0
        %v2089 = vpop.f32.mrb[0].mxu0
        %v2090 = vpop.f32.mrb[0].mxu0
        %2091 = vdwg.mxu0
        %v2092 = vpack.c.bf16 %v2087, %v2087
        %v2094 = vsel %vm872, %v2092, 0
        %v2097 = vsel %vm936, %v793, 0
        %2099 = vmatprep.subr.bf16.mxu0 0
        %2100 = vmatpush1.bf16.msra.mxu0 %v2097
        %2101 = vmatprep.subr.bf16.mxu0 0
        %2102 = vmatpush1.bf16.msra.mxu0 0
        %2103 = vmatprep.subr.bf16.mxu0 0
        %2104 = vmatpush1.bf16.msra.mxu0 0
        %2105 = vmatprep.subr.bf16.mxu0 0
        %2106 = vmatpush1.bf16.msra.mxu0 0
        %2107 = vmatprep.subr.bf16.mxu0 0
        %2108 = vmatpush1.bf16.msra.mxu0 0
        %2109 = vmatprep.subr.bf16.mxu0 0
        %2110 = vmatpush1.bf16.msra.mxu0 0
        %2111 = vmatprep.subr.bf16.mxu0 0
        %2112 = vmatpush1.bf16.msra.mxu0 0
        %2113 = vmatprep.subr.bf16.mxu0 0
        %2114 = vmatpush1.bf16.msra.mxu0 0
        %2115 = vmatprep.subr.bf16.mxu0 0
        %2116 = vmatpush1.bf16.msra.mxu0 0
        %2117 = vmatprep.subr.bf16.mxu0 0
        %2118 = vmatpush1.bf16.msra.mxu0 0
        %2119 = vmatprep.subr.bf16.mxu0 0
        %2120 = vmatpush1.bf16.msra.mxu0 0
        %2121 = vmatprep.subr.bf16.mxu0 0
        %2122 = vmatpush1.bf16.msra.mxu0 0
        %2123 = vmatprep.subr.bf16.mxu0 0
        %2124 = vmatpush1.bf16.msra.mxu0 0
        %2125 = vmatprep.subr.bf16.mxu0 0
        %2126 = vmatpush1.bf16.msra.mxu0 0
        %2127 = vmatprep.subr.bf16.mxu0 0
        %2128 = vmatpush1.bf16.msra.mxu0 0
        %2129 = vmatprep.subr.bf16.mxu0 0
        %2130 = vmatpush1.bf16.msra.mxu0 0
        %2131 = vmatprep.mubr.bf16.mxu0 0
        %2132 = vmatmul.mubr.bf16.gmra.mrb[0].mxu0 %v2094
        %v2133 = vpop.f32.mrb[0].mxu0
        %v2134 = vadd.f32 0.0, %v2133
        %v2135 = vpop.f32.mrb[0].mxu0
        %v2136 = vpop.f32.mrb[0].mxu0
        %v2137 = vpop.f32.mrb[0].mxu0
        %2138 = vdwg.mxu0
        %v2139 = vadd.f32 %v1977, %v2134
        %2140 = vrot.lane.b32.xlu0 %v1599, 104
        %v2141 = vpop.permute.xlu0 %2140
        %2142 = vrot.lane.b32.xlu0 %v1667, 104
        %v2143 = vpop.permute.xlu0 %2142
        %v2145 = vsel %vm872, %v2141, 0
        %v2148 = vsel %vm872, %v2143, 0
        %2150 = vmatprep.subr.bf16.mxu0 0
        %2151 = vmatpush1.bf16.xpose.msra.mxu0 %v2148
        %2152 = vmatprep.subr.bf16.mxu0 0
        %2153 = vmatpush1.bf16.xpose.msra.mxu0 0
        %2154 = vmatprep.subr.bf16.mxu0 0
        %2155 = vmatpush1.bf16.xpose.msra.mxu0 0
        %2156 = vmatprep.subr.bf16.mxu0 0
        %2157 = vmatpush1.bf16.xpose.msra.mxu0 0
        %2158 = vmatprep.subr.bf16.mxu0 0
        %2159 = vmatpush1.bf16.xpose.msra.mxu0 0
        %2160 = vmatprep.subr.bf16.mxu0 0
        %2161 = vmatpush1.bf16.xpose.msra.mxu0 0
        %2162 = vmatprep.subr.bf16.mxu0 0
        %2163 = vmatpush1.bf16.xpose.msra.mxu0 0
        %2164 = vmatprep.subr.bf16.mxu0 0
        %2165 = vmatpush1.bf16.xpose.msra.mxu0 0
        %2166 = vmatprep.subr.bf16.mxu0 0
        %2167 = vmatpush1.bf16.xpose.msra.mxu0 0
        %2168 = vmatprep.subr.bf16.mxu0 0
        %2169 = vmatpush1.bf16.xpose.msra.mxu0 0
        %2170 = vmatprep.subr.bf16.mxu0 0
        %2171 = vmatpush1.bf16.xpose.msra.mxu0 0
        %2172 = vmatprep.subr.bf16.mxu0 0
        %2173 = vmatpush1.bf16.xpose.msra.mxu0 0
        %2174 = vmatprep.subr.bf16.mxu0 0
        %2175 = vmatpush1.bf16.xpose.msra.mxu0 0
        %2176 = vmatprep.subr.bf16.mxu0 0
        %2177 = vmatpush1.bf16.xpose.msra.mxu0 0
        %2178 = vmatprep.subr.bf16.mxu0 0
        %2179 = vmatpush1.bf16.xpose.msra.mxu0 0
        %2180 = vmatprep.subr.bf16.mxu0 0
        %2181 = vmatpush1.bf16.xpose.msra.mxu0 0
        %2182 = vmatprep.mubr.bf16.mxu0 0
        %2183 = vmatmul.mubr.bf16.gmra.mrb[0].mxu0 %v2145
        %v2184 = vpop.f32.mrb[0].mxu0
        %v2185 = vadd.f32 0.0, %v2184
        %v2186 = vpop.f32.mrb[0].mxu0
        %v2187 = vpop.f32.mrb[0].mxu0
        %v2188 = vpop.f32.mrb[0].mxu0
        %2189 = vdwg.mxu0
        %v2190 = vsel %vm1714, %v2185, -inf
        %2191 = vmax.xlane.f32.xlu0 %v2190
        %v2192 = vpop.xlane.xlu0 %2191
        %v2193 = vsub.f32 %v2185, %v2192
        %v2194 = vmul.f32 %v2193, 1.442695
        %v2195 = vpow.pop %v2194
        %v2196 = vsel %vm1714, %v2195, 0.0
        %2197 = vadd.xlane.f32.xlu0 %v2196
        %v2198 = vpop.xlane.xlu0 %2197
        %v2199 = vrcp.pop %v2198
        %v2200 = vmul.f32 %v2195, %v2199
        %v2201 = vpack.c.bf16 %v2200, %v2200
        %2202 = vrot.lane.b32.xlu0 %v1667, 72
        %v2203 = vpop.permute.xlu0 %2202
        %v2205 = vsel %vm1714, %v2201, 0
        %v2208 = vsel %vm1733, %v2203, 0
        %2210 = vmatprep.subr.bf16.mxu0 0
        %2211 = vmatpush1.bf16.msra.mxu0 %v2208
        %2212 = vmatprep.subr.bf16.mxu0 0
        %2213 = vmatpush1.bf16.msra.mxu0 0
        %2214 = vmatprep.subr.bf16.mxu0 0
        %2215 = vmatpush1.bf16.msra.mxu0 0
        %2216 = vmatprep.subr.bf16.mxu0 0
        %2217 = vmatpush1.bf16.msra.mxu0 0
        %2218 = vmatprep.subr.bf16.mxu0 0
        %2219 = vmatpush1.bf16.msra.mxu0 0
        %2220 = vmatprep.subr.bf16.mxu0 0
        %2221 = vmatpush1.bf16.msra.mxu0 0
        %2222 = vmatprep.subr.bf16.mxu0 0
        %2223 = vmatpush1.bf16.msra.mxu0 0
        %2224 = vmatprep.subr.bf16.mxu0 0
        %2225 = vmatpush1.bf16.msra.mxu0 0
        %2226 = vmatprep.subr.bf16.mxu0 0
        %2227 = vmatpush1.bf16.msra.mxu0 0
        %2228 = vmatprep.subr.bf16.mxu0 0
        %2229 = vmatpush1.bf16.msra.mxu0 0
        %2230 = vmatprep.subr.bf16.mxu0 0
        %2231 = vmatpush1.bf16.msra.mxu0 0
        %2232 = vmatprep.subr.bf16.mxu0 0
        %2233 = vmatpush1.bf16.msra.mxu0 0
        %2234 = vmatprep.subr.bf16.mxu0 0
        %2235 = vmatpush1.bf16.msra.mxu0 0
        %2236 = vmatprep.subr.bf16.mxu0 0
        %2237 = vmatpush1.bf16.msra.mxu0 0
        %2238 = vmatprep.subr.bf16.mxu0 0
        %2239 = vmatpush1.bf16.msra.mxu0 0
        %2240 = vmatprep.subr.bf16.mxu0 0
        %2241 = vmatpush1.bf16.msra.mxu0 0
        %2242 = vmatprep.mubr.bf16.mxu0 0
        %2243 = vmatmul.mubr.bf16.gmra.mrb[0].mxu0 %v2205
        %v2244 = vpop.f32.mrb[0].mxu0
        %v2245 = vadd.f32 0.0, %v2244
        %v2246 = vpop.f32.mrb[0].mxu0
        %v2247 = vpop.f32.mrb[0].mxu0
        %v2248 = vpop.f32.mrb[0].mxu0
        %2249 = vdwg.mxu0
        %v2250 = vpack.c.bf16 %v2245, %v2245
        %v2252 = vsel %vm872, %v2250, 0
        %v2255 = vsel %vm936, %v794, 0
        %2257 = vmatprep.subr.bf16.mxu0 0
        %2258 = vmatpush1.bf16.msra.mxu0 %v2255
        %2259 = vmatprep.subr.bf16.mxu0 0
        %2260 = vmatpush1.bf16.msra.mxu0 0
        %2261 = vmatprep.subr.bf16.mxu0 0
        %2262 = vmatpush1.bf16.msra.mxu0 0
        %2263 = vmatprep.subr.bf16.mxu0 0
        %2264 = vmatpush1.bf16.msra.mxu0 0
        %2265 = vmatprep.subr.bf16.mxu0 0
        %2266 = vmatpush1.bf16.msra.mxu0 0
        %2267 = vmatprep.subr.bf16.mxu0 0
        %2268 = vmatpush1.bf16.msra.mxu0 0
        %2269 = vmatprep.subr.bf16.mxu0 0
        %2270 = vmatpush1.bf16.msra.mxu0 0
        %2271 = vmatprep.subr.bf16.mxu0 0
        %2272 = vmatpush1.bf16.msra.mxu0 0
        %2273 = vmatprep.subr.bf16.mxu0 0
        %2274 = vmatpush1.bf16.msra.mxu0 0
        %2275 = vmatprep.subr.bf16.mxu0 0
        %2276 = vmatpush1.bf16.msra.mxu0 0
        %2277 = vmatprep.subr.bf16.mxu0 0
        %2278 = vmatpush1.bf16.msra.mxu0 0
        %2279 = vmatprep.subr.bf16.mxu0 0
        %2280 = vmatpush1.bf16.msra.mxu0 0
        %2281 = vmatprep.subr.bf16.mxu0 0
        %2282 = vmatpush1.bf16.msra.mxu0 0
        %2283 = vmatprep.subr.bf16.mxu0 0
        %2284 = vmatpush1.bf16.msra.mxu0 0
        %2285 = vmatprep.subr.bf16.mxu0 0
        %2286 = vmatpush1.bf16.msra.mxu0 0
        %2287 = vmatprep.subr.bf16.mxu0 0
        %2288 = vmatpush1.bf16.msra.mxu0 0
        %2289 = vmatprep.mubr.bf16.mxu0 0
        %2290 = vmatmul.mubr.bf16.gmra.mrb[0].mxu0 %v2252
        %v2291 = vpop.f32.mrb[0].mxu0
        %v2292 = vadd.f32 0.0, %v2291
        %v2293 = vpop.f32.mrb[0].mxu0
        %v2294 = vpop.f32.mrb[0].mxu0
        %v2295 = vpop.f32.mrb[0].mxu0
        %2296 = vdwg.mxu0
        %v2297 = vadd.f32 %v2139, %v2292
        %v2298 = vadd.f32 %v1530, %v2297
        %2299 = vrot.lane.b32.xlu0 %v1596, 32
        %v2300 = vpop.permute.xlu0 %2299
        %v2302 = vadd.f32 %v2298, %v2300
        %v2303 = vsel %vm815, %v2302, 0.0
        %2304 = vadd.xlane.f32.xlu0 %v2303
        %v2305 = vpop.xlane.xlu0 %2304
        %v2306 = vmul.f32 %v2305, %v1510
        %v2307 = vsub.f32 %v2302, %v2306
        %v2308 = vmul.f32 %v2307, %v2307
        %v2309 = vsel %vm815, %v2308, 0.0
        %2310 = vadd.xlane.f32.xlu0 %v2309
        %v2311 = vpop.xlane.xlu0 %2310
        %v2312 = vmul.f32 %v2311, %v1510
        %v2313 = vadd.f32 %v2312, 1e-05
        %v2314 = vrsqrt.pop %v2313
        %v2315 = vmul.f32 %v2307, %v2314
        %2316 = vrot.lane.b32.xlu0 %v1524, 64
        %v2317 = vpop.permute.xlu0 %2316
        %v2319 = vmul.f32 %v2315, %v2317
        %2320 = vrot.lane.b32.xlu0 %v1524, 32
        %v2321 = vpop.permute.xlu0 %2320
        %v2323 = vadd.f32 %v2319, %v2321
        %v2324 = vpack.c.bf16 %v2323, %v2323
        %v2325 = vld [vmem:[%s656] sm:$0xf]
        %v2326 = vld [vmem:[%s656 + $0x4] sm:$0xf]
        %v2327 = vld [vmem:[%s656 + $0x8] sm:$0xf]
        %v2328 = vld [vmem:[%s656 + $0xc] sm:$0xf]
        %v2329 = vlaneseq
        %v2330 = vshrl.u32 %v2329, 7
        %v2331 = vsub.s32 0, %v2330
        %v2332 = vrot.slane %v786, %v2331
        %v2337 = vunpack.c.l.b16 %v2325
        %v2338 = vunpack.c.l.b16 %v2326
        %v2339 = vunpack.c.l.b16 %v2327
        %v2340 = vunpack.c.l.b16 %v2328
        %v2341 = vpack.c.b16 %v2338, %v2337
        %v2342 = vpack.c.b16 %v2340, %v2339
        %v2346 = vsel %vm815, %v2324, 0
        %2348 = vmatprep.subr.bf16.mxu0 0
        %2349 = vmatpush1.bf16.msra.mxu0 %v2341
        %2350 = vmatprep.subr.bf16.mxu0 0
        %2351 = vmatpush1.bf16.msra.mxu0 %v2342
        %2352 = vmatprep.subr.bf16.mxu0 0
        %2353 = vmatpush1.bf16.msra.mxu0 0
        %2354 = vmatprep.subr.bf16.mxu0 0
        %2355 = vmatpush1.bf16.msra.mxu0 0
        %2356 = vmatprep.subr.bf16.mxu0 0
        %2357 = vmatpush1.bf16.msra.mxu0 0
        %2358 = vmatprep.subr.bf16.mxu0 0
        %2359 = vmatpush1.bf16.msra.mxu0 0
        %2360 = vmatprep.subr.bf16.mxu0 0
        %2361 = vmatpush1.bf16.msra.mxu0 0
        %2362 = vmatprep.subr.bf16.mxu0 0
        %2363 = vmatpush1.bf16.msra.mxu0 0
        %2364 = vmatprep.subr.bf16.mxu0 0
        %2365 = vmatpush1.bf16.msra.mxu0 0
        %2366 = vmatprep.subr.bf16.mxu0 0
        %2367 = vmatpush1.bf16.msra.mxu0 0
        %2368 = vmatprep.subr.bf16.mxu0 0
        %2369 = vmatpush1.bf16.msra.mxu0 0
        %2370 = vmatprep.subr.bf16.mxu0 0
        %2371 = vmatpush1.bf16.msra.mxu0 0
        %2372 = vmatprep.subr.bf16.mxu0 0
        %2373 = vmatpush1.bf16.msra.mxu0 0
        %2374 = vmatprep.subr.bf16.mxu0 0
        %2375 = vmatpush1.bf16.msra.mxu0 0
        %2376 = vmatprep.subr.bf16.mxu0 0
        %2377 = vmatpush1.bf16.msra.mxu0 0
        %2378 = vmatprep.subr.bf16.mxu0 0
        %2379 = vmatpush1.bf16.msra.mxu0 0
        %2380 = vmatprep.mubr.bf16.mxu0 0
        %2381 = vmatmul.mubr.bf16.gmra.mrb[0].mxu0 %v2346
        %v2382 = vpop.f32.mrb[0].mxu0
        %v2383 = vadd.f32 %v2332, %v2382
        %v2384 = vpop.f32.mrb[0].mxu0
        %v2385 = vpop.f32.mrb[0].mxu0
        %v2386 = vpop.f32.mrb[0].mxu0
        %2387 = vdwg.mxu0
        %v2388 = vmax.f32 %v2383, 0.0
        %v2389 = vpack.c.bf16 %v2388, %v2388
        %v2390 = vld [vmem:[%s665] sm:$0xf]
        %v2391 = vld [vmem:[%s665 + $0x4] sm:$0xf]
        %v2392 = vld [vmem:[%s665 + $0x8] sm:$0xf]
        %v2393 = vld [vmem:[%s665 + $0xc] sm:$0xf]
        %v2394 = vld [vmem:[%s665 + $0x10] sm:$0xf]
        %v2395 = vld [vmem:[%s665 + $0x14] sm:$0xf]
        %v2396 = vld [vmem:[%s665 + $0x18] sm:$0xf]
        %v2397 = vld [vmem:[%s665 + $0x1c] sm:$0xf]
        %v2398 = vld [vmem:[%s665 + $0x20] sm:$0xf]
        %v2399 = vld [vmem:[%s665 + $0x24] sm:$0xf]
        %v2400 = vld [vmem:[%s665 + $0x28] sm:$0xf]
        %v2401 = vld [vmem:[%s665 + $0x2c] sm:$0xf]
        %v2402 = vld [vmem:[%s665 + $0x30] sm:$0xf]
        %v2403 = vld [vmem:[%s665 + $0x34] sm:$0xf]
        %v2404 = vld [vmem:[%s665 + $0x38] sm:$0xf]
        %v2405 = vld [vmem:[%s665 + $0x3c] sm:$0xf]
        %v2406 = vlaneseq
        %v2407 = vshrl.u32 %v2406, 7
        %v2408 = vsub.s32 4, %v2407
        %v2409 = vrot.slane %v786, %v2408
        %v2426 = vunpack.c.l.b16 %v2390
        %v2427 = vunpack.c.l.b16 %v2391
        %v2428 = vunpack.c.l.b16 %v2392
        %v2429 = vunpack.c.l.b16 %v2393
        %v2430 = vunpack.c.l.b16 %v2394
        %v2431 = vunpack.c.l.b16 %v2395
        %v2432 = vunpack.c.l.b16 %v2396
        %v2433 = vunpack.c.l.b16 %v2397
        %v2434 = vunpack.c.l.b16 %v2398
        %v2435 = vunpack.c.l.b16 %v2399
        %v2436 = vunpack.c.l.b16 %v2400
        %v2437 = vunpack.c.l.b16 %v2401
        %v2438 = vunpack.c.l.b16 %v2402
        %v2439 = vunpack.c.l.b16 %v2403
        %v2440 = vunpack.c.l.b16 %v2404
        %v2441 = vunpack.c.l.b16 %v2405
        %v2442 = vpack.c.b16 %v2427, %v2426
        %v2443 = vpack.c.b16 %v2429, %v2428
        %v2444 = vpack.c.b16 %v2431, %v2430
        %v2445 = vpack.c.b16 %v2433, %v2432
        %v2446 = vpack.c.b16 %v2435, %v2434
        %v2447 = vpack.c.b16 %v2437, %v2436
        %v2448 = vpack.c.b16 %v2439, %v2438
        %v2449 = vpack.c.b16 %v2441, %v2440
        %2459 = vrot.lane.b32.xlu0 %v2409, 64
        %v2460 = vpop.permute.xlu0 %2459
        %2462 = vmatprep.subr.bf16.mxu0 0
        %2463 = vmatpush1.bf16.msra.mxu0 %v2442
        %2464 = vmatprep.subr.bf16.mxu0 0
        %2465 = vmatpush1.bf16.msra.mxu0 %v2443
        %2466 = vmatprep.subr.bf16.mxu0 0
        %2467 = vmatpush1.bf16.msra.mxu0 %v2444
        %2468 = vmatprep.subr.bf16.mxu0 0
        %2469 = vmatpush1.bf16.msra.mxu0 %v2445
        %2470 = vmatprep.subr.bf16.mxu0 0
        %2471 = vmatpush1.bf16.msra.mxu0 %v2446
        %2472 = vmatprep.subr.bf16.mxu0 0
        %2473 = vmatpush1.bf16.msra.mxu0 %v2447
        %2474 = vmatprep.subr.bf16.mxu0 0
        %2475 = vmatpush1.bf16.msra.mxu0 %v2448
        %2476 = vmatprep.subr.bf16.mxu0 0
        %2477 = vmatpush1.bf16.msra.mxu0 %v2449
        %2478 = vmatprep.subr.bf16.mxu0 0
        %2479 = vmatpush1.bf16.msra.mxu0 0
        %2480 = vmatprep.subr.bf16.mxu0 0
        %2481 = vmatpush1.bf16.msra.mxu0 0
        %2482 = vmatprep.subr.bf16.mxu0 0
        %2483 = vmatpush1.bf16.msra.mxu0 0
        %2484 = vmatprep.subr.bf16.mxu0 0
        %2485 = vmatpush1.bf16.msra.mxu0 0
        %2486 = vmatprep.subr.bf16.mxu0 0
        %2487 = vmatpush1.bf16.msra.mxu0 0
        %2488 = vmatprep.subr.bf16.mxu0 0
        %2489 = vmatpush1.bf16.msra.mxu0 0
        %2490 = vmatprep.subr.bf16.mxu0 0
        %2491 = vmatpush1.bf16.msra.mxu0 0
        %2492 = vmatprep.subr.bf16.mxu0 0
        %2493 = vmatpush1.bf16.msra.mxu0 0
        %2494 = vmatprep.mubr.bf16.mxu0 0
        %2495 = vmatmul.mubr.bf16.gmra.mrb[0].mxu0 %v2389
        %v2496 = vpop.f32.mrb[0].mxu0
        %v2497 = vadd.f32 %v2460, %v2496
        %v2498 = vpop.f32.mrb[0].mxu0
        %v2499 = vpop.f32.mrb[0].mxu0
        %v2500 = vpop.f32.mrb[0].mxu0
        %2501 = vdwg.mxu0
        %v2502 = vadd.f32 %v2323, %v2497
        %v2503 = vsel %vm815, %v2502, 0.0
        %2504 = vadd.xlane.f32.xlu0 %v2503
        %v2505 = vpop.xlane.xlu0 %2504
        %v2506 = vmul.f32 %v2505, %v1510
        %v2507 = vsub.f32 %v2502, %v2506
        %v2508 = vmul.f32 %v2507, %v2507
        %v2509 = vsel %vm815, %v2508, 0.0
        %2510 = vadd.xlane.f32.xlu0 %v2509
        %v2511 = vpop.xlane.xlu0 %2510
        %v2512 = vmul.f32 %v2511, %v1510
        %v2513 = vadd.f32 %v2512, 1e-05
        %v2514 = vrsqrt.pop %v2513
        %v2515 = vmul.f32 %v2507, %v2514
        %v2516 = vmul.f32 %v2515, %v2409
        %2517 = vrot.lane.b32.xlu0 %v2409, 96
        %v2518 = vpop.permute.xlu0 %2517
        %v2520 = vadd.f32 %v2516, %v2518
        %2521 = vst.msk [vmem:[#allocation2] sm:$0xff] %vm815, %v2520
        %p2522 = scmp.eq.s32.totalorder %s42, 1
        // Predicated region
        $region113: #{vision_encoder_decoder.6} parent=63 // pred_check
          %p2523 = pneg %p2522
        $region114: #{vision_encoder_decoder.6} parent=63 // pred_check_branch
          %2525 = sbr.rel (%p2523) target = $region116
        $region115: #{vision_encoder_decoder.6} parent=63 // pred_region
          %2526 = vst.msk [vmem:[#allocation22] sm:$0xff] %vm815, %v2520
        $region116: #{vision_encoder_decoder.6} parent=63 // pred_fallthru
          _
        %s2527 = scalar_lea.vmem [#allocation2], 8
        %v2528 = vld [vmem:[%s2527] sm:$0xff]
        %s2529 = scalar_lea.vmem [#allocation7], 4
        %v2530 = vld [vmem:[%s2529] sm:$0xf]
        %s2531 = scalar_lea.vmem [#allocation3], 8
        %v2532 = vld [vmem:[%s2531] sm:$0xff]
        %v2533 = vpack.c.bf16 %v2528, %v2528
        %v2534 = vld [vmem:[%s611] sm:$0xf]
        %v2535 = vld [vmem:[%s611 + $0x4] sm:$0xf]
        %v2536 = vld [vmem:[%s611 + $0x8] sm:$0xf]
        %v2537 = vld [vmem:[%s611 + $0xc] sm:$0xf]
        %v2542 = vunpack.c.l.b16 %v2534
        %v2543 = vunpack.c.l.b16 %v2535
        %v2544 = vunpack.c.l.b16 %v2536
        %v2545 = vunpack.c.l.b16 %v2537
        %v2546 = vpack.c.b16 %v2543, %v2542
        %v2547 = vpack.c.b16 %v2545, %v2544
        %v2551 = vsel %vm815, %v2533, 0
        %2553 = vmatprep.subr.bf16.mxu0 0
        %2554 = vmatpush1.bf16.msra.mxu0 %v2546
        %2555 = vmatprep.subr.bf16.mxu0 0
        %2556 = vmatpush1.bf16.msra.mxu0 %v2547
        %2557 = vmatprep.subr.bf16.mxu0 0
        %2558 = vmatpush1.bf16.msra.mxu0 0
        %2559 = vmatprep.subr.bf16.mxu0 0
        %2560 = vmatpush1.bf16.msra.mxu0 0
        %2561 = vmatprep.subr.bf16.mxu0 0
        %2562 = vmatpush1.bf16.msra.mxu0 0
        %2563 = vmatprep.subr.bf16.mxu0 0
        %2564 = vmatpush1.bf16.msra.mxu0 0
        %2565 = vmatprep.subr.bf16.mxu0 0
        %2566 = vmatpush1.bf16.msra.mxu0 0
        %2567 = vmatprep.subr.bf16.mxu0 0
        %2568 = vmatpush1.bf16.msra.mxu0 0
        %2569 = vmatprep.subr.bf16.mxu0 0
        %2570 = vmatpush1.bf16.msra.mxu0 0
        %2571 = vmatprep.subr.bf16.mxu0 0
        %2572 = vmatpush1.bf16.msra.mxu0 0
        %2573 = vmatprep.subr.bf16.mxu0 0
        %2574 = vmatpush1.bf16.msra.mxu0 0
        %2575 = vmatprep.subr.bf16.mxu0 0
        %2576 = vmatpush1.bf16.msra.mxu0 0
        %2577 = vmatprep.subr.bf16.mxu0 0
        %2578 = vmatpush1.bf16.msra.mxu0 0
        %2579 = vmatprep.subr.bf16.mxu0 0
        %2580 = vmatpush1.bf16.msra.mxu0 0
        %2581 = vmatprep.subr.bf16.mxu0 0
        %2582 = vmatpush1.bf16.msra.mxu0 0
        %2583 = vmatprep.subr.bf16.mxu0 0
        %2584 = vmatpush1.bf16.msra.mxu0 0
        %2585 = vmatprep.mubr.bf16.mxu0 0
        %2586 = vmatmul.mubr.bf16.gmra.mrb[0].mxu0 %v2551
        %v2587 = vpop.f32.mrb[0].mxu0
        %v2588 = vadd.f32 0.0, %v2587
        %v2589 = vpop.f32.mrb[0].mxu0
        %v2590 = vpop.f32.mrb[0].mxu0
        %v2591 = vpop.f32.mrb[0].mxu0
        %2592 = vdwg.mxu0
        %v2593 = vpack.c.bf16 %v2588, %v2588
        %v2594 = vunpack.c.l.bf16 %v2593
        %v2595 = vadd.f32 %v2594, %v864
        %v2596 = vmul.f32 %v2595, 0.35355338
        %v2597 = vpack.c.bf16 %v2596, %v2596
        %v2598 = vpack.c.bf16 %v2595, %v2595
        %2600 = vrot.lane.b32.xlu0 %v2598, 96
        %v2601 = vpop.permute.xlu0 %2600
        %v2603 = vsel %vm872, %v2597, 0
        %v2606 = vsel %vm872, %v2601, 0
        %2608 = vmatprep.subr.bf16.mxu0 0
        %2609 = vmatpush1.bf16.xpose.msra.mxu0 %v2606
        %2610 = vmatprep.subr.bf16.mxu0 0
        %2611 = vmatpush1.bf16.xpose.msra.mxu0 0
        %2612 = vmatprep.subr.bf16.mxu0 0
        %2613 = vmatpush1.bf16.xpose.msra.mxu0 0
        %2614 = vmatprep.subr.bf16.mxu0 0
        %2615 = vmatpush1.bf16.xpose.msra.mxu0 0
        %2616 = vmatprep.subr.bf16.mxu0 0
        %2617 = vmatpush1.bf16.xpose.msra.mxu0 0
        %2618 = vmatprep.subr.bf16.mxu0 0
        %2619 = vmatpush1.bf16.xpose.msra.mxu0 0
        %2620 = vmatprep.subr.bf16.mxu0 0
        %2621 = vmatpush1.bf16.xpose.msra.mxu0 0
        %2622 = vmatprep.subr.bf16.mxu0 0
        %2623 = vmatpush1.bf16.xpose.msra.mxu0 0
        %2624 = vmatprep.subr.bf16.mxu0 0
        %2625 = vmatpush1.bf16.xpose.msra.mxu0 0
        %2626 = vmatprep.subr.bf16.mxu0 0
        %2627 = vmatpush1.bf16.xpose.msra.mxu0 0
        %2628 = vmatprep.subr.bf16.mxu0 0
        %2629 = vmatpush1.bf16.xpose.msra.mxu0 0
        %2630 = vmatprep.subr.bf16.mxu0 0
        %2631 = vmatpush1.bf16.xpose.msra.mxu0 0
        %2632 = vmatprep.subr.bf16.mxu0 0
        %2633 = vmatpush1.bf16.xpose.msra.mxu0 0
        %2634 = vmatprep.subr.bf16.mxu0 0
        %2635 = vmatpush1.bf16.xpose.msra.mxu0 0
        %2636 = vmatprep.subr.bf16.mxu0 0
        %2637 = vmatpush1.bf16.xpose.msra.mxu0 0
        %2638 = vmatprep.subr.bf16.mxu0 0
        %2639 = vmatpush1.bf16.xpose.msra.mxu0 0
        %2640 = vmatprep.mubr.bf16.mxu0 0
        %2641 = vmatmul.mubr.bf16.gmra.mrb[0].mxu0 %v2603
        %v2642 = vpop.f32.mrb[0].mxu0
        %v2643 = vadd.f32 %v2532, %v2642
        %v2644 = vpop.f32.mrb[0].mxu0
        %v2645 = vpop.f32.mrb[0].mxu0
        %v2646 = vpop.f32.mrb[0].mxu0
        %2647 = vdwg.mxu0
        %v2648 = vsel %vm872, %v2643, -inf
        %2649 = vmax.xlane.f32.xlu0 %v2648
        %v2650 = vpop.xlane.xlu0 %2649
        %v2651 = vsub.f32 %v2643, %v2650
        %v2652 = vmul.f32 %v2651, 1.442695
        %v2653 = vpow.pop %v2652
        %v2654 = vsel %vm872, %v2653, 0.0
        %2655 = vadd.xlane.f32.xlu0 %v2654
        %v2656 = vpop.xlane.xlu0 %2655
        %v2657 = vrcp.pop %v2656
        %v2658 = vmul.f32 %v2653, %v2657
        %v2659 = vpack.c.bf16 %v2658, %v2658
        %2660 = vrot.lane.b32.xlu0 %v2598, 64
        %v2661 = vpop.permute.xlu0 %2660
        %v2663 = vsel %vm872, %v2659, 0
        %v2666 = vsel %vm936, %v2661, 0
        %2668 = vmatprep.subr.bf16.mxu0 0
        %2669 = vmatpush1.bf16.msra.mxu0 %v2666
        %2670 = vmatprep.subr.bf16.mxu0 0
        %2671 = vmatpush1.bf16.msra.mxu0 0
        %2672 = vmatprep.subr.bf16.mxu0 0
        %2673 = vmatpush1.bf16.msra.mxu0 0
        %2674 = vmatprep.subr.bf16.mxu0 0
        %2675 = vmatpush1.bf16.msra.mxu0 0
        %2676 = vmatprep.subr.bf16.mxu0 0
        %2677 = vmatpush1.bf16.msra.mxu0 0
        %2678 = vmatprep.subr.bf16.mxu0 0
        %2679 = vmatpush1.bf16.msra.mxu0 0
        %2680 = vmatprep.subr.bf16.mxu0 0
        %2681 = vmatpush1.bf16.msra.mxu0 0
        %2682 = vmatprep.subr.bf16.mxu0 0
        %2683 = vmatpush1.bf16.msra.mxu0 0
        %2684 = vmatprep.subr.bf16.mxu0 0
        %2685 = vmatpush1.bf16.msra.mxu0 0
        %2686 = vmatprep.subr.bf16.mxu0 0
        %2687 = vmatpush1.bf16.msra.mxu0 0
        %2688 = vmatprep.subr.bf16.mxu0 0
        %2689 = vmatpush1.bf16.msra.mxu0 0
        %2690 = vmatprep.subr.bf16.mxu0 0
        %2691 = vmatpush1.bf16.msra.mxu0 0
        %2692 = vmatprep.subr.bf16.mxu0 0
        %2693 = vmatpush1.bf16.msra.mxu0 0
        %2694 = vmatprep.subr.bf16.mxu0 0
        %2695 = vmatpush1.bf16.msra.mxu0 0
        %2696 = vmatprep.subr.bf16.mxu0 0
        %2697 = vmatpush1.bf16.msra.mxu0 0
        %2698 = vmatprep.subr.bf16.mxu0 0
        %2699 = vmatpush1.bf16.msra.mxu0 0
        %2700 = vmatprep.mubr.bf16.mxu0 0
        %2701 = vmatmul.mubr.bf16.gmra.mrb[0].mxu0 %v2663
        %v2702 = vpop.f32.mrb[0].mxu0
        %v2703 = vadd.f32 0.0, %v2702
        %v2704 = vpop.f32.mrb[0].mxu0
        %v2705 = vpop.f32.mrb[0].mxu0
        %v2706 = vpop.f32.mrb[0].mxu0
        %2707 = vdwg.mxu0
        %v2708 = vpack.c.bf16 %v2703, %v2703
        %2710 = vrot.lane.b32.xlu0 %v2597, 120
        %v2711 = vpop.permute.xlu0 %2710
        %2712 = vrot.lane.b32.xlu0 %v2598, 88
        %v2713 = vpop.permute.xlu0 %2712
        %v2715 = vsel %vm872, %v2711, 0
        %v2718 = vsel %vm872, %v2713, 0
        %2720 = vmatprep.subr.bf16.mxu0 0
        %2721 = vmatpush1.bf16.xpose.msra.mxu0 %v2718
        %2722 = vmatprep.subr.bf16.mxu0 0
        %2723 = vmatpush1.bf16.xpose.msra.mxu0 0
        %2724 = vmatprep.subr.bf16.mxu0 0
        %2725 = vmatpush1.bf16.xpose.msra.mxu0 0
        %2726 = vmatprep.subr.bf16.mxu0 0
        %2727 = vmatpush1.bf16.xpose.msra.mxu0 0
        %2728 = vmatprep.subr.bf16.mxu0 0
        %2729 = vmatpush1.bf16.xpose.msra.mxu0 0
        %2730 = vmatprep.subr.bf16.mxu0 0
        %2731 = vmatpush1.bf16.xpose.msra.mxu0 0
        %2732 = vmatprep.subr.bf16.mxu0 0
        %2733 = vmatpush1.bf16.xpose.msra.mxu0 0
        %2734 = vmatprep.subr.bf16.mxu0 0
        %2735 = vmatpush1.bf16.xpose.msra.mxu0 0
        %2736 = vmatprep.subr.bf16.mxu0 0
        %2737 = vmatpush1.bf16.xpose.msra.mxu0 0
        %2738 = vmatprep.subr.bf16.mxu0 0
        %2739 = vmatpush1.bf16.xpose.msra.mxu0 0
        %2740 = vmatprep.subr.bf16.mxu0 0
        %2741 = vmatpush1.bf16.xpose.msra.mxu0 0
        %2742 = vmatprep.subr.bf16.mxu0 0
        %2743 = vmatpush1.bf16.xpose.msra.mxu0 0
        %2744 = vmatprep.subr.bf16.mxu0 0
        %2745 = vmatpush1.bf16.xpose.msra.mxu0 0
        %2746 = vmatprep.subr.bf16.mxu0 0
        %2747 = vmatpush1.bf16.xpose.msra.mxu0 0
        %2748 = vmatprep.subr.bf16.mxu0 0
        %2749 = vmatpush1.bf16.xpose.msra.mxu0 0
        %2750 = vmatprep.subr.bf16.mxu0 0
        %2751 = vmatpush1.bf16.xpose.msra.mxu0 0
        %2752 = vmatprep.mubr.bf16.mxu0 0
        %2753 = vmatmul.mubr.bf16.gmra.mrb[0].mxu0 %v2715
        %v2754 = vpop.f32.mrb[0].mxu0
        %v2755 = vadd.f32 %v2532, %v2754
        %v2756 = vpop.f32.mrb[0].mxu0
        %v2757 = vpop.f32.mrb[0].mxu0
        %v2758 = vpop.f32.mrb[0].mxu0
        %2759 = vdwg.mxu0
        %v2760 = vsel %vm872, %v2755, -inf
        %2761 = vmax.xlane.f32.xlu0 %v2760
        %v2762 = vpop.xlane.xlu0 %2761
        %v2763 = vsub.f32 %v2755, %v2762
        %v2764 = vmul.f32 %v2763, 1.442695
        %v2765 = vpow.pop %v2764
        %v2766 = vsel %vm872, %v2765, 0.0
        %2767 = vadd.xlane.f32.xlu0 %v2766
        %v2768 = vpop.xlane.xlu0 %2767
        %v2769 = vrcp.pop %v2768
        %v2770 = vmul.f32 %v2765, %v2769
        %v2771 = vpack.c.bf16 %v2770, %v2770
        %2772 = vrot.lane.b32.xlu0 %v2598, 56
        %v2773 = vpop.permute.xlu0 %2772
        %v2775 = vsel %vm872, %v2771, 0
        %v2778 = vsel %vm936, %v2773, 0
        %2780 = vmatprep.subr.bf16.mxu0 0
        %2781 = vmatpush1.bf16.msra.mxu0 %v2778
        %2782 = vmatprep.subr.bf16.mxu0 0
        %2783 = vmatpush1.bf16.msra.mxu0 0
        %2784 = vmatprep.subr.bf16.mxu0 0
        %2785 = vmatpush1.bf16.msra.mxu0 0
        %2786 = vmatprep.subr.bf16.mxu0 0
        %2787 = vmatpush1.bf16.msra.mxu0 0
        %2788 = vmatprep.subr.bf16.mxu0 0
        %2789 = vmatpush1.bf16.msra.mxu0 0
        %2790 = vmatprep.subr.bf16.mxu0 0
        %2791 = vmatpush1.bf16.msra.mxu0 0
        %2792 = vmatprep.subr.bf16.mxu0 0
        %2793 = vmatpush1.bf16.msra.mxu0 0
        %2794 = vmatprep.subr.bf16.mxu0 0
        %2795 = vmatpush1.bf16.msra.mxu0 0
        %2796 = vmatprep.subr.bf16.mxu0 0
        %2797 = vmatpush1.bf16.msra.mxu0 0
        %2798 = vmatprep.subr.bf16.mxu0 0
        %2799 = vmatpush1.bf16.msra.mxu0 0
        %2800 = vmatprep.subr.bf16.mxu0 0
        %2801 = vmatpush1.bf16.msra.mxu0 0
        %2802 = vmatprep.subr.bf16.mxu0 0
        %2803 = vmatpush1.bf16.msra.mxu0 0
        %2804 = vmatprep.subr.bf16.mxu0 0
        %2805 = vmatpush1.bf16.msra.mxu0 0
        %2806 = vmatprep.subr.bf16.mxu0 0
        %2807 = vmatpush1.bf16.msra.mxu0 0
        %2808 = vmatprep.subr.bf16.mxu0 0
        %2809 = vmatpush1.bf16.msra.mxu0 0
        %2810 = vmatprep.subr.bf16.mxu0 0
        %2811 = vmatpush1.bf16.msra.mxu0 0
        %2812 = vmatprep.mubr.bf16.mxu0 0
        %2813 = vmatmul.mubr.bf16.gmra.mrb[0].mxu0 %v2775
        %v2814 = vpop.f32.mrb[0].mxu0
        %v2815 = vadd.f32 0.0, %v2814
        %v2816 = vpop.f32.mrb[0].mxu0
        %v2817 = vpop.f32.mrb[0].mxu0
        %v2818 = vpop.f32.mrb[0].mxu0
        %2819 = vdwg.mxu0
        %v2820 = vpack.c.bf16 %v2815, %v2815
        %v2822 = vsel %vm872, %v2820, 0
        %2824 = vmatprep.subr.bf16.mxu0 0
        %2825 = vmatpush1.bf16.msra.mxu0 %v1097
        %2826 = vmatprep.subr.bf16.mxu0 0
        %2827 = vmatpush1.bf16.msra.mxu0 0
        %2828 = vmatprep.subr.bf16.mxu0 0
        %2829 = vmatpush1.bf16.msra.mxu0 0
        %2830 = vmatprep.subr.bf16.mxu0 0
        %2831 = vmatpush1.bf16.msra.mxu0 0
        %2832 = vmatprep.subr.bf16.mxu0 0
        %2833 = vmatpush1.bf16.msra.mxu0 0
        %2834 = vmatprep.subr.bf16.mxu0 0
        %2835 = vmatpush1.bf16.msra.mxu0 0
        %2836 = vmatprep.subr.bf16.mxu0 0
        %2837 = vmatpush1.bf16.msra.mxu0 0
        %2838 = vmatprep.subr.bf16.mxu0 0
        %2839 = vmatpush1.bf16.msra.mxu0 0
        %2840 = vmatprep.subr.bf16.mxu0 0
        %2841 = vmatpush1.bf16.msra.mxu0 0
        %2842 = vmatprep.subr.bf16.mxu0 0
        %2843 = vmatpush1.bf16.msra.mxu0 0
        %2844 = vmatprep.subr.bf16.mxu0 0
        %2845 = vmatpush1.bf16.msra.mxu0 0
        %2846 = vmatprep.subr.bf16.mxu0 0
        %2847 = vmatpush1.bf16.msra.mxu0 0
        %2848 = vmatprep.subr.bf16.mxu0 0
        %2849 = vmatpush1.bf16.msra.mxu0 0
        %2850 = vmatprep.subr.bf16.mxu0 0
        %2851 = vmatpush1.bf16.msra.mxu0 0
        %2852 = vmatprep.subr.bf16.mxu0 0
        %2853 = vmatpush1.bf16.msra.mxu0 0
        %2854 = vmatprep.subr.bf16.mxu0 0
        %2855 = vmatpush1.bf16.msra.mxu0 0
        %2856 = vmatprep.mubr.bf16.mxu0 0
        %2857 = vmatmul.mubr.bf16.gmra.mrb[0].mxu0 %v2822
        %v2858 = vpop.f32.mrb[0].mxu0
        %v2859 = vadd.f32 0.0, %v2858
        %v2860 = vpop.f32.mrb[0].mxu0
        %v2861 = vpop.f32.mrb[0].mxu0
        %v2862 = vpop.f32.mrb[0].mxu0
        %2863 = vdwg.mxu0
        %v2865 = vsel %vm872, %v2708, 0
        %2867 = vmatprep.subr.bf16.mxu0 0
        %2868 = vmatpush1.bf16.msra.mxu0 %v1143
        %2869 = vmatprep.subr.bf16.mxu0 0
        %2870 = vmatpush1.bf16.msra.mxu0 0
        %2871 = vmatprep.subr.bf16.mxu0 0
        %2872 = vmatpush1.bf16.msra.mxu0 0
        %2873 = vmatprep.subr.bf16.mxu0 0
        %2874 = vmatpush1.bf16.msra.mxu0 0
        %2875 = vmatprep.subr.bf16.mxu0 0
        %2876 = vmatpush1.bf16.msra.mxu0 0
        %2877 = vmatprep.subr.bf16.mxu0 0
        %2878 = vmatpush1.bf16.msra.mxu0 0
        %2879 = vmatprep.subr.bf16.mxu0 0
        %2880 = vmatpush1.bf16.msra.mxu0 0
        %2881 = vmatprep.subr.bf16.mxu0 0
        %2882 = vmatpush1.bf16.msra.mxu0 0
        %2883 = vmatprep.subr.bf16.mxu0 0
        %2884 = vmatpush1.bf16.msra.mxu0 0
        %2885 = vmatprep.subr.bf16.mxu0 0
        %2886 = vmatpush1.bf16.msra.mxu0 0
        %2887 = vmatprep.subr.bf16.mxu0 0
        %2888 = vmatpush1.bf16.msra.mxu0 0
        %2889 = vmatprep.subr.bf16.mxu0 0
        %2890 = vmatpush1.bf16.msra.mxu0 0
        %2891 = vmatprep.subr.bf16.mxu0 0
        %2892 = vmatpush1.bf16.msra.mxu0 0
        %2893 = vmatprep.subr.bf16.mxu0 0
        %2894 = vmatpush1.bf16.msra.mxu0 0
        %2895 = vmatprep.subr.bf16.mxu0 0
        %2896 = vmatpush1.bf16.msra.mxu0 0
        %2897 = vmatprep.subr.bf16.mxu0 0
        %2898 = vmatpush1.bf16.msra.mxu0 0
        %2899 = vmatprep.mubr.bf16.mxu0 0
        %2900 = vmatmul.mubr.bf16.gmra.mrb[0].mxu0 %v2865
        %v2901 = vpop.f32.mrb[0].mxu0
        %v2902 = vadd.f32 %v2859, %v2901
        %v2903 = vpop.f32.mrb[0].mxu0
        %v2904 = vpop.f32.mrb[0].mxu0
        %v2905 = vpop.f32.mrb[0].mxu0
        %2906 = vdwg.mxu0
        %2907 = vrot.lane.b32.xlu0 %v2597, 112
        %v2908 = vpop.permute.xlu0 %2907
        %2909 = vrot.lane.b32.xlu0 %v2598, 80
        %v2910 = vpop.permute.xlu0 %2909
        %v2912 = vsel %vm872, %v2908, 0
        %v2915 = vsel %vm872, %v2910, 0
        %2917 = vmatprep.subr.bf16.mxu0 0
        %2918 = vmatpush1.bf16.xpose.msra.mxu0 %v2915
        %2919 = vmatprep.subr.bf16.mxu0 0
        %2920 = vmatpush1.bf16.xpose.msra.mxu0 0
        %2921 = vmatprep.subr.bf16.mxu0 0
        %2922 = vmatpush1.bf16.xpose.msra.mxu0 0
        %2923 = vmatprep.subr.bf16.mxu0 0
        %2924 = vmatpush1.bf16.xpose.msra.mxu0 0
        %2925 = vmatprep.subr.bf16.mxu0 0
        %2926 = vmatpush1.bf16.xpose.msra.mxu0 0
        %2927 = vmatprep.subr.bf16.mxu0 0
        %2928 = vmatpush1.bf16.xpose.msra.mxu0 0
        %2929 = vmatprep.subr.bf16.mxu0 0
        %2930 = vmatpush1.bf16.xpose.msra.mxu0 0
        %2931 = vmatprep.subr.bf16.mxu0 0
        %2932 = vmatpush1.bf16.xpose.msra.mxu0 0
        %2933 = vmatprep.subr.bf16.mxu0 0
        %2934 = vmatpush1.bf16.xpose.msra.mxu0 0
        %2935 = vmatprep.subr.bf16.mxu0 0
        %2936 = vmatpush1.bf16.xpose.msra.mxu0 0
        %2937 = vmatprep.subr.bf16.mxu0 0
        %2938 = vmatpush1.bf16.xpose.msra.mxu0 0
        %2939 = vmatprep.subr.bf16.mxu0 0
        %2940 = vmatpush1.bf16.xpose.msra.mxu0 0
        %2941 = vmatprep.subr.bf16.mxu0 0
        %2942 = vmatpush1.bf16.xpose.msra.mxu0 0
        %2943 = vmatprep.subr.bf16.mxu0 0
        %2944 = vmatpush1.bf16.xpose.msra.mxu0 0
        %2945 = vmatprep.subr.bf16.mxu0 0
        %2946 = vmatpush1.bf16.xpose.msra.mxu0 0
        %2947 = vmatprep.subr.bf16.mxu0 0
        %2948 = vmatpush1.bf16.xpose.msra.mxu0 0
        %2949 = vmatprep.mubr.bf16.mxu0 0
        %2950 = vmatmul.mubr.bf16.gmra.mrb[0].mxu0 %v2912
        %v2951 = vpop.f32.mrb[0].mxu0
        %v2952 = vadd.f32 %v2532, %v2951
        %v2953 = vpop.f32.mrb[0].mxu0
        %v2954 = vpop.f32.mrb[0].mxu0
        %v2955 = vpop.f32.mrb[0].mxu0
        %2956 = vdwg.mxu0
        %v2957 = vsel %vm872, %v2952, -inf
        %2958 = vmax.xlane.f32.xlu0 %v2957
        %v2959 = vpop.xlane.xlu0 %2958
        %v2960 = vsub.f32 %v2952, %v2959
        %v2961 = vmul.f32 %v2960, 1.442695
        %v2962 = vpow.pop %v2961
        %v2963 = vsel %vm872, %v2962, 0.0
        %2964 = vadd.xlane.f32.xlu0 %v2963
        %v2965 = vpop.xlane.xlu0 %2964
        %v2966 = vrcp.pop %v2965
        %v2967 = vmul.f32 %v2962, %v2966
        %v2968 = vpack.c.bf16 %v2967, %v2967
        %2969 = vrot.lane.b32.xlu0 %v2598, 48
        %v2970 = vpop.permute.xlu0 %2969
        %v2972 = vsel %vm872, %v2968, 0
        %v2975 = vsel %vm936, %v2970, 0
        %2977 = vmatprep.subr.bf16.mxu0 0
        %2978 = vmatpush1.bf16.msra.mxu0 %v2975
        %2979 = vmatprep.subr.bf16.mxu0 0
        %2980 = vmatpush1.bf16.msra.mxu0 0
        %2981 = vmatprep.subr.bf16.mxu0 0
        %2982 = vmatpush1.bf16.msra.mxu0 0
        %2983 = vmatprep.subr.bf16.mxu0 0
        %2984 = vmatpush1.bf16.msra.mxu0 0
        %2985 = vmatprep.subr.bf16.mxu0 0
        %2986 = vmatpush1.bf16.msra.mxu0 0
        %2987 = vmatprep.subr.bf16.mxu0 0
        %2988 = vmatpush1.bf16.msra.mxu0 0
        %2989 = vmatprep.subr.bf16.mxu0 0
        %2990 = vmatpush1.bf16.msra.mxu0 0
        %2991 = vmatprep.subr.bf16.mxu0 0
        %2992 = vmatpush1.bf16.msra.mxu0 0
        %2993 = vmatprep.subr.bf16.mxu0 0
        %2994 = vmatpush1.bf16.msra.mxu0 0
        %2995 = vmatprep.subr.bf16.mxu0 0
        %2996 = vmatpush1.bf16.msra.mxu0 0
        %2997 = vmatprep.subr.bf16.mxu0 0
        %2998 = vmatpush1.bf16.msra.mxu0 0
        %2999 = vmatprep.subr.bf16.mxu0 0
        %3000 = vmatpush1.bf16.msra.mxu0 0
        %3001 = vmatprep.subr.bf16.mxu0 0
        %3002 = vmatpush1.bf16.msra.mxu0 0
        %3003 = vmatprep.subr.bf16.mxu0 0
        %3004 = vmatpush1.bf16.msra.mxu0 0
        %3005 = vmatprep.subr.bf16.mxu0 0
        %3006 = vmatpush1.bf16.msra.mxu0 0
        %3007 = vmatprep.subr.bf16.mxu0 0
        %3008 = vmatpush1.bf16.msra.mxu0 0
        %3009 = vmatprep.mubr.bf16.mxu0 0
        %3010 = vmatmul.mubr.bf16.gmra.mrb[0].mxu0 %v2972
        %v3011 = vpop.f32.mrb[0].mxu0
        %v3012 = vadd.f32 0.0, %v3011
        %v3013 = vpop.f32.mrb[0].mxu0
        %v3014 = vpop.f32.mrb[0].mxu0
        %v3015 = vpop.f32.mrb[0].mxu0
        %3016 = vdwg.mxu0
        %v3017 = vpack.c.bf16 %v3012, %v3012
        %v3019 = vsel %vm872, %v3017, 0
        %3021 = vmatprep.subr.bf16.mxu0 0
        %3022 = vmatpush1.bf16.msra.mxu0 %v1300
        %3023 = vmatprep.subr.bf16.mxu0 0
        %3024 = vmatpush1.bf16.msra.mxu0 0
        %3025 = vmatprep.subr.bf16.mxu0 0
        %3026 = vmatpush1.bf16.msra.mxu0 0
        %3027 = vmatprep.subr.bf16.mxu0 0
        %3028 = vmatpush1.bf16.msra.mxu0 0
        %3029 = vmatprep.subr.bf16.mxu0 0
        %3030 = vmatpush1.bf16.msra.mxu0 0
        %3031 = vmatprep.subr.bf16.mxu0 0
        %3032 = vmatpush1.bf16.msra.mxu0 0
        %3033 = vmatprep.subr.bf16.mxu0 0
        %3034 = vmatpush1.bf16.msra.mxu0 0
        %3035 = vmatprep.subr.bf16.mxu0 0
        %3036 = vmatpush1.bf16.msra.mxu0 0
        %3037 = vmatprep.subr.bf16.mxu0 0
        %3038 = vmatpush1.bf16.msra.mxu0 0
        %3039 = vmatprep.subr.bf16.mxu0 0
        %3040 = vmatpush1.bf16.msra.mxu0 0
        %3041 = vmatprep.subr.bf16.mxu0 0
        %3042 = vmatpush1.bf16.msra.mxu0 0
        %3043 = vmatprep.subr.bf16.mxu0 0
        %3044 = vmatpush1.bf16.msra.mxu0 0
        %3045 = vmatprep.subr.bf16.mxu0 0
        %3046 = vmatpush1.bf16.msra.mxu0 0
        %3047 = vmatprep.subr.bf16.mxu0 0
        %3048 = vmatpush1.bf16.msra.mxu0 0
        %3049 = vmatprep.subr.bf16.mxu0 0
        %3050 = vmatpush1.bf16.msra.mxu0 0
        %3051 = vmatprep.subr.bf16.mxu0 0
        %3052 = vmatpush1.bf16.msra.mxu0 0
        %3053 = vmatprep.mubr.bf16.mxu0 0
        %3054 = vmatmul.mubr.bf16.gmra.mrb[0].mxu0 %v3019
        %v3055 = vpop.f32.mrb[0].mxu0
        %v3056 = vadd.f32 0.0, %v3055
        %v3057 = vpop.f32.mrb[0].mxu0
        %v3058 = vpop.f32.mrb[0].mxu0
        %v3059 = vpop.f32.mrb[0].mxu0
        %3060 = vdwg.mxu0
        %v3061 = vadd.f32 %v2902, %v3056
        %3062 = vrot.lane.b32.xlu0 %v2597, 104
        %v3063 = vpop.permute.xlu0 %3062
        %3064 = vrot.lane.b32.xlu0 %v2598, 72
        %v3065 = vpop.permute.xlu0 %3064
        %v3067 = vsel %vm872, %v3063, 0
        %v3070 = vsel %vm872, %v3065, 0
        %3072 = vmatprep.subr.bf16.mxu0 0
        %3073 = vmatpush1.bf16.xpose.msra.mxu0 %v3070
        %3074 = vmatprep.subr.bf16.mxu0 0
        %3075 = vmatpush1.bf16.xpose.msra.mxu0 0
        %3076 = vmatprep.subr.bf16.mxu0 0
        %3077 = vmatpush1.bf16.xpose.msra.mxu0 0
        %3078 = vmatprep.subr.bf16.mxu0 0
        %3079 = vmatpush1.bf16.xpose.msra.mxu0 0
        %3080 = vmatprep.subr.bf16.mxu0 0
        %3081 = vmatpush1.bf16.xpose.msra.mxu0 0
        %3082 = vmatprep.subr.bf16.mxu0 0
        %3083 = vmatpush1.bf16.xpose.msra.mxu0 0
        %3084 = vmatprep.subr.bf16.mxu0 0
        %3085 = vmatpush1.bf16.xpose.msra.mxu0 0
        %3086 = vmatprep.subr.bf16.mxu0 0
        %3087 = vmatpush1.bf16.xpose.msra.mxu0 0
        %3088 = vmatprep.subr.bf16.mxu0 0
        %3089 = vmatpush1.bf16.xpose.msra.mxu0 0
        %3090 = vmatprep.subr.bf16.mxu0 0
        %3091 = vmatpush1.bf16.xpose.msra.mxu0 0
        %3092 = vmatprep.subr.bf16.mxu0 0
        %3093 = vmatpush1.bf16.xpose.msra.mxu0 0
        %3094 = vmatprep.subr.bf16.mxu0 0
        %3095 = vmatpush1.bf16.xpose.msra.mxu0 0
        %3096 = vmatprep.subr.bf16.mxu0 0
        %3097 = vmatpush1.bf16.xpose.msra.mxu0 0
        %3098 = vmatprep.subr.bf16.mxu0 0
        %3099 = vmatpush1.bf16.xpose.msra.mxu0 0
        %3100 = vmatprep.subr.bf16.mxu0 0
        %3101 = vmatpush1.bf16.xpose.msra.mxu0 0
        %3102 = vmatprep.subr.bf16.mxu0 0
        %3103 = vmatpush1.bf16.xpose.msra.mxu0 0
        %3104 = vmatprep.mubr.bf16.mxu0 0
        %3105 = vmatmul.mubr.bf16.gmra.mrb[0].mxu0 %v3067
        %v3106 = vpop.f32.mrb[0].mxu0
        %v3107 = vadd.f32 %v2532, %v3106
        %v3108 = vpop.f32.mrb[0].mxu0
        %v3109 = vpop.f32.mrb[0].mxu0
        %v3110 = vpop.f32.mrb[0].mxu0
        %3111 = vdwg.mxu0
        %v3112 = vsel %vm872, %v3107, -inf
        %3113 = vmax.xlane.f32.xlu0 %v3112
        %v3114 = vpop.xlane.xlu0 %3113
        %v3115 = vsub.f32 %v3107, %v3114
        %v3116 = vmul.f32 %v3115, 1.442695
        %v3117 = vpow.pop %v3116
        %v3118 = vsel %vm872, %v3117, 0.0
        %3119 = vadd.xlane.f32.xlu0 %v3118
        %v3120 = vpop.xlane.xlu0 %3119
        %v3121 = vrcp.pop %v3120
        %v3122 = vmul.f32 %v3117, %v3121
        %v3123 = vpack.c.bf16 %v3122, %v3122
        %3124 = vrot.lane.b32.xlu0 %v2598, 40
        %v3125 = vpop.permute.xlu0 %3124
        %v3127 = vsel %vm872, %v3123, 0
        %v3130 = vsel %vm936, %v3125, 0
        %3132 = vmatprep.subr.bf16.mxu0 0
        %3133 = vmatpush1.bf16.msra.mxu0 %v3130
        %3134 = vmatprep.subr.bf16.mxu0 0
        %3135 = vmatpush1.bf16.msra.mxu0 0
        %3136 = vmatprep.subr.bf16.mxu0 0
        %3137 = vmatpush1.bf16.msra.mxu0 0
        %3138 = vmatprep.subr.bf16.mxu0 0
        %3139 = vmatpush1.bf16.msra.mxu0 0
        %3140 = vmatprep.subr.bf16.mxu0 0
        %3141 = vmatpush1.bf16.msra.mxu0 0
        %3142 = vmatprep.subr.bf16.mxu0 0
        %3143 = vmatpush1.bf16.msra.mxu0 0
        %3144 = vmatprep.subr.bf16.mxu0 0
        %3145 = vmatpush1.bf16.msra.mxu0 0
        %3146 = vmatprep.subr.bf16.mxu0 0
        %3147 = vmatpush1.bf16.msra.mxu0 0
        %3148 = vmatprep.subr.bf16.mxu0 0
        %3149 = vmatpush1.bf16.msra.mxu0 0
        %3150 = vmatprep.subr.bf16.mxu0 0
        %3151 = vmatpush1.bf16.msra.mxu0 0
        %3152 = vmatprep.subr.bf16.mxu0 0
        %3153 = vmatpush1.bf16.msra.mxu0 0
        %3154 = vmatprep.subr.bf16.mxu0 0
        %3155 = vmatpush1.bf16.msra.mxu0 0
        %3156 = vmatprep.subr.bf16.mxu0 0
        %3157 = vmatpush1.bf16.msra.mxu0 0
        %3158 = vmatprep.subr.bf16.mxu0 0
        %3159 = vmatpush1.bf16.msra.mxu0 0
        %3160 = vmatprep.subr.bf16.mxu0 0
        %3161 = vmatpush1.bf16.msra.mxu0 0
        %3162 = vmatprep.subr.bf16.mxu0 0
        %3163 = vmatpush1.bf16.msra.mxu0 0
        %3164 = vmatprep.mubr.bf16.mxu0 0
        %3165 = vmatmul.mubr.bf16.gmra.mrb[0].mxu0 %v3127
        %v3166 = vpop.f32.mrb[0].mxu0
        %v3167 = vadd.f32 0.0, %v3166
        %v3168 = vpop.f32.mrb[0].mxu0
        %v3169 = vpop.f32.mrb[0].mxu0
        %v3170 = vpop.f32.mrb[0].mxu0
        %3171 = vdwg.mxu0
        %v3172 = vpack.c.bf16 %v3167, %v3167
        %v3174 = vsel %vm872, %v3172, 0
        %3176 = vmatprep.subr.bf16.mxu0 0
        %3177 = vmatpush1.bf16.msra.mxu0 %v1458
        %3178 = vmatprep.subr.bf16.mxu0 0
        %3179 = vmatpush1.bf16.msra.mxu0 0
        %3180 = vmatprep.subr.bf16.mxu0 0
        %3181 = vmatpush1.bf16.msra.mxu0 0
        %3182 = vmatprep.subr.bf16.mxu0 0
        %3183 = vmatpush1.bf16.msra.mxu0 0
        %3184 = vmatprep.subr.bf16.mxu0 0
        %3185 = vmatpush1.bf16.msra.mxu0 0
        %3186 = vmatprep.subr.bf16.mxu0 0
        %3187 = vmatpush1.bf16.msra.mxu0 0
        %3188 = vmatprep.subr.bf16.mxu0 0
        %3189 = vmatpush1.bf16.msra.mxu0 0
        %3190 = vmatprep.subr.bf16.mxu0 0
        %3191 = vmatpush1.bf16.msra.mxu0 0
        %3192 = vmatprep.subr.bf16.mxu0 0
        %3193 = vmatpush1.bf16.msra.mxu0 0
        %3194 = vmatprep.subr.bf16.mxu0 0
        %3195 = vmatpush1.bf16.msra.mxu0 0
        %3196 = vmatprep.subr.bf16.mxu0 0
        %3197 = vmatpush1.bf16.msra.mxu0 0
        %3198 = vmatprep.subr.bf16.mxu0 0
        %3199 = vmatpush1.bf16.msra.mxu0 0
        %3200 = vmatprep.subr.bf16.mxu0 0
        %3201 = vmatpush1.bf16.msra.mxu0 0
        %3202 = vmatprep.subr.bf16.mxu0 0
        %3203 = vmatpush1.bf16.msra.mxu0 0
        %3204 = vmatprep.subr.bf16.mxu0 0
        %3205 = vmatpush1.bf16.msra.mxu0 0
        %3206 = vmatprep.subr.bf16.mxu0 0
        %3207 = vmatpush1.bf16.msra.mxu0 0
        %3208 = vmatprep.mubr.bf16.mxu0 0
        %3209 = vmatmul.mubr.bf16.gmra.mrb[0].mxu0 %v3174
        %v3210 = vpop.f32.mrb[0].mxu0
        %v3211 = vadd.f32 0.0, %v3210
        %v3212 = vpop.f32.mrb[0].mxu0
        %v3213 = vpop.f32.mrb[0].mxu0
        %v3214 = vpop.f32.mrb[0].mxu0
        %3215 = vdwg.mxu0
        %v3216 = vadd.f32 %v3061, %v3211
        %v3217 = vadd.f32 %v2528, %v3216
        %v3218 = vadd.f32 %v3217, %v1504
        %v3219 = vsel %vm815, %v3218, 0.0
        %3220 = vadd.xlane.f32.xlu0 %v3219
        %v3221 = vpop.xlane.xlu0 %3220
        %v3222 = vmul.f32 %v3221, %v1510
        %v3223 = vsub.f32 %v3218, %v3222
        %v3224 = vmul.f32 %v3223, %v3223
        %v3225 = vsel %vm815, %v3224, 0.0
        %3226 = vadd.xlane.f32.xlu0 %v3225
        %v3227 = vpop.xlane.xlu0 %3226
        %v3228 = vmul.f32 %v3227, %v1510
        %v3229 = vadd.f32 %v3228, 1e-05
        %v3230 = vrsqrt.pop %v3229
        %v3231 = vmul.f32 %v3223, %v3230
        %v3232 = vmul.f32 %v3231, %v1524
        %v3233 = vadd.f32 %v3232, %v1528
        %v3234 = vpack.c.bf16 %v3233, %v3233
        %v3235 = vld [vmem:[%s629] sm:$0xf]
        %v3236 = vld [vmem:[%s629 + $0x4] sm:$0xf]
        %v3237 = vld [vmem:[%s629 + $0x8] sm:$0xf]
        %v3238 = vld [vmem:[%s629 + $0xc] sm:$0xf]
        %v3243 = vunpack.c.l.b16 %v3235
        %v3244 = vunpack.c.l.b16 %v3236
        %v3245 = vunpack.c.l.b16 %v3237
        %v3246 = vunpack.c.l.b16 %v3238
        %v3247 = vpack.c.b16 %v3244, %v3243
        %v3248 = vpack.c.b16 %v3246, %v3245
        %v3252 = vsel %vm815, %v3234, 0
        %3254 = vmatprep.subr.bf16.mxu0 0
        %3255 = vmatpush1.bf16.msra.mxu0 %v3247
        %3256 = vmatprep.subr.bf16.mxu0 0
        %3257 = vmatpush1.bf16.msra.mxu0 %v3248
        %3258 = vmatprep.subr.bf16.mxu0 0
        %3259 = vmatpush1.bf16.msra.mxu0 0
        %3260 = vmatprep.subr.bf16.mxu0 0
        %3261 = vmatpush1.bf16.msra.mxu0 0
        %3262 = vmatprep.subr.bf16.mxu0 0
        %3263 = vmatpush1.bf16.msra.mxu0 0
        %3264 = vmatprep.subr.bf16.mxu0 0
        %3265 = vmatpush1.bf16.msra.mxu0 0
        %3266 = vmatprep.subr.bf16.mxu0 0
        %3267 = vmatpush1.bf16.msra.mxu0 0
        %3268 = vmatprep.subr.bf16.mxu0 0
        %3269 = vmatpush1.bf16.msra.mxu0 0
        %3270 = vmatprep.subr.bf16.mxu0 0
        %3271 = vmatpush1.bf16.msra.mxu0 0
        %3272 = vmatprep.subr.bf16.mxu0 0
        %3273 = vmatpush1.bf16.msra.mxu0 0
        %3274 = vmatprep.subr.bf16.mxu0 0
        %3275 = vmatpush1.bf16.msra.mxu0 0
        %3276 = vmatprep.subr.bf16.mxu0 0
        %3277 = vmatpush1.bf16.msra.mxu0 0
        %3278 = vmatprep.subr.bf16.mxu0 0
        %3279 = vmatpush1.bf16.msra.mxu0 0
        %3280 = vmatprep.subr.bf16.mxu0 0
        %3281 = vmatpush1.bf16.msra.mxu0 0
        %3282 = vmatprep.subr.bf16.mxu0 0
        %3283 = vmatpush1.bf16.msra.mxu0 0
        %3284 = vmatprep.subr.bf16.mxu0 0
        %3285 = vmatpush1.bf16.msra.mxu0 0
        %3286 = vmatprep.mubr.bf16.mxu0 0
        %3287 = vmatmul.mubr.bf16.gmra.mrb[0].mxu0 %v3252
        %v3288 = vpop.f32.mrb[0].mxu0
        %v3289 = vadd.f32 0.0, %v3288
        %v3290 = vpop.f32.mrb[0].mxu0
        %v3291 = vpop.f32.mrb[0].mxu0
        %v3292 = vpop.f32.mrb[0].mxu0
        %3293 = vdwg.mxu0
        %v3294 = vpack.c.bf16 %v3289, %v3289
        %v3295 = vunpack.c.l.bf16 %v3294
        %v3296 = vadd.f32 %v3295, %v1596
        %v3297 = vmul.f32 %v3296, 0.35355338
        %v3298 = vpack.c.bf16 %v3297, %v3297
        %v3299 = vpack.c.bf16 %v2530, %v2530
        %v3300 = vld [vmem:[%s638] sm:$0xf]
        %v3301 = vld [vmem:[%s638 + $0x4] sm:$0xf]
        %v3302 = vld [vmem:[%s638 + $0x8] sm:$0xf]
        %v3303 = vld [vmem:[%s638 + $0xc] sm:$0xf]
        %v3308 = vunpack.c.l.b16 %v3300
        %v3309 = vunpack.c.l.b16 %v3301
        %v3310 = vunpack.c.l.b16 %v3302
        %v3311 = vunpack.c.l.b16 %v3303
        %v3312 = vpack.c.b16 %v3309, %v3308
        %v3313 = vpack.c.b16 %v3311, %v3310
        %v3317 = vsel %vm815, %v3299, 0
        %3319 = vmatprep.subr.bf16.mxu0 0
        %3320 = vmatpush1.bf16.msra.mxu0 %v3312
        %3321 = vmatprep.subr.bf16.mxu0 0
        %3322 = vmatpush1.bf16.msra.mxu0 %v3313
        %3323 = vmatprep.subr.bf16.mxu0 0
        %3324 = vmatpush1.bf16.msra.mxu0 0
        %3325 = vmatprep.subr.bf16.mxu0 0
        %3326 = vmatpush1.bf16.msra.mxu0 0
        %3327 = vmatprep.subr.bf16.mxu0 0
        %3328 = vmatpush1.bf16.msra.mxu0 0
        %3329 = vmatprep.subr.bf16.mxu0 0
        %3330 = vmatpush1.bf16.msra.mxu0 0
        %3331 = vmatprep.subr.bf16.mxu0 0
        %3332 = vmatpush1.bf16.msra.mxu0 0
        %3333 = vmatprep.subr.bf16.mxu0 0
        %3334 = vmatpush1.bf16.msra.mxu0 0
        %3335 = vmatprep.subr.bf16.mxu0 0
        %3336 = vmatpush1.bf16.msra.mxu0 0
        %3337 = vmatprep.subr.bf16.mxu0 0
        %3338 = vmatpush1.bf16.msra.mxu0 0
        %3339 = vmatprep.subr.bf16.mxu0 0
        %3340 = vmatpush1.bf16.msra.mxu0 0
        %3341 = vmatprep.subr.bf16.mxu0 0
        %3342 = vmatpush1.bf16.msra.mxu0 0
        %3343 = vmatprep.subr.bf16.mxu0 0
        %3344 = vmatpush1.bf16.msra.mxu0 0
        %3345 = vmatprep.subr.bf16.mxu0 0
        %3346 = vmatpush1.bf16.msra.mxu0 0
        %3347 = vmatprep.subr.bf16.mxu0 0
        %3348 = vmatpush1.bf16.msra.mxu0 0
        %3349 = vmatprep.subr.bf16.mxu0 0
        %3350 = vmatpush1.bf16.msra.mxu0 0
        %3351 = vmatprep.mubr.bf16.mxu0 0
        %3352 = vmatmul.mubr.bf16.gmra.mrb[0].mxu0 %v3317
        %v3353 = vpop.f32.mrb[0].mxu0
        %v3354 = vadd.f32 0.0, %v3353
        %v3355 = vpop.f32.mrb[0].mxu0
        %v3356 = vpop.f32.mrb[0].mxu0
        %v3357 = vpop.f32.mrb[0].mxu0
        %3358 = vdwg.mxu0
        %v3359 = vpack.c.bf16 %v3354, %v3354
        %v3360 = vunpack.c.l.bf16 %v3359
        %v3361 = vadd.f32 %v3360, %v1664
        %v3362 = vpack.c.bf16 %v3361, %v3361
        %v3364 = vsel %vm872, %v3298, 0
        %v3367 = vsel %vm872, %v3362, 0
        %3369 = vmatprep.subr.bf16.mxu0 0
        %3370 = vmatpush1.bf16.xpose.msra.mxu0 %v3367
        %3371 = vmatprep.subr.bf16.mxu0 0
        %3372 = vmatpush1.bf16.xpose.msra.mxu0 0
        %3373 = vmatprep.subr.bf16.mxu0 0
        %3374 = vmatpush1.bf16.xpose.msra.mxu0 0
        %3375 = vmatprep.subr.bf16.mxu0 0
        %3376 = vmatpush1.bf16.xpose.msra.mxu0 0
        %3377 = vmatprep.subr.bf16.mxu0 0
        %3378 = vmatpush1.bf16.xpose.msra.mxu0 0
        %3379 = vmatprep.subr.bf16.mxu0 0
        %3380 = vmatpush1.bf16.xpose.msra.mxu0 0
        %3381 = vmatprep.subr.bf16.mxu0 0
        %3382 = vmatpush1.bf16.xpose.msra.mxu0 0
        %3383 = vmatprep.subr.bf16.mxu0 0
        %3384 = vmatpush1.bf16.xpose.msra.mxu0 0
        %3385 = vmatprep.subr.bf16.mxu0 0
        %3386 = vmatpush1.bf16.xpose.msra.mxu0 0
        %3387 = vmatprep.subr.bf16.mxu0 0
        %3388 = vmatpush1.bf16.xpose.msra.mxu0 0
        %3389 = vmatprep.subr.bf16.mxu0 0
        %3390 = vmatpush1.bf16.xpose.msra.mxu0 0
        %3391 = vmatprep.subr.bf16.mxu0 0
        %3392 = vmatpush1.bf16.xpose.msra.mxu0 0
        %3393 = vmatprep.subr.bf16.mxu0 0
        %3394 = vmatpush1.bf16.xpose.msra.mxu0 0
        %3395 = vmatprep.subr.bf16.mxu0 0
        %3396 = vmatpush1.bf16.xpose.msra.mxu0 0
        %3397 = vmatprep.subr.bf16.mxu0 0
        %3398 = vmatpush1.bf16.xpose.msra.mxu0 0
        %3399 = vmatprep.subr.bf16.mxu0 0
        %3400 = vmatpush1.bf16.xpose.msra.mxu0 0
        %3401 = vmatprep.mubr.bf16.mxu0 0
        %3402 = vmatmul.mubr.bf16.gmra.mrb[0].mxu0 %v3364
        %v3403 = vpop.f32.mrb[0].mxu0
        %v3404 = vadd.f32 0.0, %v3403
        %v3405 = vpop.f32.mrb[0].mxu0
        %v3406 = vpop.f32.mrb[0].mxu0
        %v3407 = vpop.f32.mrb[0].mxu0
        %3408 = vdwg.mxu0
        %v3409 = vsel %vm1714, %v3404, -inf
        %3410 = vmax.xlane.f32.xlu0 %v3409
        %v3411 = vpop.xlane.xlu0 %3410
        %v3412 = vsub.f32 %v3404, %v3411
        %v3413 = vmul.f32 %v3412, 1.442695
        %v3414 = vpow.pop %v3413
        %v3415 = vsel %vm1714, %v3414, 0.0
        %3416 = vadd.xlane.f32.xlu0 %v3415
        %v3417 = vpop.xlane.xlu0 %3416
        %v3418 = vrcp.pop %v3417
        %v3419 = vmul.f32 %v3414, %v3418
        %v3420 = vpack.c.bf16 %v3419, %v3419
        %3422 = vrot.lane.b32.xlu0 %v3362, 96
        %v3423 = vpop.permute.xlu0 %3422
        %v3425 = vsel %vm1714, %v3420, 0
        %v3428 = vsel %vm1733, %v3423, 0
        %3430 = vmatprep.subr.bf16.mxu0 0
        %3431 = vmatpush1.bf16.msra.mxu0 %v3428
        %3432 = vmatprep.subr.bf16.mxu0 0
        %3433 = vmatpush1.bf16.msra.mxu0 0
        %3434 = vmatprep.subr.bf16.mxu0 0
        %3435 = vmatpush1.bf16.msra.mxu0 0
        %3436 = vmatprep.subr.bf16.mxu0 0
        %3437 = vmatpush1.bf16.msra.mxu0 0
        %3438 = vmatprep.subr.bf16.mxu0 0
        %3439 = vmatpush1.bf16.msra.mxu0 0
        %3440 = vmatprep.subr.bf16.mxu0 0
        %3441 = vmatpush1.bf16.msra.mxu0 0
        %3442 = vmatprep.subr.bf16.mxu0 0
        %3443 = vmatpush1.bf16.msra.mxu0 0
        %3444 = vmatprep.subr.bf16.mxu0 0
        %3445 = vmatpush1.bf16.msra.mxu0 0
        %3446 = vmatprep.subr.bf16.mxu0 0
        %3447 = vmatpush1.bf16.msra.mxu0 0
        %3448 = vmatprep.subr.bf16.mxu0 0
        %3449 = vmatpush1.bf16.msra.mxu0 0
        %3450 = vmatprep.subr.bf16.mxu0 0
        %3451 = vmatpush1.bf16.msra.mxu0 0
        %3452 = vmatprep.subr.bf16.mxu0 0
        %3453 = vmatpush1.bf16.msra.mxu0 0
        %3454 = vmatprep.subr.bf16.mxu0 0
        %3455 = vmatpush1.bf16.msra.mxu0 0
        %3456 = vmatprep.subr.bf16.mxu0 0
        %3457 = vmatpush1.bf16.msra.mxu0 0
        %3458 = vmatprep.subr.bf16.mxu0 0
        %3459 = vmatpush1.bf16.msra.mxu0 0
        %3460 = vmatprep.subr.bf16.mxu0 0
        %3461 = vmatpush1.bf16.msra.mxu0 0
        %3462 = vmatprep.mubr.bf16.mxu0 0
        %3463 = vmatmul.mubr.bf16.gmra.mrb[0].mxu0 %v3425
        %v3464 = vpop.f32.mrb[0].mxu0
        %v3465 = vadd.f32 0.0, %v3464
        %v3466 = vpop.f32.mrb[0].mxu0
        %v3467 = vpop.f32.mrb[0].mxu0
        %v3468 = vpop.f32.mrb[0].mxu0
        %3469 = vdwg.mxu0
        %v3470 = vpack.c.bf16 %v3465, %v3465
        %3472 = vrot.lane.b32.xlu0 %v3298, 120
        %v3473 = vpop.permute.xlu0 %3472
        %3474 = vrot.lane.b32.xlu0 %v3362, 120
        %v3475 = vpop.permute.xlu0 %3474
        %v3477 = vsel %vm872, %v3473, 0
        %v3480 = vsel %vm872, %v3475, 0
        %3482 = vmatprep.subr.bf16.mxu0 0
        %3483 = vmatpush1.bf16.xpose.msra.mxu0 %v3480
        %3484 = vmatprep.subr.bf16.mxu0 0
        %3485 = vmatpush1.bf16.xpose.msra.mxu0 0
        %3486 = vmatprep.subr.bf16.mxu0 0
        %3487 = vmatpush1.bf16.xpose.msra.mxu0 0
        %3488 = vmatprep.subr.bf16.mxu0 0
        %3489 = vmatpush1.bf16.xpose.msra.mxu0 0
        %3490 = vmatprep.subr.bf16.mxu0 0
        %3491 = vmatpush1.bf16.xpose.msra.mxu0 0
        %3492 = vmatprep.subr.bf16.mxu0 0
        %3493 = vmatpush1.bf16.xpose.msra.mxu0 0
        %3494 = vmatprep.subr.bf16.mxu0 0
        %3495 = vmatpush1.bf16.xpose.msra.mxu0 0
        %3496 = vmatprep.subr.bf16.mxu0 0
        %3497 = vmatpush1.bf16.xpose.msra.mxu0 0
        %3498 = vmatprep.subr.bf16.mxu0 0
        %3499 = vmatpush1.bf16.xpose.msra.mxu0 0
        %3500 = vmatprep.subr.bf16.mxu0 0
        %3501 = vmatpush1.bf16.xpose.msra.mxu0 0
        %3502 = vmatprep.subr.bf16.mxu0 0
        %3503 = vmatpush1.bf16.xpose.msra.mxu0 0
        %3504 = vmatprep.subr.bf16.mxu0 0
        %3505 = vmatpush1.bf16.xpose.msra.mxu0 0
        %3506 = vmatprep.subr.bf16.mxu0 0
        %3507 = vmatpush1.bf16.xpose.msra.mxu0 0
        %3508 = vmatprep.subr.bf16.mxu0 0
        %3509 = vmatpush1.bf16.xpose.msra.mxu0 0
        %3510 = vmatprep.subr.bf16.mxu0 0
        %3511 = vmatpush1.bf16.xpose.msra.mxu0 0
        %3512 = vmatprep.subr.bf16.mxu0 0
        %3513 = vmatpush1.bf16.xpose.msra.mxu0 0
        %3514 = vmatprep.mubr.bf16.mxu0 0
        %3515 = vmatmul.mubr.bf16.gmra.mrb[0].mxu0 %v3477
        %v3516 = vpop.f32.mrb[0].mxu0
        %v3517 = vadd.f32 0.0, %v3516
        %v3518 = vpop.f32.mrb[0].mxu0
        %v3519 = vpop.f32.mrb[0].mxu0
        %v3520 = vpop.f32.mrb[0].mxu0
        %3521 = vdwg.mxu0
        %v3522 = vsel %vm1714, %v3517, -inf
        %3523 = vmax.xlane.f32.xlu0 %v3522
        %v3524 = vpop.xlane.xlu0 %3523
        %v3525 = vsub.f32 %v3517, %v3524
        %v3526 = vmul.f32 %v3525, 1.442695
        %v3527 = vpow.pop %v3526
        %v3528 = vsel %vm1714, %v3527, 0.0
        %3529 = vadd.xlane.f32.xlu0 %v3528
        %v3530 = vpop.xlane.xlu0 %3529
        %v3531 = vrcp.pop %v3530
        %v3532 = vmul.f32 %v3527, %v3531
        %v3533 = vpack.c.bf16 %v3532, %v3532
        %3534 = vrot.lane.b32.xlu0 %v3362, 88
        %v3535 = vpop.permute.xlu0 %3534
        %v3537 = vsel %vm1714, %v3533, 0
        %v3540 = vsel %vm1733, %v3535, 0
        %3542 = vmatprep.subr.bf16.mxu0 0
        %3543 = vmatpush1.bf16.msra.mxu0 %v3540
        %3544 = vmatprep.subr.bf16.mxu0 0
        %3545 = vmatpush1.bf16.msra.mxu0 0
        %3546 = vmatprep.subr.bf16.mxu0 0
        %3547 = vmatpush1.bf16.msra.mxu0 0
        %3548 = vmatprep.subr.bf16.mxu0 0
        %3549 = vmatpush1.bf16.msra.mxu0 0
        %3550 = vmatprep.subr.bf16.mxu0 0
        %3551 = vmatpush1.bf16.msra.mxu0 0
        %3552 = vmatprep.subr.bf16.mxu0 0
        %3553 = vmatpush1.bf16.msra.mxu0 0
        %3554 = vmatprep.subr.bf16.mxu0 0
        %3555 = vmatpush1.bf16.msra.mxu0 0
        %3556 = vmatprep.subr.bf16.mxu0 0
        %3557 = vmatpush1.bf16.msra.mxu0 0
        %3558 = vmatprep.subr.bf16.mxu0 0
        %3559 = vmatpush1.bf16.msra.mxu0 0
        %3560 = vmatprep.subr.bf16.mxu0 0
        %3561 = vmatpush1.bf16.msra.mxu0 0
        %3562 = vmatprep.subr.bf16.mxu0 0
        %3563 = vmatpush1.bf16.msra.mxu0 0
        %3564 = vmatprep.subr.bf16.mxu0 0
        %3565 = vmatpush1.bf16.msra.mxu0 0
        %3566 = vmatprep.subr.bf16.mxu0 0
        %3567 = vmatpush1.bf16.msra.mxu0 0
        %3568 = vmatprep.subr.bf16.mxu0 0
        %3569 = vmatpush1.bf16.msra.mxu0 0
        %3570 = vmatprep.subr.bf16.mxu0 0
        %3571 = vmatpush1.bf16.msra.mxu0 0
        %3572 = vmatprep.subr.bf16.mxu0 0
        %3573 = vmatpush1.bf16.msra.mxu0 0
        %3574 = vmatprep.mubr.bf16.mxu0 0
        %3575 = vmatmul.mubr.bf16.gmra.mrb[0].mxu0 %v3537
        %v3576 = vpop.f32.mrb[0].mxu0
        %v3577 = vadd.f32 0.0, %v3576
        %v3578 = vpop.f32.mrb[0].mxu0
        %v3579 = vpop.f32.mrb[0].mxu0
        %v3580 = vpop.f32.mrb[0].mxu0
        %3581 = vdwg.mxu0
        %v3582 = vpack.c.bf16 %v3577, %v3577
        %v3584 = vsel %vm872, %v3582, 0
        %3586 = vmatprep.subr.bf16.mxu0 0
        %3587 = vmatpush1.bf16.msra.mxu0 %v1894
        %3588 = vmatprep.subr.bf16.mxu0 0
        %3589 = vmatpush1.bf16.msra.mxu0 0
        %3590 = vmatprep.subr.bf16.mxu0 0
        %3591 = vmatpush1.bf16.msra.mxu0 0
        %3592 = vmatprep.subr.bf16.mxu0 0
        %3593 = vmatpush1.bf16.msra.mxu0 0
        %3594 = vmatprep.subr.bf16.mxu0 0
        %3595 = vmatpush1.bf16.msra.mxu0 0
        %3596 = vmatprep.subr.bf16.mxu0 0
        %3597 = vmatpush1.bf16.msra.mxu0 0
        %3598 = vmatprep.subr.bf16.mxu0 0
        %3599 = vmatpush1.bf16.msra.mxu0 0
        %3600 = vmatprep.subr.bf16.mxu0 0
        %3601 = vmatpush1.bf16.msra.mxu0 0
        %3602 = vmatprep.subr.bf16.mxu0 0
        %3603 = vmatpush1.bf16.msra.mxu0 0
        %3604 = vmatprep.subr.bf16.mxu0 0
        %3605 = vmatpush1.bf16.msra.mxu0 0
        %3606 = vmatprep.subr.bf16.mxu0 0
        %3607 = vmatpush1.bf16.msra.mxu0 0
        %3608 = vmatprep.subr.bf16.mxu0 0
        %3609 = vmatpush1.bf16.msra.mxu0 0
        %3610 = vmatprep.subr.bf16.mxu0 0
        %3611 = vmatpush1.bf16.msra.mxu0 0
        %3612 = vmatprep.subr.bf16.mxu0 0
        %3613 = vmatpush1.bf16.msra.mxu0 0
        %3614 = vmatprep.subr.bf16.mxu0 0
        %3615 = vmatpush1.bf16.msra.mxu0 0
        %3616 = vmatprep.subr.bf16.mxu0 0
        %3617 = vmatpush1.bf16.msra.mxu0 0
        %3618 = vmatprep.mubr.bf16.mxu0 0
        %3619 = vmatmul.mubr.bf16.gmra.mrb[0].mxu0 %v3584
        %v3620 = vpop.f32.mrb[0].mxu0
        %v3621 = vadd.f32 0.0, %v3620
        %v3622 = vpop.f32.mrb[0].mxu0
        %v3623 = vpop.f32.mrb[0].mxu0
        %v3624 = vpop.f32.mrb[0].mxu0
        %3625 = vdwg.mxu0
        %v3627 = vsel %vm872, %v3470, 0
        %3629 = vmatprep.subr.bf16.mxu0 0
        %3630 = vmatpush1.bf16.msra.mxu0 %v1940
        %3631 = vmatprep.subr.bf16.mxu0 0
        %3632 = vmatpush1.bf16.msra.mxu0 0
        %3633 = vmatprep.subr.bf16.mxu0 0
        %3634 = vmatpush1.bf16.msra.mxu0 0
        %3635 = vmatprep.subr.bf16.mxu0 0
        %3636 = vmatpush1.bf16.msra.mxu0 0
        %3637 = vmatprep.subr.bf16.mxu0 0
        %3638 = vmatpush1.bf16.msra.mxu0 0
        %3639 = vmatprep.subr.bf16.mxu0 0
        %3640 = vmatpush1.bf16.msra.mxu0 0
        %3641 = vmatprep.subr.bf16.mxu0 0
        %3642 = vmatpush1.bf16.msra.mxu0 0
        %3643 = vmatprep.subr.bf16.mxu0 0
        %3644 = vmatpush1.bf16.msra.mxu0 0
        %3645 = vmatprep.subr.bf16.mxu0 0
        %3646 = vmatpush1.bf16.msra.mxu0 0
        %3647 = vmatprep.subr.bf16.mxu0 0
        %3648 = vmatpush1.bf16.msra.mxu0 0
        %3649 = vmatprep.subr.bf16.mxu0 0
        %3650 = vmatpush1.bf16.msra.mxu0 0
        %3651 = vmatprep.subr.bf16.mxu0 0
        %3652 = vmatpush1.bf16.msra.mxu0 0
        %3653 = vmatprep.subr.bf16.mxu0 0
        %3654 = vmatpush1.bf16.msra.mxu0 0
        %3655 = vmatprep.subr.bf16.mxu0 0
        %3656 = vmatpush1.bf16.msra.mxu0 0
        %3657 = vmatprep.subr.bf16.mxu0 0
        %3658 = vmatpush1.bf16.msra.mxu0 0
        %3659 = vmatprep.subr.bf16.mxu0 0
        %3660 = vmatpush1.bf16.msra.mxu0 0
        %3661 = vmatprep.mubr.bf16.mxu0 0
        %3662 = vmatmul.mubr.bf16.gmra.mrb[0].mxu0 %v3627
        %v3663 = vpop.f32.mrb[0].mxu0
        %v3664 = vadd.f32 %v3621, %v3663
        %v3665 = vpop.f32.mrb[0].mxu0
        %v3666 = vpop.f32.mrb[0].mxu0
        %v3667 = vpop.f32.mrb[0].mxu0
        %3668 = vdwg.mxu0
        %3669 = vrot.lane.b32.xlu0 %v3298, 112
        %v3670 = vpop.permute.xlu0 %3669
        %3671 = vrot.lane.b32.xlu0 %v3362, 112
        %v3672 = vpop.permute.xlu0 %3671
        %v3674 = vsel %vm872, %v3670, 0
        %v3677 = vsel %vm872, %v3672, 0
        %3679 = vmatprep.subr.bf16.mxu0 0
        %3680 = vmatpush1.bf16.xpose.msra.mxu0 %v3677
        %3681 = vmatprep.subr.bf16.mxu0 0
        %3682 = vmatpush1.bf16.xpose.msra.mxu0 0
        %3683 = vmatprep.subr.bf16.mxu0 0
        %3684 = vmatpush1.bf16.xpose.msra.mxu0 0
        %3685 = vmatprep.subr.bf16.mxu0 0
        %3686 = vmatpush1.bf16.xpose.msra.mxu0 0
        %3687 = vmatprep.subr.bf16.mxu0 0
        %3688 = vmatpush1.bf16.xpose.msra.mxu0 0
        %3689 = vmatprep.subr.bf16.mxu0 0
        %3690 = vmatpush1.bf16.xpose.msra.mxu0 0
        %3691 = vmatprep.subr.bf16.mxu0 0
        %3692 = vmatpush1.bf16.xpose.msra.mxu0 0
        %3693 = vmatprep.subr.bf16.mxu0 0
        %3694 = vmatpush1.bf16.xpose.msra.mxu0 0
        %3695 = vmatprep.subr.bf16.mxu0 0
        %3696 = vmatpush1.bf16.xpose.msra.mxu0 0
        %3697 = vmatprep.subr.bf16.mxu0 0
        %3698 = vmatpush1.bf16.xpose.msra.mxu0 0
        %3699 = vmatprep.subr.bf16.mxu0 0
        %3700 = vmatpush1.bf16.xpose.msra.mxu0 0
        %3701 = vmatprep.subr.bf16.mxu0 0
        %3702 = vmatpush1.bf16.xpose.msra.mxu0 0
        %3703 = vmatprep.subr.bf16.mxu0 0
        %3704 = vmatpush1.bf16.xpose.msra.mxu0 0
        %3705 = vmatprep.subr.bf16.mxu0 0
        %3706 = vmatpush1.bf16.xpose.msra.mxu0 0
        %3707 = vmatprep.subr.bf16.mxu0 0
        %3708 = vmatpush1.bf16.xpose.msra.mxu0 0
        %3709 = vmatprep.subr.bf16.mxu0 0
        %3710 = vmatpush1.bf16.xpose.msra.mxu0 0
        %3711 = vmatprep.mubr.bf16.mxu0 0
        %3712 = vmatmul.mubr.bf16.gmra.mrb[0].mxu0 %v3674
        %v3713 = vpop.f32.mrb[0].mxu0
        %v3714 = vadd.f32 0.0, %v3713
        %v3715 = vpop.f32.mrb[0].mxu0
        %v3716 = vpop.f32.mrb[0].mxu0
        %v3717 = vpop.f32.mrb[0].mxu0
        %3718 = vdwg.mxu0
        %v3719 = vsel %vm1714, %v3714, -inf
        %3720 = vmax.xlane.f32.xlu0 %v3719
        %v3721 = vpop.xlane.xlu0 %3720
        %v3722 = vsub.f32 %v3714, %v3721
        %v3723 = vmul.f32 %v3722, 1.442695
        %v3724 = vpow.pop %v3723
        %v3725 = vsel %vm1714, %v3724, 0.0
        %3726 = vadd.xlane.f32.xlu0 %v3725
        %v3727 = vpop.xlane.xlu0 %3726
        %v3728 = vrcp.pop %v3727
        %v3729 = vmul.f32 %v3724, %v3728
        %v3730 = vpack.c.bf16 %v3729, %v3729
        %3731 = vrot.lane.b32.xlu0 %v3362, 80
        %v3732 = vpop.permute.xlu0 %3731
        %v3734 = vsel %vm1714, %v3730, 0
        %v3737 = vsel %vm1733, %v3732, 0
        %3739 = vmatprep.subr.bf16.mxu0 0
        %3740 = vmatpush1.bf16.msra.mxu0 %v3737
        %3741 = vmatprep.subr.bf16.mxu0 0
        %3742 = vmatpush1.bf16.msra.mxu0 0
        %3743 = vmatprep.subr.bf16.mxu0 0
        %3744 = vmatpush1.bf16.msra.mxu0 0
        %3745 = vmatprep.subr.bf16.mxu0 0
        %3746 = vmatpush1.bf16.msra.mxu0 0
        %3747 = vmatprep.subr.bf16.mxu0 0
        %3748 = vmatpush1.bf16.msra.mxu0 0
        %3749 = vmatprep.subr.bf16.mxu0 0
        %3750 = vmatpush1.bf16.msra.mxu0 0
        %3751 = vmatprep.subr.bf16.mxu0 0
        %3752 = vmatpush1.bf16.msra.mxu0 0
        %3753 = vmatprep.subr.bf16.mxu0 0
        %3754 = vmatpush1.bf16.msra.mxu0 0
        %3755 = vmatprep.subr.bf16.mxu0 0
        %3756 = vmatpush1.bf16.msra.mxu0 0
        %3757 = vmatprep.subr.bf16.mxu0 0
        %3758 = vmatpush1.bf16.msra.mxu0 0
        %3759 = vmatprep.subr.bf16.mxu0 0
        %3760 = vmatpush1.bf16.msra.mxu0 0
        %3761 = vmatprep.subr.bf16.mxu0 0
        %3762 = vmatpush1.bf16.msra.mxu0 0
        %3763 = vmatprep.subr.bf16.mxu0 0
        %3764 = vmatpush1.bf16.msra.mxu0 0
        %3765 = vmatprep.subr.bf16.mxu0 0
        %3766 = vmatpush1.bf16.msra.mxu0 0
        %3767 = vmatprep.subr.bf16.mxu0 0
        %3768 = vmatpush1.bf16.msra.mxu0 0
        %3769 = vmatprep.subr.bf16.mxu0 0
        %3770 = vmatpush1.bf16.msra.mxu0 0
        %3771 = vmatprep.mubr.bf16.mxu0 0
        %3772 = vmatmul.mubr.bf16.gmra.mrb[0].mxu0 %v3734
        %v3773 = vpop.f32.mrb[0].mxu0
        %v3774 = vadd.f32 0.0, %v3773
        %v3775 = vpop.f32.mrb[0].mxu0
        %v3776 = vpop.f32.mrb[0].mxu0
        %v3777 = vpop.f32.mrb[0].mxu0
        %3778 = vdwg.mxu0
        %v3779 = vpack.c.bf16 %v3774, %v3774
        %v3781 = vsel %vm872, %v3779, 0
        %3783 = vmatprep.subr.bf16.mxu0 0
        %3784 = vmatpush1.bf16.msra.mxu0 %v2097
        %3785 = vmatprep.subr.bf16.mxu0 0
        %3786 = vmatpush1.bf16.msra.mxu0 0
        %3787 = vmatprep.subr.bf16.mxu0 0
        %3788 = vmatpush1.bf16.msra.mxu0 0
        %3789 = vmatprep.subr.bf16.mxu0 0
        %3790 = vmatpush1.bf16.msra.mxu0 0
        %3791 = vmatprep.subr.bf16.mxu0 0
        %3792 = vmatpush1.bf16.msra.mxu0 0
        %3793 = vmatprep.subr.bf16.mxu0 0
        %3794 = vmatpush1.bf16.msra.mxu0 0
        %3795 = vmatprep.subr.bf16.mxu0 0
        %3796 = vmatpush1.bf16.msra.mxu0 0
        %3797 = vmatprep.subr.bf16.mxu0 0
        %3798 = vmatpush1.bf16.msra.mxu0 0
        %3799 = vmatprep.subr.bf16.mxu0 0
        %3800 = vmatpush1.bf16.msra.mxu0 0
        %3801 = vmatprep.subr.bf16.mxu0 0
        %3802 = vmatpush1.bf16.msra.mxu0 0
        %3803 = vmatprep.subr.bf16.mxu0 0
        %3804 = vmatpush1.bf16.msra.mxu0 0
        %3805 = vmatprep.subr.bf16.mxu0 0
        %3806 = vmatpush1.bf16.msra.mxu0 0
        %3807 = vmatprep.subr.bf16.mxu0 0
        %3808 = vmatpush1.bf16.msra.mxu0 0
        %3809 = vmatprep.subr.bf16.mxu0 0
        %3810 = vmatpush1.bf16.msra.mxu0 0
        %3811 = vmatprep.subr.bf16.mxu0 0
        %3812 = vmatpush1.bf16.msra.mxu0 0
        %3813 = vmatprep.subr.bf16.mxu0 0
        %3814 = vmatpush1.bf16.msra.mxu0 0
        %3815 = vmatprep.mubr.bf16.mxu0 0
        %3816 = vmatmul.mubr.bf16.gmra.mrb[0].mxu0 %v3781
        %v3817 = vpop.f32.mrb[0].mxu0
        %v3818 = vadd.f32 0.0, %v3817
        %v3819 = vpop.f32.mrb[0].mxu0
        %v3820 = vpop.f32.mrb[0].mxu0
        %v3821 = vpop.f32.mrb[0].mxu0
        %3822 = vdwg.mxu0
        %v3823 = vadd.f32 %v3664, %v3818
        %3824 = vrot.lane.b32.xlu0 %v3298, 104
        %v3825 = vpop.permute.xlu0 %3824
        %3826 = vrot.lane.b32.xlu0 %v3362, 104
        %v3827 = vpop.permute.xlu0 %3826
        %v3829 = vsel %vm872, %v3825, 0
        %v3832 = vsel %vm872, %v3827, 0
        %3834 = vmatprep.subr.bf16.mxu0 0
        %3835 = vmatpush1.bf16.xpose.msra.mxu0 %v3832
        %3836 = vmatprep.subr.bf16.mxu0 0
        %3837 = vmatpush1.bf16.xpose.msra.mxu0 0
        %3838 = vmatprep.subr.bf16.mxu0 0
        %3839 = vmatpush1.bf16.xpose.msra.mxu0 0
        %3840 = vmatprep.subr.bf16.mxu0 0
        %3841 = vmatpush1.bf16.xpose.msra.mxu0 0
        %3842 = vmatprep.subr.bf16.mxu0 0
        %3843 = vmatpush1.bf16.xpose.msra.mxu0 0
        %3844 = vmatprep.subr.bf16.mxu0 0
        %3845 = vmatpush1.bf16.xpose.msra.mxu0 0
        %3846 = vmatprep.subr.bf16.mxu0 0
        %3847 = vmatpush1.bf16.xpose.msra.mxu0 0
        %3848 = vmatprep.subr.bf16.mxu0 0
        %3849 = vmatpush1.bf16.xpose.msra.mxu0 0
        %3850 = vmatprep.subr.bf16.mxu0 0
        %3851 = vmatpush1.bf16.xpose.msra.mxu0 0
        %3852 = vmatprep.subr.bf16.mxu0 0
        %3853 = vmatpush1.bf16.xpose.msra.mxu0 0
        %3854 = vmatprep.subr.bf16.mxu0 0
        %3855 = vmatpush1.bf16.xpose.msra.mxu0 0
        %3856 = vmatprep.subr.bf16.mxu0 0
        %3857 = vmatpush1.bf16.xpose.msra.mxu0 0
        %3858 = vmatprep.subr.bf16.mxu0 0
        %3859 = vmatpush1.bf16.xpose.msra.mxu0 0
        %3860 = vmatprep.subr.bf16.mxu0 0
        %3861 = vmatpush1.bf16.xpose.msra.mxu0 0
        %3862 = vmatprep.subr.bf16.mxu0 0
        %3863 = vmatpush1.bf16.xpose.msra.mxu0 0
        %3864 = vmatprep.subr.bf16.mxu0 0
        %3865 = vmatpush1.bf16.xpose.msra.mxu0 0
        %3866 = vmatprep.mubr.bf16.mxu0 0
        %3867 = vmatmul.mubr.bf16.gmra.mrb[0].mxu0 %v3829
        %v3868 = vpop.f32.mrb[0].mxu0
        %v3869 = vadd.f32 0.0, %v3868
        %v3870 = vpop.f32.mrb[0].mxu0
        %v3871 = vpop.f32.mrb[0].mxu0
        %v3872 = vpop.f32.mrb[0].mxu0
        %3873 = vdwg.mxu0
        %v3874 = vsel %vm1714, %v3869, -inf
        %3875 = vmax.xlane.f32.xlu0 %v3874
        %v3876 = vpop.xlane.xlu0 %3875
        %v3877 = vsub.f32 %v3869, %v3876
        %v3878 = vmul.f32 %v3877, 1.442695
        %v3879 = vpow.pop %v3878
        %v3880 = vsel %vm1714, %v3879, 0.0
        %3881 = vadd.xlane.f32.xlu0 %v3880
        %v3882 = vpop.xlane.xlu0 %3881
        %v3883 = vrcp.pop %v3882
        %v3884 = vmul.f32 %v3879, %v3883
        %v3885 = vpack.c.bf16 %v3884, %v3884
        %3886 = vrot.lane.b32.xlu0 %v3362, 72
        %v3887 = vpop.permute.xlu0 %3886
        %v3889 = vsel %vm1714, %v3885, 0
        %v3892 = vsel %vm1733, %v3887, 0
        %3894 = vmatprep.subr.bf16.mxu0 0
        %3895 = vmatpush1.bf16.msra.mxu0 %v3892
        %3896 = vmatprep.subr.bf16.mxu0 0
        %3897 = vmatpush1.bf16.msra.mxu0 0
        %3898 = vmatprep.subr.bf16.mxu0 0
        %3899 = vmatpush1.bf16.msra.mxu0 0
        %3900 = vmatprep.subr.bf16.mxu0 0
        %3901 = vmatpush1.bf16.msra.mxu0 0
        %3902 = vmatprep.subr.bf16.mxu0 0
        %3903 = vmatpush1.bf16.msra.mxu0 0
        %3904 = vmatprep.subr.bf16.mxu0 0
        %3905 = vmatpush1.bf16.msra.mxu0 0
        %3906 = vmatprep.subr.bf16.mxu0 0
        %3907 = vmatpush1.bf16.msra.mxu0 0
        %3908 = vmatprep.subr.bf16.mxu0 0
        %3909 = vmatpush1.bf16.msra.mxu0 0
        %3910 = vmatprep.subr.bf16.mxu0 0
        %3911 = vmatpush1.bf16.msra.mxu0 0
        %3912 = vmatprep.subr.bf16.mxu0 0
        %3913 = vmatpush1.bf16.msra.mxu0 0
        %3914 = vmatprep.subr.bf16.mxu0 0
        %3915 = vmatpush1.bf16.msra.mxu0 0
        %3916 = vmatprep.subr.bf16.mxu0 0
        %3917 = vmatpush1.bf16.msra.mxu0 0
        %3918 = vmatprep.subr.bf16.mxu0 0
        %3919 = vmatpush1.bf16.msra.mxu0 0
        %3920 = vmatprep.subr.bf16.mxu0 0
        %3921 = vmatpush1.bf16.msra.mxu0 0
        %3922 = vmatprep.subr.bf16.mxu0 0
        %3923 = vmatpush1.bf16.msra.mxu0 0
        %3924 = vmatprep.subr.bf16.mxu0 0
        %3925 = vmatpush1.bf16.msra.mxu0 0
        %3926 = vmatprep.mubr.bf16.mxu0 0
        %3927 = vmatmul.mubr.bf16.gmra.mrb[0].mxu0 %v3889
        %v3928 = vpop.f32.mrb[0].mxu0
        %v3929 = vadd.f32 0.0, %v3928
        %v3930 = vpop.f32.mrb[0].mxu0
        %v3931 = vpop.f32.mrb[0].mxu0
        %v3932 = vpop.f32.mrb[0].mxu0
        %3933 = vdwg.mxu0
        %v3934 = vpack.c.bf16 %v3929, %v3929
        %v3936 = vsel %vm872, %v3934, 0
        %3938 = vmatprep.subr.bf16.mxu0 0
        %3939 = vmatpush1.bf16.msra.mxu0 %v2255
        %3940 = vmatprep.subr.bf16.mxu0 0
        %3941 = vmatpush1.bf16.msra.mxu0 0
        %3942 = vmatprep.subr.bf16.mxu0 0
        %3943 = vmatpush1.bf16.msra.mxu0 0
        %3944 = vmatprep.subr.bf16.mxu0 0
        %3945 = vmatpush1.bf16.msra.mxu0 0
        %3946 = vmatprep.subr.bf16.mxu0 0
        %3947 = vmatpush1.bf16.msra.mxu0 0
        %3948 = vmatprep.subr.bf16.mxu0 0
        %3949 = vmatpush1.bf16.msra.mxu0 0
        %3950 = vmatprep.subr.bf16.mxu0 0
        %3951 = vmatpush1.bf16.msra.mxu0 0
        %3952 = vmatprep.subr.bf16.mxu0 0
        %3953 = vmatpush1.bf16.msra.mxu0 0
        %3954 = vmatprep.subr.bf16.mxu0 0
        %3955 = vmatpush1.bf16.msra.mxu0 0
        %3956 = vmatprep.subr.bf16.mxu0 0
        %3957 = vmatpush1.bf16.msra.mxu0 0
        %3958 = vmatprep.subr.bf16.mxu0 0
        %3959 = vmatpush1.bf16.msra.mxu0 0
        %3960 = vmatprep.subr.bf16.mxu0 0
        %3961 = vmatpush1.bf16.msra.mxu0 0
        %3962 = vmatprep.subr.bf16.mxu0 0
        %3963 = vmatpush1.bf16.msra.mxu0 0
        %3964 = vmatprep.subr.bf16.mxu0 0
        %3965 = vmatpush1.bf16.msra.mxu0 0
        %3966 = vmatprep.subr.bf16.mxu0 0
        %3967 = vmatpush1.bf16.msra.mxu0 0
        %3968 = vmatprep.subr.bf16.mxu0 0
        %3969 = vmatpush1.bf16.msra.mxu0 0
        %3970 = vmatprep.mubr.bf16.mxu0 0
        %3971 = vmatmul.mubr.bf16.gmra.mrb[0].mxu0 %v3936
        %v3972 = vpop.f32.mrb[0].mxu0
        %v3973 = vadd.f32 0.0, %v3972
        %v3974 = vpop.f32.mrb[0].mxu0
        %v3975 = vpop.f32.mrb[0].mxu0
        %v3976 = vpop.f32.mrb[0].mxu0
        %3977 = vdwg.mxu0
        %v3978 = vadd.f32 %v3823, %v3973
        %v3979 = vadd.f32 %v3233, %v3978
        %v3980 = vadd.f32 %v3979, %v2300
        %v3981 = vsel %vm815, %v3980, 0.0
        %3982 = vadd.xlane.f32.xlu0 %v3981
        %v3983 = vpop.xlane.xlu0 %3982
        %v3984 = vmul.f32 %v3983, %v1510
        %v3985 = vsub.f32 %v3980, %v3984
        %v3986 = vmul.f32 %v3985, %v3985
        %v3987 = vsel %vm815, %v3986, 0.0
        %3988 = vadd.xlane.f32.xlu0 %v3987
        %v3989 = vpop.xlane.xlu0 %3988
        %v3990 = vmul.f32 %v3989, %v1510
        %v3991 = vadd.f32 %v3990, 1e-05
        %v3992 = vrsqrt.pop %v3991
        %v3993 = vmul.f32 %v3985, %v3992
        %v3994 = vmul.f32 %v3993, %v2317
        %v3995 = vadd.f32 %v3994, %v2321
        %v3996 = vpack.c.bf16 %v3995, %v3995
        %v3997 = vld [vmem:[%s656] sm:$0xf]
        %v3998 = vld [vmem:[%s656 + $0x4] sm:$0xf]
        %v3999 = vld [vmem:[%s656 + $0x8] sm:$0xf]
        %v4000 = vld [vmem:[%s656 + $0xc] sm:$0xf]
        %v4005 = vunpack.c.l.b16 %v3997
        %v4006 = vunpack.c.l.b16 %v3998
        %v4007 = vunpack.c.l.b16 %v3999
        %v4008 = vunpack.c.l.b16 %v4000
        %v4009 = vpack.c.b16 %v4006, %v4005
        %v4010 = vpack.c.b16 %v4008, %v4007
        %v4014 = vsel %vm815, %v3996, 0
        %4016 = vmatprep.subr.bf16.mxu0 0
        %4017 = vmatpush1.bf16.msra.mxu0 %v4009
        %4018 = vmatprep.subr.bf16.mxu0 0
        %4019 = vmatpush1.bf16.msra.mxu0 %v4010
        %4020 = vmatprep.subr.bf16.mxu0 0
        %4021 = vmatpush1.bf16.msra.mxu0 0
        %4022 = vmatprep.subr.bf16.mxu0 0
        %4023 = vmatpush1.bf16.msra.mxu0 0
        %4024 = vmatprep.subr.bf16.mxu0 0
        %4025 = vmatpush1.bf16.msra.mxu0 0
        %4026 = vmatprep.subr.bf16.mxu0 0
        %4027 = vmatpush1.bf16.msra.mxu0 0
        %4028 = vmatprep.subr.bf16.mxu0 0
        %4029 = vmatpush1.bf16.msra.mxu0 0
        %4030 = vmatprep.subr.bf16.mxu0 0
        %4031 = vmatpush1.bf16.msra.mxu0 0
        %4032 = vmatprep.subr.bf16.mxu0 0
        %4033 = vmatpush1.bf16.msra.mxu0 0
        %4034 = vmatprep.subr.bf16.mxu0 0
        %4035 = vmatpush1.bf16.msra.mxu0 0
        %4036 = vmatprep.subr.bf16.mxu0 0
        %4037 = vmatpush1.bf16.msra.mxu0 0
        %4038 = vmatprep.subr.bf16.mxu0 0
        %4039 = vmatpush1.bf16.msra.mxu0 0
        %4040 = vmatprep.subr.bf16.mxu0 0
        %4041 = vmatpush1.bf16.msra.mxu0 0
        %4042 = vmatprep.subr.bf16.mxu0 0
        %4043 = vmatpush1.bf16.msra.mxu0 0
        %4044 = vmatprep.subr.bf16.mxu0 0
        %4045 = vmatpush1.bf16.msra.mxu0 0
        %4046 = vmatprep.subr.bf16.mxu0 0
        %4047 = vmatpush1.bf16.msra.mxu0 0
        %4048 = vmatprep.mubr.bf16.mxu0 0
        %4049 = vmatmul.mubr.bf16.gmra.mrb[0].mxu0 %v4014
        %v4050 = vpop.f32.mrb[0].mxu0
        %v4051 = vadd.f32 %v2332, %v4050
        %v4052 = vpop.f32.mrb[0].mxu0
        %v4053 = vpop.f32.mrb[0].mxu0
        %v4054 = vpop.f32.mrb[0].mxu0
        %4055 = vdwg.mxu0
        %v4056 = vmax.f32 %v4051, 0.0
        %v4057 = vpack.c.bf16 %v4056, %v4056
        %v4058 = vld [vmem:[%s665] sm:$0xf]
        %v4059 = vld [vmem:[%s665 + $0x4] sm:$0xf]
        %v4060 = vld [vmem:[%s665 + $0x8] sm:$0xf]
        %v4061 = vld [vmem:[%s665 + $0xc] sm:$0xf]
        %v4062 = vld [vmem:[%s665 + $0x10] sm:$0xf]
        %v4063 = vld [vmem:[%s665 + $0x14] sm:$0xf]
        %v4064 = vld [vmem:[%s665 + $0x18] sm:$0xf]
        %v4065 = vld [vmem:[%s665 + $0x1c] sm:$0xf]
        %v4066 = vld [vmem:[%s665 + $0x20] sm:$0xf]
        %v4067 = vld [vmem:[%s665 + $0x24] sm:$0xf]
        %v4068 = vld [vmem:[%s665 + $0x28] sm:$0xf]
        %v4069 = vld [vmem:[%s665 + $0x2c] sm:$0xf]
        %v4070 = vld [vmem:[%s665 + $0x30] sm:$0xf]
        %v4071 = vld [vmem:[%s665 + $0x34] sm:$0xf]
        %v4072 = vld [vmem:[%s665 + $0x38] sm:$0xf]
        %v4073 = vld [vmem:[%s665 + $0x3c] sm:$0xf]
        %v4090 = vunpack.c.l.b16 %v4058
        %v4091 = vunpack.c.l.b16 %v4059
        %v4092 = vunpack.c.l.b16 %v4060
        %v4093 = vunpack.c.l.b16 %v4061
        %v4094 = vunpack.c.l.b16 %v4062
        %v4095 = vunpack.c.l.b16 %v4063
        %v4096 = vunpack.c.l.b16 %v4064
        %v4097 = vunpack.c.l.b16 %v4065
        %v4098 = vunpack.c.l.b16 %v4066
        %v4099 = vunpack.c.l.b16 %v4067
        %v4100 = vunpack.c.l.b16 %v4068
        %v4101 = vunpack.c.l.b16 %v4069
        %v4102 = vunpack.c.l.b16 %v4070
        %v4103 = vunpack.c.l.b16 %v4071
        %v4104 = vunpack.c.l.b16 %v4072
        %v4105 = vunpack.c.l.b16 %v4073
        %v4106 = vpack.c.b16 %v4091, %v4090
        %v4107 = vpack.c.b16 %v4093, %v4092
        %v4108 = vpack.c.b16 %v4095, %v4094
        %v4109 = vpack.c.b16 %v4097, %v4096
        %v4110 = vpack.c.b16 %v4099, %v4098
        %v4111 = vpack.c.b16 %v4101, %v4100
        %v4112 = vpack.c.b16 %v4103, %v4102
        %v4113 = vpack.c.b16 %v4105, %v4104
        %4122 = vmatprep.subr.bf16.mxu0 0
        %4123 = vmatpush1.bf16.msra.mxu0 %v4106
        %4124 = vmatprep.subr.bf16.mxu0 0
        %4125 = vmatpush1.bf16.msra.mxu0 %v4107
        %4126 = vmatprep.subr.bf16.mxu0 0
        %4127 = vmatpush1.bf16.msra.mxu0 %v4108
        %4128 = vmatprep.subr.bf16.mxu0 0
        %4129 = vmatpush1.bf16.msra.mxu0 %v4109
        %4130 = vmatprep.subr.bf16.mxu0 0
        %4131 = vmatpush1.bf16.msra.mxu0 %v4110
        %4132 = vmatprep.subr.bf16.mxu0 0
        %4133 = vmatpush1.bf16.msra.mxu0 %v4111
        %4134 = vmatprep.subr.bf16.mxu0 0
        %4135 = vmatpush1.bf16.msra.mxu0 %v4112
        %4136 = vmatprep.subr.bf16.mxu0 0
        %4137 = vmatpush1.bf16.msra.mxu0 %v4113
        %4138 = vmatprep.subr.bf16.mxu0 0
        %4139 = vmatpush1.bf16.msra.mxu0 0
        %4140 = vmatprep.subr.bf16.mxu0 0
        %4141 = vmatpush1.bf16.msra.mxu0 0
        %4142 = vmatprep.subr.bf16.mxu0 0
        %4143 = vmatpush1.bf16.msra.mxu0 0
        %4144 = vmatprep.subr.bf16.mxu0 0
        %4145 = vmatpush1.bf16.msra.mxu0 0
        %4146 = vmatprep.subr.bf16.mxu0 0
        %4147 = vmatpush1.bf16.msra.mxu0 0
        %4148 = vmatprep.subr.bf16.mxu0 0
        %4149 = vmatpush1.bf16.msra.mxu0 0
        %4150 = vmatprep.subr.bf16.mxu0 0
        %4151 = vmatpush1.bf16.msra.mxu0 0
        %4152 = vmatprep.subr.bf16.mxu0 0
        %4153 = vmatpush1.bf16.msra.mxu0 0
        %4154 = vmatprep.mubr.bf16.mxu0 0
        %4155 = vmatmul.mubr.bf16.gmra.mrb[0].mxu0 %v4057
        %v4156 = vpop.f32.mrb[0].mxu0
        %v4157 = vadd.f32 %v2460, %v4156
        %v4158 = vpop.f32.mrb[0].mxu0
        %v4159 = vpop.f32.mrb[0].mxu0
        %v4160 = vpop.f32.mrb[0].mxu0
        %4161 = vdwg.mxu0
        %v4162 = vadd.f32 %v3995, %v4157
        %v4163 = vsel %vm815, %v4162, 0.0
        %4164 = vadd.xlane.f32.xlu0 %v4163
        %v4165 = vpop.xlane.xlu0 %4164
        %v4166 = vmul.f32 %v4165, %v1510
        %v4167 = vsub.f32 %v4162, %v4166
        %v4168 = vmul.f32 %v4167, %v4167
        %v4169 = vsel %vm815, %v4168, 0.0
        %4170 = vadd.xlane.f32.xlu0 %v4169
        %v4171 = vpop.xlane.xlu0 %4170
        %v4172 = vmul.f32 %v4171, %v1510
        %v4173 = vadd.f32 %v4172, 1e-05
        %v4174 = vrsqrt.pop %v4173
        %v4175 = vmul.f32 %v4167, %v4174
        %v4176 = vmul.f32 %v4175, %v2409
        %v4177 = vadd.f32 %v4176, %v2518
        %4178 = vst.msk [vmem:[%s2527] sm:$0xff] %vm815, %v4177
        // Predicated region
        $region117: #{vision_encoder_decoder.6} parent=63 // pred_check
          %p4179 = pneg %p2522
        $region118: #{vision_encoder_decoder.6} parent=63 // pred_check_branch
          %4181 = sbr.rel (%p4179) target = $region120
        $region119: #{vision_encoder_decoder.6} parent=63 // pred_region
          %s4182 = scalar_lea.vmem [#allocation22], 8
          %4183 = vst.msk [vmem:[%s4182] sm:$0xff] %vm815, %v4177
        $region120: #{vision_encoder_decoder.6} parent=63 // pred_fallthru
          _
        // Predicated region
        $region121: #{vision_encoder_decoder.6} parent=63 // pred_check
          %p4184 = pneg %p353
        $region122: #{vision_encoder_decoder.6} parent=63 // pred_check_branch
          %4186 = sbr.rel (%p4184) target = $region124
        $region123: #{vision_encoder_decoder.6} parent=63 // pred_region
          %s4187 = smul.u32 2, %s41
          %s4189 = ssub.s32 256, 256
          %4190 = vsyncadd [#allocation6], %s4189
          %s4191 = smul.addr %s4187, 128
          %s4192 = scalar_lea.hbm %s11, %s4191
          %s4193 = sshll.u32 [#allocation22], 4
          %s4194 = int_to_ptr.vmem [resolvable:$true] %s4193
          %4199 = dma.vmem_to_hbm [thread:$0]  %s4194, 256, %s4192, [#allocation6], 128, 128, 8
        $region124: #{vision_encoder_decoder.6} parent=63 // pred_fallthru
          _
        // Predicated region
        $region125: #{vision_encoder_decoder.6} parent=63 // pred_check
          %p4200 = pneg %p353
        $region126: #{vision_encoder_decoder.6} parent=63 // pred_check_branch
          %4202 = sbr.rel (%p4200) target = $region128
        $region127: #{vision_encoder_decoder.6} parent=63 // pred_region
          %4203 = dma.done [#allocation6], 256
        $region128: #{vision_encoder_decoder.6} parent=63 // pred_fallthru
          _
      $region64: #{vision_encoder_decoder.6} parent=5 // pred_fallthru
        _
      %p4204 = scmp.le.s32.totalorder 2, %s32
      // Predicated region
      $region129: #{vision_encoder_decoder.6} parent=5 // pred_check
        %p4205 = pneg %p4204
      $region130: #{vision_encoder_decoder.6} parent=5 // pred_check_branch
        %4207 = sbr.rel (%p4205) target = $region132
      $region131: #{vision_encoder_decoder.6} parent=5 // pred_region
        %s4208 = ssub.s32 %s32, 2
      $region132: #{vision_encoder_decoder.6} parent=5 // pred_fallthru
        _
    $region6: #{vision_encoder_decoder.6} parent=1 // loop_footer
      %s36 = sadd.s32 1, %s32
    $region7: #{vision_encoder_decoder.6} parent=1 // loop_footer_branch
      %31 = sbr.rel target = $region3
    $region8: #{vision_encoder_decoder.6} parent=1 // loop_exit
      _
    %4209 = vsyncpa [#allocation5], 1
    %s4210 = scalar_lea.sflag [#allocation5], 1
    %4211 = vsyncpa %s4210, 1
    %4212 = vsyncpa [#allocation8], 1
    %4213 = vsyncpa [#allocation11], 1
    %s4214 = scalar_lea.sflag [#allocation11], 1
    %4215 = vsyncpa %s4214, 1
    %4216 = vsyncpa [#allocation14], 1
    %s4217 = scalar_lea.sflag [#allocation14], 1
    %4218 = vsyncpa %s4217, 1
    %4219 = vsyncpa [#allocation17], 1
    %s4220 = scalar_lea.sflag [#allocation17], 1
    %4221 = vsyncpa %s4220, 1
    %4222 = vsyncpa [#allocation20], 1
    %s4223 = scalar_lea.sflag [#allocation20], 1
    %4224 = vsyncpa %s4223, 1
    %4225 = vsyncpa [#allocation6], 1
    %s4226 = scalar_lea.sflag [#allocation6], 1
    %4227 = vsyncpa %s4226, 1

</llo_original>
